<compile_context>
chip_gen: v6e
topology: v6e:2x2x1
jax: 0.10.0
libtpu: 0.0.40
codegen_flags: <defaults>
</compile_context>

<pallas_src>
import math

import jax
import jax.numpy as jnp
from jax.experimental import pallas as pl
from jax.experimental.pallas import tpu as pltpu

LEAKY_SLOPE = 0.01          # nn.LeakyReLU() default
INV_SQRT2 = 0.7071067811865476
SIGMA_FLOOR = 1e-6
LIKELIHOOD_FLOOR = 1e-6


def _round_up(v, m):
    return (v + m - 1) // m * m


def _leaky_relu(x):
    return jnp.where(x >= 0, x, LEAKY_SLOPE * x)


def _erf(z):
    # Abramowitz & Stegun 7.1.26 polynomial erf (|err| < 1.5e-7); the divide is
    # an approx reciprocal so it lands on the otherwise-idle EUP slot.
    a1, a2, a3, a4, a5 = (0.254829592, -0.284496736, 1.421413741,
                          -1.453152027, 1.061405429)
    p = 0.3275911
    az = jnp.abs(z)
    t = pl.reciprocal(1.0 + p * az, approx=True)
    poly = ((((a5 * t + a4) * t + a3) * t + a2) * t + a1) * t
    y = 1.0 - poly * jnp.exp(-az * az)
    return jnp.where(z >= 0, y, -y)


# ---------------------------------------------------------------------------
# Kernel 1: conv3 = Conv2d(128, 64, 3, 1, 1) + LeakyReLU, row-tiled im2col.
# ---------------------------------------------------------------------------
def _conv3_kernel(patch_ref, w_ref, b_ref, o_ref):
    acc = jnp.dot(patch_ref[...], w_ref[...], preferred_element_type=jnp.float32)
    o_ref[...] = _leaky_relu(acc + b_ref[...])


def conv3_pallas(hpatch, w3, b3, tile=256):
    p2, k = hpatch.shape
    co = w3.shape[1]
    assert p2 % tile == 0, (p2, tile)
    row = lambda i: (i, 0)
    full = lambda i: (0, 0)
    return pl.pallas_call(
        _conv3_kernel,
        out_shape=jax.ShapeDtypeStruct((p2, co), jnp.float32),
        grid=(p2 // tile,),
        in_specs=[
            pl.BlockSpec((tile, k), row),
            pl.BlockSpec((k, co), full),
            pl.BlockSpec((1, co), full),
        ],
        out_specs=pl.BlockSpec((tile, co), row),
        compiler_params=pltpu.CompilerParams(dimension_semantics=("parallel",)),
    )(hpatch, w3, b3)


# ---------------------------------------------------------------------------
# Kernel 2: folded (masked-conv1 + concat + 1x1x1 chain) -> (mu, sigma).
# ---------------------------------------------------------------------------
def _chain_kernel(patch_ref, w1_ref, ba_ref, wb_ref, bb_ref, wc_ref, bc_ref,
                  o_ref):
    # Single matmul covers conv1 (60 live taps) folded through conv2a plus the
    # hyper column of the implicit concat; bias already includes b1 @ W2a.
    h = jnp.dot(patch_ref[...], w1_ref[...],
                preferred_element_type=jnp.float32) + ba_ref[...]
    h = _leaky_relu(h).astype(jnp.bfloat16)
    h = jnp.dot(h, wb_ref[...], preferred_element_type=jnp.float32) + bb_ref[...]
    h = _leaky_relu(h).astype(jnp.bfloat16)
    o_ref[...] = jnp.dot(h, wc_ref[...],
                         preferred_element_type=jnp.float32) + bc_ref[...]


def context_chain_pallas(patches, wbig, ba, wb, bb, wc, bc, tile=2048):
    p, k = patches.shape
    assert p % tile == 0, (p, tile)
    row = lambda i: (i, 0)
    full = lambda i: (0, 0)
    return pl.pallas_call(
        _chain_kernel,
        out_shape=jax.ShapeDtypeStruct((p, 2), jnp.float32),
        grid=(p // tile,),
        in_specs=[
            pl.BlockSpec((tile, k), row),
            pl.BlockSpec(wbig.shape, full),
            pl.BlockSpec(ba.shape, full),
            pl.BlockSpec(wb.shape, full),
            pl.BlockSpec(bb.shape, full),
            pl.BlockSpec(wc.shape, full),
            pl.BlockSpec(bc.shape, full),
        ],
        out_specs=pl.BlockSpec((tile, 2), row),
        compiler_params=pltpu.CompilerParams(dimension_semantics=("parallel",)),
    )(patches, wbig, ba, wb, bb, wc, bc)


# ---------------------------------------------------------------------------
# Kernel 3: Gaussian entropy on lane-dense (rows, 128) slabs.
# ---------------------------------------------------------------------------
def _entropy_kernel(x_ref, mu_ref, s_ref, o_ref):
    # TODO(synk): Gaussian_entropy_model source not provided in the reference;
    # standard CDF-difference with |scale| clamp and a 1e-6 likelihood floor
    # is assumed (same convention as the previous version).
    sigma = jnp.maximum(jnp.abs(s_ref[...]), SIGMA_FLOOR)
    inv = pl.reciprocal(sigma, approx=True) * INV_SQRT2
    dlt = x_ref[...] - mu_ref[...]
    lik = 0.5 * (_erf((dlt + 0.5) * inv) - _erf((dlt - 0.5) * inv))
    o_ref[...] = jnp.maximum(jnp.abs(lik), LIKELIHOOD_FLOOR)


def entropy_pallas(xs, mus, ss, tile=256):
    rows, lanes = xs.shape
    assert rows % tile == 0 and lanes == 128
    row = lambda i: (i, 0)
    return pl.pallas_call(
        _entropy_kernel,
        out_shape=jax.ShapeDtypeStruct((rows, lanes), jnp.float32),
        grid=(rows // tile,),
        in_specs=[pl.BlockSpec((tile, lanes), row)] * 3,
        out_specs=pl.BlockSpec((tile, lanes), row),
        compiler_params=pltpu.CompilerParams(dimension_semantics=("parallel",)),
    )(xs, mus, ss)


# ---------------------------------------------------------------------------
# Full forward pass (glue / im2col in plain JAX, compute in the Pallas kernels)
# ---------------------------------------------------------------------------
def _replication_pad_to_mult4(x):
    # Faithful translation of the module's ReplicationPad2d block (no-op when
    # H and W are multiples of 4; shapes are static -> trace-time Python).
    _, _, hh, ww = x.shape
    pad_w = (4 - hh % 4) % 4
    pad_h = (4 - ww % 4) % 4
    if pad_w == 0 and pad_h == 0:
        return x
    pad_left, pad_right = pad_w // 2, pad_w - pad_w // 2
    pad_top, pad_bottom = pad_h // 2, pad_h - pad_h // 2
    # nn.ReplicationPad2d((pad_top, pad_bottom, pad_left, pad_right)) pads the
    # last dim (W) by (pad_top, pad_bottom) and H by (pad_left, pad_right).
    return jnp.pad(x, ((0, 0), (0, 0), (pad_left, pad_right),
                       (pad_top, pad_bottom)), mode='edge')


def context4_forward(params, x, hyper):
    n, d, _, _ = x.shape
    assert d == 64, "conv3 output (64 ch) is concatenated along the depth axis"
    xp = _replication_pad_to_mult4(x)
    _, _, hp, wp = xp.shape
    assert hyper.shape == (n, 128, hp, wp)
    f32, bf16 = jnp.float32, jnp.bfloat16

    # ---- Kernel 1: conv3 on `hyper` (im2col: 9 taps x 128 ch).
    hyp = jnp.transpose(hyper, (0, 2, 3, 1))                      # (N,Hp,Wp,128)
    hyp = jnp.pad(hyp, ((0, 0), (1, 1), (1, 1), (0, 0)))
    taps3 = [hyp[:, dy:dy + hp, dx:dx + wp, :]
             for dy in range(3) for dx in range(3)]
    hpatch = jnp.concatenate(taps3, axis=-1).reshape(n * hp * wp, 9 * 128)
    w3 = jnp.transpose(params['conv3_w'], (2, 3, 1, 0)).reshape(9 * 128, 64)
    b3 = params['conv3_b'].reshape(1, 64).astype(f32)
    p2 = n * hp * wp
    tile3 = 256
    p2p = _round_up(p2, tile3)
    hpatch = jnp.pad(hpatch, ((0, p2p - p2), (0, 0))).astype(bf16)
    h3 = conv3_pallas(hpatch, w3.astype(bf16), b3, tile=tile3)[:p2]   # (p2,64)
    # unsqueeze(dim=1): conv3 channels become the depth axis -> one scalar per
    # (n, d, h, w) position, same raster order as the conv1 patches.
    hcol = jnp.transpose(h3.reshape(n, hp, wp, 64), (0, 3, 1, 2)).reshape(-1, 1)

    # ---- conv1 im2col: only the 60 taps kept by the type-'A' mask
    #      (raster id kd*25 + kh*5 + kw < 60) + the hyper column, K padded to 64.
    # TODO(synk): longer-term, build these patch rows in-kernel from a haloed x
    # tile via manual DMA instead of materialising the ~64x im2col in HBM.
    xpad = jnp.pad(xp, ((0, 0), (2, 2), (2, 2), (2, 2)))
    taps1 = [xpad[:, kd:kd + d, kh:kh + hp, kw:kw + wp]
             for kd in range(5) for kh in range(5) for kw in range(5)
             if kd * 25 + kh * 5 + kw < 60]
    pos = n * d * hp * wp
    patches = jnp.stack(taps1, axis=-1).reshape(pos, 60)
    patches = jnp.concatenate([patches, hcol, jnp.zeros((pos, 3), f32)],
                              axis=-1)                                # (pos,64)

    # ---- Fold conv1 (no activation) + the channel concat into conv2's first
    #      1x1x1 conv:  W = w1_live^T @ W2a[:, :24]^T , extra row = W2a[:, 24],
    #      bias = b2a + b1 @ W2a[:, :24]^T.
    w1_live = params['conv1_w'].reshape(24, 125)[:, :60]          # mask 'A'
    w2a = params['conv2a_w'].reshape(64, 25)
    wa_x = jnp.transpose(w2a[:, :24])                             # (24, 64)
    wa_h = jnp.transpose(w2a[:, 24:25])                           # (1, 64)
    wbig = jnp.concatenate([jnp.transpose(w1_live) @ wa_x, wa_h,
                            jnp.zeros((3, 64), f32)], axis=0)     # (64, 64)
    ba = (params['conv2a_b'][None, :]
          + params['conv1_b'][None, :] @ wa_x).astype(f32)        # (1, 64)
    wb = jnp.transpose(params['conv2b_w'].reshape(96, 64))        # (64, 96)
    bb = params['conv2b_b'].reshape(1, 96).astype(f32)
    wc = jnp.transpose(params['conv2c_w'].reshape(2, 96))         # (96, 2)
    bc = params['conv2c_b'].reshape(1, 2).astype(f32)

    tile2 = 2048
    posp = _round_up(pos, tile2)
    patches = jnp.pad(patches, ((0, posp - pos), (0, 0))).astype(bf16)
    o2 = context_chain_pallas(patches, wbig.astype(bf16), ba,
                              wb.astype(bf16), bb, wc.astype(bf16), bc,
                              tile=tile2)[:pos]                   # (pos, 2) f32

    # ---- Kernel 3: Gaussian entropy on lane-dense (rows, 128) slabs.
    tile_e = 256
    rows = _round_up(_round_up(pos, 128) // 128, tile_e)
    tot = rows * 128

    def slab(v, fill):
        return jnp.pad(v, (0, tot - pos),
                       constant_values=fill).reshape(rows, 128)

    lik = entropy_pallas(slab(xp.reshape(-1), 0.0),
                         slab(o2[:, 0], 0.0),
                         slab(o2[:, 1], 1.0), tile=tile_e)
    return lik.reshape(-1)[:pos].reshape(n, d, hp, wp)


# ---------------------------------------------------------------------------
# Deterministic parameter init (PyTorch-conv-style uniform bounds).
# ---------------------------------------------------------------------------
def init_params(key):
    ks = jax.random.split(key, 10)

    def u(k, shape, fan_in):
        b = 1.0 / math.sqrt(fan_in)
        return jax.random.uniform(k, shape, jnp.float32, -b, b)

    return {
        'conv1_w': u(ks[0], (24, 1, 5, 5, 5), 125),
        'conv1_b': u(ks[1], (24,), 125),
        'conv2a_w': u(ks[2], (64, 25, 1, 1, 1), 25),
        'conv2a_b': u(ks[3], (64,), 25),
        'conv2b_w': u(ks[4], (96, 64, 1, 1, 1), 64),
        'conv2b_b': u(ks[5], (96,), 64),
        'conv2c_w': u(ks[6], (2, 96, 1, 1, 1), 96),
        'conv2c_b': u(ks[7], (2,), 96),
        'conv3_w': u(ks[8], (64, 128, 3, 3), 128 * 9),
        'conv3_b': u(ks[9], (64,), 128 * 9),
    }


if __name__ == "__main__":
    key = jax.random.PRNGKey(0)
    kp, kx, kh = jax.random.split(key, 3)
    params = init_params(kp)

    # Depth must be 64 (conv3 outputs 64 channels concatenated along the 3D
    # depth axis); hyper has 128 channels and the same spatial size as x.
    N, D, H, W = 2, 64, 8, 8
    x = jax.random.normal(kx, (N, D, H, W), jnp.float32)
    hyper = jax.random.normal(kh, (N, 128, H, W), jnp.float32)

    fwd = jax.jit(context4_forward)
    p3 = jax.block_until_ready(fwd(params, x, hyper))

    assert p3.shape == (N, D, H, W)
    assert bool(jnp.all(jnp.isfinite(p3)))
    print("KERNEL_OK")
</pallas_src>

<mosaic_0001>
module attributes {stable_mosaic.version = 11 : i64} {
  func.func @_conv3_kernel(%arg0: i32, %arg1: memref<256x1152xbf16, #tpu.memory_space<vmem>>, %arg2: memref<1152x64xbf16, #tpu.memory_space<vmem>>, %arg3: memref<1x64xf32, #tpu.memory_space<vmem>>, %arg4: memref<256x64xf32, #tpu.memory_space<vmem>>) attributes {dimension_semantics = [#tpu.dimension_semantics<parallel>], iteration_bounds = array<i64: 1>, scalar_prefetch = 0 : i64, scratch_operands = 0 : i64, tpu.core_type = #tpu.core_type<tc>, window_params = [{transform_indices = @transform_0, window_bounds = array<i64: 256, 1152>}, {pipeline_mode = #tpu.pipeline_mode<synchronous>, transform_indices = @transform_1, window_bounds = array<i64: 1152, 64>}, {pipeline_mode = #tpu.pipeline_mode<synchronous>, transform_indices = @transform_2, window_bounds = array<i64: 1, 64>}, {transform_indices = @transform_3, window_bounds = array<i64: 256, 64>}]} {
    %c0 = arith.constant 0 : index
    %c0_0 = arith.constant 0 : index
    %0 = vector.load %arg1[%c0, %c0_0] : memref<256x1152xbf16, #tpu.memory_space<vmem>>, vector<256x1152xbf16>
    %c0_1 = arith.constant 0 : index
    %c0_2 = arith.constant 0 : index
    %1 = vector.load %arg2[%c0_1, %c0_2] : memref<1152x64xbf16, #tpu.memory_space<vmem>>, vector<1152x64xbf16>
    %cst = arith.constant dense<0.000000e+00> : vector<256x64xf32>
    %2 = tpu.matmul %0, %1, %cst {dimension_numbers = #tpu.dot_dimension_numbers<[1], [0], [0], [1], [0, 0, 1, 1], [], []>} : vector<256x1152xbf16>, vector<1152x64xbf16>, vector<256x64xf32> -> vector<256x64xf32>
    %c0_3 = arith.constant 0 : index
    %c0_4 = arith.constant 0 : index
    %3 = vector.load %arg3[%c0_3, %c0_4] : memref<1x64xf32, #tpu.memory_space<vmem>>, vector<1x64xf32>
    %4 = vector.broadcast %3 : vector<1x64xf32> to vector<256x64xf32>
    %5 = arith.addf %2, %4 : vector<256x64xf32>
    %cst_5 = arith.constant 0.000000e+00 : f32
    %6 = vector.broadcast %cst_5 : f32 to vector<256x64xf32>
    %7 = arith.cmpf oge, %5, %6 : vector<256x64xf32>
    %cst_6 = arith.constant 0.00999999977 : f32
    %8 = vector.broadcast %cst_6 : f32 to vector<256x64xf32>
    %9 = arith.mulf %8, %5 : vector<256x64xf32>
    %10 = arith.select %7, %5, %9 : vector<256x64xi1>, vector<256x64xf32>
    %c0_7 = arith.constant 0 : index
    %c0_8 = arith.constant 0 : index
    %11 = vector.load %arg4[%c0_7, %c0_8] : memref<256x64xf32, #tpu.memory_space<vmem>>, vector<256x64xf32>
    tpu.vector_store %arg4[%c0_7, %c0_8], %10 {strides = array<i32>} : memref<256x64xf32, #tpu.memory_space<vmem>>, vector<256x64xf32>,
    return
  }
  func.func @transform_0(%arg0: i32) -> (i32, i32) {
    %c0_i32 = arith.constant 0 : i32
    %c0_i32_0 = arith.constant 0 : i32
    return %arg0, %c0_i32 : i32, i32
  }
  func.func @transform_1(%arg0: i32) -> (i32, i32) {
    %c0_i32 = arith.constant 0 : i32
    %c0_i32_0 = arith.constant 0 : i32
    %c0_i32_1 = arith.constant 0 : i32
    return %c0_i32, %c0_i32_0 : i32, i32
  }
  func.func @transform_2(%arg0: i32) -> (i32, i32) {
    %c0_i32 = arith.constant 0 : i32
    %c0_i32_0 = arith.constant 0 : i32
    %c0_i32_1 = arith.constant 0 : i32
    return %c0_i32, %c0_i32_0 : i32, i32
  }
  func.func @transform_3(%arg0: i32) -> (i32, i32) {
    %c0_i32 = arith.constant 0 : i32
    %c0_i32_0 = arith.constant 0 : i32
    return %arg0, %c0_i32 : i32, i32
  }
}

module attributes {stable_mosaic.version = 11 : i64} {
  func.func @_chain_kernel(%arg0: i32, %arg1: memref<2048x64xbf16, #tpu.memory_space<vmem>>, %arg2: memref<64x64xbf16, #tpu.memory_space<vmem>>, %arg3: memref<1x64xf32, #tpu.memory_space<vmem>>, %arg4: memref<64x96xbf16, #tpu.memory_space<vmem>>, %arg5: memref<1x96xf32, #tpu.memory_space<vmem>>, %arg6: memref<96x2xbf16, #tpu.memory_space<vmem>>, %arg7: memref<1x2xf32, #tpu.memory_space<vmem>>, %arg8: memref<2048x2xf32, #tpu.memory_space<vmem>>) attributes {dimension_semantics = [#tpu.dimension_semantics<parallel>], iteration_bounds = array<i64: 4>, scalar_prefetch = 0 : i64, scratch_operands = 0 : i64, tpu.core_type = #tpu.core_type<tc>, window_params = [{transform_indices = @transform_0, window_bounds = array<i64: 2048, 64>}, {pipeline_mode = #tpu.pipeline_mode<synchronous>, transform_indices = @transform_1, window_bounds = array<i64: 64, 64>}, {pipeline_mode = #tpu.pipeline_mode<synchronous>, transform_indices = @transform_2, window_bounds = array<i64: 1, 64>}, {pipeline_mode = #tpu.pipeline_mode<synchronous>, transform_indices = @transform_3, window_bounds = array<i64: 64, 96>}, {pipeline_mode = #tpu.pipeline_mode<synchronous>, transform_indices = @transform_4, window_bounds = array<i64: 1, 96>}, {pipeline_mode = #tpu.pipeline_mode<synchronous>, transform_indices = @transform_5, window_bounds = array<i64: 96, 2>}, {pipeline_mode = #tpu.pipeline_mode<synchronous>, transform_indices = @transform_6, window_bounds = array<i64: 1, 2>}, {transform_indices = @transform_7, window_bounds = array<i64: 2048, 2>}]} {
    %c0 = arith.constant 0 : index
    %c0_0 = arith.constant 0 : index
    %0 = vector.load %arg1[%c0, %c0_0] : memref<2048x64xbf16, #tpu.memory_space<vmem>>, vector<2048x64xbf16>
    %c0_1 = arith.constant 0 : index
    %c0_2 = arith.constant 0 : index
    %1 = vector.load %arg2[%c0_1, %c0_2] : memref<64x64xbf16, #tpu.memory_space<vmem>>, vector<64x64xbf16>
    %cst = arith.constant dense<0.000000e+00> : vector<2048x64xf32>
    %2 = tpu.matmul %0, %1, %cst {dimension_numbers = #tpu.dot_dimension_numbers<[1], [0], [0], [1], [0, 0, 1, 1], [], []>} : vector<2048x64xbf16>, vector<64x64xbf16>, vector<2048x64xf32> -> vector<2048x64xf32>
    %c0_3 = arith.constant 0 : index
    %c0_4 = arith.constant 0 : index
    %3 = vector.load %arg3[%c0_3, %c0_4] : memref<1x64xf32, #tpu.memory_space<vmem>>, vector<1x64xf32>
    %4 = vector.broadcast %3 : vector<1x64xf32> to vector<2048x64xf32>
    %5 = arith.addf %2, %4 : vector<2048x64xf32>
    %cst_5 = arith.constant 0.000000e+00 : f32
    %6 = vector.broadcast %cst_5 : f32 to vector<2048x64xf32>
    %7 = arith.cmpf oge, %5, %6 : vector<2048x64xf32>
    %cst_6 = arith.constant 0.00999999977 : f32
    %8 = vector.broadcast %cst_6 : f32 to vector<2048x64xf32>
    %9 = arith.mulf %8, %5 : vector<2048x64xf32>
    %10 = arith.select %7, %5, %9 : vector<2048x64xi1>, vector<2048x64xf32>
    %11 = arith.truncf %10 : vector<2048x64xf32> to vector<2048x64xbf16>
    %c0_7 = arith.constant 0 : index
    %c0_8 = arith.constant 0 : index
    %12 = vector.load %arg4[%c0_7, %c0_8] : memref<64x96xbf16, #tpu.memory_space<vmem>>, vector<64x96xbf16>
    %cst_9 = arith.constant dense<0.000000e+00> : vector<2048x96xf32>
    %13 = tpu.matmul %11, %12, %cst_9 {dimension_numbers = #tpu.dot_dimension_numbers<[1], [0], [0], [1], [0, 0, 1, 1], [], []>} : vector<2048x64xbf16>, vector<64x96xbf16>, vector<2048x96xf32> -> vector<2048x96xf32>
    %c0_10 = arith.constant 0 : index
    %c0_11 = arith.constant 0 : index
    %14 = vector.load %arg5[%c0_10, %c0_11] : memref<1x96xf32, #tpu.memory_space<vmem>>, vector<1x96xf32>
    %15 = vector.broadcast %14 : vector<1x96xf32> to vector<2048x96xf32>
    %16 = arith.addf %13, %15 : vector<2048x96xf32>
    %cst_12 = arith.constant 0.000000e+00 : f32
    %17 = vector.broadcast %cst_12 : f32 to vector<2048x96xf32>
    %18 = arith.cmpf oge, %16, %17 : vector<2048x96xf32>
    %cst_13 = arith.constant 0.00999999977 : f32
    %19 = vector.broadcast %cst_13 : f32 to vector<2048x96xf32>
    %20 = arith.mulf %19, %16 : vector<2048x96xf32>
    %21 = arith.select %18, %16, %20 : vector<2048x96xi1>, vector<2048x96xf32>
    %22 = arith.truncf %21 : vector<2048x96xf32> to vector<2048x96xbf16>
    %c0_14 = arith.constant 0 : index
    %c0_15 = arith.constant 0 : index
    %23 = vector.load %arg6[%c0_14, %c0_15] : memref<96x2xbf16, #tpu.memory_space<vmem>>, vector<96x2xbf16>
    %cst_16 = arith.constant dense<0.000000e+00> : vector<2048x2xf32>
    %24 = tpu.matmul %22, %23, %cst_16 {dimension_numbers = #tpu.dot_dimension_numbers<[1], [0], [0], [1], [0, 0, 1, 1], [], []>} : vector<2048x96xbf16>, vector<96x2xbf16>, vector<2048x2xf32> -> vector<2048x2xf32>
    %c0_17 = arith.constant 0 : index
    %c0_18 = arith.constant 0 : index
    %25 = vector.load %arg7[%c0_17, %c0_18] : memref<1x2xf32, #tpu.memory_space<vmem>>, vector<1x2xf32>
    %26 = vector.broadcast %25 : vector<1x2xf32> to vector<2048x2xf32>
    %27 = arith.addf %24, %26 : vector<2048x2xf32>
    %c0_19 = arith.constant 0 : index
    %c0_20 = arith.constant 0 : index
    %28 = vector.load %arg8[%c0_19, %c0_20] : memref<2048x2xf32, #tpu.memory_space<vmem>>, vector<2048x2xf32>
    tpu.vector_store %arg8[%c0_19, %c0_20], %27 {strides = array<i32>} : memref<2048x2xf32, #tpu.memory_space<vmem>>, vector<2048x2xf32>,
    return
  }
  func.func @transform_0(%arg0: i32) -> (i32, i32) {
    %c0_i32 = arith.constant 0 : i32
    %c0_i32_0 = arith.constant 0 : i32
    return %arg0, %c0_i32 : i32, i32
  }
  func.func @transform_1(%arg0: i32) -> (i32, i32) {
    %c0_i32 = arith.constant 0 : i32
    %c0_i32_0 = arith.constant 0 : i32
    %c0_i32_1 = arith.constant 0 : i32
    return %c0_i32, %c0_i32_0 : i32, i32
  }
  func.func @transform_2(%arg0: i32) -> (i32, i32) {
    %c0_i32 = arith.constant 0 : i32
    %c0_i32_0 = arith.constant 0 : i32
    %c0_i32_1 = arith.constant 0 : i32
    return %c0_i32, %c0_i32_0 : i32, i32
  }
  func.func @transform_3(%arg0: i32) -> (i32, i32) {
    %c0_i32 = arith.constant 0 : i32
    %c0_i32_0 = arith.constant 0 : i32
    %c0_i32_1 = arith.constant 0 : i32
    return %c0_i32, %c0_i32_0 : i32, i32
  }
  func.func @transform_4(%arg0: i32) -> (i32, i32) {
    %c0_i32 = arith.constant 0 : i32
    %c0_i32_0 = arith.constant 0 : i32
    %c0_i32_1 = arith.constant 0 : i32
    return %c0_i32, %c0_i32_0 : i32, i32
  }
  func.func @transform_5(%arg0: i32) -> (i32, i32) {
    %c0_i32 = arith.constant 0 : i32
    %c0_i32_0 = arith.constant 0 : i32
    %c0_i32_1 = arith.constant 0 : i32
    return %c0_i32, %c0_i32_0 : i32, i32
  }
  func.func @transform_6(%arg0: i32) -> (i32, i32) {
    %c0_i32 = arith.constant 0 : i32
    %c0_i32_0 = arith.constant 0 : i32
    %c0_i32_1 = arith.constant 0 : i32
    return %c0_i32, %c0_i32_0 : i32, i32
  }
  func.func @transform_7(%arg0: i32) -> (i32, i32) {
    %c0_i32 = arith.constant 0 : i32
    %c0_i32_0 = arith.constant 0 : i32
    return %arg0, %c0_i32 : i32, i32
  }
}

module attributes {stable_mosaic.version = 11 : i64} {
  func.func @_entropy_kernel(%arg0: i32, %arg1: memref<256x128xf32, #tpu.memory_space<vmem>>, %arg2: memref<256x128xf32, #tpu.memory_space<vmem>>, %arg3: memref<256x128xf32, #tpu.memory_space<vmem>>, %arg4: memref<256x128xf32, #tpu.memory_space<vmem>>) attributes {dimension_semantics = [#tpu.dimension_semantics<parallel>], iteration_bounds = array<i64: 1>, scalar_prefetch = 0 : i64, scratch_operands = 0 : i64, tpu.core_type = #tpu.core_type<tc>, window_params = [{transform_indices = @transform_0, window_bounds = array<i64: 256, 128>}, {transform_indices = @transform_1, window_bounds = array<i64: 256, 128>}, {transform_indices = @transform_2, window_bounds = array<i64: 256, 128>}, {transform_indices = @transform_3, window_bounds = array<i64: 256, 128>}]} {
    %c0 = arith.constant 0 : index
    %c0_0 = arith.constant 0 : index
    %0 = vector.load %arg3[%c0, %c0_0] : memref<256x128xf32, #tpu.memory_space<vmem>>, vector<256x128xf32>
    %1 = math.absf %0 : vector<256x128xf32>
    %cst = arith.constant 9.99999997E-7 : f32
    %2 = vector.broadcast %cst : f32 to vector<256x128xf32>
    %3 = arith.maximumf %1, %2 : vector<256x128xf32>
    %4 = tpu.reciprocal %3 {approx = true} : vector<256x128xf32> -> vector<256x128xf32>
    %cst_1 = arith.constant 0.707106769 : f32
    %5 = vector.broadcast %cst_1 : f32 to vector<256x128xf32>
    %6 = arith.mulf %4, %5 : vector<256x128xf32>
    %c0_2 = arith.constant 0 : index
    %c0_3 = arith.constant 0 : index
    %7 = vector.load %arg1[%c0_2, %c0_3] : memref<256x128xf32, #tpu.memory_space<vmem>>, vector<256x128xf32>
    %c0_4 = arith.constant 0 : index
    %c0_5 = arith.constant 0 : index
    %8 = vector.load %arg2[%c0_4, %c0_5] : memref<256x128xf32, #tpu.memory_space<vmem>>, vector<256x128xf32>
    %9 = arith.subf %7, %8 : vector<256x128xf32>
    %cst_6 = arith.constant 5.000000e-01 : f32
    %10 = vector.broadcast %cst_6 : f32 to vector<256x128xf32>
    %11 = arith.addf %9, %10 : vector<256x128xf32>
    %12 = arith.mulf %11, %6 : vector<256x128xf32>
    %13 = math.absf %12 : vector<256x128xf32>
    %cst_7 = arith.constant 0.327591091 : f32
    %14 = vector.broadcast %cst_7 : f32 to vector<256x128xf32>
    %15 = arith.mulf %14, %13 : vector<256x128xf32>
    %cst_8 = arith.constant 1.000000e+00 : f32
    %16 = vector.broadcast %cst_8 : f32 to vector<256x128xf32>
    %17 = arith.addf %16, %15 : vector<256x128xf32>
    %18 = tpu.reciprocal %17 {approx = true} : vector<256x128xf32> -> vector<256x128xf32>
    %cst_9 = arith.constant 1.06140542 : f32
    %19 = vector.broadcast %cst_9 : f32 to vector<256x128xf32>
    %20 = arith.mulf %19, %18 : vector<256x128xf32>
    %cst_10 = arith.constant -1.45315206 : f32
    %21 = vector.broadcast %cst_10 : f32 to vector<256x128xf32>
    %22 = arith.addf %20, %21 : vector<256x128xf32>
    %23 = arith.mulf %22, %18 : vector<256x128xf32>
    %cst_11 = arith.constant 1.42141378 : f32
    %24 = vector.broadcast %cst_11 : f32 to vector<256x128xf32>
    %25 = arith.addf %23, %24 : vector<256x128xf32>
    %26 = arith.mulf %25, %18 : vector<256x128xf32>
    %cst_12 = arith.constant -0.284496725 : f32
    %27 = vector.broadcast %cst_12 : f32 to vector<256x128xf32>
    %28 = arith.addf %26, %27 : vector<256x128xf32>
    %29 = arith.mulf %28, %18 : vector<256x128xf32>
    %cst_13 = arith.constant 0.254829586 : f32
    %30 = vector.broadcast %cst_13 : f32 to vector<256x128xf32>
    %31 = arith.addf %29, %30 : vector<256x128xf32>
    %32 = arith.mulf %31, %18 : vector<256x128xf32>
    %cst_14 = arith.constant 0.000000e+00 : f32
    %33 = vector.broadcast %cst_14 : f32 to vector<256x128xf32>
    %34 = arith.subf %33, %13 : vector<256x128xf32>
    %35 = arith.mulf %34, %13 : vector<256x128xf32>
    %36 = math.exp %35 : vector<256x128xf32>
    %37 = arith.mulf %32, %36 : vector<256x128xf32>
    %cst_15 = arith.constant 1.000000e+00 : f32
    %38 = vector.broadcast %cst_15 : f32 to vector<256x128xf32>
    %39 = arith.subf %38, %37 : vector<256x128xf32>
    %cst_16 = arith.constant 0.000000e+00 : f32
    %40 = vector.broadcast %cst_16 : f32 to vector<256x128xf32>
    %41 = arith.cmpf oge, %12, %40 : vector<256x128xf32>
    %cst_17 = arith.constant 0.000000e+00 : f32
    %42 = vector.broadcast %cst_17 : f32 to vector<256x128xf32>
    %43 = arith.subf %42, %39 : vector<256x128xf32>
    %44 = arith.select %41, %39, %43 : vector<256x128xi1>, vector<256x128xf32>
    %cst_18 = arith.constant 5.000000e-01 : f32
    %45 = vector.broadcast %cst_18 : f32 to vector<256x128xf32>
    %46 = arith.subf %9, %45 : vector<256x128xf32>
    %47 = arith.mulf %46, %6 : vector<256x128xf32>
    %48 = math.absf %47 : vector<256x128xf32>
    %cst_19 = arith.constant 0.327591091 : f32
    %49 = vector.broadcast %cst_19 : f32 to vector<256x128xf32>
    %50 = arith.mulf %49, %48 : vector<256x128xf32>
    %cst_20 = arith.constant 1.000000e+00 : f32
    %51 = vector.broadcast %cst_20 : f32 to vector<256x128xf32>
    %52 = arith.addf %51, %50 : vector<256x128xf32>
    %53 = tpu.reciprocal %52 {approx = true} : vector<256x128xf32> -> vector<256x128xf32>
    %cst_21 = arith.constant 1.06140542 : f32
    %54 = vector.broadcast %cst_21 : f32 to vector<256x128xf32>
    %55 = arith.mulf %54, %53 : vector<256x128xf32>
    %cst_22 = arith.constant -1.45315206 : f32
    %56 = vector.broadcast %cst_22 : f32 to vector<256x128xf32>
    %57 = arith.addf %55, %56 : vector<256x128xf32>
    %58 = arith.mulf %57, %53 : vector<256x128xf32>
    %cst_23 = arith.constant 1.42141378 : f32
    %59 = vector.broadcast %cst_23 : f32 to vector<256x128xf32>
    %60 = arith.addf %58, %59 : vector<256x128xf32>
    %61 = arith.mulf %60, %53 : vector<256x128xf32>
    %cst_24 = arith.constant -0.284496725 : f32
    %62 = vector.broadcast %cst_24 : f32 to vector<256x128xf32>
    %63 = arith.addf %61, %62 : vector<256x128xf32>
    %64 = arith.mulf %63, %53 : vector<256x128xf32>
    %cst_25 = arith.constant 0.254829586 : f32
    %65 = vector.broadcast %cst_25 : f32 to vector<256x128xf32>
    %66 = arith.addf %64, %65 : vector<256x128xf32>
    %67 = arith.mulf %66, %53 : vector<256x128xf32>
    %cst_26 = arith.constant 0.000000e+00 : f32
    %68 = vector.broadcast %cst_26 : f32 to vector<256x128xf32>
    %69 = arith.subf %68, %48 : vector<256x128xf32>
    %70 = arith.mulf %69, %48 : vector<256x128xf32>
    %71 = math.exp %70 : vector<256x128xf32>
    %72 = arith.mulf %67, %71 : vector<256x128xf32>
    %cst_27 = arith.constant 1.000000e+00 : f32
    %73 = vector.broadcast %cst_27 : f32 to vector<256x128xf32>
    %74 = arith.subf %73, %72 : vector<256x128xf32>
    %cst_28 = arith.constant 0.000000e+00 : f32
    %75 = vector.broadcast %cst_28 : f32 to vector<256x128xf32>
    %76 = arith.cmpf oge, %47, %75 : vector<256x128xf32>
    %cst_29 = arith.constant 0.000000e+00 : f32
    %77 = vector.broadcast %cst_29 : f32 to vector<256x128xf32>
    %78 = arith.subf %77, %74 : vector<256x128xf32>
    %79 = arith.select %76, %74, %78 : vector<256x128xi1>, vector<256x128xf32>
    %80 = arith.subf %44, %79 : vector<256x128xf32>
    %cst_30 = arith.constant 5.000000e-01 : f32
    %81 = vector.broadcast %cst_30 : f32 to vector<256x128xf32>
    %82 = arith.mulf %81, %80 : vector<256x128xf32>
    %83 = math.absf %82 : vector<256x128xf32>
    %cst_31 = arith.constant 9.99999997E-7 : f32
    %84 = vector.broadcast %cst_31 : f32 to vector<256x128xf32>
    %85 = arith.maximumf %83, %84 : vector<256x128xf32>
    %c0_32 = arith.constant 0 : index
    %c0_33 = arith.constant 0 : index
    %86 = vector.load %arg4[%c0_32, %c0_33] : memref<256x128xf32, #tpu.memory_space<vmem>>, vector<256x128xf32>
    tpu.vector_store %arg4[%c0_32, %c0_33], %85 {strides = array<i32>} : memref<256x128xf32, #tpu.memory_space<vmem>>, vector<256x128xf32>,
    return
  }
  func.func @transform_0(%arg0: i32) -> (i32, i32) {
    %c0_i32 = arith.constant 0 : i32
    %c0_i32_0 = arith.constant 0 : i32
    return %arg0, %c0_i32 : i32, i32
  }
  func.func @transform_1(%arg0: i32) -> (i32, i32) {
    %c0_i32 = arith.constant 0 : i32
    %c0_i32_0 = arith.constant 0 : i32
    return %arg0, %c0_i32 : i32, i32
  }
  func.func @transform_2(%arg0: i32) -> (i32, i32) {
    %c0_i32 = arith.constant 0 : i32
    %c0_i32_0 = arith.constant 0 : i32
    return %arg0, %c0_i32 : i32, i32
  }
  func.func @transform_3(%arg0: i32) -> (i32, i32) {
    %c0_i32 = arith.constant 0 : i32
    %c0_i32_0 = arith.constant 0 : i32
    return %arg0, %c0_i32 : i32, i32
  }
}

</mosaic_0001>

<llo_original>
// kernel: context4_forward.3
$region0: #{context4_forward.3}
  #allocation0 [shape = 'u32[]', space=smem, size = 0x4, offset = 0x4, fixed_abs, tag = 'smem constant byte address 0x4 - core index']
  #allocation1 [shape = 'u32[144,128]{1,0:T(1,128)}', space=vmem, size = 0x12000, scoped, tag = 'internal scratch']
  %s0 = inlined_call_operand.vmem [shape: bf16[256,1152], index: 0, kind: input, shape index: {}]
  %s1 = inlined_call_operand.vmem [shape: bf16[1152,64], index: 1, kind: input, shape index: {}]
  %s2 = inlined_call_operand.vmem [shape: f32[1,64], index: 2, kind: input, shape index: {}]
  %s3 = inlined_call_operand.vmem [shape: f32[256,64], index: 3, kind: output, shape index: {}]
  %s4 = sld [smem:[#allocation0]]
  $region22: #{context4_forward.3} parent=0
    _
  %s6 = ssub.s32 1, %s4
  %s7 = scalar_select 0, %s6, %s4
  // Predicated region
  $region2: #{context4_forward.3} parent=0 // pred_check
    _
  $region3: #{context4_forward.3} parent=0 // pred_check_branch
    %9 = sbr.rel (0) target = $region5
  $region4: #{context4_forward.3} parent=0 // pred_region
    _
  $region5: #{context4_forward.3} parent=0 // pred_fallthru
    _
  // Predicated region
  $region6: #{context4_forward.3} parent=0 // pred_check
    _
  $region7: #{context4_forward.3} parent=0 // pred_check_branch
    %11 = sbr.rel (0) target = $region9
  $region8: #{context4_forward.3} parent=0 // pred_region
    _
  $region9: #{context4_forward.3} parent=0 // pred_fallthru
    _
  // Predicated region
  $region10: #{context4_forward.3} parent=0 // pred_check
    _
  $region11: #{context4_forward.3} parent=0 // pred_check_branch
    %13 = sbr.rel (0) target = $region13
  $region12: #{context4_forward.3} parent=0 // pred_region
    _
  $region13: #{context4_forward.3} parent=0 // pred_fallthru
    _
  %v15 = vld [vmem:[%s0] sm:$0xff]
  %v16 = vld [vmem:[%s0 + $0x8] sm:$0xff]
  %v17 = vld [vmem:[%s0 + $0x10] sm:$0xff]
  %v18 = vld [vmem:[%s0 + $0x18] sm:$0xff]
  %v19 = vld [vmem:[%s0 + $0x20] sm:$0xf]
  %v20 = vld [vmem:[%s0 + $0x24] sm:$0xff]
  %v21 = vld [vmem:[%s0 + $0x2c] sm:$0xff]
  %v22 = vld [vmem:[%s0 + $0x34] sm:$0xff]
  %v23 = vld [vmem:[%s0 + $0x3c] sm:$0xff]
  %v24 = vld [vmem:[%s0 + $0x44] sm:$0xf]
  %v25 = vld [vmem:[%s0 + $0x48] sm:$0xff]
  %v26 = vld [vmem:[%s0 + $0x50] sm:$0xff]
  %v27 = vld [vmem:[%s0 + $0x58] sm:$0xff]
  %v28 = vld [vmem:[%s0 + $0x60] sm:$0xff]
  %v29 = vld [vmem:[%s0 + $0x68] sm:$0xf]
  %v30 = vld [vmem:[%s0 + $0x6c] sm:$0xff]
  %v31 = vld [vmem:[%s0 + $0x74] sm:$0xff]
  %v32 = vld [vmem:[%s0 + $0x7c] sm:$0xff]
  %v33 = vld [vmem:[%s0 + $0x84] sm:$0xff]
  %v34 = vld [vmem:[%s0 + $0x8c] sm:$0xf]
  %v35 = vld [vmem:[%s0 + $0x90] sm:$0xff]
  %v36 = vld [vmem:[%s0 + $0x98] sm:$0xff]
  %v37 = vld [vmem:[%s0 + $0xa0] sm:$0xff]
  %v38 = vld [vmem:[%s0 + $0xa8] sm:$0xff]
  %v39 = vld [vmem:[%s0 + $0xb0] sm:$0xf]
  %v40 = vld [vmem:[%s0 + $0xb4] sm:$0xff]
  %v41 = vld [vmem:[%s0 + $0xbc] sm:$0xff]
  %v42 = vld [vmem:[%s0 + $0xc4] sm:$0xff]
  %v43 = vld [vmem:[%s0 + $0xcc] sm:$0xff]
  %v44 = vld [vmem:[%s0 + $0xd4] sm:$0xf]
  %v45 = vld [vmem:[%s0 + $0xd8] sm:$0xff]
  %v46 = vld [vmem:[%s0 + $0xe0] sm:$0xff]
  %v47 = vld [vmem:[%s0 + $0xe8] sm:$0xff]
  %v48 = vld [vmem:[%s0 + $0xf0] sm:$0xff]
  %v49 = vld [vmem:[%s0 + $0xf8] sm:$0xf]
  %v50 = vld [vmem:[%s0 + $0xfc] sm:$0xff]
  %v51 = vld [vmem:[%s0 + $0x104] sm:$0xff]
  %v52 = vld [vmem:[%s0 + $0x10c] sm:$0xff]
  %v53 = vld [vmem:[%s0 + $0x114] sm:$0xff]
  %v54 = vld [vmem:[%s0 + $0x11c] sm:$0xf]
  %v55 = vld [vmem:[%s0 + $0x120] sm:$0xff]
  %v56 = vld [vmem:[%s0 + $0x128] sm:$0xff]
  %v57 = vld [vmem:[%s0 + $0x130] sm:$0xff]
  %v58 = vld [vmem:[%s0 + $0x138] sm:$0xff]
  %v59 = vld [vmem:[%s0 + $0x140] sm:$0xf]
  %v60 = vld [vmem:[%s0 + $0x144] sm:$0xff]
  %v61 = vld [vmem:[%s0 + $0x14c] sm:$0xff]
  %v62 = vld [vmem:[%s0 + $0x154] sm:$0xff]
  %v63 = vld [vmem:[%s0 + $0x15c] sm:$0xff]
  %v64 = vld [vmem:[%s0 + $0x164] sm:$0xf]
  %v65 = vld [vmem:[%s0 + $0x168] sm:$0xff]
  %v66 = vld [vmem:[%s0 + $0x170] sm:$0xff]
  %v67 = vld [vmem:[%s0 + $0x178] sm:$0xff]
  %v68 = vld [vmem:[%s0 + $0x180] sm:$0xff]
  %v69 = vld [vmem:[%s0 + $0x188] sm:$0xf]
  %v70 = vld [vmem:[%s0 + $0x18c] sm:$0xff]
  %v71 = vld [vmem:[%s0 + $0x194] sm:$0xff]
  %v72 = vld [vmem:[%s0 + $0x19c] sm:$0xff]
  %v73 = vld [vmem:[%s0 + $0x1a4] sm:$0xff]
  %v74 = vld [vmem:[%s0 + $0x1ac] sm:$0xf]
  %v75 = vld [vmem:[%s0 + $0x1b0] sm:$0xff]
  %v76 = vld [vmem:[%s0 + $0x1b8] sm:$0xff]
  %v77 = vld [vmem:[%s0 + $0x1c0] sm:$0xff]
  %v78 = vld [vmem:[%s0 + $0x1c8] sm:$0xff]
  %v79 = vld [vmem:[%s0 + $0x1d0] sm:$0xf]
  %v80 = vld [vmem:[%s0 + $0x1d4] sm:$0xff]
  %v81 = vld [vmem:[%s0 + $0x1dc] sm:$0xff]
  %v82 = vld [vmem:[%s0 + $0x1e4] sm:$0xff]
  %v83 = vld [vmem:[%s0 + $0x1ec] sm:$0xff]
  %v84 = vld [vmem:[%s0 + $0x1f4] sm:$0xf]
  %v85 = vld [vmem:[%s0 + $0x1f8] sm:$0xff]
  %v86 = vld [vmem:[%s0 + $0x200] sm:$0xff]
  %v87 = vld [vmem:[%s0 + $0x208] sm:$0xff]
  %v88 = vld [vmem:[%s0 + $0x210] sm:$0xff]
  %v89 = vld [vmem:[%s0 + $0x218] sm:$0xf]
  %v90 = vld [vmem:[%s0 + $0x21c] sm:$0xff]
  %v91 = vld [vmem:[%s0 + $0x224] sm:$0xff]
  %v92 = vld [vmem:[%s0 + $0x22c] sm:$0xff]
  %v93 = vld [vmem:[%s0 + $0x234] sm:$0xff]
  %v94 = vld [vmem:[%s0 + $0x23c] sm:$0xf]
  %v95 = vld [vmem:[%s0 + $0x240] sm:$0xff]
  %v96 = vld [vmem:[%s0 + $0x248] sm:$0xff]
  %v97 = vld [vmem:[%s0 + $0x250] sm:$0xff]
  %v98 = vld [vmem:[%s0 + $0x258] sm:$0xff]
  %v99 = vld [vmem:[%s0 + $0x260] sm:$0xf]
  %v100 = vld [vmem:[%s0 + $0x264] sm:$0xff]
  %v101 = vld [vmem:[%s0 + $0x26c] sm:$0xff]
  %v102 = vld [vmem:[%s0 + $0x274] sm:$0xff]
  %v103 = vld [vmem:[%s0 + $0x27c] sm:$0xff]
  %v104 = vld [vmem:[%s0 + $0x284] sm:$0xf]
  %v105 = vld [vmem:[%s0 + $0x288] sm:$0xff]
  %v106 = vld [vmem:[%s0 + $0x290] sm:$0xff]
  %v107 = vld [vmem:[%s0 + $0x298] sm:$0xff]
  %v108 = vld [vmem:[%s0 + $0x2a0] sm:$0xff]
  %v109 = vld [vmem:[%s0 + $0x2a8] sm:$0xf]
  %v110 = vld [vmem:[%s0 + $0x2ac] sm:$0xff]
  %v111 = vld [vmem:[%s0 + $0x2b4] sm:$0xff]
  %v112 = vld [vmem:[%s0 + $0x2bc] sm:$0xff]
  %v113 = vld [vmem:[%s0 + $0x2c4] sm:$0xff]
  %v114 = vld [vmem:[%s0 + $0x2cc] sm:$0xf]
  %v115 = vld [vmem:[%s0 + $0x2d0] sm:$0xff]
  %v116 = vld [vmem:[%s0 + $0x2d8] sm:$0xff]
  %v117 = vld [vmem:[%s0 + $0x2e0] sm:$0xff]
  %v118 = vld [vmem:[%s0 + $0x2e8] sm:$0xff]
  %v119 = vld [vmem:[%s0 + $0x2f0] sm:$0xf]
  %v120 = vld [vmem:[%s0 + $0x2f4] sm:$0xff]
  %v121 = vld [vmem:[%s0 + $0x2fc] sm:$0xff]
  %v122 = vld [vmem:[%s0 + $0x304] sm:$0xff]
  %v123 = vld [vmem:[%s0 + $0x30c] sm:$0xff]
  %v124 = vld [vmem:[%s0 + $0x314] sm:$0xf]
  %v125 = vld [vmem:[%s0 + $0x318] sm:$0xff]
  %v126 = vld [vmem:[%s0 + $0x320] sm:$0xff]
  %v127 = vld [vmem:[%s0 + $0x328] sm:$0xff]
  %v128 = vld [vmem:[%s0 + $0x330] sm:$0xff]
  %v129 = vld [vmem:[%s0 + $0x338] sm:$0xf]
  %v130 = vld [vmem:[%s0 + $0x33c] sm:$0xff]
  %v131 = vld [vmem:[%s0 + $0x344] sm:$0xff]
  %v132 = vld [vmem:[%s0 + $0x34c] sm:$0xff]
  %v133 = vld [vmem:[%s0 + $0x354] sm:$0xff]
  %v134 = vld [vmem:[%s0 + $0x35c] sm:$0xf]
  %v135 = vld [vmem:[%s0 + $0x360] sm:$0xff]
  %v136 = vld [vmem:[%s0 + $0x368] sm:$0xff]
  %v137 = vld [vmem:[%s0 + $0x370] sm:$0xff]
  %v138 = vld [vmem:[%s0 + $0x378] sm:$0xff]
  %v139 = vld [vmem:[%s0 + $0x380] sm:$0xf]
  %v140 = vld [vmem:[%s0 + $0x384] sm:$0xff]
  %v141 = vld [vmem:[%s0 + $0x38c] sm:$0xff]
  %v142 = vld [vmem:[%s0 + $0x394] sm:$0xff]
  %v143 = vld [vmem:[%s0 + $0x39c] sm:$0xff]
  %v144 = vld [vmem:[%s0 + $0x3a4] sm:$0xf]
  %v145 = vld [vmem:[%s0 + $0x3a8] sm:$0xff]
  %v146 = vld [vmem:[%s0 + $0x3b0] sm:$0xff]
  %v147 = vld [vmem:[%s0 + $0x3b8] sm:$0xff]
  %v148 = vld [vmem:[%s0 + $0x3c0] sm:$0xff]
  %v149 = vld [vmem:[%s0 + $0x3c8] sm:$0xf]
  %v150 = vld [vmem:[%s0 + $0x3cc] sm:$0xff]
  %v151 = vld [vmem:[%s0 + $0x3d4] sm:$0xff]
  %v152 = vld [vmem:[%s0 + $0x3dc] sm:$0xff]
  %v153 = vld [vmem:[%s0 + $0x3e4] sm:$0xff]
  %v154 = vld [vmem:[%s0 + $0x3ec] sm:$0xf]
  %v155 = vld [vmem:[%s0 + $0x3f0] sm:$0xff]
  %v156 = vld [vmem:[%s0 + $0x3f8] sm:$0xff]
  %v157 = vld [vmem:[%s0 + $0x400] sm:$0xff]
  %v158 = vld [vmem:[%s0 + $0x408] sm:$0xff]
  %v159 = vld [vmem:[%s0 + $0x410] sm:$0xf]
  %v160 = vld [vmem:[%s0 + $0x414] sm:$0xff]
  %v161 = vld [vmem:[%s0 + $0x41c] sm:$0xff]
  %v162 = vld [vmem:[%s0 + $0x424] sm:$0xff]
  %v163 = vld [vmem:[%s0 + $0x42c] sm:$0xff]
  %v164 = vld [vmem:[%s0 + $0x434] sm:$0xf]
  %v165 = vld [vmem:[%s0 + $0x438] sm:$0xff]
  %v166 = vld [vmem:[%s0 + $0x440] sm:$0xff]
  %v167 = vld [vmem:[%s0 + $0x448] sm:$0xff]
  %v168 = vld [vmem:[%s0 + $0x450] sm:$0xff]
  %v169 = vld [vmem:[%s0 + $0x458] sm:$0xf]
  %v170 = vld [vmem:[%s0 + $0x45c] sm:$0xff]
  %v171 = vld [vmem:[%s0 + $0x464] sm:$0xff]
  %v172 = vld [vmem:[%s0 + $0x46c] sm:$0xff]
  %v173 = vld [vmem:[%s0 + $0x474] sm:$0xff]
  %v174 = vld [vmem:[%s0 + $0x47c] sm:$0xf]
  %v175 = vld [vmem:[%s1] sm:$0xf]
  %v176 = vld [vmem:[%s1 + $0x4] sm:$0xf]
  %v177 = vld [vmem:[%s1 + $0x8] sm:$0xf]
  %v178 = vld [vmem:[%s1 + $0xc] sm:$0xf]
  %v179 = vld [vmem:[%s1 + $0x10] sm:$0xf]
  %v180 = vld [vmem:[%s1 + $0x14] sm:$0xf]
  %v181 = vld [vmem:[%s1 + $0x18] sm:$0xf]
  %v182 = vld [vmem:[%s1 + $0x1c] sm:$0xf]
  %v183 = vld [vmem:[%s1 + $0x20] sm:$0xf]
  %v184 = vld [vmem:[%s1 + $0x24] sm:$0xf]
  %v185 = vld [vmem:[%s1 + $0x28] sm:$0xf]
  %v186 = vld [vmem:[%s1 + $0x2c] sm:$0xf]
  %v187 = vld [vmem:[%s1 + $0x30] sm:$0xf]
  %v188 = vld [vmem:[%s1 + $0x34] sm:$0xf]
  %v189 = vld [vmem:[%s1 + $0x38] sm:$0xf]
  %v190 = vld [vmem:[%s1 + $0x3c] sm:$0xf]
  %v191 = vld [vmem:[%s1 + $0x40] sm:$0xf]
  %v192 = vld [vmem:[%s1 + $0x44] sm:$0xf]
  %v193 = vld [vmem:[%s1 + $0x48] sm:$0xf]
  %v194 = vld [vmem:[%s1 + $0x4c] sm:$0xf]
  %v195 = vld [vmem:[%s1 + $0x50] sm:$0xf]
  %v196 = vld [vmem:[%s1 + $0x54] sm:$0xf]
  %v197 = vld [vmem:[%s1 + $0x58] sm:$0xf]
  %v198 = vld [vmem:[%s1 + $0x5c] sm:$0xf]
  %v199 = vld [vmem:[%s1 + $0x60] sm:$0xf]
  %v200 = vld [vmem:[%s1 + $0x64] sm:$0xf]
  %v201 = vld [vmem:[%s1 + $0x68] sm:$0xf]
  %v202 = vld [vmem:[%s1 + $0x6c] sm:$0xf]
  %v203 = vld [vmem:[%s1 + $0x70] sm:$0xf]
  %v204 = vld [vmem:[%s1 + $0x74] sm:$0xf]
  %v205 = vld [vmem:[%s1 + $0x78] sm:$0xf]
  %v206 = vld [vmem:[%s1 + $0x7c] sm:$0xf]
  %v207 = vld [vmem:[%s1 + $0x80] sm:$0xf]
  %v208 = vld [vmem:[%s1 + $0x84] sm:$0xf]
  %v209 = vld [vmem:[%s1 + $0x88] sm:$0xf]
  %v210 = vld [vmem:[%s1 + $0x8c] sm:$0xf]
  %v211 = vld [vmem:[%s1 + $0x90] sm:$0xf]
  %v212 = vld [vmem:[%s1 + $0x94] sm:$0xf]
  %v213 = vld [vmem:[%s1 + $0x98] sm:$0xf]
  %v214 = vld [vmem:[%s1 + $0x9c] sm:$0xf]
  %v215 = vld [vmem:[%s1 + $0xa0] sm:$0xf]
  %v216 = vld [vmem:[%s1 + $0xa4] sm:$0xf]
  %v217 = vld [vmem:[%s1 + $0xa8] sm:$0xf]
  %v218 = vld [vmem:[%s1 + $0xac] sm:$0xf]
  %v219 = vld [vmem:[%s1 + $0xb0] sm:$0xf]
  %v220 = vld [vmem:[%s1 + $0xb4] sm:$0xf]
  %v221 = vld [vmem:[%s1 + $0xb8] sm:$0xf]
  %v222 = vld [vmem:[%s1 + $0xbc] sm:$0xf]
  %v223 = vld [vmem:[%s1 + $0xc0] sm:$0xf]
  %v224 = vld [vmem:[%s1 + $0xc4] sm:$0xf]
  %v225 = vld [vmem:[%s1 + $0xc8] sm:$0xf]
  %v226 = vld [vmem:[%s1 + $0xcc] sm:$0xf]
  %v227 = vld [vmem:[%s1 + $0xd0] sm:$0xf]
  %v228 = vld [vmem:[%s1 + $0xd4] sm:$0xf]
  %v229 = vld [vmem:[%s1 + $0xd8] sm:$0xf]
  %v230 = vld [vmem:[%s1 + $0xdc] sm:$0xf]
  %v231 = vld [vmem:[%s1 + $0xe0] sm:$0xf]
  %v232 = vld [vmem:[%s1 + $0xe4] sm:$0xf]
  %v233 = vld [vmem:[%s1 + $0xe8] sm:$0xf]
  %v234 = vld [vmem:[%s1 + $0xec] sm:$0xf]
  %v235 = vld [vmem:[%s1 + $0xf0] sm:$0xf]
  %v236 = vld [vmem:[%s1 + $0xf4] sm:$0xf]
  %v237 = vld [vmem:[%s1 + $0xf8] sm:$0xf]
  %v238 = vld [vmem:[%s1 + $0xfc] sm:$0xf]
  %v239 = vld [vmem:[%s1 + $0x100] sm:$0xf]
  %v240 = vld [vmem:[%s1 + $0x104] sm:$0xf]
  %v241 = vld [vmem:[%s1 + $0x108] sm:$0xf]
  %v242 = vld [vmem:[%s1 + $0x10c] sm:$0xf]
  %v243 = vld [vmem:[%s1 + $0x110] sm:$0xf]
  %v244 = vld [vmem:[%s1 + $0x114] sm:$0xf]
  %v245 = vld [vmem:[%s1 + $0x118] sm:$0xf]
  %v246 = vld [vmem:[%s1 + $0x11c] sm:$0xf]
  %v247 = vld [vmem:[%s1 + $0x120] sm:$0xf]
  %v248 = vld [vmem:[%s1 + $0x124] sm:$0xf]
  %v249 = vld [vmem:[%s1 + $0x128] sm:$0xf]
  %v250 = vld [vmem:[%s1 + $0x12c] sm:$0xf]
  %v251 = vld [vmem:[%s1 + $0x130] sm:$0xf]
  %v252 = vld [vmem:[%s1 + $0x134] sm:$0xf]
  %v253 = vld [vmem:[%s1 + $0x138] sm:$0xf]
  %v254 = vld [vmem:[%s1 + $0x13c] sm:$0xf]
  %v255 = vld [vmem:[%s1 + $0x140] sm:$0xf]
  %v256 = vld [vmem:[%s1 + $0x144] sm:$0xf]
  %v257 = vld [vmem:[%s1 + $0x148] sm:$0xf]
  %v258 = vld [vmem:[%s1 + $0x14c] sm:$0xf]
  %v259 = vld [vmem:[%s1 + $0x150] sm:$0xf]
  %v260 = vld [vmem:[%s1 + $0x154] sm:$0xf]
  %v261 = vld [vmem:[%s1 + $0x158] sm:$0xf]
  %v262 = vld [vmem:[%s1 + $0x15c] sm:$0xf]
  %v263 = vld [vmem:[%s1 + $0x160] sm:$0xf]
  %v264 = vld [vmem:[%s1 + $0x164] sm:$0xf]
  %v265 = vld [vmem:[%s1 + $0x168] sm:$0xf]
  %v266 = vld [vmem:[%s1 + $0x16c] sm:$0xf]
  %v267 = vld [vmem:[%s1 + $0x170] sm:$0xf]
  %v268 = vld [vmem:[%s1 + $0x174] sm:$0xf]
  %v269 = vld [vmem:[%s1 + $0x178] sm:$0xf]
  %v270 = vld [vmem:[%s1 + $0x17c] sm:$0xf]
  %v271 = vld [vmem:[%s1 + $0x180] sm:$0xf]
  %v272 = vld [vmem:[%s1 + $0x184] sm:$0xf]
  %v273 = vld [vmem:[%s1 + $0x188] sm:$0xf]
  %v274 = vld [vmem:[%s1 + $0x18c] sm:$0xf]
  %v275 = vld [vmem:[%s1 + $0x190] sm:$0xf]
  %v276 = vld [vmem:[%s1 + $0x194] sm:$0xf]
  %v277 = vld [vmem:[%s1 + $0x198] sm:$0xf]
  %v278 = vld [vmem:[%s1 + $0x19c] sm:$0xf]
  %v279 = vld [vmem:[%s1 + $0x1a0] sm:$0xf]
  %v280 = vld [vmem:[%s1 + $0x1a4] sm:$0xf]
  %v281 = vld [vmem:[%s1 + $0x1a8] sm:$0xf]
  %v282 = vld [vmem:[%s1 + $0x1ac] sm:$0xf]
  %v283 = vld [vmem:[%s1 + $0x1b0] sm:$0xf]
  %v284 = vld [vmem:[%s1 + $0x1b4] sm:$0xf]
  %v285 = vld [vmem:[%s1 + $0x1b8] sm:$0xf]
  %v286 = vld [vmem:[%s1 + $0x1bc] sm:$0xf]
  %v287 = vld [vmem:[%s1 + $0x1c0] sm:$0xf]
  %v288 = vld [vmem:[%s1 + $0x1c4] sm:$0xf]
  %v289 = vld [vmem:[%s1 + $0x1c8] sm:$0xf]
  %v290 = vld [vmem:[%s1 + $0x1cc] sm:$0xf]
  %v291 = vld [vmem:[%s1 + $0x1d0] sm:$0xf]
  %v292 = vld [vmem:[%s1 + $0x1d4] sm:$0xf]
  %v293 = vld [vmem:[%s1 + $0x1d8] sm:$0xf]
  %v294 = vld [vmem:[%s1 + $0x1dc] sm:$0xf]
  %v295 = vld [vmem:[%s1 + $0x1e0] sm:$0xf]
  %v296 = vld [vmem:[%s1 + $0x1e4] sm:$0xf]
  %v297 = vld [vmem:[%s1 + $0x1e8] sm:$0xf]
  %v298 = vld [vmem:[%s1 + $0x1ec] sm:$0xf]
  %v299 = vld [vmem:[%s1 + $0x1f0] sm:$0xf]
  %v300 = vld [vmem:[%s1 + $0x1f4] sm:$0xf]
  %v301 = vld [vmem:[%s1 + $0x1f8] sm:$0xf]
  %v302 = vld [vmem:[%s1 + $0x1fc] sm:$0xf]
  %v303 = vld [vmem:[%s1 + $0x200] sm:$0xf]
  %v304 = vld [vmem:[%s1 + $0x204] sm:$0xf]
  %v305 = vld [vmem:[%s1 + $0x208] sm:$0xf]
  %v306 = vld [vmem:[%s1 + $0x20c] sm:$0xf]
  %v307 = vld [vmem:[%s1 + $0x210] sm:$0xf]
  %v308 = vld [vmem:[%s1 + $0x214] sm:$0xf]
  %v309 = vld [vmem:[%s1 + $0x218] sm:$0xf]
  %v310 = vld [vmem:[%s1 + $0x21c] sm:$0xf]
  %v311 = vld [vmem:[%s1 + $0x220] sm:$0xf]
  %v312 = vld [vmem:[%s1 + $0x224] sm:$0xf]
  %v313 = vld [vmem:[%s1 + $0x228] sm:$0xf]
  %v314 = vld [vmem:[%s1 + $0x22c] sm:$0xf]
  %v315 = vld [vmem:[%s1 + $0x230] sm:$0xf]
  %v316 = vld [vmem:[%s1 + $0x234] sm:$0xf]
  %v317 = vld [vmem:[%s1 + $0x238] sm:$0xf]
  %v318 = vld [vmem:[%s1 + $0x23c] sm:$0xf]
  %v319 = vld [vmem:[%s2] sm:$0x1]
  %v321 = vlaneseq
  %v322 = vshrl.u32 %v321, 7
  %v323 = vsub.s32 0, %v322
  %v324 = vrot.slane %v319, %v323
  %v486 = vunpack.c.l.b16 %v15
  %v487 = vunpack.c.h.b16 %v15
  %v488 = vunpack.c.l.b16 %v16
  %v489 = vunpack.c.h.b16 %v16
  %v490 = vunpack.c.l.b16 %v17
  %v491 = vunpack.c.h.b16 %v17
  %v492 = vunpack.c.l.b16 %v18
  %v493 = vunpack.c.h.b16 %v18
  %v494 = vunpack.c.l.b16 %v19
  %v495 = vunpack.c.l.b16 %v20
  %v496 = vunpack.c.h.b16 %v20
  %v497 = vunpack.c.l.b16 %v21
  %v498 = vunpack.c.h.b16 %v21
  %v499 = vunpack.c.l.b16 %v22
  %v500 = vunpack.c.h.b16 %v22
  %v501 = vunpack.c.l.b16 %v23
  %v502 = vunpack.c.h.b16 %v23
  %v503 = vunpack.c.l.b16 %v24
  %v504 = vunpack.c.l.b16 %v25
  %v505 = vunpack.c.h.b16 %v25
  %v506 = vunpack.c.l.b16 %v26
  %v507 = vunpack.c.h.b16 %v26
  %v508 = vunpack.c.l.b16 %v27
  %v509 = vunpack.c.h.b16 %v27
  %v510 = vunpack.c.l.b16 %v28
  %v511 = vunpack.c.h.b16 %v28
  %v512 = vunpack.c.l.b16 %v29
  %v513 = vunpack.c.l.b16 %v30
  %v514 = vunpack.c.h.b16 %v30
  %v515 = vunpack.c.l.b16 %v31
  %v516 = vunpack.c.h.b16 %v31
  %v517 = vunpack.c.l.b16 %v32
  %v518 = vunpack.c.h.b16 %v32
  %v519 = vunpack.c.l.b16 %v33
  %v520 = vunpack.c.h.b16 %v33
  %v521 = vunpack.c.l.b16 %v34
  %v522 = vunpack.c.l.b16 %v35
  %v523 = vunpack.c.h.b16 %v35
  %v524 = vunpack.c.l.b16 %v36
  %v525 = vunpack.c.h.b16 %v36
  %v526 = vunpack.c.l.b16 %v37
  %v527 = vunpack.c.h.b16 %v37
  %v528 = vunpack.c.l.b16 %v38
  %v529 = vunpack.c.h.b16 %v38
  %v530 = vunpack.c.l.b16 %v39
  %v531 = vunpack.c.l.b16 %v40
  %v532 = vunpack.c.h.b16 %v40
  %v533 = vunpack.c.l.b16 %v41
  %v534 = vunpack.c.h.b16 %v41
  %v535 = vunpack.c.l.b16 %v42
  %v536 = vunpack.c.h.b16 %v42
  %v537 = vunpack.c.l.b16 %v43
  %v538 = vunpack.c.h.b16 %v43
  %v539 = vunpack.c.l.b16 %v44
  %v540 = vunpack.c.l.b16 %v45
  %v541 = vunpack.c.h.b16 %v45
  %v542 = vunpack.c.l.b16 %v46
  %v543 = vunpack.c.h.b16 %v46
  %v544 = vunpack.c.l.b16 %v47
  %v545 = vunpack.c.h.b16 %v47
  %v546 = vunpack.c.l.b16 %v48
  %v547 = vunpack.c.h.b16 %v48
  %v548 = vunpack.c.l.b16 %v49
  %v549 = vunpack.c.l.b16 %v50
  %v550 = vunpack.c.h.b16 %v50
  %v551 = vunpack.c.l.b16 %v51
  %v552 = vunpack.c.h.b16 %v51
  %v553 = vunpack.c.l.b16 %v52
  %v554 = vunpack.c.h.b16 %v52
  %v555 = vunpack.c.l.b16 %v53
  %v556 = vunpack.c.h.b16 %v53
  %v557 = vunpack.c.l.b16 %v54
  %v558 = vunpack.c.l.b16 %v55
  %v559 = vunpack.c.h.b16 %v55
  %v560 = vunpack.c.l.b16 %v56
  %v561 = vunpack.c.h.b16 %v56
  %v562 = vunpack.c.l.b16 %v57
  %v563 = vunpack.c.h.b16 %v57
  %v564 = vunpack.c.l.b16 %v58
  %v565 = vunpack.c.h.b16 %v58
  %v566 = vunpack.c.l.b16 %v59
  %v567 = vunpack.c.l.b16 %v60
  %v568 = vunpack.c.h.b16 %v60
  %v569 = vunpack.c.l.b16 %v61
  %v570 = vunpack.c.h.b16 %v61
  %v571 = vunpack.c.l.b16 %v62
  %v572 = vunpack.c.h.b16 %v62
  %v573 = vunpack.c.l.b16 %v63
  %v574 = vunpack.c.h.b16 %v63
  %v575 = vunpack.c.l.b16 %v64
  %v576 = vunpack.c.l.b16 %v65
  %v577 = vunpack.c.h.b16 %v65
  %v578 = vunpack.c.l.b16 %v66
  %v579 = vunpack.c.h.b16 %v66
  %v580 = vunpack.c.l.b16 %v67
  %v581 = vunpack.c.h.b16 %v67
  %v582 = vunpack.c.l.b16 %v68
  %v583 = vunpack.c.h.b16 %v68
  %v584 = vunpack.c.l.b16 %v69
  %v585 = vunpack.c.l.b16 %v70
  %v586 = vunpack.c.h.b16 %v70
  %v587 = vunpack.c.l.b16 %v71
  %v588 = vunpack.c.h.b16 %v71
  %v589 = vunpack.c.l.b16 %v72
  %v590 = vunpack.c.h.b16 %v72
  %v591 = vunpack.c.l.b16 %v73
  %v592 = vunpack.c.h.b16 %v73
  %v593 = vunpack.c.l.b16 %v74
  %v594 = vunpack.c.l.b16 %v75
  %v595 = vunpack.c.h.b16 %v75
  %v596 = vunpack.c.l.b16 %v76
  %v597 = vunpack.c.h.b16 %v76
  %v598 = vunpack.c.l.b16 %v77
  %v599 = vunpack.c.h.b16 %v77
  %v600 = vunpack.c.l.b16 %v78
  %v601 = vunpack.c.h.b16 %v78
  %v602 = vunpack.c.l.b16 %v79
  %v603 = vunpack.c.l.b16 %v80
  %v604 = vunpack.c.h.b16 %v80
  %v605 = vunpack.c.l.b16 %v81
  %v606 = vunpack.c.h.b16 %v81
  %v607 = vunpack.c.l.b16 %v82
  %v608 = vunpack.c.h.b16 %v82
  %v609 = vunpack.c.l.b16 %v83
  %v610 = vunpack.c.h.b16 %v83
  %v611 = vunpack.c.l.b16 %v84
  %v612 = vunpack.c.l.b16 %v85
  %v613 = vunpack.c.h.b16 %v85
  %v614 = vunpack.c.l.b16 %v86
  %v615 = vunpack.c.h.b16 %v86
  %v616 = vunpack.c.l.b16 %v87
  %v617 = vunpack.c.h.b16 %v87
  %v618 = vunpack.c.l.b16 %v88
  %v619 = vunpack.c.h.b16 %v88
  %v620 = vunpack.c.l.b16 %v89
  %v621 = vunpack.c.l.b16 %v90
  %v622 = vunpack.c.h.b16 %v90
  %v623 = vunpack.c.l.b16 %v91
  %v624 = vunpack.c.h.b16 %v91
  %v625 = vunpack.c.l.b16 %v92
  %v626 = vunpack.c.h.b16 %v92
  %v627 = vunpack.c.l.b16 %v93
  %v628 = vunpack.c.h.b16 %v93
  %v629 = vunpack.c.l.b16 %v94
  %v630 = vunpack.c.l.b16 %v95
  %v631 = vunpack.c.h.b16 %v95
  %v632 = vunpack.c.l.b16 %v96
  %v633 = vunpack.c.h.b16 %v96
  %v634 = vunpack.c.l.b16 %v97
  %v635 = vunpack.c.h.b16 %v97
  %v636 = vunpack.c.l.b16 %v98
  %v637 = vunpack.c.h.b16 %v98
  %v638 = vunpack.c.l.b16 %v99
  %v639 = vunpack.c.l.b16 %v100
  %v640 = vunpack.c.h.b16 %v100
  %v641 = vunpack.c.l.b16 %v101
  %v642 = vunpack.c.h.b16 %v101
  %v643 = vunpack.c.l.b16 %v102
  %v644 = vunpack.c.h.b16 %v102
  %v645 = vunpack.c.l.b16 %v103
  %v646 = vunpack.c.h.b16 %v103
  %v647 = vunpack.c.l.b16 %v104
  %v648 = vunpack.c.l.b16 %v105
  %v649 = vunpack.c.h.b16 %v105
  %v650 = vunpack.c.l.b16 %v106
  %v651 = vunpack.c.h.b16 %v106
  %v652 = vunpack.c.l.b16 %v107
  %v653 = vunpack.c.h.b16 %v107
  %v654 = vunpack.c.l.b16 %v108
  %v655 = vunpack.c.h.b16 %v108
  %v656 = vunpack.c.l.b16 %v109
  %v657 = vunpack.c.l.b16 %v110
  %v658 = vunpack.c.h.b16 %v110
  %v659 = vunpack.c.l.b16 %v111
  %v660 = vunpack.c.h.b16 %v111
  %v661 = vunpack.c.l.b16 %v112
  %v662 = vunpack.c.h.b16 %v112
  %v663 = vunpack.c.l.b16 %v113
  %v664 = vunpack.c.h.b16 %v113
  %v665 = vunpack.c.l.b16 %v114
  %v666 = vunpack.c.l.b16 %v115
  %v667 = vunpack.c.h.b16 %v115
  %v668 = vunpack.c.l.b16 %v116
  %v669 = vunpack.c.h.b16 %v116
  %v670 = vunpack.c.l.b16 %v117
  %v671 = vunpack.c.h.b16 %v117
  %v672 = vunpack.c.l.b16 %v118
  %v673 = vunpack.c.h.b16 %v118
  %v674 = vunpack.c.l.b16 %v119
  %v675 = vunpack.c.l.b16 %v120
  %v676 = vunpack.c.h.b16 %v120
  %v677 = vunpack.c.l.b16 %v121
  %v678 = vunpack.c.h.b16 %v121
  %v679 = vunpack.c.l.b16 %v122
  %v680 = vunpack.c.h.b16 %v122
  %v681 = vunpack.c.l.b16 %v123
  %v682 = vunpack.c.h.b16 %v123
  %v683 = vunpack.c.l.b16 %v124
  %v684 = vunpack.c.l.b16 %v125
  %v685 = vunpack.c.h.b16 %v125
  %v686 = vunpack.c.l.b16 %v126
  %v687 = vunpack.c.h.b16 %v126
  %v688 = vunpack.c.l.b16 %v127
  %v689 = vunpack.c.h.b16 %v127
  %v690 = vunpack.c.l.b16 %v128
  %v691 = vunpack.c.h.b16 %v128
  %v692 = vunpack.c.l.b16 %v129
  %v693 = vunpack.c.l.b16 %v130
  %v694 = vunpack.c.h.b16 %v130
  %v695 = vunpack.c.l.b16 %v131
  %v696 = vunpack.c.h.b16 %v131
  %v697 = vunpack.c.l.b16 %v132
  %v698 = vunpack.c.h.b16 %v132
  %v699 = vunpack.c.l.b16 %v133
  %v700 = vunpack.c.h.b16 %v133
  %v701 = vunpack.c.l.b16 %v134
  %v702 = vunpack.c.l.b16 %v135
  %v703 = vunpack.c.h.b16 %v135
  %v704 = vunpack.c.l.b16 %v136
  %v705 = vunpack.c.h.b16 %v136
  %v706 = vunpack.c.l.b16 %v137
  %v707 = vunpack.c.h.b16 %v137
  %v708 = vunpack.c.l.b16 %v138
  %v709 = vunpack.c.h.b16 %v138
  %v710 = vunpack.c.l.b16 %v139
  %v711 = vunpack.c.l.b16 %v140
  %v712 = vunpack.c.h.b16 %v140
  %v713 = vunpack.c.l.b16 %v141
  %v714 = vunpack.c.h.b16 %v141
  %v715 = vunpack.c.l.b16 %v142
  %v716 = vunpack.c.h.b16 %v142
  %v717 = vunpack.c.l.b16 %v143
  %v718 = vunpack.c.h.b16 %v143
  %v719 = vunpack.c.l.b16 %v144
  %v720 = vunpack.c.l.b16 %v145
  %v721 = vunpack.c.h.b16 %v145
  %v722 = vunpack.c.l.b16 %v146
  %v723 = vunpack.c.h.b16 %v146
  %v724 = vunpack.c.l.b16 %v147
  %v725 = vunpack.c.h.b16 %v147
  %v726 = vunpack.c.l.b16 %v148
  %v727 = vunpack.c.h.b16 %v148
  %v728 = vunpack.c.l.b16 %v149
  %v729 = vunpack.c.l.b16 %v150
  %v730 = vunpack.c.h.b16 %v150
  %v731 = vunpack.c.l.b16 %v151
  %v732 = vunpack.c.h.b16 %v151
  %v733 = vunpack.c.l.b16 %v152
  %v734 = vunpack.c.h.b16 %v152
  %v735 = vunpack.c.l.b16 %v153
  %v736 = vunpack.c.h.b16 %v153
  %v737 = vunpack.c.l.b16 %v154
  %v738 = vunpack.c.l.b16 %v155
  %v739 = vunpack.c.h.b16 %v155
  %v740 = vunpack.c.l.b16 %v156
  %v741 = vunpack.c.h.b16 %v156
  %v742 = vunpack.c.l.b16 %v157
  %v743 = vunpack.c.h.b16 %v157
  %v744 = vunpack.c.l.b16 %v158
  %v745 = vunpack.c.h.b16 %v158
  %v746 = vunpack.c.l.b16 %v159
  %v747 = vunpack.c.l.b16 %v160
  %v748 = vunpack.c.h.b16 %v160
  %v749 = vunpack.c.l.b16 %v161
  %v750 = vunpack.c.h.b16 %v161
  %v751 = vunpack.c.l.b16 %v162
  %v752 = vunpack.c.h.b16 %v162
  %v753 = vunpack.c.l.b16 %v163
  %v754 = vunpack.c.h.b16 %v163
  %v755 = vunpack.c.l.b16 %v164
  %v756 = vunpack.c.l.b16 %v165
  %v757 = vunpack.c.h.b16 %v165
  %v758 = vunpack.c.l.b16 %v166
  %v759 = vunpack.c.h.b16 %v166
  %v760 = vunpack.c.l.b16 %v167
  %v761 = vunpack.c.h.b16 %v167
  %v762 = vunpack.c.l.b16 %v168
  %v763 = vunpack.c.h.b16 %v168
  %v764 = vunpack.c.l.b16 %v169
  %v765 = vunpack.c.l.b16 %v170
  %v766 = vunpack.c.h.b16 %v170
  %v767 = vunpack.c.l.b16 %v171
  %v768 = vunpack.c.h.b16 %v171
  %v769 = vunpack.c.l.b16 %v172
  %v770 = vunpack.c.h.b16 %v172
  %v771 = vunpack.c.l.b16 %v173
  %v772 = vunpack.c.h.b16 %v173
  %v773 = vunpack.c.l.b16 %v174
  %v774 = vpack.c.b16 %v495, %v486
  %v775 = vpack.c.b16 %v496, %v487
  %v776 = vpack.c.b16 %v497, %v488
  %v777 = vpack.c.b16 %v498, %v489
  %v778 = vpack.c.b16 %v499, %v490
  %v779 = vpack.c.b16 %v500, %v491
  %v780 = vpack.c.b16 %v501, %v492
  %v781 = vpack.c.b16 %v502, %v493
  %v782 = vpack.c.b16 %v503, %v494
  %v783 = vpack.c.b16 %v513, %v504
  %v784 = vpack.c.b16 %v514, %v505
  %v785 = vpack.c.b16 %v515, %v506
  %v786 = vpack.c.b16 %v516, %v507
  %v787 = vpack.c.b16 %v517, %v508
  %v788 = vpack.c.b16 %v518, %v509
  %v789 = vpack.c.b16 %v519, %v510
  %v790 = vpack.c.b16 %v520, %v511
  %v791 = vpack.c.b16 %v521, %v512
  %v792 = vpack.c.b16 %v531, %v522
  %v793 = vpack.c.b16 %v532, %v523
  %v794 = vpack.c.b16 %v533, %v524
  %v795 = vpack.c.b16 %v534, %v525
  %v796 = vpack.c.b16 %v535, %v526
  %v797 = vpack.c.b16 %v536, %v527
  %v798 = vpack.c.b16 %v537, %v528
  %v799 = vpack.c.b16 %v538, %v529
  %v800 = vpack.c.b16 %v539, %v530
  %v801 = vpack.c.b16 %v549, %v540
  %v802 = vpack.c.b16 %v550, %v541
  %v803 = vpack.c.b16 %v551, %v542
  %v804 = vpack.c.b16 %v552, %v543
  %v805 = vpack.c.b16 %v553, %v544
  %v806 = vpack.c.b16 %v554, %v545
  %v807 = vpack.c.b16 %v555, %v546
  %v808 = vpack.c.b16 %v556, %v547
  %v809 = vpack.c.b16 %v557, %v548
  %v810 = vpack.c.b16 %v567, %v558
  %v811 = vpack.c.b16 %v568, %v559
  %v812 = vpack.c.b16 %v569, %v560
  %v813 = vpack.c.b16 %v570, %v561
  %v814 = vpack.c.b16 %v571, %v562
  %v815 = vpack.c.b16 %v572, %v563
  %v816 = vpack.c.b16 %v573, %v564
  %v817 = vpack.c.b16 %v574, %v565
  %v818 = vpack.c.b16 %v575, %v566
  %v819 = vpack.c.b16 %v585, %v576
  %v820 = vpack.c.b16 %v586, %v577
  %v821 = vpack.c.b16 %v587, %v578
  %v822 = vpack.c.b16 %v588, %v579
  %v823 = vpack.c.b16 %v589, %v580
  %v824 = vpack.c.b16 %v590, %v581
  %v825 = vpack.c.b16 %v591, %v582
  %v826 = vpack.c.b16 %v592, %v583
  %v827 = vpack.c.b16 %v593, %v584
  %v828 = vpack.c.b16 %v603, %v594
  %v829 = vpack.c.b16 %v604, %v595
  %v830 = vpack.c.b16 %v605, %v596
  %v831 = vpack.c.b16 %v606, %v597
  %v832 = vpack.c.b16 %v607, %v598
  %v833 = vpack.c.b16 %v608, %v599
  %v834 = vpack.c.b16 %v609, %v600
  %v835 = vpack.c.b16 %v610, %v601
  %v836 = vpack.c.b16 %v611, %v602
  %v837 = vpack.c.b16 %v621, %v612
  %v838 = vpack.c.b16 %v622, %v613
  %v839 = vpack.c.b16 %v623, %v614
  %v840 = vpack.c.b16 %v624, %v615
  %v841 = vpack.c.b16 %v625, %v616
  %v842 = vpack.c.b16 %v626, %v617
  %v843 = vpack.c.b16 %v627, %v618
  %v844 = vpack.c.b16 %v628, %v619
  %v845 = vpack.c.b16 %v629, %v620
  %v846 = vpack.c.b16 %v639, %v630
  %v847 = vpack.c.b16 %v640, %v631
  %v848 = vpack.c.b16 %v641, %v632
  %v849 = vpack.c.b16 %v642, %v633
  %v850 = vpack.c.b16 %v643, %v634
  %v851 = vpack.c.b16 %v644, %v635
  %v852 = vpack.c.b16 %v645, %v636
  %v853 = vpack.c.b16 %v646, %v637
  %v854 = vpack.c.b16 %v647, %v638
  %v855 = vpack.c.b16 %v657, %v648
  %v856 = vpack.c.b16 %v658, %v649
  %v857 = vpack.c.b16 %v659, %v650
  %v858 = vpack.c.b16 %v660, %v651
  %v859 = vpack.c.b16 %v661, %v652
  %v860 = vpack.c.b16 %v662, %v653
  %v861 = vpack.c.b16 %v663, %v654
  %v862 = vpack.c.b16 %v664, %v655
  %v863 = vpack.c.b16 %v665, %v656
  %v864 = vpack.c.b16 %v675, %v666
  %v865 = vpack.c.b16 %v676, %v667
  %v866 = vpack.c.b16 %v677, %v668
  %v867 = vpack.c.b16 %v678, %v669
  %v868 = vpack.c.b16 %v679, %v670
  %v869 = vpack.c.b16 %v680, %v671
  %v870 = vpack.c.b16 %v681, %v672
  %v871 = vpack.c.b16 %v682, %v673
  %v872 = vpack.c.b16 %v683, %v674
  %v873 = vpack.c.b16 %v693, %v684
  %v874 = vpack.c.b16 %v694, %v685
  %v875 = vpack.c.b16 %v695, %v686
  %v876 = vpack.c.b16 %v696, %v687
  %v877 = vpack.c.b16 %v697, %v688
  %v878 = vpack.c.b16 %v698, %v689
  %v879 = vpack.c.b16 %v699, %v690
  %v880 = vpack.c.b16 %v700, %v691
  %v881 = vpack.c.b16 %v701, %v692
  %v882 = vpack.c.b16 %v711, %v702
  %v883 = vpack.c.b16 %v712, %v703
  %v884 = vpack.c.b16 %v713, %v704
  %v885 = vpack.c.b16 %v714, %v705
  %v886 = vpack.c.b16 %v715, %v706
  %v887 = vpack.c.b16 %v716, %v707
  %v888 = vpack.c.b16 %v717, %v708
  %v889 = vpack.c.b16 %v718, %v709
  %v890 = vpack.c.b16 %v719, %v710
  %v891 = vpack.c.b16 %v729, %v720
  %v892 = vpack.c.b16 %v730, %v721
  %v893 = vpack.c.b16 %v731, %v722
  %v894 = vpack.c.b16 %v732, %v723
  %v895 = vpack.c.b16 %v733, %v724
  %v896 = vpack.c.b16 %v734, %v725
  %v897 = vpack.c.b16 %v735, %v726
  %v898 = vpack.c.b16 %v736, %v727
  %v899 = vpack.c.b16 %v737, %v728
  %v900 = vpack.c.b16 %v747, %v738
  %v901 = vpack.c.b16 %v748, %v739
  %v902 = vpack.c.b16 %v749, %v740
  %v903 = vpack.c.b16 %v750, %v741
  %v904 = vpack.c.b16 %v751, %v742
  %v905 = vpack.c.b16 %v752, %v743
  %v906 = vpack.c.b16 %v753, %v744
  %v907 = vpack.c.b16 %v754, %v745
  %v908 = vpack.c.b16 %v755, %v746
  %v909 = vpack.c.b16 %v765, %v756
  %v910 = vpack.c.b16 %v766, %v757
  %v911 = vpack.c.b16 %v767, %v758
  %v912 = vpack.c.b16 %v768, %v759
  %v913 = vpack.c.b16 %v769, %v760
  %v914 = vpack.c.b16 %v770, %v761
  %v915 = vpack.c.b16 %v771, %v762
  %v916 = vpack.c.b16 %v772, %v763
  %v917 = vpack.c.b16 %v773, %v764
  %v1206 = vunpack.c.l.b16 %v175
  %v1207 = vunpack.c.l.b16 %v176
  %v1208 = vunpack.c.l.b16 %v177
  %v1209 = vunpack.c.l.b16 %v178
  %v1210 = vunpack.c.l.b16 %v179
  %v1211 = vunpack.c.l.b16 %v180
  %v1212 = vunpack.c.l.b16 %v181
  %v1213 = vunpack.c.l.b16 %v182
  %v1214 = vunpack.c.l.b16 %v183
  %v1215 = vunpack.c.l.b16 %v184
  %v1216 = vunpack.c.l.b16 %v185
  %v1217 = vunpack.c.l.b16 %v186
  %v1218 = vunpack.c.l.b16 %v187
  %v1219 = vunpack.c.l.b16 %v188
  %v1220 = vunpack.c.l.b16 %v189
  %v1221 = vunpack.c.l.b16 %v190
  %v1222 = vunpack.c.l.b16 %v191
  %v1223 = vunpack.c.l.b16 %v192
  %v1224 = vunpack.c.l.b16 %v193
  %v1225 = vunpack.c.l.b16 %v194
  %v1226 = vunpack.c.l.b16 %v195
  %v1227 = vunpack.c.l.b16 %v196
  %v1228 = vunpack.c.l.b16 %v197
  %v1229 = vunpack.c.l.b16 %v198
  %v1230 = vunpack.c.l.b16 %v199
  %v1231 = vunpack.c.l.b16 %v200
  %v1232 = vunpack.c.l.b16 %v201
  %v1233 = vunpack.c.l.b16 %v202
  %v1234 = vunpack.c.l.b16 %v203
  %v1235 = vunpack.c.l.b16 %v204
  %v1236 = vunpack.c.l.b16 %v205
  %v1237 = vunpack.c.l.b16 %v206
  %v1238 = vunpack.c.l.b16 %v207
  %v1239 = vunpack.c.l.b16 %v208
  %v1240 = vunpack.c.l.b16 %v209
  %v1241 = vunpack.c.l.b16 %v210
  %v1242 = vunpack.c.l.b16 %v211
  %v1243 = vunpack.c.l.b16 %v212
  %v1244 = vunpack.c.l.b16 %v213
  %v1245 = vunpack.c.l.b16 %v214
  %v1246 = vunpack.c.l.b16 %v215
  %v1247 = vunpack.c.l.b16 %v216
  %v1248 = vunpack.c.l.b16 %v217
  %v1249 = vunpack.c.l.b16 %v218
  %v1250 = vunpack.c.l.b16 %v219
  %v1251 = vunpack.c.l.b16 %v220
  %v1252 = vunpack.c.l.b16 %v221
  %v1253 = vunpack.c.l.b16 %v222
  %v1254 = vunpack.c.l.b16 %v223
  %v1255 = vunpack.c.l.b16 %v224
  %v1256 = vunpack.c.l.b16 %v225
  %v1257 = vunpack.c.l.b16 %v226
  %v1258 = vunpack.c.l.b16 %v227
  %v1259 = vunpack.c.l.b16 %v228
  %v1260 = vunpack.c.l.b16 %v229
  %v1261 = vunpack.c.l.b16 %v230
  %v1262 = vunpack.c.l.b16 %v231
  %v1263 = vunpack.c.l.b16 %v232
  %v1264 = vunpack.c.l.b16 %v233
  %v1265 = vunpack.c.l.b16 %v234
  %v1266 = vunpack.c.l.b16 %v235
  %v1267 = vunpack.c.l.b16 %v236
  %v1268 = vunpack.c.l.b16 %v237
  %v1269 = vunpack.c.l.b16 %v238
  %v1270 = vunpack.c.l.b16 %v239
  %v1271 = vunpack.c.l.b16 %v240
  %v1272 = vunpack.c.l.b16 %v241
  %v1273 = vunpack.c.l.b16 %v242
  %v1274 = vunpack.c.l.b16 %v243
  %v1275 = vunpack.c.l.b16 %v244
  %v1276 = vunpack.c.l.b16 %v245
  %v1277 = vunpack.c.l.b16 %v246
  %v1278 = vunpack.c.l.b16 %v247
  %v1279 = vunpack.c.l.b16 %v248
  %v1280 = vunpack.c.l.b16 %v249
  %v1281 = vunpack.c.l.b16 %v250
  %v1282 = vunpack.c.l.b16 %v251
  %v1283 = vunpack.c.l.b16 %v252
  %v1284 = vunpack.c.l.b16 %v253
  %v1285 = vunpack.c.l.b16 %v254
  %v1286 = vunpack.c.l.b16 %v255
  %v1287 = vunpack.c.l.b16 %v256
  %v1288 = vunpack.c.l.b16 %v257
  %v1289 = vunpack.c.l.b16 %v258
  %v1290 = vunpack.c.l.b16 %v259
  %v1291 = vunpack.c.l.b16 %v260
  %v1292 = vunpack.c.l.b16 %v261
  %v1293 = vunpack.c.l.b16 %v262
  %v1294 = vunpack.c.l.b16 %v263
  %v1295 = vunpack.c.l.b16 %v264
  %v1296 = vunpack.c.l.b16 %v265
  %v1297 = vunpack.c.l.b16 %v266
  %v1298 = vunpack.c.l.b16 %v267
  %v1299 = vunpack.c.l.b16 %v268
  %v1300 = vunpack.c.l.b16 %v269
  %v1301 = vunpack.c.l.b16 %v270
  %v1302 = vunpack.c.l.b16 %v271
  %v1303 = vunpack.c.l.b16 %v272
  %v1304 = vunpack.c.l.b16 %v273
  %v1305 = vunpack.c.l.b16 %v274
  %v1306 = vunpack.c.l.b16 %v275
  %v1307 = vunpack.c.l.b16 %v276
  %v1308 = vunpack.c.l.b16 %v277
  %v1309 = vunpack.c.l.b16 %v278
  %v1310 = vunpack.c.l.b16 %v279
  %v1311 = vunpack.c.l.b16 %v280
  %v1312 = vunpack.c.l.b16 %v281
  %v1313 = vunpack.c.l.b16 %v282
  %v1314 = vunpack.c.l.b16 %v283
  %v1315 = vunpack.c.l.b16 %v284
  %v1316 = vunpack.c.l.b16 %v285
  %v1317 = vunpack.c.l.b16 %v286
  %v1318 = vunpack.c.l.b16 %v287
  %v1319 = vunpack.c.l.b16 %v288
  %v1320 = vunpack.c.l.b16 %v289
  %v1321 = vunpack.c.l.b16 %v290
  %v1322 = vunpack.c.l.b16 %v291
  %v1323 = vunpack.c.l.b16 %v292
  %v1324 = vunpack.c.l.b16 %v293
  %v1325 = vunpack.c.l.b16 %v294
  %v1326 = vunpack.c.l.b16 %v295
  %v1327 = vunpack.c.l.b16 %v296
  %v1328 = vunpack.c.l.b16 %v297
  %v1329 = vunpack.c.l.b16 %v298
  %v1330 = vunpack.c.l.b16 %v299
  %v1331 = vunpack.c.l.b16 %v300
  %v1332 = vunpack.c.l.b16 %v301
  %v1333 = vunpack.c.l.b16 %v302
  %v1334 = vunpack.c.l.b16 %v303
  %v1335 = vunpack.c.l.b16 %v304
  %v1336 = vunpack.c.l.b16 %v305
  %v1337 = vunpack.c.l.b16 %v306
  %v1338 = vunpack.c.l.b16 %v307
  %v1339 = vunpack.c.l.b16 %v308
  %v1340 = vunpack.c.l.b16 %v309
  %v1341 = vunpack.c.l.b16 %v310
  %v1342 = vunpack.c.l.b16 %v311
  %v1343 = vunpack.c.l.b16 %v312
  %v1344 = vunpack.c.l.b16 %v313
  %v1345 = vunpack.c.l.b16 %v314
  %v1346 = vunpack.c.l.b16 %v315
  %v1347 = vunpack.c.l.b16 %v316
  %v1348 = vunpack.c.l.b16 %v317
  %v1349 = vunpack.c.l.b16 %v318
  %v1350 = vpack.c.b16 %v1207, %v1206
  %v1351 = vpack.c.b16 %v1209, %v1208
  %v1352 = vpack.c.b16 %v1211, %v1210
  %v1353 = vpack.c.b16 %v1213, %v1212
  %v1354 = vpack.c.b16 %v1215, %v1214
  %v1355 = vpack.c.b16 %v1217, %v1216
  %v1356 = vpack.c.b16 %v1219, %v1218
  %v1357 = vpack.c.b16 %v1221, %v1220
  %v1358 = vpack.c.b16 %v1223, %v1222
  %v1359 = vpack.c.b16 %v1225, %v1224
  %v1360 = vpack.c.b16 %v1227, %v1226
  %v1361 = vpack.c.b16 %v1229, %v1228
  %v1362 = vpack.c.b16 %v1231, %v1230
  %v1363 = vpack.c.b16 %v1233, %v1232
  %v1364 = vpack.c.b16 %v1235, %v1234
  %v1365 = vpack.c.b16 %v1237, %v1236
  %v1366 = vpack.c.b16 %v1239, %v1238
  %v1367 = vpack.c.b16 %v1241, %v1240
  %v1368 = vpack.c.b16 %v1243, %v1242
  %v1369 = vpack.c.b16 %v1245, %v1244
  %v1370 = vpack.c.b16 %v1247, %v1246
  %v1371 = vpack.c.b16 %v1249, %v1248
  %v1372 = vpack.c.b16 %v1251, %v1250
  %v1373 = vpack.c.b16 %v1253, %v1252
  %v1374 = vpack.c.b16 %v1255, %v1254
  %v1375 = vpack.c.b16 %v1257, %v1256
  %v1376 = vpack.c.b16 %v1259, %v1258
  %v1377 = vpack.c.b16 %v1261, %v1260
  %v1378 = vpack.c.b16 %v1263, %v1262
  %v1379 = vpack.c.b16 %v1265, %v1264
  %v1380 = vpack.c.b16 %v1267, %v1266
  %v1381 = vpack.c.b16 %v1269, %v1268
  %v1382 = vpack.c.b16 %v1271, %v1270
  %v1383 = vpack.c.b16 %v1273, %v1272
  %v1384 = vpack.c.b16 %v1275, %v1274
  %v1385 = vpack.c.b16 %v1277, %v1276
  %v1386 = vpack.c.b16 %v1279, %v1278
  %v1387 = vpack.c.b16 %v1281, %v1280
  %v1388 = vpack.c.b16 %v1283, %v1282
  %v1389 = vpack.c.b16 %v1285, %v1284
  %v1390 = vpack.c.b16 %v1287, %v1286
  %v1391 = vpack.c.b16 %v1289, %v1288
  %v1392 = vpack.c.b16 %v1291, %v1290
  %v1393 = vpack.c.b16 %v1293, %v1292
  %v1394 = vpack.c.b16 %v1295, %v1294
  %v1395 = vpack.c.b16 %v1297, %v1296
  %v1396 = vpack.c.b16 %v1299, %v1298
  %v1397 = vpack.c.b16 %v1301, %v1300
  %v1398 = vpack.c.b16 %v1303, %v1302
  %v1399 = vpack.c.b16 %v1305, %v1304
  %v1400 = vpack.c.b16 %v1307, %v1306
  %v1401 = vpack.c.b16 %v1309, %v1308
  %v1402 = vpack.c.b16 %v1311, %v1310
  %v1403 = vpack.c.b16 %v1313, %v1312
  %v1404 = vpack.c.b16 %v1315, %v1314
  %v1405 = vpack.c.b16 %v1317, %v1316
  %v1406 = vpack.c.b16 %v1319, %v1318
  %v1407 = vpack.c.b16 %v1321, %v1320
  %v1408 = vpack.c.b16 %v1323, %v1322
  %v1409 = vpack.c.b16 %v1325, %v1324
  %v1410 = vpack.c.b16 %v1327, %v1326
  %v1411 = vpack.c.b16 %v1329, %v1328
  %v1412 = vpack.c.b16 %v1331, %v1330
  %v1413 = vpack.c.b16 %v1333, %v1332
  %v1414 = vpack.c.b16 %v1335, %v1334
  %v1415 = vpack.c.b16 %v1337, %v1336
  %v1416 = vpack.c.b16 %v1339, %v1338
  %v1417 = vpack.c.b16 %v1341, %v1340
  %v1418 = vpack.c.b16 %v1343, %v1342
  %v1419 = vpack.c.b16 %v1345, %v1344
  %v1420 = vpack.c.b16 %v1347, %v1346
  %v1421 = vpack.c.b16 %v1349, %v1348
  %1494 = vmatprep.subr.bf16.mxu0 0
  %1495 = vmatpush1.bf16.msra.mxu0 %v1357
  %1496 = vmatprep.subr.bf16.mxu0 0
  %1497 = vmatpush1.bf16.msra.mxu0 %v1356
  %1498 = vmatprep.subr.bf16.mxu0 0
  %1499 = vmatpush1.bf16.msra.mxu0 %v1355
  %1500 = vmatprep.subr.bf16.mxu0 0
  %1501 = vmatpush1.bf16.msra.mxu0 %v1354
  %1502 = vmatprep.subr.bf16.mxu0 0
  %1503 = vmatpush1.bf16.msra.mxu0 %v1353
  %1504 = vmatprep.subr.bf16.mxu0 0
  %1505 = vmatpush1.bf16.msra.mxu0 %v1352
  %1506 = vmatprep.subr.bf16.mxu0 0
  %1507 = vmatpush1.bf16.msra.mxu0 %v1351
  %1508 = vmatprep.subr.bf16.mxu0 0
  %1509 = vmatpush1.bf16.msra.mxu0 %v1350
  %1510 = vmatprep.subr.bf16.mxu0 0
  %1511 = vmatpush2.bf16.msra.mxu0 %v1365
  %1512 = vmatprep.subr.bf16.mxu0 0
  %1513 = vmatpush2.bf16.msra.mxu0 %v1364
  %1514 = vmatprep.subr.bf16.mxu0 0
  %1515 = vmatpush2.bf16.msra.mxu0 %v1363
  %1516 = vmatprep.subr.bf16.mxu0 0
  %1517 = vmatpush2.bf16.msra.mxu0 %v1362
  %1518 = vmatprep.subr.bf16.mxu0 0
  %1519 = vmatpush2.bf16.msra.mxu0 %v1361
  %1520 = vmatprep.subr.bf16.mxu0 0
  %1521 = vmatpush2.bf16.msra.mxu0 %v1360
  %1522 = vmatprep.subr.bf16.mxu0 0
  %1523 = vmatpush2.bf16.msra.mxu0 %v1359
  %1524 = vmatprep.subr.bf16.mxu0 0
  %1525 = vmatpush2.bf16.msra.mxu0 %v1358
  %1526 = vmatprep.mubr.bf16.mxu0 %v775
  %1527 = vmatmul.mubr.bf16.gmra.mxu0 %v774
  %v1528 = vpop.f32.mrf.mxu0
  %v1529 = vadd.f32 %v324, %v1528
  %v1530 = vpop.f32.mrf.mxu0
  %v1531 = vpop.f32.mrf.mxu0
  %v1532 = vadd.f32 %v324, %v1531
  %v1533 = vpop.f32.mrf.mxu0
  %1534 = vmatprep.mubr.bf16.mxu0 %v784
  %1535 = vmatmul.mubr.bf16.gmra.mxu0 %v783
  %v1536 = vpop.f32.mrf.mxu0
  %v1537 = vadd.f32 %v324, %v1536
  %v1538 = vpop.f32.mrf.mxu0
  %v1539 = vpop.f32.mrf.mxu0
  %v1540 = vadd.f32 %v324, %v1539
  %v1541 = vpop.f32.mrf.mxu0
  %1542 = vmatprep.mubr.bf16.mxu0 %v793
  %1543 = vmatmul.mubr.bf16.gmra.mxu0 %v792
  %v1544 = vpop.f32.mrf.mxu0
  %v1545 = vadd.f32 %v324, %v1544
  %v1546 = vpop.f32.mrf.mxu0
  %v1547 = vpop.f32.mrf.mxu0
  %v1548 = vadd.f32 %v324, %v1547
  %v1549 = vpop.f32.mrf.mxu0
  %1550 = vmatprep.mubr.bf16.mxu0 %v802
  %1551 = vmatmul.mubr.bf16.gmra.mxu0 %v801
  %v1552 = vpop.f32.mrf.mxu0
  %v1553 = vadd.f32 %v324, %v1552
  %v1554 = vpop.f32.mrf.mxu0
  %v1555 = vpop.f32.mrf.mxu0
  %v1556 = vadd.f32 %v324, %v1555
  %v1557 = vpop.f32.mrf.mxu0
  %1558 = vmatprep.mubr.bf16.mxu0 %v811
  %1559 = vmatmul.mubr.bf16.gmra.mxu0 %v810
  %v1560 = vpop.f32.mrf.mxu0
  %v1561 = vadd.f32 %v324, %v1560
  %v1562 = vpop.f32.mrf.mxu0
  %v1563 = vpop.f32.mrf.mxu0
  %v1564 = vadd.f32 %v324, %v1563
  %v1565 = vpop.f32.mrf.mxu0
  %1566 = vmatprep.mubr.bf16.mxu0 %v820
  %1567 = vmatmul.mubr.bf16.gmra.mxu0 %v819
  %v1568 = vpop.f32.mrf.mxu0
  %v1569 = vadd.f32 %v324, %v1568
  %v1570 = vpop.f32.mrf.mxu0
  %v1571 = vpop.f32.mrf.mxu0
  %v1572 = vadd.f32 %v324, %v1571
  %v1573 = vpop.f32.mrf.mxu0
  %1574 = vmatprep.mubr.bf16.mxu0 %v829
  %1575 = vmatmul.mubr.bf16.gmra.mxu0 %v828
  %v1576 = vpop.f32.mrf.mxu0
  %v1577 = vadd.f32 %v324, %v1576
  %v1578 = vpop.f32.mrf.mxu0
  %v1579 = vpop.f32.mrf.mxu0
  %v1580 = vadd.f32 %v324, %v1579
  %v1581 = vpop.f32.mrf.mxu0
  %1582 = vmatprep.mubr.bf16.mxu0 %v838
  %1583 = vmatmul.mubr.bf16.gmra.mxu0 %v837
  %v1584 = vpop.f32.mrf.mxu0
  %v1585 = vadd.f32 %v324, %v1584
  %v1586 = vpop.f32.mrf.mxu0
  %v1587 = vpop.f32.mrf.mxu0
  %v1588 = vadd.f32 %v324, %v1587
  %v1589 = vpop.f32.mrf.mxu0
  %1590 = vmatprep.mubr.bf16.mxu0 %v847
  %1591 = vmatmul.mubr.bf16.gmra.mxu0 %v846
  %v1592 = vpop.f32.mrf.mxu0
  %v1593 = vadd.f32 %v324, %v1592
  %v1594 = vpop.f32.mrf.mxu0
  %v1595 = vpop.f32.mrf.mxu0
  %v1596 = vadd.f32 %v324, %v1595
  %v1597 = vpop.f32.mrf.mxu0
  %1598 = vmatprep.mubr.bf16.mxu0 %v856
  %1599 = vmatmul.mubr.bf16.gmra.mxu0 %v855
  %v1600 = vpop.f32.mrf.mxu0
  %v1601 = vadd.f32 %v324, %v1600
  %v1602 = vpop.f32.mrf.mxu0
  %v1603 = vpop.f32.mrf.mxu0
  %v1604 = vadd.f32 %v324, %v1603
  %v1605 = vpop.f32.mrf.mxu0
  %1606 = vmatprep.mubr.bf16.mxu0 %v865
  %1607 = vmatmul.mubr.bf16.gmra.mxu0 %v864
  %v1608 = vpop.f32.mrf.mxu0
  %v1609 = vadd.f32 %v324, %v1608
  %v1610 = vpop.f32.mrf.mxu0
  %v1611 = vpop.f32.mrf.mxu0
  %v1612 = vadd.f32 %v324, %v1611
  %v1613 = vpop.f32.mrf.mxu0
  %1614 = vmatprep.mubr.bf16.mxu0 %v874
  %1615 = vmatmul.mubr.bf16.gmra.mxu0 %v873
  %v1616 = vpop.f32.mrf.mxu0
  %v1617 = vadd.f32 %v324, %v1616
  %v1618 = vpop.f32.mrf.mxu0
  %v1619 = vpop.f32.mrf.mxu0
  %v1620 = vadd.f32 %v324, %v1619
  %v1621 = vpop.f32.mrf.mxu0
  %1622 = vmatprep.mubr.bf16.mxu0 %v883
  %1623 = vmatmul.mubr.bf16.gmra.mxu0 %v882
  %v1624 = vpop.f32.mrf.mxu0
  %v1625 = vadd.f32 %v324, %v1624
  %v1626 = vpop.f32.mrf.mxu0
  %v1627 = vpop.f32.mrf.mxu0
  %v1628 = vadd.f32 %v324, %v1627
  %v1629 = vpop.f32.mrf.mxu0
  %1630 = vmatprep.mubr.bf16.mxu0 %v892
  %1631 = vmatmul.mubr.bf16.gmra.mxu0 %v891
  %v1632 = vpop.f32.mrf.mxu0
  %v1633 = vadd.f32 %v324, %v1632
  %v1634 = vpop.f32.mrf.mxu0
  %v1635 = vpop.f32.mrf.mxu0
  %v1636 = vadd.f32 %v324, %v1635
  %v1637 = vpop.f32.mrf.mxu0
  %1638 = vmatprep.mubr.bf16.mxu0 %v901
  %1639 = vmatmul.mubr.bf16.gmra.mxu0 %v900
  %v1640 = vpop.f32.mrf.mxu0
  %v1641 = vadd.f32 %v324, %v1640
  %v1642 = vpop.f32.mrf.mxu0
  %v1643 = vpop.f32.mrf.mxu0
  %v1644 = vadd.f32 %v324, %v1643
  %v1645 = vpop.f32.mrf.mxu0
  %1646 = vmatprep.mubr.bf16.mxu0 %v910
  %1647 = vmatmul.mubr.bf16.gmra.mxu0 %v909
  %v1648 = vpop.f32.mrf.mxu0
  %v1649 = vadd.f32 %v324, %v1648
  %v1650 = vpop.f32.mrf.mxu0
  %v1651 = vpop.f32.mrf.mxu0
  %v1652 = vadd.f32 %v324, %v1651
  %v1653 = vpop.f32.mrf.mxu0
  %1654 = vdwg.mxu0
  %1655 = vmatprep.subr.bf16.mxu0 0
  %1656 = vmatpush1.bf16.msra.mxu0 %v1373
  %1657 = vmatprep.subr.bf16.mxu0 0
  %1658 = vmatpush1.bf16.msra.mxu0 %v1372
  %1659 = vmatprep.subr.bf16.mxu0 0
  %1660 = vmatpush1.bf16.msra.mxu0 %v1371
  %1661 = vmatprep.subr.bf16.mxu0 0
  %1662 = vmatpush1.bf16.msra.mxu0 %v1370
  %1663 = vmatprep.subr.bf16.mxu0 0
  %1664 = vmatpush1.bf16.msra.mxu0 %v1369
  %1665 = vmatprep.subr.bf16.mxu0 0
  %1666 = vmatpush1.bf16.msra.mxu0 %v1368
  %1667 = vmatprep.subr.bf16.mxu0 0
  %1668 = vmatpush1.bf16.msra.mxu0 %v1367
  %1669 = vmatprep.subr.bf16.mxu0 0
  %1670 = vmatpush1.bf16.msra.mxu0 %v1366
  %1671 = vmatprep.subr.bf16.mxu0 0
  %1672 = vmatpush2.bf16.msra.mxu0 %v1381
  %1673 = vmatprep.subr.bf16.mxu0 0
  %1674 = vmatpush2.bf16.msra.mxu0 %v1380
  %1675 = vmatprep.subr.bf16.mxu0 0
  %1676 = vmatpush2.bf16.msra.mxu0 %v1379
  %1677 = vmatprep.subr.bf16.mxu0 0
  %1678 = vmatpush2.bf16.msra.mxu0 %v1378
  %1679 = vmatprep.subr.bf16.mxu0 0
  %1680 = vmatpush2.bf16.msra.mxu0 %v1377
  %1681 = vmatprep.subr.bf16.mxu0 0
  %1682 = vmatpush2.bf16.msra.mxu0 %v1376
  %1683 = vmatprep.subr.bf16.mxu0 0
  %1684 = vmatpush2.bf16.msra.mxu0 %v1375
  %1685 = vmatprep.subr.bf16.mxu0 0
  %1686 = vmatpush2.bf16.msra.mxu0 %v1374
  %1687 = vmatprep.mubr.bf16.mxu0 %v777
  %1688 = vmatmul.mubr.bf16.gmra.mxu0 %v776
  %v1689 = vpop.f32.mrf.mxu0
  %v1690 = vadd.f32 %v1529, %v1689
  %v1691 = vpop.f32.mrf.mxu0
  %v1692 = vpop.f32.mrf.mxu0
  %v1693 = vadd.f32 %v1532, %v1692
  %v1694 = vpop.f32.mrf.mxu0
  %1695 = vmatprep.mubr.bf16.mxu0 %v786
  %1696 = vmatmul.mubr.bf16.gmra.mxu0 %v785
  %v1697 = vpop.f32.mrf.mxu0
  %v1698 = vadd.f32 %v1537, %v1697
  %v1699 = vpop.f32.mrf.mxu0
  %v1700 = vpop.f32.mrf.mxu0
  %v1701 = vadd.f32 %v1540, %v1700
  %v1702 = vpop.f32.mrf.mxu0
  %1703 = vmatprep.mubr.bf16.mxu0 %v795
  %1704 = vmatmul.mubr.bf16.gmra.mxu0 %v794
  %v1705 = vpop.f32.mrf.mxu0
  %v1706 = vadd.f32 %v1545, %v1705
  %v1707 = vpop.f32.mrf.mxu0
  %v1708 = vpop.f32.mrf.mxu0
  %v1709 = vadd.f32 %v1548, %v1708
  %v1710 = vpop.f32.mrf.mxu0
  %1711 = vmatprep.mubr.bf16.mxu0 %v804
  %1712 = vmatmul.mubr.bf16.gmra.mxu0 %v803
  %v1713 = vpop.f32.mrf.mxu0
  %v1714 = vadd.f32 %v1553, %v1713
  %v1715 = vpop.f32.mrf.mxu0
  %v1716 = vpop.f32.mrf.mxu0
  %v1717 = vadd.f32 %v1556, %v1716
  %v1718 = vpop.f32.mrf.mxu0
  %1719 = vmatprep.mubr.bf16.mxu0 %v813
  %1720 = vmatmul.mubr.bf16.gmra.mxu0 %v812
  %v1721 = vpop.f32.mrf.mxu0
  %v1722 = vadd.f32 %v1561, %v1721
  %v1723 = vpop.f32.mrf.mxu0
  %v1724 = vpop.f32.mrf.mxu0
  %v1725 = vadd.f32 %v1564, %v1724
  %v1726 = vpop.f32.mrf.mxu0
  %1727 = vmatprep.mubr.bf16.mxu0 %v822
  %1728 = vmatmul.mubr.bf16.gmra.mxu0 %v821
  %v1729 = vpop.f32.mrf.mxu0
  %v1730 = vadd.f32 %v1569, %v1729
  %v1731 = vpop.f32.mrf.mxu0
  %v1732 = vpop.f32.mrf.mxu0
  %v1733 = vadd.f32 %v1572, %v1732
  %v1734 = vpop.f32.mrf.mxu0
  %1735 = vmatprep.mubr.bf16.mxu0 %v831
  %1736 = vmatmul.mubr.bf16.gmra.mxu0 %v830
  %v1737 = vpop.f32.mrf.mxu0
  %v1738 = vadd.f32 %v1577, %v1737
  %v1739 = vpop.f32.mrf.mxu0
  %v1740 = vpop.f32.mrf.mxu0
  %v1741 = vadd.f32 %v1580, %v1740
  %v1742 = vpop.f32.mrf.mxu0
  %1743 = vmatprep.mubr.bf16.mxu0 %v840
  %1744 = vmatmul.mubr.bf16.gmra.mxu0 %v839
  %v1745 = vpop.f32.mrf.mxu0
  %v1746 = vadd.f32 %v1585, %v1745
  %v1747 = vpop.f32.mrf.mxu0
  %v1748 = vpop.f32.mrf.mxu0
  %v1749 = vadd.f32 %v1588, %v1748
  %v1750 = vpop.f32.mrf.mxu0
  %1751 = vmatprep.mubr.bf16.mxu0 %v849
  %1752 = vmatmul.mubr.bf16.gmra.mxu0 %v848
  %v1753 = vpop.f32.mrf.mxu0
  %v1754 = vadd.f32 %v1593, %v1753
  %v1755 = vpop.f32.mrf.mxu0
  %v1756 = vpop.f32.mrf.mxu0
  %v1757 = vadd.f32 %v1596, %v1756
  %v1758 = vpop.f32.mrf.mxu0
  %1759 = vmatprep.mubr.bf16.mxu0 %v858
  %1760 = vmatmul.mubr.bf16.gmra.mxu0 %v857
  %v1761 = vpop.f32.mrf.mxu0
  %v1762 = vadd.f32 %v1601, %v1761
  %v1763 = vpop.f32.mrf.mxu0
  %v1764 = vpop.f32.mrf.mxu0
  %v1765 = vadd.f32 %v1604, %v1764
  %v1766 = vpop.f32.mrf.mxu0
  %1767 = vmatprep.mubr.bf16.mxu0 %v867
  %1768 = vmatmul.mubr.bf16.gmra.mxu0 %v866
  %v1769 = vpop.f32.mrf.mxu0
  %v1770 = vadd.f32 %v1609, %v1769
  %v1771 = vpop.f32.mrf.mxu0
  %v1772 = vpop.f32.mrf.mxu0
  %v1773 = vadd.f32 %v1612, %v1772
  %v1774 = vpop.f32.mrf.mxu0
  %1775 = vmatprep.mubr.bf16.mxu0 %v876
  %1776 = vmatmul.mubr.bf16.gmra.mxu0 %v875
  %v1777 = vpop.f32.mrf.mxu0
  %v1778 = vadd.f32 %v1617, %v1777
  %v1779 = vpop.f32.mrf.mxu0
  %v1780 = vpop.f32.mrf.mxu0
  %v1781 = vadd.f32 %v1620, %v1780
  %v1782 = vpop.f32.mrf.mxu0
  %1783 = vmatprep.mubr.bf16.mxu0 %v885
  %1784 = vmatmul.mubr.bf16.gmra.mxu0 %v884
  %v1785 = vpop.f32.mrf.mxu0
  %v1786 = vadd.f32 %v1625, %v1785
  %v1787 = vpop.f32.mrf.mxu0
  %v1788 = vpop.f32.mrf.mxu0
  %v1789 = vadd.f32 %v1628, %v1788
  %v1790 = vpop.f32.mrf.mxu0
  %1791 = vmatprep.mubr.bf16.mxu0 %v894
  %1792 = vmatmul.mubr.bf16.gmra.mxu0 %v893
  %v1793 = vpop.f32.mrf.mxu0
  %v1794 = vadd.f32 %v1633, %v1793
  %v1795 = vpop.f32.mrf.mxu0
  %v1796 = vpop.f32.mrf.mxu0
  %v1797 = vadd.f32 %v1636, %v1796
  %v1798 = vpop.f32.mrf.mxu0
  %1799 = vmatprep.mubr.bf16.mxu0 %v903
  %1800 = vmatmul.mubr.bf16.gmra.mxu0 %v902
  %v1801 = vpop.f32.mrf.mxu0
  %v1802 = vadd.f32 %v1641, %v1801
  %v1803 = vpop.f32.mrf.mxu0
  %v1804 = vpop.f32.mrf.mxu0
  %v1805 = vadd.f32 %v1644, %v1804
  %v1806 = vpop.f32.mrf.mxu0
  %1807 = vmatprep.mubr.bf16.mxu0 %v912
  %1808 = vmatmul.mubr.bf16.gmra.mxu0 %v911
  %v1809 = vpop.f32.mrf.mxu0
  %v1810 = vadd.f32 %v1649, %v1809
  %v1811 = vpop.f32.mrf.mxu0
  %v1812 = vpop.f32.mrf.mxu0
  %v1813 = vadd.f32 %v1652, %v1812
  %v1814 = vpop.f32.mrf.mxu0
  %1815 = vdwg.mxu0
  %1816 = vmatprep.subr.bf16.mxu0 0
  %1817 = vmatpush1.bf16.msra.mxu0 %v1389
  %1818 = vmatprep.subr.bf16.mxu0 0
  %1819 = vmatpush1.bf16.msra.mxu0 %v1388
  %1820 = vmatprep.subr.bf16.mxu0 0
  %1821 = vmatpush1.bf16.msra.mxu0 %v1387
  %1822 = vmatprep.subr.bf16.mxu0 0
  %1823 = vmatpush1.bf16.msra.mxu0 %v1386
  %1824 = vmatprep.subr.bf16.mxu0 0
  %1825 = vmatpush1.bf16.msra.mxu0 %v1385
  %1826 = vmatprep.subr.bf16.mxu0 0
  %1827 = vmatpush1.bf16.msra.mxu0 %v1384
  %1828 = vmatprep.subr.bf16.mxu0 0
  %1829 = vmatpush1.bf16.msra.mxu0 %v1383
  %1830 = vmatprep.subr.bf16.mxu0 0
  %1831 = vmatpush1.bf16.msra.mxu0 %v1382
  %1832 = vmatprep.subr.bf16.mxu0 0
  %1833 = vmatpush2.bf16.msra.mxu0 %v1397
  %1834 = vmatprep.subr.bf16.mxu0 0
  %1835 = vmatpush2.bf16.msra.mxu0 %v1396
  %1836 = vmatprep.subr.bf16.mxu0 0
  %1837 = vmatpush2.bf16.msra.mxu0 %v1395
  %1838 = vmatprep.subr.bf16.mxu0 0
  %1839 = vmatpush2.bf16.msra.mxu0 %v1394
  %1840 = vmatprep.subr.bf16.mxu0 0
  %1841 = vmatpush2.bf16.msra.mxu0 %v1393
  %1842 = vmatprep.subr.bf16.mxu0 0
  %1843 = vmatpush2.bf16.msra.mxu0 %v1392
  %1844 = vmatprep.subr.bf16.mxu0 0
  %1845 = vmatpush2.bf16.msra.mxu0 %v1391
  %1846 = vmatprep.subr.bf16.mxu0 0
  %1847 = vmatpush2.bf16.msra.mxu0 %v1390
  %1848 = vmatprep.mubr.bf16.mxu0 %v779
  %1849 = vmatmul.mubr.bf16.gmra.mxu0 %v778
  %v1850 = vpop.f32.mrf.mxu0
  %v1851 = vadd.f32 %v1690, %v1850
  %v1852 = vpop.f32.mrf.mxu0
  %v1853 = vpop.f32.mrf.mxu0
  %v1854 = vadd.f32 %v1693, %v1853
  %v1855 = vpop.f32.mrf.mxu0
  %1856 = vmatprep.mubr.bf16.mxu0 %v788
  %1857 = vmatmul.mubr.bf16.gmra.mxu0 %v787
  %v1858 = vpop.f32.mrf.mxu0
  %v1859 = vadd.f32 %v1698, %v1858
  %v1860 = vpop.f32.mrf.mxu0
  %v1861 = vpop.f32.mrf.mxu0
  %v1862 = vadd.f32 %v1701, %v1861
  %v1863 = vpop.f32.mrf.mxu0
  %1864 = vmatprep.mubr.bf16.mxu0 %v797
  %1865 = vmatmul.mubr.bf16.gmra.mxu0 %v796
  %v1866 = vpop.f32.mrf.mxu0
  %v1867 = vadd.f32 %v1706, %v1866
  %v1868 = vpop.f32.mrf.mxu0
  %v1869 = vpop.f32.mrf.mxu0
  %v1870 = vadd.f32 %v1709, %v1869
  %v1871 = vpop.f32.mrf.mxu0
  %1872 = vmatprep.mubr.bf16.mxu0 %v806
  %1873 = vmatmul.mubr.bf16.gmra.mxu0 %v805
  %v1874 = vpop.f32.mrf.mxu0
  %v1875 = vadd.f32 %v1714, %v1874
  %v1876 = vpop.f32.mrf.mxu0
  %v1877 = vpop.f32.mrf.mxu0
  %v1878 = vadd.f32 %v1717, %v1877
  %v1879 = vpop.f32.mrf.mxu0
  %1880 = vmatprep.mubr.bf16.mxu0 %v815
  %1881 = vmatmul.mubr.bf16.gmra.mxu0 %v814
  %v1882 = vpop.f32.mrf.mxu0
  %v1883 = vadd.f32 %v1722, %v1882
  %v1884 = vpop.f32.mrf.mxu0
  %v1885 = vpop.f32.mrf.mxu0
  %v1886 = vadd.f32 %v1725, %v1885
  %v1887 = vpop.f32.mrf.mxu0
  %1888 = vmatprep.mubr.bf16.mxu0 %v824
  %1889 = vmatmul.mubr.bf16.gmra.mxu0 %v823
  %v1890 = vpop.f32.mrf.mxu0
  %v1891 = vadd.f32 %v1730, %v1890
  %v1892 = vpop.f32.mrf.mxu0
  %v1893 = vpop.f32.mrf.mxu0
  %v1894 = vadd.f32 %v1733, %v1893
  %v1895 = vpop.f32.mrf.mxu0
  %1896 = vmatprep.mubr.bf16.mxu0 %v833
  %1897 = vmatmul.mubr.bf16.gmra.mxu0 %v832
  %v1898 = vpop.f32.mrf.mxu0
  %v1899 = vadd.f32 %v1738, %v1898
  %v1900 = vpop.f32.mrf.mxu0
  %v1901 = vpop.f32.mrf.mxu0
  %v1902 = vadd.f32 %v1741, %v1901
  %v1903 = vpop.f32.mrf.mxu0
  %1904 = vmatprep.mubr.bf16.mxu0 %v842
  %1905 = vmatmul.mubr.bf16.gmra.mxu0 %v841
  %v1906 = vpop.f32.mrf.mxu0
  %v1907 = vadd.f32 %v1746, %v1906
  %v1908 = vpop.f32.mrf.mxu0
  %v1909 = vpop.f32.mrf.mxu0
  %v1910 = vadd.f32 %v1749, %v1909
  %v1911 = vpop.f32.mrf.mxu0
  %1912 = vmatprep.mubr.bf16.mxu0 %v851
  %1913 = vmatmul.mubr.bf16.gmra.mxu0 %v850
  %v1914 = vpop.f32.mrf.mxu0
  %v1915 = vadd.f32 %v1754, %v1914
  %v1916 = vpop.f32.mrf.mxu0
  %v1917 = vpop.f32.mrf.mxu0
  %v1918 = vadd.f32 %v1757, %v1917
  %v1919 = vpop.f32.mrf.mxu0
  %1920 = vmatprep.mubr.bf16.mxu0 %v860
  %1921 = vmatmul.mubr.bf16.gmra.mxu0 %v859
  %v1922 = vpop.f32.mrf.mxu0
  %v1923 = vadd.f32 %v1762, %v1922
  %v1924 = vpop.f32.mrf.mxu0
  %v1925 = vpop.f32.mrf.mxu0
  %v1926 = vadd.f32 %v1765, %v1925
  %v1927 = vpop.f32.mrf.mxu0
  %1928 = vmatprep.mubr.bf16.mxu0 %v869
  %1929 = vmatmul.mubr.bf16.gmra.mxu0 %v868
  %v1930 = vpop.f32.mrf.mxu0
  %v1931 = vadd.f32 %v1770, %v1930
  %v1932 = vpop.f32.mrf.mxu0
  %v1933 = vpop.f32.mrf.mxu0
  %v1934 = vadd.f32 %v1773, %v1933
  %v1935 = vpop.f32.mrf.mxu0
  %1936 = vmatprep.mubr.bf16.mxu0 %v878
  %1937 = vmatmul.mubr.bf16.gmra.mxu0 %v877
  %v1938 = vpop.f32.mrf.mxu0
  %v1939 = vadd.f32 %v1778, %v1938
  %v1940 = vpop.f32.mrf.mxu0
  %v1941 = vpop.f32.mrf.mxu0
  %v1942 = vadd.f32 %v1781, %v1941
  %v1943 = vpop.f32.mrf.mxu0
  %1944 = vmatprep.mubr.bf16.mxu0 %v887
  %1945 = vmatmul.mubr.bf16.gmra.mxu0 %v886
  %v1946 = vpop.f32.mrf.mxu0
  %v1947 = vadd.f32 %v1786, %v1946
  %v1948 = vpop.f32.mrf.mxu0
  %v1949 = vpop.f32.mrf.mxu0
  %v1950 = vadd.f32 %v1789, %v1949
  %v1951 = vpop.f32.mrf.mxu0
  %1952 = vmatprep.mubr.bf16.mxu0 %v896
  %1953 = vmatmul.mubr.bf16.gmra.mxu0 %v895
  %v1954 = vpop.f32.mrf.mxu0
  %v1955 = vadd.f32 %v1794, %v1954
  %v1956 = vpop.f32.mrf.mxu0
  %v1957 = vpop.f32.mrf.mxu0
  %v1958 = vadd.f32 %v1797, %v1957
  %v1959 = vpop.f32.mrf.mxu0
  %1960 = vmatprep.mubr.bf16.mxu0 %v905
  %1961 = vmatmul.mubr.bf16.gmra.mxu0 %v904
  %v1962 = vpop.f32.mrf.mxu0
  %v1963 = vadd.f32 %v1802, %v1962
  %v1964 = vpop.f32.mrf.mxu0
  %v1965 = vpop.f32.mrf.mxu0
  %v1966 = vadd.f32 %v1805, %v1965
  %v1967 = vpop.f32.mrf.mxu0
  %1968 = vmatprep.mubr.bf16.mxu0 %v914
  %1969 = vmatmul.mubr.bf16.gmra.mxu0 %v913
  %v1970 = vpop.f32.mrf.mxu0
  %v1971 = vadd.f32 %v1810, %v1970
  %v1972 = vpop.f32.mrf.mxu0
  %v1973 = vpop.f32.mrf.mxu0
  %v1974 = vadd.f32 %v1813, %v1973
  %v1975 = vpop.f32.mrf.mxu0
  %1976 = vdwg.mxu0
  %1977 = vmatprep.subr.bf16.mxu0 0
  %1978 = vmatpush1.bf16.msra.mxu0 %v1405
  %1979 = vmatprep.subr.bf16.mxu0 0
  %1980 = vmatpush1.bf16.msra.mxu0 %v1404
  %1981 = vmatprep.subr.bf16.mxu0 0
  %1982 = vmatpush1.bf16.msra.mxu0 %v1403
  %1983 = vmatprep.subr.bf16.mxu0 0
  %1984 = vmatpush1.bf16.msra.mxu0 %v1402
  %1985 = vmatprep.subr.bf16.mxu0 0
  %1986 = vmatpush1.bf16.msra.mxu0 %v1401
  %1987 = vmatprep.subr.bf16.mxu0 0
  %1988 = vmatpush1.bf16.msra.mxu0 %v1400
  %1989 = vmatprep.subr.bf16.mxu0 0
  %1990 = vmatpush1.bf16.msra.mxu0 %v1399
  %1991 = vmatprep.subr.bf16.mxu0 0
  %1992 = vmatpush1.bf16.msra.mxu0 %v1398
  %1993 = vmatprep.subr.bf16.mxu0 0
  %1994 = vmatpush2.bf16.msra.mxu0 %v1413
  %1995 = vmatprep.subr.bf16.mxu0 0
  %1996 = vmatpush2.bf16.msra.mxu0 %v1412
  %1997 = vmatprep.subr.bf16.mxu0 0
  %1998 = vmatpush2.bf16.msra.mxu0 %v1411
  %1999 = vmatprep.subr.bf16.mxu0 0
  %2000 = vmatpush2.bf16.msra.mxu0 %v1410
  %2001 = vmatprep.subr.bf16.mxu0 0
  %2002 = vmatpush2.bf16.msra.mxu0 %v1409
  %2003 = vmatprep.subr.bf16.mxu0 0
  %2004 = vmatpush2.bf16.msra.mxu0 %v1408
  %2005 = vmatprep.subr.bf16.mxu0 0
  %2006 = vmatpush2.bf16.msra.mxu0 %v1407
  %2007 = vmatprep.subr.bf16.mxu0 0
  %2008 = vmatpush2.bf16.msra.mxu0 %v1406
  %2009 = vmatprep.mubr.bf16.mxu0 %v781
  %2010 = vmatmul.mubr.bf16.gmra.mxu0 %v780
  %v2011 = vpop.f32.mrf.mxu0
  %v2012 = vadd.f32 %v1851, %v2011
  %v2013 = vpop.f32.mrf.mxu0
  %v2014 = vpop.f32.mrf.mxu0
  %v2015 = vadd.f32 %v1854, %v2014
  %v2016 = vpop.f32.mrf.mxu0
  %2017 = vmatprep.mubr.bf16.mxu0 %v790
  %2018 = vmatmul.mubr.bf16.gmra.mxu0 %v789
  %v2019 = vpop.f32.mrf.mxu0
  %v2020 = vadd.f32 %v1859, %v2019
  %v2021 = vpop.f32.mrf.mxu0
  %v2022 = vpop.f32.mrf.mxu0
  %v2023 = vadd.f32 %v1862, %v2022
  %v2024 = vpop.f32.mrf.mxu0
  %2025 = vmatprep.mubr.bf16.mxu0 %v799
  %2026 = vmatmul.mubr.bf16.gmra.mxu0 %v798
  %v2027 = vpop.f32.mrf.mxu0
  %v2028 = vadd.f32 %v1867, %v2027
  %v2029 = vpop.f32.mrf.mxu0
  %v2030 = vpop.f32.mrf.mxu0
  %v2031 = vadd.f32 %v1870, %v2030
  %v2032 = vpop.f32.mrf.mxu0
  %2033 = vmatprep.mubr.bf16.mxu0 %v808
  %2034 = vmatmul.mubr.bf16.gmra.mxu0 %v807
  %v2035 = vpop.f32.mrf.mxu0
  %v2036 = vadd.f32 %v1875, %v2035
  %v2037 = vpop.f32.mrf.mxu0
  %v2038 = vpop.f32.mrf.mxu0
  %v2039 = vadd.f32 %v1878, %v2038
  %v2040 = vpop.f32.mrf.mxu0
  %2041 = vmatprep.mubr.bf16.mxu0 %v817
  %2042 = vmatmul.mubr.bf16.gmra.mxu0 %v816
  %v2043 = vpop.f32.mrf.mxu0
  %v2044 = vadd.f32 %v1883, %v2043
  %v2045 = vpop.f32.mrf.mxu0
  %v2046 = vpop.f32.mrf.mxu0
  %v2047 = vadd.f32 %v1886, %v2046
  %v2048 = vpop.f32.mrf.mxu0
  %2049 = vmatprep.mubr.bf16.mxu0 %v826
  %2050 = vmatmul.mubr.bf16.gmra.mxu0 %v825
  %v2051 = vpop.f32.mrf.mxu0
  %v2052 = vadd.f32 %v1891, %v2051
  %v2053 = vpop.f32.mrf.mxu0
  %v2054 = vpop.f32.mrf.mxu0
  %v2055 = vadd.f32 %v1894, %v2054
  %v2056 = vpop.f32.mrf.mxu0
  %2057 = vmatprep.mubr.bf16.mxu0 %v835
  %2058 = vmatmul.mubr.bf16.gmra.mxu0 %v834
  %v2059 = vpop.f32.mrf.mxu0
  %v2060 = vadd.f32 %v1899, %v2059
  %v2061 = vpop.f32.mrf.mxu0
  %v2062 = vpop.f32.mrf.mxu0
  %v2063 = vadd.f32 %v1902, %v2062
  %v2064 = vpop.f32.mrf.mxu0
  %2065 = vmatprep.mubr.bf16.mxu0 %v844
  %2066 = vmatmul.mubr.bf16.gmra.mxu0 %v843
  %v2067 = vpop.f32.mrf.mxu0
  %v2068 = vadd.f32 %v1907, %v2067
  %v2069 = vpop.f32.mrf.mxu0
  %v2070 = vpop.f32.mrf.mxu0
  %v2071 = vadd.f32 %v1910, %v2070
  %v2072 = vpop.f32.mrf.mxu0
  %2073 = vmatprep.mubr.bf16.mxu0 %v853
  %2074 = vmatmul.mubr.bf16.gmra.mxu0 %v852
  %v2075 = vpop.f32.mrf.mxu0
  %v2076 = vadd.f32 %v1915, %v2075
  %v2077 = vpop.f32.mrf.mxu0
  %v2078 = vpop.f32.mrf.mxu0
  %v2079 = vadd.f32 %v1918, %v2078
  %v2080 = vpop.f32.mrf.mxu0
  %2081 = vmatprep.mubr.bf16.mxu0 %v862
  %2082 = vmatmul.mubr.bf16.gmra.mxu0 %v861
  %v2083 = vpop.f32.mrf.mxu0
  %v2084 = vadd.f32 %v1923, %v2083
  %v2085 = vpop.f32.mrf.mxu0
  %v2086 = vpop.f32.mrf.mxu0
  %v2087 = vadd.f32 %v1926, %v2086
  %v2088 = vpop.f32.mrf.mxu0
  %2089 = vmatprep.mubr.bf16.mxu0 %v871
  %2090 = vmatmul.mubr.bf16.gmra.mxu0 %v870
  %v2091 = vpop.f32.mrf.mxu0
  %v2092 = vadd.f32 %v1931, %v2091
  %v2093 = vpop.f32.mrf.mxu0
  %v2094 = vpop.f32.mrf.mxu0
  %v2095 = vadd.f32 %v1934, %v2094
  %v2096 = vpop.f32.mrf.mxu0
  %2097 = vmatprep.mubr.bf16.mxu0 %v880
  %2098 = vmatmul.mubr.bf16.gmra.mxu0 %v879
  %v2099 = vpop.f32.mrf.mxu0
  %v2100 = vadd.f32 %v1939, %v2099
  %v2101 = vpop.f32.mrf.mxu0
  %v2102 = vpop.f32.mrf.mxu0
  %v2103 = vadd.f32 %v1942, %v2102
  %v2104 = vpop.f32.mrf.mxu0
  %2105 = vmatprep.mubr.bf16.mxu0 %v889
  %2106 = vmatmul.mubr.bf16.gmra.mxu0 %v888
  %v2107 = vpop.f32.mrf.mxu0
  %v2108 = vadd.f32 %v1947, %v2107
  %v2109 = vpop.f32.mrf.mxu0
  %v2110 = vpop.f32.mrf.mxu0
  %v2111 = vadd.f32 %v1950, %v2110
  %v2112 = vpop.f32.mrf.mxu0
  %2113 = vmatprep.mubr.bf16.mxu0 %v898
  %2114 = vmatmul.mubr.bf16.gmra.mxu0 %v897
  %v2115 = vpop.f32.mrf.mxu0
  %v2116 = vadd.f32 %v1955, %v2115
  %v2117 = vpop.f32.mrf.mxu0
  %v2118 = vpop.f32.mrf.mxu0
  %v2119 = vadd.f32 %v1958, %v2118
  %v2120 = vpop.f32.mrf.mxu0
  %2121 = vmatprep.mubr.bf16.mxu0 %v907
  %2122 = vmatmul.mubr.bf16.gmra.mxu0 %v906
  %v2123 = vpop.f32.mrf.mxu0
  %v2124 = vadd.f32 %v1963, %v2123
  %v2125 = vpop.f32.mrf.mxu0
  %v2126 = vpop.f32.mrf.mxu0
  %v2127 = vadd.f32 %v1966, %v2126
  %v2128 = vpop.f32.mrf.mxu0
  %2129 = vmatprep.mubr.bf16.mxu0 %v916
  %2130 = vmatmul.mubr.bf16.gmra.mxu0 %v915
  %v2131 = vpop.f32.mrf.mxu0
  %v2132 = vadd.f32 %v1971, %v2131
  %v2133 = vpop.f32.mrf.mxu0
  %v2134 = vpop.f32.mrf.mxu0
  %v2135 = vadd.f32 %v1974, %v2134
  %v2136 = vpop.f32.mrf.mxu0
  %2137 = vdwg.mxu0
  %2138 = vmatprep.subr.bf16.mxu0 0
  %2139 = vmatpush1.bf16.msra.mxu0 %v1421
  %2140 = vmatprep.subr.bf16.mxu0 0
  %2141 = vmatpush1.bf16.msra.mxu0 %v1420
  %2142 = vmatprep.subr.bf16.mxu0 0
  %2143 = vmatpush1.bf16.msra.mxu0 %v1419
  %2144 = vmatprep.subr.bf16.mxu0 0
  %2145 = vmatpush1.bf16.msra.mxu0 %v1418
  %2146 = vmatprep.subr.bf16.mxu0 0
  %2147 = vmatpush1.bf16.msra.mxu0 %v1417
  %2148 = vmatprep.subr.bf16.mxu0 0
  %2149 = vmatpush1.bf16.msra.mxu0 %v1416
  %2150 = vmatprep.subr.bf16.mxu0 0
  %2151 = vmatpush1.bf16.msra.mxu0 %v1415
  %2152 = vmatprep.subr.bf16.mxu0 0
  %2153 = vmatpush1.bf16.msra.mxu0 %v1414
  %2154 = vmatprep.subr.bf16.mxu0 0
  %2155 = vmatpush2.bf16.msra.mxu0 0
  %2156 = vmatprep.subr.bf16.mxu0 0
  %2157 = vmatpush2.bf16.msra.mxu0 0
  %2158 = vmatprep.subr.bf16.mxu0 0
  %2159 = vmatpush2.bf16.msra.mxu0 0
  %2160 = vmatprep.subr.bf16.mxu0 0
  %2161 = vmatpush2.bf16.msra.mxu0 0
  %2162 = vmatprep.subr.bf16.mxu0 0
  %2163 = vmatpush2.bf16.msra.mxu0 0
  %2164 = vmatprep.subr.bf16.mxu0 0
  %2165 = vmatpush2.bf16.msra.mxu0 0
  %2166 = vmatprep.subr.bf16.mxu0 0
  %2167 = vmatpush2.bf16.msra.mxu0 0
  %2168 = vmatprep.subr.bf16.mxu0 0
  %2169 = vmatpush2.bf16.msra.mxu0 0
  %2170 = vmatprep.mubr.bf16.mxu0 0
  %2171 = vmatmul.mubr.bf16.gmra.mxu0 %v782
  %v2172 = vpop.f32.mrf.mxu0
  %v2173 = vadd.f32 %v2012, %v2172
  %v2174 = vpop.f32.mrf.mxu0
  %v2175 = vpop.f32.mrf.mxu0
  %v2176 = vadd.f32 %v2015, %v2175
  %v2177 = vpop.f32.mrf.mxu0
  %2178 = vmatprep.mubr.bf16.mxu0 0
  %2179 = vmatmul.mubr.bf16.gmra.mxu0 %v791
  %v2180 = vpop.f32.mrf.mxu0
  %v2181 = vadd.f32 %v2020, %v2180
  %v2182 = vpop.f32.mrf.mxu0
  %v2183 = vpop.f32.mrf.mxu0
  %v2184 = vadd.f32 %v2023, %v2183
  %v2185 = vpop.f32.mrf.mxu0
  %2186 = vmatprep.mubr.bf16.mxu0 0
  %2187 = vmatmul.mubr.bf16.gmra.mxu0 %v800
  %v2188 = vpop.f32.mrf.mxu0
  %v2189 = vadd.f32 %v2028, %v2188
  %v2190 = vpop.f32.mrf.mxu0
  %v2191 = vpop.f32.mrf.mxu0
  %v2192 = vadd.f32 %v2031, %v2191
  %v2193 = vpop.f32.mrf.mxu0
  %2194 = vmatprep.mubr.bf16.mxu0 0
  %2195 = vmatmul.mubr.bf16.gmra.mxu0 %v809
  %v2196 = vpop.f32.mrf.mxu0
  %v2197 = vadd.f32 %v2036, %v2196
  %v2198 = vpop.f32.mrf.mxu0
  %v2199 = vpop.f32.mrf.mxu0
  %v2200 = vadd.f32 %v2039, %v2199
  %v2201 = vpop.f32.mrf.mxu0
  %2202 = vmatprep.mubr.bf16.mxu0 0
  %2203 = vmatmul.mubr.bf16.gmra.mxu0 %v818
  %v2204 = vpop.f32.mrf.mxu0
  %v2205 = vadd.f32 %v2044, %v2204
  %v2206 = vpop.f32.mrf.mxu0
  %v2207 = vpop.f32.mrf.mxu0
  %v2208 = vadd.f32 %v2047, %v2207
  %v2209 = vpop.f32.mrf.mxu0
  %2210 = vmatprep.mubr.bf16.mxu0 0
  %2211 = vmatmul.mubr.bf16.gmra.mxu0 %v827
  %v2212 = vpop.f32.mrf.mxu0
  %v2213 = vadd.f32 %v2052, %v2212
  %v2214 = vpop.f32.mrf.mxu0
  %v2215 = vpop.f32.mrf.mxu0
  %v2216 = vadd.f32 %v2055, %v2215
  %v2217 = vpop.f32.mrf.mxu0
  %2218 = vmatprep.mubr.bf16.mxu0 0
  %2219 = vmatmul.mubr.bf16.gmra.mxu0 %v836
  %v2220 = vpop.f32.mrf.mxu0
  %v2221 = vadd.f32 %v2060, %v2220
  %v2222 = vpop.f32.mrf.mxu0
  %v2223 = vpop.f32.mrf.mxu0
  %v2224 = vadd.f32 %v2063, %v2223
  %v2225 = vpop.f32.mrf.mxu0
  %2226 = vmatprep.mubr.bf16.mxu0 0
  %2227 = vmatmul.mubr.bf16.gmra.mxu0 %v845
  %v2228 = vpop.f32.mrf.mxu0
  %v2229 = vadd.f32 %v2068, %v2228
  %v2230 = vpop.f32.mrf.mxu0
  %v2231 = vpop.f32.mrf.mxu0
  %v2232 = vadd.f32 %v2071, %v2231
  %v2233 = vpop.f32.mrf.mxu0
  %2234 = vmatprep.mubr.bf16.mxu0 0
  %2235 = vmatmul.mubr.bf16.gmra.mxu0 %v854
  %v2236 = vpop.f32.mrf.mxu0
  %v2237 = vadd.f32 %v2076, %v2236
  %v2238 = vpop.f32.mrf.mxu0
  %v2239 = vpop.f32.mrf.mxu0
  %v2240 = vadd.f32 %v2079, %v2239
  %v2241 = vpop.f32.mrf.mxu0
  %2242 = vmatprep.mubr.bf16.mxu0 0
  %2243 = vmatmul.mubr.bf16.gmra.mxu0 %v863
  %v2244 = vpop.f32.mrf.mxu0
  %v2245 = vadd.f32 %v2084, %v2244
  %v2246 = vpop.f32.mrf.mxu0
  %v2247 = vpop.f32.mrf.mxu0
  %v2248 = vadd.f32 %v2087, %v2247
  %v2249 = vpop.f32.mrf.mxu0
  %2250 = vmatprep.mubr.bf16.mxu0 0
  %2251 = vmatmul.mubr.bf16.gmra.mxu0 %v872
  %v2252 = vpop.f32.mrf.mxu0
  %v2253 = vadd.f32 %v2092, %v2252
  %v2254 = vpop.f32.mrf.mxu0
  %v2255 = vpop.f32.mrf.mxu0
  %v2256 = vadd.f32 %v2095, %v2255
  %v2257 = vpop.f32.mrf.mxu0
  %2258 = vmatprep.mubr.bf16.mxu0 0
  %2259 = vmatmul.mubr.bf16.gmra.mxu0 %v881
  %v2260 = vpop.f32.mrf.mxu0
  %v2261 = vadd.f32 %v2100, %v2260
  %v2262 = vpop.f32.mrf.mxu0
  %v2263 = vpop.f32.mrf.mxu0
  %v2264 = vadd.f32 %v2103, %v2263
  %v2265 = vpop.f32.mrf.mxu0
  %2266 = vmatprep.mubr.bf16.mxu0 0
  %2267 = vmatmul.mubr.bf16.gmra.mxu0 %v890
  %v2268 = vpop.f32.mrf.mxu0
  %v2269 = vadd.f32 %v2108, %v2268
  %v2270 = vpop.f32.mrf.mxu0
  %v2271 = vpop.f32.mrf.mxu0
  %v2272 = vadd.f32 %v2111, %v2271
  %v2273 = vpop.f32.mrf.mxu0
  %2274 = vmatprep.mubr.bf16.mxu0 0
  %2275 = vmatmul.mubr.bf16.gmra.mxu0 %v899
  %v2276 = vpop.f32.mrf.mxu0
  %v2277 = vadd.f32 %v2116, %v2276
  %v2278 = vpop.f32.mrf.mxu0
  %v2279 = vpop.f32.mrf.mxu0
  %v2280 = vadd.f32 %v2119, %v2279
  %v2281 = vpop.f32.mrf.mxu0
  %2282 = vmatprep.mubr.bf16.mxu0 0
  %2283 = vmatmul.mubr.bf16.gmra.mxu0 %v908
  %v2284 = vpop.f32.mrf.mxu0
  %v2285 = vadd.f32 %v2124, %v2284
  %v2286 = vpop.f32.mrf.mxu0
  %v2287 = vpop.f32.mrf.mxu0
  %v2288 = vadd.f32 %v2127, %v2287
  %v2289 = vpop.f32.mrf.mxu0
  %2290 = vmatprep.mubr.bf16.mxu0 0
  %2291 = vmatmul.mubr.bf16.gmra.mxu0 %v917
  %v2292 = vpop.f32.mrf.mxu0
  %v2293 = vadd.f32 %v2132, %v2292
  %v2294 = vpop.f32.mrf.mxu0
  %v2295 = vpop.f32.mrf.mxu0
  %v2296 = vadd.f32 %v2135, %v2295
  %v2297 = vpop.f32.mrf.mxu0
  %2298 = vdwg.mxu0
  %vm2299 = vcmp.ge.f32.partialorder %v2173, 0.0
  %vm2300 = vcmp.ge.f32.partialorder %v2176, 0.0
  %vm2301 = vcmp.ge.f32.partialorder %v2181, 0.0
  %vm2302 = vcmp.ge.f32.partialorder %v2184, 0.0
  %vm2303 = vcmp.ge.f32.partialorder %v2189, 0.0
  %vm2304 = vcmp.ge.f32.partialorder %v2192, 0.0
  %vm2305 = vcmp.ge.f32.partialorder %v2197, 0.0
  %vm2306 = vcmp.ge.f32.partialorder %v2200, 0.0
  %vm2307 = vcmp.ge.f32.partialorder %v2205, 0.0
  %vm2308 = vcmp.ge.f32.partialorder %v2208, 0.0
  %vm2309 = vcmp.ge.f32.partialorder %v2213, 0.0
  %vm2310 = vcmp.ge.f32.partialorder %v2216, 0.0
  %vm2311 = vcmp.ge.f32.partialorder %v2221, 0.0
  %vm2312 = vcmp.ge.f32.partialorder %v2224, 0.0
  %vm2313 = vcmp.ge.f32.partialorder %v2229, 0.0
  %vm2314 = vcmp.ge.f32.partialorder %v2232, 0.0
  %vm2315 = vcmp.ge.f32.partialorder %v2237, 0.0
  %vm2316 = vcmp.ge.f32.partialorder %v2240, 0.0
  %vm2317 = vcmp.ge.f32.partialorder %v2245, 0.0
  %vm2318 = vcmp.ge.f32.partialorder %v2248, 0.0
  %vm2319 = vcmp.ge.f32.partialorder %v2253, 0.0
  %vm2320 = vcmp.ge.f32.partialorder %v2256, 0.0
  %vm2321 = vcmp.ge.f32.partialorder %v2261, 0.0
  %vm2322 = vcmp.ge.f32.partialorder %v2264, 0.0
  %vm2323 = vcmp.ge.f32.partialorder %v2269, 0.0
  %vm2324 = vcmp.ge.f32.partialorder %v2272, 0.0
  %vm2325 = vcmp.ge.f32.partialorder %v2277, 0.0
  %vm2326 = vcmp.ge.f32.partialorder %v2280, 0.0
  %vm2327 = vcmp.ge.f32.partialorder %v2285, 0.0
  %vm2328 = vcmp.ge.f32.partialorder %v2288, 0.0
  %vm2329 = vcmp.ge.f32.partialorder %v2293, 0.0
  %vm2330 = vcmp.ge.f32.partialorder %v2296, 0.0
  %v2331 = vmul.f32 %v2173, 0.01
  %v2332 = vmul.f32 %v2176, 0.01
  %v2333 = vmul.f32 %v2181, 0.01
  %v2334 = vmul.f32 %v2184, 0.01
  %v2335 = vmul.f32 %v2189, 0.01
  %v2336 = vmul.f32 %v2192, 0.01
  %v2337 = vmul.f32 %v2197, 0.01
  %v2338 = vmul.f32 %v2200, 0.01
  %v2339 = vmul.f32 %v2205, 0.01
  %v2340 = vmul.f32 %v2208, 0.01
  %v2341 = vmul.f32 %v2213, 0.01
  %v2342 = vmul.f32 %v2216, 0.01
  %v2343 = vmul.f32 %v2221, 0.01
  %v2344 = vmul.f32 %v2224, 0.01
  %v2345 = vmul.f32 %v2229, 0.01
  %v2346 = vmul.f32 %v2232, 0.01
  %v2347 = vmul.f32 %v2237, 0.01
  %v2348 = vmul.f32 %v2240, 0.01
  %v2349 = vmul.f32 %v2245, 0.01
  %v2350 = vmul.f32 %v2248, 0.01
  %v2351 = vmul.f32 %v2253, 0.01
  %v2352 = vmul.f32 %v2256, 0.01
  %v2353 = vmul.f32 %v2261, 0.01
  %v2354 = vmul.f32 %v2264, 0.01
  %v2355 = vmul.f32 %v2269, 0.01
  %v2356 = vmul.f32 %v2272, 0.01
  %v2357 = vmul.f32 %v2277, 0.01
  %v2358 = vmul.f32 %v2280, 0.01
  %v2359 = vmul.f32 %v2285, 0.01
  %v2360 = vmul.f32 %v2288, 0.01
  %v2361 = vmul.f32 %v2293, 0.01
  %v2362 = vmul.f32 %v2296, 0.01
  %v2363 = vsel %vm2299, %v2173, %v2331
  %v2364 = vsel %vm2300, %v2176, %v2332
  %v2365 = vsel %vm2301, %v2181, %v2333
  %v2366 = vsel %vm2302, %v2184, %v2334
  %v2367 = vsel %vm2303, %v2189, %v2335
  %v2368 = vsel %vm2304, %v2192, %v2336
  %v2369 = vsel %vm2305, %v2197, %v2337
  %v2370 = vsel %vm2306, %v2200, %v2338
  %v2371 = vsel %vm2307, %v2205, %v2339
  %v2372 = vsel %vm2308, %v2208, %v2340
  %v2373 = vsel %vm2309, %v2213, %v2341
  %v2374 = vsel %vm2310, %v2216, %v2342
  %v2375 = vsel %vm2311, %v2221, %v2343
  %v2376 = vsel %vm2312, %v2224, %v2344
  %v2377 = vsel %vm2313, %v2229, %v2345
  %v2378 = vsel %vm2314, %v2232, %v2346
  %v2379 = vsel %vm2315, %v2237, %v2347
  %v2380 = vsel %vm2316, %v2240, %v2348
  %v2381 = vsel %vm2317, %v2245, %v2349
  %v2382 = vsel %vm2318, %v2248, %v2350
  %v2383 = vsel %vm2319, %v2253, %v2351
  %v2384 = vsel %vm2320, %v2256, %v2352
  %v2385 = vsel %vm2321, %v2261, %v2353
  %v2386 = vsel %vm2322, %v2264, %v2354
  %v2387 = vsel %vm2323, %v2269, %v2355
  %v2388 = vsel %vm2324, %v2272, %v2356
  %v2389 = vsel %vm2325, %v2277, %v2357
  %v2390 = vsel %vm2326, %v2280, %v2358
  %v2391 = vsel %vm2327, %v2285, %v2359
  %v2392 = vsel %vm2328, %v2288, %v2360
  %v2393 = vsel %vm2329, %v2293, %v2361
  %v2394 = vsel %vm2330, %v2296, %v2362
  %vm2395 = vcmask 523264
  %2396 = vst.msk [vmem:[%s3] sm:$0xff] %vm2395, %v2363
  %2397 = vst.msk [vmem:[%s3 + $0x8] sm:$0xff] %vm2395, %v2364
  %2398 = vst.msk [vmem:[%s3 + $0x10] sm:$0xff] %vm2395, %v2365
  %2399 = vst.msk [vmem:[%s3 + $0x18] sm:$0xff] %vm2395, %v2366
  %2400 = vst.msk [vmem:[%s3 + $0x20] sm:$0xff] %vm2395, %v2367
  %2401 = vst.msk [vmem:[%s3 + $0x28] sm:$0xff] %vm2395, %v2368
  %2402 = vst.msk [vmem:[%s3 + $0x30] sm:$0xff] %vm2395, %v2369
  %2403 = vst.msk [vmem:[%s3 + $0x38] sm:$0xff] %vm2395, %v2370
  %2404 = vst.msk [vmem:[%s3 + $0x40] sm:$0xff] %vm2395, %v2371
  %2405 = vst.msk [vmem:[%s3 + $0x48] sm:$0xff] %vm2395, %v2372
  %2406 = vst.msk [vmem:[%s3 + $0x50] sm:$0xff] %vm2395, %v2373
  %2407 = vst.msk [vmem:[%s3 + $0x58] sm:$0xff] %vm2395, %v2374
  %2408 = vst.msk [vmem:[%s3 + $0x60] sm:$0xff] %vm2395, %v2375
  %2409 = vst.msk [vmem:[%s3 + $0x68] sm:$0xff] %vm2395, %v2376
  %2410 = vst.msk [vmem:[%s3 + $0x70] sm:$0xff] %vm2395, %v2377
  %2411 = vst.msk [vmem:[%s3 + $0x78] sm:$0xff] %vm2395, %v2378
  %2412 = vst.msk [vmem:[%s3 + $0x80] sm:$0xff] %vm2395, %v2379
  %2413 = vst.msk [vmem:[%s3 + $0x88] sm:$0xff] %vm2395, %v2380
  %2414 = vst.msk [vmem:[%s3 + $0x90] sm:$0xff] %vm2395, %v2381
  %2415 = vst.msk [vmem:[%s3 + $0x98] sm:$0xff] %vm2395, %v2382
  %2416 = vst.msk [vmem:[%s3 + $0xa0] sm:$0xff] %vm2395, %v2383
  %2417 = vst.msk [vmem:[%s3 + $0xa8] sm:$0xff] %vm2395, %v2384
  %2418 = vst.msk [vmem:[%s3 + $0xb0] sm:$0xff] %vm2395, %v2385
  %2419 = vst.msk [vmem:[%s3 + $0xb8] sm:$0xff] %vm2395, %v2386
  %2420 = vst.msk [vmem:[%s3 + $0xc0] sm:$0xff] %vm2395, %v2387
  %2421 = vst.msk [vmem:[%s3 + $0xc8] sm:$0xff] %vm2395, %v2388
  %2422 = vst.msk [vmem:[%s3 + $0xd0] sm:$0xff] %vm2395, %v2389
  %2423 = vst.msk [vmem:[%s3 + $0xd8] sm:$0xff] %vm2395, %v2390
  %2424 = vst.msk [vmem:[%s3 + $0xe0] sm:$0xff] %vm2395, %v2391
  %2425 = vst.msk [vmem:[%s3 + $0xe8] sm:$0xff] %vm2395, %v2392
  %2426 = vst.msk [vmem:[%s3 + $0xf0] sm:$0xff] %vm2395, %v2393
  %2427 = vst.msk [vmem:[%s3 + $0xf8] sm:$0xff] %vm2395, %v2394
  // Predicated region
  $region14: #{context4_forward.3} parent=0 // pred_check
    _
  $region15: #{context4_forward.3} parent=0 // pred_check_branch
    %2429 = sbr.rel (0) target = $region17
  $region16: #{context4_forward.3} parent=0 // pred_region
    _
  $region17: #{context4_forward.3} parent=0 // pred_fallthru
    _
  // Predicated region
  $region18: #{context4_forward.3} parent=0 // pred_check
    _
  $region19: #{context4_forward.3} parent=0 // pred_check_branch
    %2431 = sbr.rel (0) target = $region21
  $region20: #{context4_forward.3} parent=0 // pred_region
    _
  $region21: #{context4_forward.3} parent=0 // pred_fallthru
    _

// kernel: context4_forward.5
$region0: #{context4_forward.5}
  #allocation0 [shape = 'u32[]', space=smem, size = 0x4, offset = 0x4, fixed_abs, tag = 'smem constant byte address 0x4 - core index']
  #allocation1 [shape = 'u32[144,128]{1,0:T(1,128)}', space=vmem, size = 0x12000, scoped, tag = 'internal scratch']
  %s0 = inlined_call_operand.vmem [shape: f32[256,128], index: 0, kind: input, shape index: {}]
  %s1 = inlined_call_operand.vmem [shape: f32[256,128], index: 1, kind: input, shape index: {}]
  %s2 = inlined_call_operand.vmem [shape: f32[256,128], index: 2, kind: input, shape index: {}]
  %s3 = inlined_call_operand.vmem [shape: f32[256,128], index: 3, kind: output, shape index: {}]
  %s4 = sld [smem:[#allocation0]]
  $region22: #{context4_forward.5} parent=0
    _
  %s6 = ssub.s32 1, %s4
  %s7 = scalar_select 0, %s6, %s4
  // Predicated region
  $region2: #{context4_forward.5} parent=0 // pred_check
    _
  $region3: #{context4_forward.5} parent=0 // pred_check_branch
    %9 = sbr.rel (0) target = $region5
  $region4: #{context4_forward.5} parent=0 // pred_region
    _
  $region5: #{context4_forward.5} parent=0 // pred_fallthru
    _
  // Predicated region
  $region6: #{context4_forward.5} parent=0 // pred_check
    _
  $region7: #{context4_forward.5} parent=0 // pred_check_branch
    %11 = sbr.rel (0) target = $region9
  $region8: #{context4_forward.5} parent=0 // pred_region
    _
  $region9: #{context4_forward.5} parent=0 // pred_fallthru
    _
  // Predicated region
  $region10: #{context4_forward.5} parent=0 // pred_check
    _
  $region11: #{context4_forward.5} parent=0 // pred_check_branch
    %13 = sbr.rel (0) target = $region13
  $region12: #{context4_forward.5} parent=0 // pred_region
    _
  $region13: #{context4_forward.5} parent=0 // pred_fallthru
    _
  %v14 = vld [vmem:[%s2] sm:$0xff]
  %v15 = vld [vmem:[%s2 + $0x8] sm:$0xff]
  %v16 = vld [vmem:[%s2 + $0x10] sm:$0xff]
  %v17 = vld [vmem:[%s2 + $0x18] sm:$0xff]
  %v18 = vld [vmem:[%s2 + $0x20] sm:$0xff]
  %v19 = vld [vmem:[%s2 + $0x28] sm:$0xff]
  %v20 = vld [vmem:[%s2 + $0x30] sm:$0xff]
  %v21 = vld [vmem:[%s2 + $0x38] sm:$0xff]
  %v22 = vld [vmem:[%s2 + $0x40] sm:$0xff]
  %v23 = vld [vmem:[%s2 + $0x48] sm:$0xff]
  %v24 = vld [vmem:[%s2 + $0x50] sm:$0xff]
  %v25 = vld [vmem:[%s2 + $0x58] sm:$0xff]
  %v26 = vld [vmem:[%s2 + $0x60] sm:$0xff]
  %v27 = vld [vmem:[%s2 + $0x68] sm:$0xff]
  %v28 = vld [vmem:[%s2 + $0x70] sm:$0xff]
  %v29 = vld [vmem:[%s2 + $0x78] sm:$0xff]
  %v30 = vld [vmem:[%s2 + $0x80] sm:$0xff]
  %v31 = vld [vmem:[%s2 + $0x88] sm:$0xff]
  %v32 = vld [vmem:[%s2 + $0x90] sm:$0xff]
  %v33 = vld [vmem:[%s2 + $0x98] sm:$0xff]
  %v34 = vld [vmem:[%s2 + $0xa0] sm:$0xff]
  %v35 = vld [vmem:[%s2 + $0xa8] sm:$0xff]
  %v36 = vld [vmem:[%s2 + $0xb0] sm:$0xff]
  %v37 = vld [vmem:[%s2 + $0xb8] sm:$0xff]
  %v38 = vld [vmem:[%s2 + $0xc0] sm:$0xff]
  %v39 = vld [vmem:[%s2 + $0xc8] sm:$0xff]
  %v40 = vld [vmem:[%s2 + $0xd0] sm:$0xff]
  %v41 = vld [vmem:[%s2 + $0xd8] sm:$0xff]
  %v42 = vld [vmem:[%s2 + $0xe0] sm:$0xff]
  %v43 = vld [vmem:[%s2 + $0xe8] sm:$0xff]
  %v44 = vld [vmem:[%s2 + $0xf0] sm:$0xff]
  %v45 = vld [vmem:[%s2 + $0xf8] sm:$0xff]
  %v46 = vand.u32 2147483647, %v14
  %v47 = vand.u32 2147483647, %v15
  %v48 = vand.u32 2147483647, %v16
  %v49 = vand.u32 2147483647, %v17
  %v50 = vand.u32 2147483647, %v18
  %v51 = vand.u32 2147483647, %v19
  %v52 = vand.u32 2147483647, %v20
  %v53 = vand.u32 2147483647, %v21
  %v54 = vand.u32 2147483647, %v22
  %v55 = vand.u32 2147483647, %v23
  %v56 = vand.u32 2147483647, %v24
  %v57 = vand.u32 2147483647, %v25
  %v58 = vand.u32 2147483647, %v26
  %v59 = vand.u32 2147483647, %v27
  %v60 = vand.u32 2147483647, %v28
  %v61 = vand.u32 2147483647, %v29
  %v62 = vand.u32 2147483647, %v30
  %v63 = vand.u32 2147483647, %v31
  %v64 = vand.u32 2147483647, %v32
  %v65 = vand.u32 2147483647, %v33
  %v66 = vand.u32 2147483647, %v34
  %v67 = vand.u32 2147483647, %v35
  %v68 = vand.u32 2147483647, %v36
  %v69 = vand.u32 2147483647, %v37
  %v70 = vand.u32 2147483647, %v38
  %v71 = vand.u32 2147483647, %v39
  %v72 = vand.u32 2147483647, %v40
  %v73 = vand.u32 2147483647, %v41
  %v74 = vand.u32 2147483647, %v42
  %v75 = vand.u32 2147483647, %v43
  %v76 = vand.u32 2147483647, %v44
  %v77 = vand.u32 2147483647, %v45
  %v78 = vmax.f32 %v46, 1e-06
  %v79 = vmax.f32 %v47, 1e-06
  %v80 = vmax.f32 %v48, 1e-06
  %v81 = vmax.f32 %v49, 1e-06
  %v82 = vmax.f32 %v50, 1e-06
  %v83 = vmax.f32 %v51, 1e-06
  %v84 = vmax.f32 %v52, 1e-06
  %v85 = vmax.f32 %v53, 1e-06
  %v86 = vmax.f32 %v54, 1e-06
  %v87 = vmax.f32 %v55, 1e-06
  %v88 = vmax.f32 %v56, 1e-06
  %v89 = vmax.f32 %v57, 1e-06
  %v90 = vmax.f32 %v58, 1e-06
  %v91 = vmax.f32 %v59, 1e-06
  %v92 = vmax.f32 %v60, 1e-06
  %v93 = vmax.f32 %v61, 1e-06
  %v94 = vmax.f32 %v62, 1e-06
  %v95 = vmax.f32 %v63, 1e-06
  %v96 = vmax.f32 %v64, 1e-06
  %v97 = vmax.f32 %v65, 1e-06
  %v98 = vmax.f32 %v66, 1e-06
  %v99 = vmax.f32 %v67, 1e-06
  %v100 = vmax.f32 %v68, 1e-06
  %v101 = vmax.f32 %v69, 1e-06
  %v102 = vmax.f32 %v70, 1e-06
  %v103 = vmax.f32 %v71, 1e-06
  %v104 = vmax.f32 %v72, 1e-06
  %v105 = vmax.f32 %v73, 1e-06
  %v106 = vmax.f32 %v74, 1e-06
  %v107 = vmax.f32 %v75, 1e-06
  %v108 = vmax.f32 %v76, 1e-06
  %v109 = vmax.f32 %v77, 1e-06
  %v110 = vrcp.pop %v78
  %v111 = vrcp.pop %v79
  %v112 = vrcp.pop %v80
  %v113 = vrcp.pop %v81
  %v114 = vrcp.pop %v82
  %v115 = vrcp.pop %v83
  %v116 = vrcp.pop %v84
  %v117 = vrcp.pop %v85
  %v118 = vrcp.pop %v86
  %v119 = vrcp.pop %v87
  %v120 = vrcp.pop %v88
  %v121 = vrcp.pop %v89
  %v122 = vrcp.pop %v90
  %v123 = vrcp.pop %v91
  %v124 = vrcp.pop %v92
  %v125 = vrcp.pop %v93
  %v126 = vrcp.pop %v94
  %v127 = vrcp.pop %v95
  %v128 = vrcp.pop %v96
  %v129 = vrcp.pop %v97
  %v130 = vrcp.pop %v98
  %v131 = vrcp.pop %v99
  %v132 = vrcp.pop %v100
  %v133 = vrcp.pop %v101
  %v134 = vrcp.pop %v102
  %v135 = vrcp.pop %v103
  %v136 = vrcp.pop %v104
  %v137 = vrcp.pop %v105
  %v138 = vrcp.pop %v106
  %v139 = vrcp.pop %v107
  %v140 = vrcp.pop %v108
  %v141 = vrcp.pop %v109
  %v142 = vmul.f32 %v110, 0.70710677
  %v143 = vmul.f32 %v111, 0.70710677
  %v144 = vmul.f32 %v112, 0.70710677
  %v145 = vmul.f32 %v113, 0.70710677
  %v146 = vmul.f32 %v114, 0.70710677
  %v147 = vmul.f32 %v115, 0.70710677
  %v148 = vmul.f32 %v116, 0.70710677
  %v149 = vmul.f32 %v117, 0.70710677
  %v150 = vmul.f32 %v118, 0.70710677
  %v151 = vmul.f32 %v119, 0.70710677
  %v152 = vmul.f32 %v120, 0.70710677
  %v153 = vmul.f32 %v121, 0.70710677
  %v154 = vmul.f32 %v122, 0.70710677
  %v155 = vmul.f32 %v123, 0.70710677
  %v156 = vmul.f32 %v124, 0.70710677
  %v157 = vmul.f32 %v125, 0.70710677
  %v158 = vmul.f32 %v126, 0.70710677
  %v159 = vmul.f32 %v127, 0.70710677
  %v160 = vmul.f32 %v128, 0.70710677
  %v161 = vmul.f32 %v129, 0.70710677
  %v162 = vmul.f32 %v130, 0.70710677
  %v163 = vmul.f32 %v131, 0.70710677
  %v164 = vmul.f32 %v132, 0.70710677
  %v165 = vmul.f32 %v133, 0.70710677
  %v166 = vmul.f32 %v134, 0.70710677
  %v167 = vmul.f32 %v135, 0.70710677
  %v168 = vmul.f32 %v136, 0.70710677
  %v169 = vmul.f32 %v137, 0.70710677
  %v170 = vmul.f32 %v138, 0.70710677
  %v171 = vmul.f32 %v139, 0.70710677
  %v172 = vmul.f32 %v140, 0.70710677
  %v173 = vmul.f32 %v141, 0.70710677
  %v174 = vld [vmem:[%s0] sm:$0xff]
  %v175 = vld [vmem:[%s0 + $0x8] sm:$0xff]
  %v176 = vld [vmem:[%s0 + $0x10] sm:$0xff]
  %v177 = vld [vmem:[%s0 + $0x18] sm:$0xff]
  %v178 = vld [vmem:[%s0 + $0x20] sm:$0xff]
  %v179 = vld [vmem:[%s0 + $0x28] sm:$0xff]
  %v180 = vld [vmem:[%s0 + $0x30] sm:$0xff]
  %v181 = vld [vmem:[%s0 + $0x38] sm:$0xff]
  %v182 = vld [vmem:[%s0 + $0x40] sm:$0xff]
  %v183 = vld [vmem:[%s0 + $0x48] sm:$0xff]
  %v184 = vld [vmem:[%s0 + $0x50] sm:$0xff]
  %v185 = vld [vmem:[%s0 + $0x58] sm:$0xff]
  %v186 = vld [vmem:[%s0 + $0x60] sm:$0xff]
  %v187 = vld [vmem:[%s0 + $0x68] sm:$0xff]
  %v188 = vld [vmem:[%s0 + $0x70] sm:$0xff]
  %v189 = vld [vmem:[%s0 + $0x78] sm:$0xff]
  %v190 = vld [vmem:[%s0 + $0x80] sm:$0xff]
  %v191 = vld [vmem:[%s0 + $0x88] sm:$0xff]
  %v192 = vld [vmem:[%s0 + $0x90] sm:$0xff]
  %v193 = vld [vmem:[%s0 + $0x98] sm:$0xff]
  %v194 = vld [vmem:[%s0 + $0xa0] sm:$0xff]
  %v195 = vld [vmem:[%s0 + $0xa8] sm:$0xff]
  %v196 = vld [vmem:[%s0 + $0xb0] sm:$0xff]
  %v197 = vld [vmem:[%s0 + $0xb8] sm:$0xff]
  %v198 = vld [vmem:[%s0 + $0xc0] sm:$0xff]
  %v199 = vld [vmem:[%s0 + $0xc8] sm:$0xff]
  %v200 = vld [vmem:[%s0 + $0xd0] sm:$0xff]
  %v201 = vld [vmem:[%s0 + $0xd8] sm:$0xff]
  %v202 = vld [vmem:[%s0 + $0xe0] sm:$0xff]
  %v203 = vld [vmem:[%s0 + $0xe8] sm:$0xff]
  %v204 = vld [vmem:[%s0 + $0xf0] sm:$0xff]
  %v205 = vld [vmem:[%s0 + $0xf8] sm:$0xff]
  %v206 = vld [vmem:[%s1] sm:$0xff]
  %v207 = vld [vmem:[%s1 + $0x8] sm:$0xff]
  %v208 = vld [vmem:[%s1 + $0x10] sm:$0xff]
  %v209 = vld [vmem:[%s1 + $0x18] sm:$0xff]
  %v210 = vld [vmem:[%s1 + $0x20] sm:$0xff]
  %v211 = vld [vmem:[%s1 + $0x28] sm:$0xff]
  %v212 = vld [vmem:[%s1 + $0x30] sm:$0xff]
  %v213 = vld [vmem:[%s1 + $0x38] sm:$0xff]
  %v214 = vld [vmem:[%s1 + $0x40] sm:$0xff]
  %v215 = vld [vmem:[%s1 + $0x48] sm:$0xff]
  %v216 = vld [vmem:[%s1 + $0x50] sm:$0xff]
  %v217 = vld [vmem:[%s1 + $0x58] sm:$0xff]
  %v218 = vld [vmem:[%s1 + $0x60] sm:$0xff]
  %v219 = vld [vmem:[%s1 + $0x68] sm:$0xff]
  %v220 = vld [vmem:[%s1 + $0x70] sm:$0xff]
  %v221 = vld [vmem:[%s1 + $0x78] sm:$0xff]
  %v222 = vld [vmem:[%s1 + $0x80] sm:$0xff]
  %v223 = vld [vmem:[%s1 + $0x88] sm:$0xff]
  %v224 = vld [vmem:[%s1 + $0x90] sm:$0xff]
  %v225 = vld [vmem:[%s1 + $0x98] sm:$0xff]
  %v226 = vld [vmem:[%s1 + $0xa0] sm:$0xff]
  %v227 = vld [vmem:[%s1 + $0xa8] sm:$0xff]
  %v228 = vld [vmem:[%s1 + $0xb0] sm:$0xff]
  %v229 = vld [vmem:[%s1 + $0xb8] sm:$0xff]
  %v230 = vld [vmem:[%s1 + $0xc0] sm:$0xff]
  %v231 = vld [vmem:[%s1 + $0xc8] sm:$0xff]
  %v232 = vld [vmem:[%s1 + $0xd0] sm:$0xff]
  %v233 = vld [vmem:[%s1 + $0xd8] sm:$0xff]
  %v234 = vld [vmem:[%s1 + $0xe0] sm:$0xff]
  %v235 = vld [vmem:[%s1 + $0xe8] sm:$0xff]
  %v236 = vld [vmem:[%s1 + $0xf0] sm:$0xff]
  %v237 = vld [vmem:[%s1 + $0xf8] sm:$0xff]
  %v238 = vsub.f32 %v174, %v206
  %v239 = vsub.f32 %v175, %v207
  %v240 = vsub.f32 %v176, %v208
  %v241 = vsub.f32 %v177, %v209
  %v242 = vsub.f32 %v178, %v210
  %v243 = vsub.f32 %v179, %v211
  %v244 = vsub.f32 %v180, %v212
  %v245 = vsub.f32 %v181, %v213
  %v246 = vsub.f32 %v182, %v214
  %v247 = vsub.f32 %v183, %v215
  %v248 = vsub.f32 %v184, %v216
  %v249 = vsub.f32 %v185, %v217
  %v250 = vsub.f32 %v186, %v218
  %v251 = vsub.f32 %v187, %v219
  %v252 = vsub.f32 %v188, %v220
  %v253 = vsub.f32 %v189, %v221
  %v254 = vsub.f32 %v190, %v222
  %v255 = vsub.f32 %v191, %v223
  %v256 = vsub.f32 %v192, %v224
  %v257 = vsub.f32 %v193, %v225
  %v258 = vsub.f32 %v194, %v226
  %v259 = vsub.f32 %v195, %v227
  %v260 = vsub.f32 %v196, %v228
  %v261 = vsub.f32 %v197, %v229
  %v262 = vsub.f32 %v198, %v230
  %v263 = vsub.f32 %v199, %v231
  %v264 = vsub.f32 %v200, %v232
  %v265 = vsub.f32 %v201, %v233
  %v266 = vsub.f32 %v202, %v234
  %v267 = vsub.f32 %v203, %v235
  %v268 = vsub.f32 %v204, %v236
  %v269 = vsub.f32 %v205, %v237
  %v270 = vadd.f32 %v238, 0.5
  %v271 = vadd.f32 %v239, 0.5
  %v272 = vadd.f32 %v240, 0.5
  %v273 = vadd.f32 %v241, 0.5
  %v274 = vadd.f32 %v242, 0.5
  %v275 = vadd.f32 %v243, 0.5
  %v276 = vadd.f32 %v244, 0.5
  %v277 = vadd.f32 %v245, 0.5
  %v278 = vadd.f32 %v246, 0.5
  %v279 = vadd.f32 %v247, 0.5
  %v280 = vadd.f32 %v248, 0.5
  %v281 = vadd.f32 %v249, 0.5
  %v282 = vadd.f32 %v250, 0.5
  %v283 = vadd.f32 %v251, 0.5
  %v284 = vadd.f32 %v252, 0.5
  %v285 = vadd.f32 %v253, 0.5
  %v286 = vadd.f32 %v254, 0.5
  %v287 = vadd.f32 %v255, 0.5
  %v288 = vadd.f32 %v256, 0.5
  %v289 = vadd.f32 %v257, 0.5
  %v290 = vadd.f32 %v258, 0.5
  %v291 = vadd.f32 %v259, 0.5
  %v292 = vadd.f32 %v260, 0.5
  %v293 = vadd.f32 %v261, 0.5
  %v294 = vadd.f32 %v262, 0.5
  %v295 = vadd.f32 %v263, 0.5
  %v296 = vadd.f32 %v264, 0.5
  %v297 = vadd.f32 %v265, 0.5
  %v298 = vadd.f32 %v266, 0.5
  %v299 = vadd.f32 %v267, 0.5
  %v300 = vadd.f32 %v268, 0.5
  %v301 = vadd.f32 %v269, 0.5
  %v302 = vmul.f32 %v270, %v142
  %v303 = vmul.f32 %v271, %v143
  %v304 = vmul.f32 %v272, %v144
  %v305 = vmul.f32 %v273, %v145
  %v306 = vmul.f32 %v274, %v146
  %v307 = vmul.f32 %v275, %v147
  %v308 = vmul.f32 %v276, %v148
  %v309 = vmul.f32 %v277, %v149
  %v310 = vmul.f32 %v278, %v150
  %v311 = vmul.f32 %v279, %v151
  %v312 = vmul.f32 %v280, %v152
  %v313 = vmul.f32 %v281, %v153
  %v314 = vmul.f32 %v282, %v154
  %v315 = vmul.f32 %v283, %v155
  %v316 = vmul.f32 %v284, %v156
  %v317 = vmul.f32 %v285, %v157
  %v318 = vmul.f32 %v286, %v158
  %v319 = vmul.f32 %v287, %v159
  %v320 = vmul.f32 %v288, %v160
  %v321 = vmul.f32 %v289, %v161
  %v322 = vmul.f32 %v290, %v162
  %v323 = vmul.f32 %v291, %v163
  %v324 = vmul.f32 %v292, %v164
  %v325 = vmul.f32 %v293, %v165
  %v326 = vmul.f32 %v294, %v166
  %v327 = vmul.f32 %v295, %v167
  %v328 = vmul.f32 %v296, %v168
  %v329 = vmul.f32 %v297, %v169
  %v330 = vmul.f32 %v298, %v170
  %v331 = vmul.f32 %v299, %v171
  %v332 = vmul.f32 %v300, %v172
  %v333 = vmul.f32 %v301, %v173
  %v334 = vand.u32 2147483647, %v302
  %v335 = vand.u32 2147483647, %v303
  %v336 = vand.u32 2147483647, %v304
  %v337 = vand.u32 2147483647, %v305
  %v338 = vand.u32 2147483647, %v306
  %v339 = vand.u32 2147483647, %v307
  %v340 = vand.u32 2147483647, %v308
  %v341 = vand.u32 2147483647, %v309
  %v342 = vand.u32 2147483647, %v310
  %v343 = vand.u32 2147483647, %v311
  %v344 = vand.u32 2147483647, %v312
  %v345 = vand.u32 2147483647, %v313
  %v346 = vand.u32 2147483647, %v314
  %v347 = vand.u32 2147483647, %v315
  %v348 = vand.u32 2147483647, %v316
  %v349 = vand.u32 2147483647, %v317
  %v350 = vand.u32 2147483647, %v318
  %v351 = vand.u32 2147483647, %v319
  %v352 = vand.u32 2147483647, %v320
  %v353 = vand.u32 2147483647, %v321
  %v354 = vand.u32 2147483647, %v322
  %v355 = vand.u32 2147483647, %v323
  %v356 = vand.u32 2147483647, %v324
  %v357 = vand.u32 2147483647, %v325
  %v358 = vand.u32 2147483647, %v326
  %v359 = vand.u32 2147483647, %v327
  %v360 = vand.u32 2147483647, %v328
  %v361 = vand.u32 2147483647, %v329
  %v362 = vand.u32 2147483647, %v330
  %v363 = vand.u32 2147483647, %v331
  %v364 = vand.u32 2147483647, %v332
  %v365 = vand.u32 2147483647, %v333
  %v366 = vmul.f32 %v334, 0.3275911
  %v367 = vmul.f32 %v335, 0.3275911
  %v368 = vmul.f32 %v336, 0.3275911
  %v369 = vmul.f32 %v337, 0.3275911
  %v370 = vmul.f32 %v338, 0.3275911
  %v371 = vmul.f32 %v339, 0.3275911
  %v372 = vmul.f32 %v340, 0.3275911
  %v373 = vmul.f32 %v341, 0.3275911
  %v374 = vmul.f32 %v342, 0.3275911
  %v375 = vmul.f32 %v343, 0.3275911
  %v376 = vmul.f32 %v344, 0.3275911
  %v377 = vmul.f32 %v345, 0.3275911
  %v378 = vmul.f32 %v346, 0.3275911
  %v379 = vmul.f32 %v347, 0.3275911
  %v380 = vmul.f32 %v348, 0.3275911
  %v381 = vmul.f32 %v349, 0.3275911
  %v382 = vmul.f32 %v350, 0.3275911
  %v383 = vmul.f32 %v351, 0.3275911
  %v384 = vmul.f32 %v352, 0.3275911
  %v385 = vmul.f32 %v353, 0.3275911
  %v386 = vmul.f32 %v354, 0.3275911
  %v387 = vmul.f32 %v355, 0.3275911
  %v388 = vmul.f32 %v356, 0.3275911
  %v389 = vmul.f32 %v357, 0.3275911
  %v390 = vmul.f32 %v358, 0.3275911
  %v391 = vmul.f32 %v359, 0.3275911
  %v392 = vmul.f32 %v360, 0.3275911
  %v393 = vmul.f32 %v361, 0.3275911
  %v394 = vmul.f32 %v362, 0.3275911
  %v395 = vmul.f32 %v363, 0.3275911
  %v396 = vmul.f32 %v364, 0.3275911
  %v397 = vmul.f32 %v365, 0.3275911
  %v398 = vadd.f32 %v366, 1.0
  %v399 = vadd.f32 %v367, 1.0
  %v400 = vadd.f32 %v368, 1.0
  %v401 = vadd.f32 %v369, 1.0
  %v402 = vadd.f32 %v370, 1.0
  %v403 = vadd.f32 %v371, 1.0
  %v404 = vadd.f32 %v372, 1.0
  %v405 = vadd.f32 %v373, 1.0
  %v406 = vadd.f32 %v374, 1.0
  %v407 = vadd.f32 %v375, 1.0
  %v408 = vadd.f32 %v376, 1.0
  %v409 = vadd.f32 %v377, 1.0
  %v410 = vadd.f32 %v378, 1.0
  %v411 = vadd.f32 %v379, 1.0
  %v412 = vadd.f32 %v380, 1.0
  %v413 = vadd.f32 %v381, 1.0
  %v414 = vadd.f32 %v382, 1.0
  %v415 = vadd.f32 %v383, 1.0
  %v416 = vadd.f32 %v384, 1.0
  %v417 = vadd.f32 %v385, 1.0
  %v418 = vadd.f32 %v386, 1.0
  %v419 = vadd.f32 %v387, 1.0
  %v420 = vadd.f32 %v388, 1.0
  %v421 = vadd.f32 %v389, 1.0
  %v422 = vadd.f32 %v390, 1.0
  %v423 = vadd.f32 %v391, 1.0
  %v424 = vadd.f32 %v392, 1.0
  %v425 = vadd.f32 %v393, 1.0
  %v426 = vadd.f32 %v394, 1.0
  %v427 = vadd.f32 %v395, 1.0
  %v428 = vadd.f32 %v396, 1.0
  %v429 = vadd.f32 %v397, 1.0
  %v430 = vrcp.pop %v398
  %v431 = vrcp.pop %v399
  %v432 = vrcp.pop %v400
  %v433 = vrcp.pop %v401
  %v434 = vrcp.pop %v402
  %v435 = vrcp.pop %v403
  %v436 = vrcp.pop %v404
  %v437 = vrcp.pop %v405
  %v438 = vrcp.pop %v406
  %v439 = vrcp.pop %v407
  %v440 = vrcp.pop %v408
  %v441 = vrcp.pop %v409
  %v442 = vrcp.pop %v410
  %v443 = vrcp.pop %v411
  %v444 = vrcp.pop %v412
  %v445 = vrcp.pop %v413
  %v446 = vrcp.pop %v414
  %v447 = vrcp.pop %v415
  %v448 = vrcp.pop %v416
  %v449 = vrcp.pop %v417
  %v450 = vrcp.pop %v418
  %v451 = vrcp.pop %v419
  %v452 = vrcp.pop %v420
  %v453 = vrcp.pop %v421
  %v454 = vrcp.pop %v422
  %v455 = vrcp.pop %v423
  %v456 = vrcp.pop %v424
  %v457 = vrcp.pop %v425
  %v458 = vrcp.pop %v426
  %v459 = vrcp.pop %v427
  %v460 = vrcp.pop %v428
  %v461 = vrcp.pop %v429
  %v462 = vmul.f32 %v430, 1.0614054
  %v463 = vmul.f32 %v431, 1.0614054
  %v464 = vmul.f32 %v432, 1.0614054
  %v465 = vmul.f32 %v433, 1.0614054
  %v466 = vmul.f32 %v434, 1.0614054
  %v467 = vmul.f32 %v435, 1.0614054
  %v468 = vmul.f32 %v436, 1.0614054
  %v469 = vmul.f32 %v437, 1.0614054
  %v470 = vmul.f32 %v438, 1.0614054
  %v471 = vmul.f32 %v439, 1.0614054
  %v472 = vmul.f32 %v440, 1.0614054
  %v473 = vmul.f32 %v441, 1.0614054
  %v474 = vmul.f32 %v442, 1.0614054
  %v475 = vmul.f32 %v443, 1.0614054
  %v476 = vmul.f32 %v444, 1.0614054
  %v477 = vmul.f32 %v445, 1.0614054
  %v478 = vmul.f32 %v446, 1.0614054
  %v479 = vmul.f32 %v447, 1.0614054
  %v480 = vmul.f32 %v448, 1.0614054
  %v481 = vmul.f32 %v449, 1.0614054
  %v482 = vmul.f32 %v450, 1.0614054
  %v483 = vmul.f32 %v451, 1.0614054
  %v484 = vmul.f32 %v452, 1.0614054
  %v485 = vmul.f32 %v453, 1.0614054
  %v486 = vmul.f32 %v454, 1.0614054
  %v487 = vmul.f32 %v455, 1.0614054
  %v488 = vmul.f32 %v456, 1.0614054
  %v489 = vmul.f32 %v457, 1.0614054
  %v490 = vmul.f32 %v458, 1.0614054
  %v491 = vmul.f32 %v459, 1.0614054
  %v492 = vmul.f32 %v460, 1.0614054
  %v493 = vmul.f32 %v461, 1.0614054
  %v494 = vadd.f32 %v462, -1.4531521
  %v495 = vadd.f32 %v463, -1.4531521
  %v496 = vadd.f32 %v464, -1.4531521
  %v497 = vadd.f32 %v465, -1.4531521
  %v498 = vadd.f32 %v466, -1.4531521
  %v499 = vadd.f32 %v467, -1.4531521
  %v500 = vadd.f32 %v468, -1.4531521
  %v501 = vadd.f32 %v469, -1.4531521
  %v502 = vadd.f32 %v470, -1.4531521
  %v503 = vadd.f32 %v471, -1.4531521
  %v504 = vadd.f32 %v472, -1.4531521
  %v505 = vadd.f32 %v473, -1.4531521
  %v506 = vadd.f32 %v474, -1.4531521
  %v507 = vadd.f32 %v475, -1.4531521
  %v508 = vadd.f32 %v476, -1.4531521
  %v509 = vadd.f32 %v477, -1.4531521
  %v510 = vadd.f32 %v478, -1.4531521
  %v511 = vadd.f32 %v479, -1.4531521
  %v512 = vadd.f32 %v480, -1.4531521
  %v513 = vadd.f32 %v481, -1.4531521
  %v514 = vadd.f32 %v482, -1.4531521
  %v515 = vadd.f32 %v483, -1.4531521
  %v516 = vadd.f32 %v484, -1.4531521
  %v517 = vadd.f32 %v485, -1.4531521
  %v518 = vadd.f32 %v486, -1.4531521
  %v519 = vadd.f32 %v487, -1.4531521
  %v520 = vadd.f32 %v488, -1.4531521
  %v521 = vadd.f32 %v489, -1.4531521
  %v522 = vadd.f32 %v490, -1.4531521
  %v523 = vadd.f32 %v491, -1.4531521
  %v524 = vadd.f32 %v492, -1.4531521
  %v525 = vadd.f32 %v493, -1.4531521
  %v526 = vmul.f32 %v494, %v430
  %v527 = vmul.f32 %v495, %v431
  %v528 = vmul.f32 %v496, %v432
  %v529 = vmul.f32 %v497, %v433
  %v530 = vmul.f32 %v498, %v434
  %v531 = vmul.f32 %v499, %v435
  %v532 = vmul.f32 %v500, %v436
  %v533 = vmul.f32 %v501, %v437
  %v534 = vmul.f32 %v502, %v438
  %v535 = vmul.f32 %v503, %v439
  %v536 = vmul.f32 %v504, %v440
  %v537 = vmul.f32 %v505, %v441
  %v538 = vmul.f32 %v506, %v442
  %v539 = vmul.f32 %v507, %v443
  %v540 = vmul.f32 %v508, %v444
  %v541 = vmul.f32 %v509, %v445
  %v542 = vmul.f32 %v510, %v446
  %v543 = vmul.f32 %v511, %v447
  %v544 = vmul.f32 %v512, %v448
  %v545 = vmul.f32 %v513, %v449
  %v546 = vmul.f32 %v514, %v450
  %v547 = vmul.f32 %v515, %v451
  %v548 = vmul.f32 %v516, %v452
  %v549 = vmul.f32 %v517, %v453
  %v550 = vmul.f32 %v518, %v454
  %v551 = vmul.f32 %v519, %v455
  %v552 = vmul.f32 %v520, %v456
  %v553 = vmul.f32 %v521, %v457
  %v554 = vmul.f32 %v522, %v458
  %v555 = vmul.f32 %v523, %v459
  %v556 = vmul.f32 %v524, %v460
  %v557 = vmul.f32 %v525, %v461
  %v558 = vadd.f32 %v526, 1.4214138
  %v559 = vadd.f32 %v527, 1.4214138
  %v560 = vadd.f32 %v528, 1.4214138
  %v561 = vadd.f32 %v529, 1.4214138
  %v562 = vadd.f32 %v530, 1.4214138
  %v563 = vadd.f32 %v531, 1.4214138
  %v564 = vadd.f32 %v532, 1.4214138
  %v565 = vadd.f32 %v533, 1.4214138
  %v566 = vadd.f32 %v534, 1.4214138
  %v567 = vadd.f32 %v535, 1.4214138
  %v568 = vadd.f32 %v536, 1.4214138
  %v569 = vadd.f32 %v537, 1.4214138
  %v570 = vadd.f32 %v538, 1.4214138
  %v571 = vadd.f32 %v539, 1.4214138
  %v572 = vadd.f32 %v540, 1.4214138
  %v573 = vadd.f32 %v541, 1.4214138
  %v574 = vadd.f32 %v542, 1.4214138
  %v575 = vadd.f32 %v543, 1.4214138
  %v576 = vadd.f32 %v544, 1.4214138
  %v577 = vadd.f32 %v545, 1.4214138
  %v578 = vadd.f32 %v546, 1.4214138
  %v579 = vadd.f32 %v547, 1.4214138
  %v580 = vadd.f32 %v548, 1.4214138
  %v581 = vadd.f32 %v549, 1.4214138
  %v582 = vadd.f32 %v550, 1.4214138
  %v583 = vadd.f32 %v551, 1.4214138
  %v584 = vadd.f32 %v552, 1.4214138
  %v585 = vadd.f32 %v553, 1.4214138
  %v586 = vadd.f32 %v554, 1.4214138
  %v587 = vadd.f32 %v555, 1.4214138
  %v588 = vadd.f32 %v556, 1.4214138
  %v589 = vadd.f32 %v557, 1.4214138
  %v590 = vmul.f32 %v558, %v430
  %v591 = vmul.f32 %v559, %v431
  %v592 = vmul.f32 %v560, %v432
  %v593 = vmul.f32 %v561, %v433
  %v594 = vmul.f32 %v562, %v434
  %v595 = vmul.f32 %v563, %v435
  %v596 = vmul.f32 %v564, %v436
  %v597 = vmul.f32 %v565, %v437
  %v598 = vmul.f32 %v566, %v438
  %v599 = vmul.f32 %v567, %v439
  %v600 = vmul.f32 %v568, %v440
  %v601 = vmul.f32 %v569, %v441
  %v602 = vmul.f32 %v570, %v442
  %v603 = vmul.f32 %v571, %v443
  %v604 = vmul.f32 %v572, %v444
  %v605 = vmul.f32 %v573, %v445
  %v606 = vmul.f32 %v574, %v446
  %v607 = vmul.f32 %v575, %v447
  %v608 = vmul.f32 %v576, %v448
  %v609 = vmul.f32 %v577, %v449
  %v610 = vmul.f32 %v578, %v450
  %v611 = vmul.f32 %v579, %v451
  %v612 = vmul.f32 %v580, %v452
  %v613 = vmul.f32 %v581, %v453
  %v614 = vmul.f32 %v582, %v454
  %v615 = vmul.f32 %v583, %v455
  %v616 = vmul.f32 %v584, %v456
  %v617 = vmul.f32 %v585, %v457
  %v618 = vmul.f32 %v586, %v458
  %v619 = vmul.f32 %v587, %v459
  %v620 = vmul.f32 %v588, %v460
  %v621 = vmul.f32 %v589, %v461
  %v622 = vadd.f32 %v590, -0.28449672
  %v623 = vadd.f32 %v591, -0.28449672
  %v624 = vadd.f32 %v592, -0.28449672
  %v625 = vadd.f32 %v593, -0.28449672
  %v626 = vadd.f32 %v594, -0.28449672
  %v627 = vadd.f32 %v595, -0.28449672
  %v628 = vadd.f32 %v596, -0.28449672
  %v629 = vadd.f32 %v597, -0.28449672
  %v630 = vadd.f32 %v598, -0.28449672
  %v631 = vadd.f32 %v599, -0.28449672
  %v632 = vadd.f32 %v600, -0.28449672
  %v633 = vadd.f32 %v601, -0.28449672
  %v634 = vadd.f32 %v602, -0.28449672
  %v635 = vadd.f32 %v603, -0.28449672
  %v636 = vadd.f32 %v604, -0.28449672
  %v637 = vadd.f32 %v605, -0.28449672
  %v638 = vadd.f32 %v606, -0.28449672
  %v639 = vadd.f32 %v607, -0.28449672
  %v640 = vadd.f32 %v608, -0.28449672
  %v641 = vadd.f32 %v609, -0.28449672
  %v642 = vadd.f32 %v610, -0.28449672
  %v643 = vadd.f32 %v611, -0.28449672
  %v644 = vadd.f32 %v612, -0.28449672
  %v645 = vadd.f32 %v613, -0.28449672
  %v646 = vadd.f32 %v614, -0.28449672
  %v647 = vadd.f32 %v615, -0.28449672
  %v648 = vadd.f32 %v616, -0.28449672
  %v649 = vadd.f32 %v617, -0.28449672
  %v650 = vadd.f32 %v618, -0.28449672
  %v651 = vadd.f32 %v619, -0.28449672
  %v652 = vadd.f32 %v620, -0.28449672
  %v653 = vadd.f32 %v621, -0.28449672
  %v654 = vmul.f32 %v622, %v430
  %v655 = vmul.f32 %v623, %v431
  %v656 = vmul.f32 %v624, %v432
  %v657 = vmul.f32 %v625, %v433
  %v658 = vmul.f32 %v626, %v434
  %v659 = vmul.f32 %v627, %v435
  %v660 = vmul.f32 %v628, %v436
  %v661 = vmul.f32 %v629, %v437
  %v662 = vmul.f32 %v630, %v438
  %v663 = vmul.f32 %v631, %v439
  %v664 = vmul.f32 %v632, %v440
  %v665 = vmul.f32 %v633, %v441
  %v666 = vmul.f32 %v634, %v442
  %v667 = vmul.f32 %v635, %v443
  %v668 = vmul.f32 %v636, %v444
  %v669 = vmul.f32 %v637, %v445
  %v670 = vmul.f32 %v638, %v446
  %v671 = vmul.f32 %v639, %v447
  %v672 = vmul.f32 %v640, %v448
  %v673 = vmul.f32 %v641, %v449
  %v674 = vmul.f32 %v642, %v450
  %v675 = vmul.f32 %v643, %v451
  %v676 = vmul.f32 %v644, %v452
  %v677 = vmul.f32 %v645, %v453
  %v678 = vmul.f32 %v646, %v454
  %v679 = vmul.f32 %v647, %v455
  %v680 = vmul.f32 %v648, %v456
  %v681 = vmul.f32 %v649, %v457
  %v682 = vmul.f32 %v650, %v458
  %v683 = vmul.f32 %v651, %v459
  %v684 = vmul.f32 %v652, %v460
  %v685 = vmul.f32 %v653, %v461
  %v686 = vadd.f32 %v654, 0.2548296
  %v687 = vadd.f32 %v655, 0.2548296
  %v688 = vadd.f32 %v656, 0.2548296
  %v689 = vadd.f32 %v657, 0.2548296
  %v690 = vadd.f32 %v658, 0.2548296
  %v691 = vadd.f32 %v659, 0.2548296
  %v692 = vadd.f32 %v660, 0.2548296
  %v693 = vadd.f32 %v661, 0.2548296
  %v694 = vadd.f32 %v662, 0.2548296
  %v695 = vadd.f32 %v663, 0.2548296
  %v696 = vadd.f32 %v664, 0.2548296
  %v697 = vadd.f32 %v665, 0.2548296
  %v698 = vadd.f32 %v666, 0.2548296
  %v699 = vadd.f32 %v667, 0.2548296
  %v700 = vadd.f32 %v668, 0.2548296
  %v701 = vadd.f32 %v669, 0.2548296
  %v702 = vadd.f32 %v670, 0.2548296
  %v703 = vadd.f32 %v671, 0.2548296
  %v704 = vadd.f32 %v672, 0.2548296
  %v705 = vadd.f32 %v673, 0.2548296
  %v706 = vadd.f32 %v674, 0.2548296
  %v707 = vadd.f32 %v675, 0.2548296
  %v708 = vadd.f32 %v676, 0.2548296
  %v709 = vadd.f32 %v677, 0.2548296
  %v710 = vadd.f32 %v678, 0.2548296
  %v711 = vadd.f32 %v679, 0.2548296
  %v712 = vadd.f32 %v680, 0.2548296
  %v713 = vadd.f32 %v681, 0.2548296
  %v714 = vadd.f32 %v682, 0.2548296
  %v715 = vadd.f32 %v683, 0.2548296
  %v716 = vadd.f32 %v684, 0.2548296
  %v717 = vadd.f32 %v685, 0.2548296
  %v718 = vmul.f32 %v686, %v430
  %v719 = vmul.f32 %v687, %v431
  %v720 = vmul.f32 %v688, %v432
  %v721 = vmul.f32 %v689, %v433
  %v722 = vmul.f32 %v690, %v434
  %v723 = vmul.f32 %v691, %v435
  %v724 = vmul.f32 %v692, %v436
  %v725 = vmul.f32 %v693, %v437
  %v726 = vmul.f32 %v694, %v438
  %v727 = vmul.f32 %v695, %v439
  %v728 = vmul.f32 %v696, %v440
  %v729 = vmul.f32 %v697, %v441
  %v730 = vmul.f32 %v698, %v442
  %v731 = vmul.f32 %v699, %v443
  %v732 = vmul.f32 %v700, %v444
  %v733 = vmul.f32 %v701, %v445
  %v734 = vmul.f32 %v702, %v446
  %v735 = vmul.f32 %v703, %v447
  %v736 = vmul.f32 %v704, %v448
  %v737 = vmul.f32 %v705, %v449
  %v738 = vmul.f32 %v706, %v450
  %v739 = vmul.f32 %v707, %v451
  %v740 = vmul.f32 %v708, %v452
  %v741 = vmul.f32 %v709, %v453
  %v742 = vmul.f32 %v710, %v454
  %v743 = vmul.f32 %v711, %v455
  %v744 = vmul.f32 %v712, %v456
  %v745 = vmul.f32 %v713, %v457
  %v746 = vmul.f32 %v714, %v458
  %v747 = vmul.f32 %v715, %v459
  %v748 = vmul.f32 %v716, %v460
  %v749 = vmul.f32 %v717, %v461
  %v750 = vsub.f32 0.0, %v334
  %v751 = vsub.f32 0.0, %v335
  %v752 = vsub.f32 0.0, %v336
  %v753 = vsub.f32 0.0, %v337
  %v754 = vsub.f32 0.0, %v338
  %v755 = vsub.f32 0.0, %v339
  %v756 = vsub.f32 0.0, %v340
  %v757 = vsub.f32 0.0, %v341
  %v758 = vsub.f32 0.0, %v342
  %v759 = vsub.f32 0.0, %v343
  %v760 = vsub.f32 0.0, %v344
  %v761 = vsub.f32 0.0, %v345
  %v762 = vsub.f32 0.0, %v346
  %v763 = vsub.f32 0.0, %v347
  %v764 = vsub.f32 0.0, %v348
  %v765 = vsub.f32 0.0, %v349
  %v766 = vsub.f32 0.0, %v350
  %v767 = vsub.f32 0.0, %v351
  %v768 = vsub.f32 0.0, %v352
  %v769 = vsub.f32 0.0, %v353
  %v770 = vsub.f32 0.0, %v354
  %v771 = vsub.f32 0.0, %v355
  %v772 = vsub.f32 0.0, %v356
  %v773 = vsub.f32 0.0, %v357
  %v774 = vsub.f32 0.0, %v358
  %v775 = vsub.f32 0.0, %v359
  %v776 = vsub.f32 0.0, %v360
  %v777 = vsub.f32 0.0, %v361
  %v778 = vsub.f32 0.0, %v362
  %v779 = vsub.f32 0.0, %v363
  %v780 = vsub.f32 0.0, %v364
  %v781 = vsub.f32 0.0, %v365
  %v782 = vmul.f32 %v750, %v334
  %v783 = vmul.f32 %v751, %v335
  %v784 = vmul.f32 %v752, %v336
  %v785 = vmul.f32 %v753, %v337
  %v786 = vmul.f32 %v754, %v338
  %v787 = vmul.f32 %v755, %v339
  %v788 = vmul.f32 %v756, %v340
  %v789 = vmul.f32 %v757, %v341
  %v790 = vmul.f32 %v758, %v342
  %v791 = vmul.f32 %v759, %v343
  %v792 = vmul.f32 %v760, %v344
  %v793 = vmul.f32 %v761, %v345
  %v794 = vmul.f32 %v762, %v346
  %v795 = vmul.f32 %v763, %v347
  %v796 = vmul.f32 %v764, %v348
  %v797 = vmul.f32 %v765, %v349
  %v798 = vmul.f32 %v766, %v350
  %v799 = vmul.f32 %v767, %v351
  %v800 = vmul.f32 %v768, %v352
  %v801 = vmul.f32 %v769, %v353
  %v802 = vmul.f32 %v770, %v354
  %v803 = vmul.f32 %v771, %v355
  %v804 = vmul.f32 %v772, %v356
  %v805 = vmul.f32 %v773, %v357
  %v806 = vmul.f32 %v774, %v358
  %v807 = vmul.f32 %v775, %v359
  %v808 = vmul.f32 %v776, %v360
  %v809 = vmul.f32 %v777, %v361
  %v810 = vmul.f32 %v778, %v362
  %v811 = vmul.f32 %v779, %v363
  %v812 = vmul.f32 %v780, %v364
  %v813 = vmul.f32 %v781, %v365
  %v814 = vmul.f32 %v782, 1.442695
  %v815 = vpow.pop %v814
  %v816 = vmul.f32 %v783, 1.442695
  %v817 = vpow.pop %v816
  %v818 = vmul.f32 %v784, 1.442695
  %v819 = vpow.pop %v818
  %v820 = vmul.f32 %v785, 1.442695
  %v821 = vpow.pop %v820
  %v822 = vmul.f32 %v786, 1.442695
  %v823 = vpow.pop %v822
  %v824 = vmul.f32 %v787, 1.442695
  %v825 = vpow.pop %v824
  %v826 = vmul.f32 %v788, 1.442695
  %v827 = vpow.pop %v826
  %v828 = vmul.f32 %v789, 1.442695
  %v829 = vpow.pop %v828
  %v830 = vmul.f32 %v790, 1.442695
  %v831 = vpow.pop %v830
  %v832 = vmul.f32 %v791, 1.442695
  %v833 = vpow.pop %v832
  %v834 = vmul.f32 %v792, 1.442695
  %v835 = vpow.pop %v834
  %v836 = vmul.f32 %v793, 1.442695
  %v837 = vpow.pop %v836
  %v838 = vmul.f32 %v794, 1.442695
  %v839 = vpow.pop %v838
  %v840 = vmul.f32 %v795, 1.442695
  %v841 = vpow.pop %v840
  %v842 = vmul.f32 %v796, 1.442695
  %v843 = vpow.pop %v842
  %v844 = vmul.f32 %v797, 1.442695
  %v845 = vpow.pop %v844
  %v846 = vmul.f32 %v798, 1.442695
  %v847 = vpow.pop %v846
  %v848 = vmul.f32 %v799, 1.442695
  %v849 = vpow.pop %v848
  %v850 = vmul.f32 %v800, 1.442695
  %v851 = vpow.pop %v850
  %v852 = vmul.f32 %v801, 1.442695
  %v853 = vpow.pop %v852
  %v854 = vmul.f32 %v802, 1.442695
  %v855 = vpow.pop %v854
  %v856 = vmul.f32 %v803, 1.442695
  %v857 = vpow.pop %v856
  %v858 = vmul.f32 %v804, 1.442695
  %v859 = vpow.pop %v858
  %v860 = vmul.f32 %v805, 1.442695
  %v861 = vpow.pop %v860
  %v862 = vmul.f32 %v806, 1.442695
  %v863 = vpow.pop %v862
  %v864 = vmul.f32 %v807, 1.442695
  %v865 = vpow.pop %v864
  %v866 = vmul.f32 %v808, 1.442695
  %v867 = vpow.pop %v866
  %v868 = vmul.f32 %v809, 1.442695
  %v869 = vpow.pop %v868
  %v870 = vmul.f32 %v810, 1.442695
  %v871 = vpow.pop %v870
  %v872 = vmul.f32 %v811, 1.442695
  %v873 = vpow.pop %v872
  %v874 = vmul.f32 %v812, 1.442695
  %v875 = vpow.pop %v874
  %v876 = vmul.f32 %v813, 1.442695
  %v877 = vpow.pop %v876
  %v878 = vmul.f32 %v718, %v815
  %v879 = vmul.f32 %v719, %v817
  %v880 = vmul.f32 %v720, %v819
  %v881 = vmul.f32 %v721, %v821
  %v882 = vmul.f32 %v722, %v823
  %v883 = vmul.f32 %v723, %v825
  %v884 = vmul.f32 %v724, %v827
  %v885 = vmul.f32 %v725, %v829
  %v886 = vmul.f32 %v726, %v831
  %v887 = vmul.f32 %v727, %v833
  %v888 = vmul.f32 %v728, %v835
  %v889 = vmul.f32 %v729, %v837
  %v890 = vmul.f32 %v730, %v839
  %v891 = vmul.f32 %v731, %v841
  %v892 = vmul.f32 %v732, %v843
  %v893 = vmul.f32 %v733, %v845
  %v894 = vmul.f32 %v734, %v847
  %v895 = vmul.f32 %v735, %v849
  %v896 = vmul.f32 %v736, %v851
  %v897 = vmul.f32 %v737, %v853
  %v898 = vmul.f32 %v738, %v855
  %v899 = vmul.f32 %v739, %v857
  %v900 = vmul.f32 %v740, %v859
  %v901 = vmul.f32 %v741, %v861
  %v902 = vmul.f32 %v742, %v863
  %v903 = vmul.f32 %v743, %v865
  %v904 = vmul.f32 %v744, %v867
  %v905 = vmul.f32 %v745, %v869
  %v906 = vmul.f32 %v746, %v871
  %v907 = vmul.f32 %v747, %v873
  %v908 = vmul.f32 %v748, %v875
  %v909 = vmul.f32 %v749, %v877
  %v910 = vsub.f32 1.0, %v878
  %v911 = vsub.f32 1.0, %v879
  %v912 = vsub.f32 1.0, %v880
  %v913 = vsub.f32 1.0, %v881
  %v914 = vsub.f32 1.0, %v882
  %v915 = vsub.f32 1.0, %v883
  %v916 = vsub.f32 1.0, %v884
  %v917 = vsub.f32 1.0, %v885
  %v918 = vsub.f32 1.0, %v886
  %v919 = vsub.f32 1.0, %v887
  %v920 = vsub.f32 1.0, %v888
  %v921 = vsub.f32 1.0, %v889
  %v922 = vsub.f32 1.0, %v890
  %v923 = vsub.f32 1.0, %v891
  %v924 = vsub.f32 1.0, %v892
  %v925 = vsub.f32 1.0, %v893
  %v926 = vsub.f32 1.0, %v894
  %v927 = vsub.f32 1.0, %v895
  %v928 = vsub.f32 1.0, %v896
  %v929 = vsub.f32 1.0, %v897
  %v930 = vsub.f32 1.0, %v898
  %v931 = vsub.f32 1.0, %v899
  %v932 = vsub.f32 1.0, %v900
  %v933 = vsub.f32 1.0, %v901
  %v934 = vsub.f32 1.0, %v902
  %v935 = vsub.f32 1.0, %v903
  %v936 = vsub.f32 1.0, %v904
  %v937 = vsub.f32 1.0, %v905
  %v938 = vsub.f32 1.0, %v906
  %v939 = vsub.f32 1.0, %v907
  %v940 = vsub.f32 1.0, %v908
  %v941 = vsub.f32 1.0, %v909
  %vm942 = vcmp.ge.f32.partialorder %v302, 0.0
  %vm943 = vcmp.ge.f32.partialorder %v303, 0.0
  %vm944 = vcmp.ge.f32.partialorder %v304, 0.0
  %vm945 = vcmp.ge.f32.partialorder %v305, 0.0
  %vm946 = vcmp.ge.f32.partialorder %v306, 0.0
  %vm947 = vcmp.ge.f32.partialorder %v307, 0.0
  %vm948 = vcmp.ge.f32.partialorder %v308, 0.0
  %vm949 = vcmp.ge.f32.partialorder %v309, 0.0
  %vm950 = vcmp.ge.f32.partialorder %v310, 0.0
  %vm951 = vcmp.ge.f32.partialorder %v311, 0.0
  %vm952 = vcmp.ge.f32.partialorder %v312, 0.0
  %vm953 = vcmp.ge.f32.partialorder %v313, 0.0
  %vm954 = vcmp.ge.f32.partialorder %v314, 0.0
  %vm955 = vcmp.ge.f32.partialorder %v315, 0.0
  %vm956 = vcmp.ge.f32.partialorder %v316, 0.0
  %vm957 = vcmp.ge.f32.partialorder %v317, 0.0
  %vm958 = vcmp.ge.f32.partialorder %v318, 0.0
  %vm959 = vcmp.ge.f32.partialorder %v319, 0.0
  %vm960 = vcmp.ge.f32.partialorder %v320, 0.0
  %vm961 = vcmp.ge.f32.partialorder %v321, 0.0
  %vm962 = vcmp.ge.f32.partialorder %v322, 0.0
  %vm963 = vcmp.ge.f32.partialorder %v323, 0.0
  %vm964 = vcmp.ge.f32.partialorder %v324, 0.0
  %vm965 = vcmp.ge.f32.partialorder %v325, 0.0
  %vm966 = vcmp.ge.f32.partialorder %v326, 0.0
  %vm967 = vcmp.ge.f32.partialorder %v327, 0.0
  %vm968 = vcmp.ge.f32.partialorder %v328, 0.0
  %vm969 = vcmp.ge.f32.partialorder %v329, 0.0
  %vm970 = vcmp.ge.f32.partialorder %v330, 0.0
  %vm971 = vcmp.ge.f32.partialorder %v331, 0.0
  %vm972 = vcmp.ge.f32.partialorder %v332, 0.0
  %vm973 = vcmp.ge.f32.partialorder %v333, 0.0
  %v974 = vsub.f32 0.0, %v910
  %v975 = vsub.f32 0.0, %v911
  %v976 = vsub.f32 0.0, %v912
  %v977 = vsub.f32 0.0, %v913
  %v978 = vsub.f32 0.0, %v914
  %v979 = vsub.f32 0.0, %v915
  %v980 = vsub.f32 0.0, %v916
  %v981 = vsub.f32 0.0, %v917
  %v982 = vsub.f32 0.0, %v918
  %v983 = vsub.f32 0.0, %v919
  %v984 = vsub.f32 0.0, %v920
  %v985 = vsub.f32 0.0, %v921
  %v986 = vsub.f32 0.0, %v922
  %v987 = vsub.f32 0.0, %v923
  %v988 = vsub.f32 0.0, %v924
  %v989 = vsub.f32 0.0, %v925
  %v990 = vsub.f32 0.0, %v926
  %v991 = vsub.f32 0.0, %v927
  %v992 = vsub.f32 0.0, %v928
  %v993 = vsub.f32 0.0, %v929
  %v994 = vsub.f32 0.0, %v930
  %v995 = vsub.f32 0.0, %v931
  %v996 = vsub.f32 0.0, %v932
  %v997 = vsub.f32 0.0, %v933
  %v998 = vsub.f32 0.0, %v934
  %v999 = vsub.f32 0.0, %v935
  %v1000 = vsub.f32 0.0, %v936
  %v1001 = vsub.f32 0.0, %v937
  %v1002 = vsub.f32 0.0, %v938
  %v1003 = vsub.f32 0.0, %v939
  %v1004 = vsub.f32 0.0, %v940
  %v1005 = vsub.f32 0.0, %v941
  %v1006 = vsel %vm942, %v910, %v974
  %v1007 = vsel %vm943, %v911, %v975
  %v1008 = vsel %vm944, %v912, %v976
  %v1009 = vsel %vm945, %v913, %v977
  %v1010 = vsel %vm946, %v914, %v978
  %v1011 = vsel %vm947, %v915, %v979
  %v1012 = vsel %vm948, %v916, %v980
  %v1013 = vsel %vm949, %v917, %v981
  %v1014 = vsel %vm950, %v918, %v982
  %v1015 = vsel %vm951, %v919, %v983
  %v1016 = vsel %vm952, %v920, %v984
  %v1017 = vsel %vm953, %v921, %v985
  %v1018 = vsel %vm954, %v922, %v986
  %v1019 = vsel %vm955, %v923, %v987
  %v1020 = vsel %vm956, %v924, %v988
  %v1021 = vsel %vm957, %v925, %v989
  %v1022 = vsel %vm958, %v926, %v990
  %v1023 = vsel %vm959, %v927, %v991
  %v1024 = vsel %vm960, %v928, %v992
  %v1025 = vsel %vm961, %v929, %v993
  %v1026 = vsel %vm962, %v930, %v994
  %v1027 = vsel %vm963, %v931, %v995
  %v1028 = vsel %vm964, %v932, %v996
  %v1029 = vsel %vm965, %v933, %v997
  %v1030 = vsel %vm966, %v934, %v998
  %v1031 = vsel %vm967, %v935, %v999
  %v1032 = vsel %vm968, %v936, %v1000
  %v1033 = vsel %vm969, %v937, %v1001
  %v1034 = vsel %vm970, %v938, %v1002
  %v1035 = vsel %vm971, %v939, %v1003
  %v1036 = vsel %vm972, %v940, %v1004
  %v1037 = vsel %vm973, %v941, %v1005
  %v1038 = vsub.f32 %v238, 0.5
  %v1039 = vsub.f32 %v239, 0.5
  %v1040 = vsub.f32 %v240, 0.5
  %v1041 = vsub.f32 %v241, 0.5
  %v1042 = vsub.f32 %v242, 0.5
  %v1043 = vsub.f32 %v243, 0.5
  %v1044 = vsub.f32 %v244, 0.5
  %v1045 = vsub.f32 %v245, 0.5
  %v1046 = vsub.f32 %v246, 0.5
  %v1047 = vsub.f32 %v247, 0.5
  %v1048 = vsub.f32 %v248, 0.5
  %v1049 = vsub.f32 %v249, 0.5
  %v1050 = vsub.f32 %v250, 0.5
  %v1051 = vsub.f32 %v251, 0.5
  %v1052 = vsub.f32 %v252, 0.5
  %v1053 = vsub.f32 %v253, 0.5
  %v1054 = vsub.f32 %v254, 0.5
  %v1055 = vsub.f32 %v255, 0.5
  %v1056 = vsub.f32 %v256, 0.5
  %v1057 = vsub.f32 %v257, 0.5
  %v1058 = vsub.f32 %v258, 0.5
  %v1059 = vsub.f32 %v259, 0.5
  %v1060 = vsub.f32 %v260, 0.5
  %v1061 = vsub.f32 %v261, 0.5
  %v1062 = vsub.f32 %v262, 0.5
  %v1063 = vsub.f32 %v263, 0.5
  %v1064 = vsub.f32 %v264, 0.5
  %v1065 = vsub.f32 %v265, 0.5
  %v1066 = vsub.f32 %v266, 0.5
  %v1067 = vsub.f32 %v267, 0.5
  %v1068 = vsub.f32 %v268, 0.5
  %v1069 = vsub.f32 %v269, 0.5
  %v1070 = vmul.f32 %v1038, %v142
  %v1071 = vmul.f32 %v1039, %v143
  %v1072 = vmul.f32 %v1040, %v144
  %v1073 = vmul.f32 %v1041, %v145
  %v1074 = vmul.f32 %v1042, %v146
  %v1075 = vmul.f32 %v1043, %v147
  %v1076 = vmul.f32 %v1044, %v148
  %v1077 = vmul.f32 %v1045, %v149
  %v1078 = vmul.f32 %v1046, %v150
  %v1079 = vmul.f32 %v1047, %v151
  %v1080 = vmul.f32 %v1048, %v152
  %v1081 = vmul.f32 %v1049, %v153
  %v1082 = vmul.f32 %v1050, %v154
  %v1083 = vmul.f32 %v1051, %v155
  %v1084 = vmul.f32 %v1052, %v156
  %v1085 = vmul.f32 %v1053, %v157
  %v1086 = vmul.f32 %v1054, %v158
  %v1087 = vmul.f32 %v1055, %v159
  %v1088 = vmul.f32 %v1056, %v160
  %v1089 = vmul.f32 %v1057, %v161
  %v1090 = vmul.f32 %v1058, %v162
  %v1091 = vmul.f32 %v1059, %v163
  %v1092 = vmul.f32 %v1060, %v164
  %v1093 = vmul.f32 %v1061, %v165
  %v1094 = vmul.f32 %v1062, %v166
  %v1095 = vmul.f32 %v1063, %v167
  %v1096 = vmul.f32 %v1064, %v168
  %v1097 = vmul.f32 %v1065, %v169
  %v1098 = vmul.f32 %v1066, %v170
  %v1099 = vmul.f32 %v1067, %v171
  %v1100 = vmul.f32 %v1068, %v172
  %v1101 = vmul.f32 %v1069, %v173
  %v1102 = vand.u32 2147483647, %v1070
  %v1103 = vand.u32 2147483647, %v1071
  %v1104 = vand.u32 2147483647, %v1072
  %v1105 = vand.u32 2147483647, %v1073
  %v1106 = vand.u32 2147483647, %v1074
  %v1107 = vand.u32 2147483647, %v1075
  %v1108 = vand.u32 2147483647, %v1076
  %v1109 = vand.u32 2147483647, %v1077
  %v1110 = vand.u32 2147483647, %v1078
  %v1111 = vand.u32 2147483647, %v1079
  %v1112 = vand.u32 2147483647, %v1080
  %v1113 = vand.u32 2147483647, %v1081
  %v1114 = vand.u32 2147483647, %v1082
  %v1115 = vand.u32 2147483647, %v1083
  %v1116 = vand.u32 2147483647, %v1084
  %v1117 = vand.u32 2147483647, %v1085
  %v1118 = vand.u32 2147483647, %v1086
  %v1119 = vand.u32 2147483647, %v1087
  %v1120 = vand.u32 2147483647, %v1088
  %v1121 = vand.u32 2147483647, %v1089
  %v1122 = vand.u32 2147483647, %v1090
  %v1123 = vand.u32 2147483647, %v1091
  %v1124 = vand.u32 2147483647, %v1092
  %v1125 = vand.u32 2147483647, %v1093
  %v1126 = vand.u32 2147483647, %v1094
  %v1127 = vand.u32 2147483647, %v1095
  %v1128 = vand.u32 2147483647, %v1096
  %v1129 = vand.u32 2147483647, %v1097
  %v1130 = vand.u32 2147483647, %v1098
  %v1131 = vand.u32 2147483647, %v1099
  %v1132 = vand.u32 2147483647, %v1100
  %v1133 = vand.u32 2147483647, %v1101
  %v1134 = vmul.f32 %v1102, 0.3275911
  %v1135 = vmul.f32 %v1103, 0.3275911
  %v1136 = vmul.f32 %v1104, 0.3275911
  %v1137 = vmul.f32 %v1105, 0.3275911
  %v1138 = vmul.f32 %v1106, 0.3275911
  %v1139 = vmul.f32 %v1107, 0.3275911
  %v1140 = vmul.f32 %v1108, 0.3275911
  %v1141 = vmul.f32 %v1109, 0.3275911
  %v1142 = vmul.f32 %v1110, 0.3275911
  %v1143 = vmul.f32 %v1111, 0.3275911
  %v1144 = vmul.f32 %v1112, 0.3275911
  %v1145 = vmul.f32 %v1113, 0.3275911
  %v1146 = vmul.f32 %v1114, 0.3275911
  %v1147 = vmul.f32 %v1115, 0.3275911
  %v1148 = vmul.f32 %v1116, 0.3275911
  %v1149 = vmul.f32 %v1117, 0.3275911
  %v1150 = vmul.f32 %v1118, 0.3275911
  %v1151 = vmul.f32 %v1119, 0.3275911
  %v1152 = vmul.f32 %v1120, 0.3275911
  %v1153 = vmul.f32 %v1121, 0.3275911
  %v1154 = vmul.f32 %v1122, 0.3275911
  %v1155 = vmul.f32 %v1123, 0.3275911
  %v1156 = vmul.f32 %v1124, 0.3275911
  %v1157 = vmul.f32 %v1125, 0.3275911
  %v1158 = vmul.f32 %v1126, 0.3275911
  %v1159 = vmul.f32 %v1127, 0.3275911
  %v1160 = vmul.f32 %v1128, 0.3275911
  %v1161 = vmul.f32 %v1129, 0.3275911
  %v1162 = vmul.f32 %v1130, 0.3275911
  %v1163 = vmul.f32 %v1131, 0.3275911
  %v1164 = vmul.f32 %v1132, 0.3275911
  %v1165 = vmul.f32 %v1133, 0.3275911
  %v1166 = vadd.f32 %v1134, 1.0
  %v1167 = vadd.f32 %v1135, 1.0
  %v1168 = vadd.f32 %v1136, 1.0
  %v1169 = vadd.f32 %v1137, 1.0
  %v1170 = vadd.f32 %v1138, 1.0
  %v1171 = vadd.f32 %v1139, 1.0
  %v1172 = vadd.f32 %v1140, 1.0
  %v1173 = vadd.f32 %v1141, 1.0
  %v1174 = vadd.f32 %v1142, 1.0
  %v1175 = vadd.f32 %v1143, 1.0
  %v1176 = vadd.f32 %v1144, 1.0
  %v1177 = vadd.f32 %v1145, 1.0
  %v1178 = vadd.f32 %v1146, 1.0
  %v1179 = vadd.f32 %v1147, 1.0
  %v1180 = vadd.f32 %v1148, 1.0
  %v1181 = vadd.f32 %v1149, 1.0
  %v1182 = vadd.f32 %v1150, 1.0
  %v1183 = vadd.f32 %v1151, 1.0
  %v1184 = vadd.f32 %v1152, 1.0
  %v1185 = vadd.f32 %v1153, 1.0
  %v1186 = vadd.f32 %v1154, 1.0
  %v1187 = vadd.f32 %v1155, 1.0
  %v1188 = vadd.f32 %v1156, 1.0
  %v1189 = vadd.f32 %v1157, 1.0
  %v1190 = vadd.f32 %v1158, 1.0
  %v1191 = vadd.f32 %v1159, 1.0
  %v1192 = vadd.f32 %v1160, 1.0
  %v1193 = vadd.f32 %v1161, 1.0
  %v1194 = vadd.f32 %v1162, 1.0
  %v1195 = vadd.f32 %v1163, 1.0
  %v1196 = vadd.f32 %v1164, 1.0
  %v1197 = vadd.f32 %v1165, 1.0
  %v1198 = vrcp.pop %v1166
  %v1199 = vrcp.pop %v1167
  %v1200 = vrcp.pop %v1168
  %v1201 = vrcp.pop %v1169
  %v1202 = vrcp.pop %v1170
  %v1203 = vrcp.pop %v1171
  %v1204 = vrcp.pop %v1172
  %v1205 = vrcp.pop %v1173
  %v1206 = vrcp.pop %v1174
  %v1207 = vrcp.pop %v1175
  %v1208 = vrcp.pop %v1176
  %v1209 = vrcp.pop %v1177
  %v1210 = vrcp.pop %v1178
  %v1211 = vrcp.pop %v1179
  %v1212 = vrcp.pop %v1180
  %v1213 = vrcp.pop %v1181
  %v1214 = vrcp.pop %v1182
  %v1215 = vrcp.pop %v1183
  %v1216 = vrcp.pop %v1184
  %v1217 = vrcp.pop %v1185
  %v1218 = vrcp.pop %v1186
  %v1219 = vrcp.pop %v1187
  %v1220 = vrcp.pop %v1188
  %v1221 = vrcp.pop %v1189
  %v1222 = vrcp.pop %v1190
  %v1223 = vrcp.pop %v1191
  %v1224 = vrcp.pop %v1192
  %v1225 = vrcp.pop %v1193
  %v1226 = vrcp.pop %v1194
  %v1227 = vrcp.pop %v1195
  %v1228 = vrcp.pop %v1196
  %v1229 = vrcp.pop %v1197
  %v1230 = vmul.f32 %v1198, 1.0614054
  %v1231 = vmul.f32 %v1199, 1.0614054
  %v1232 = vmul.f32 %v1200, 1.0614054
  %v1233 = vmul.f32 %v1201, 1.0614054
  %v1234 = vmul.f32 %v1202, 1.0614054
  %v1235 = vmul.f32 %v1203, 1.0614054
  %v1236 = vmul.f32 %v1204, 1.0614054
  %v1237 = vmul.f32 %v1205, 1.0614054
  %v1238 = vmul.f32 %v1206, 1.0614054
  %v1239 = vmul.f32 %v1207, 1.0614054
  %v1240 = vmul.f32 %v1208, 1.0614054
  %v1241 = vmul.f32 %v1209, 1.0614054
  %v1242 = vmul.f32 %v1210, 1.0614054
  %v1243 = vmul.f32 %v1211, 1.0614054
  %v1244 = vmul.f32 %v1212, 1.0614054
  %v1245 = vmul.f32 %v1213, 1.0614054
  %v1246 = vmul.f32 %v1214, 1.0614054
  %v1247 = vmul.f32 %v1215, 1.0614054
  %v1248 = vmul.f32 %v1216, 1.0614054
  %v1249 = vmul.f32 %v1217, 1.0614054
  %v1250 = vmul.f32 %v1218, 1.0614054
  %v1251 = vmul.f32 %v1219, 1.0614054
  %v1252 = vmul.f32 %v1220, 1.0614054
  %v1253 = vmul.f32 %v1221, 1.0614054
  %v1254 = vmul.f32 %v1222, 1.0614054
  %v1255 = vmul.f32 %v1223, 1.0614054
  %v1256 = vmul.f32 %v1224, 1.0614054
  %v1257 = vmul.f32 %v1225, 1.0614054
  %v1258 = vmul.f32 %v1226, 1.0614054
  %v1259 = vmul.f32 %v1227, 1.0614054
  %v1260 = vmul.f32 %v1228, 1.0614054
  %v1261 = vmul.f32 %v1229, 1.0614054
  %v1262 = vadd.f32 %v1230, -1.4531521
  %v1263 = vadd.f32 %v1231, -1.4531521
  %v1264 = vadd.f32 %v1232, -1.4531521
  %v1265 = vadd.f32 %v1233, -1.4531521
  %v1266 = vadd.f32 %v1234, -1.4531521
  %v1267 = vadd.f32 %v1235, -1.4531521
  %v1268 = vadd.f32 %v1236, -1.4531521
  %v1269 = vadd.f32 %v1237, -1.4531521
  %v1270 = vadd.f32 %v1238, -1.4531521
  %v1271 = vadd.f32 %v1239, -1.4531521
  %v1272 = vadd.f32 %v1240, -1.4531521
  %v1273 = vadd.f32 %v1241, -1.4531521
  %v1274 = vadd.f32 %v1242, -1.4531521
  %v1275 = vadd.f32 %v1243, -1.4531521
  %v1276 = vadd.f32 %v1244, -1.4531521
  %v1277 = vadd.f32 %v1245, -1.4531521
  %v1278 = vadd.f32 %v1246, -1.4531521
  %v1279 = vadd.f32 %v1247, -1.4531521
  %v1280 = vadd.f32 %v1248, -1.4531521
  %v1281 = vadd.f32 %v1249, -1.4531521
  %v1282 = vadd.f32 %v1250, -1.4531521
  %v1283 = vadd.f32 %v1251, -1.4531521
  %v1284 = vadd.f32 %v1252, -1.4531521
  %v1285 = vadd.f32 %v1253, -1.4531521
  %v1286 = vadd.f32 %v1254, -1.4531521
  %v1287 = vadd.f32 %v1255, -1.4531521
  %v1288 = vadd.f32 %v1256, -1.4531521
  %v1289 = vadd.f32 %v1257, -1.4531521
  %v1290 = vadd.f32 %v1258, -1.4531521
  %v1291 = vadd.f32 %v1259, -1.4531521
  %v1292 = vadd.f32 %v1260, -1.4531521
  %v1293 = vadd.f32 %v1261, -1.4531521
  %v1294 = vmul.f32 %v1262, %v1198
  %v1295 = vmul.f32 %v1263, %v1199
  %v1296 = vmul.f32 %v1264, %v1200
  %v1297 = vmul.f32 %v1265, %v1201
  %v1298 = vmul.f32 %v1266, %v1202
  %v1299 = vmul.f32 %v1267, %v1203
  %v1300 = vmul.f32 %v1268, %v1204
  %v1301 = vmul.f32 %v1269, %v1205
  %v1302 = vmul.f32 %v1270, %v1206
  %v1303 = vmul.f32 %v1271, %v1207
  %v1304 = vmul.f32 %v1272, %v1208
  %v1305 = vmul.f32 %v1273, %v1209
  %v1306 = vmul.f32 %v1274, %v1210
  %v1307 = vmul.f32 %v1275, %v1211
  %v1308 = vmul.f32 %v1276, %v1212
  %v1309 = vmul.f32 %v1277, %v1213
  %v1310 = vmul.f32 %v1278, %v1214
  %v1311 = vmul.f32 %v1279, %v1215
  %v1312 = vmul.f32 %v1280, %v1216
  %v1313 = vmul.f32 %v1281, %v1217
  %v1314 = vmul.f32 %v1282, %v1218
  %v1315 = vmul.f32 %v1283, %v1219
  %v1316 = vmul.f32 %v1284, %v1220
  %v1317 = vmul.f32 %v1285, %v1221
  %v1318 = vmul.f32 %v1286, %v1222
  %v1319 = vmul.f32 %v1287, %v1223
  %v1320 = vmul.f32 %v1288, %v1224
  %v1321 = vmul.f32 %v1289, %v1225
  %v1322 = vmul.f32 %v1290, %v1226
  %v1323 = vmul.f32 %v1291, %v1227
  %v1324 = vmul.f32 %v1292, %v1228
  %v1325 = vmul.f32 %v1293, %v1229
  %v1326 = vadd.f32 %v1294, 1.4214138
  %v1327 = vadd.f32 %v1295, 1.4214138
  %v1328 = vadd.f32 %v1296, 1.4214138
  %v1329 = vadd.f32 %v1297, 1.4214138
  %v1330 = vadd.f32 %v1298, 1.4214138
  %v1331 = vadd.f32 %v1299, 1.4214138
  %v1332 = vadd.f32 %v1300, 1.4214138
  %v1333 = vadd.f32 %v1301, 1.4214138
  %v1334 = vadd.f32 %v1302, 1.4214138
  %v1335 = vadd.f32 %v1303, 1.4214138
  %v1336 = vadd.f32 %v1304, 1.4214138
  %v1337 = vadd.f32 %v1305, 1.4214138
  %v1338 = vadd.f32 %v1306, 1.4214138
  %v1339 = vadd.f32 %v1307, 1.4214138
  %v1340 = vadd.f32 %v1308, 1.4214138
  %v1341 = vadd.f32 %v1309, 1.4214138
  %v1342 = vadd.f32 %v1310, 1.4214138
  %v1343 = vadd.f32 %v1311, 1.4214138
  %v1344 = vadd.f32 %v1312, 1.4214138
  %v1345 = vadd.f32 %v1313, 1.4214138
  %v1346 = vadd.f32 %v1314, 1.4214138
  %v1347 = vadd.f32 %v1315, 1.4214138
  %v1348 = vadd.f32 %v1316, 1.4214138
  %v1349 = vadd.f32 %v1317, 1.4214138
  %v1350 = vadd.f32 %v1318, 1.4214138
  %v1351 = vadd.f32 %v1319, 1.4214138
  %v1352 = vadd.f32 %v1320, 1.4214138
  %v1353 = vadd.f32 %v1321, 1.4214138
  %v1354 = vadd.f32 %v1322, 1.4214138
  %v1355 = vadd.f32 %v1323, 1.4214138
  %v1356 = vadd.f32 %v1324, 1.4214138
  %v1357 = vadd.f32 %v1325, 1.4214138
  %v1358 = vmul.f32 %v1326, %v1198
  %v1359 = vmul.f32 %v1327, %v1199
  %v1360 = vmul.f32 %v1328, %v1200
  %v1361 = vmul.f32 %v1329, %v1201
  %v1362 = vmul.f32 %v1330, %v1202
  %v1363 = vmul.f32 %v1331, %v1203
  %v1364 = vmul.f32 %v1332, %v1204
  %v1365 = vmul.f32 %v1333, %v1205
  %v1366 = vmul.f32 %v1334, %v1206
  %v1367 = vmul.f32 %v1335, %v1207
  %v1368 = vmul.f32 %v1336, %v1208
  %v1369 = vmul.f32 %v1337, %v1209
  %v1370 = vmul.f32 %v1338, %v1210
  %v1371 = vmul.f32 %v1339, %v1211
  %v1372 = vmul.f32 %v1340, %v1212
  %v1373 = vmul.f32 %v1341, %v1213
  %v1374 = vmul.f32 %v1342, %v1214
  %v1375 = vmul.f32 %v1343, %v1215
  %v1376 = vmul.f32 %v1344, %v1216
  %v1377 = vmul.f32 %v1345, %v1217
  %v1378 = vmul.f32 %v1346, %v1218
  %v1379 = vmul.f32 %v1347, %v1219
  %v1380 = vmul.f32 %v1348, %v1220
  %v1381 = vmul.f32 %v1349, %v1221
  %v1382 = vmul.f32 %v1350, %v1222
  %v1383 = vmul.f32 %v1351, %v1223
  %v1384 = vmul.f32 %v1352, %v1224
  %v1385 = vmul.f32 %v1353, %v1225
  %v1386 = vmul.f32 %v1354, %v1226
  %v1387 = vmul.f32 %v1355, %v1227
  %v1388 = vmul.f32 %v1356, %v1228
  %v1389 = vmul.f32 %v1357, %v1229
  %v1390 = vadd.f32 %v1358, -0.28449672
  %v1391 = vadd.f32 %v1359, -0.28449672
  %v1392 = vadd.f32 %v1360, -0.28449672
  %v1393 = vadd.f32 %v1361, -0.28449672
  %v1394 = vadd.f32 %v1362, -0.28449672
  %v1395 = vadd.f32 %v1363, -0.28449672
  %v1396 = vadd.f32 %v1364, -0.28449672
  %v1397 = vadd.f32 %v1365, -0.28449672
  %v1398 = vadd.f32 %v1366, -0.28449672
  %v1399 = vadd.f32 %v1367, -0.28449672
  %v1400 = vadd.f32 %v1368, -0.28449672
  %v1401 = vadd.f32 %v1369, -0.28449672
  %v1402 = vadd.f32 %v1370, -0.28449672
  %v1403 = vadd.f32 %v1371, -0.28449672
  %v1404 = vadd.f32 %v1372, -0.28449672
  %v1405 = vadd.f32 %v1373, -0.28449672
  %v1406 = vadd.f32 %v1374, -0.28449672
  %v1407 = vadd.f32 %v1375, -0.28449672
  %v1408 = vadd.f32 %v1376, -0.28449672
  %v1409 = vadd.f32 %v1377, -0.28449672
  %v1410 = vadd.f32 %v1378, -0.28449672
  %v1411 = vadd.f32 %v1379, -0.28449672
  %v1412 = vadd.f32 %v1380, -0.28449672
  %v1413 = vadd.f32 %v1381, -0.28449672
  %v1414 = vadd.f32 %v1382, -0.28449672
  %v1415 = vadd.f32 %v1383, -0.28449672
  %v1416 = vadd.f32 %v1384, -0.28449672
  %v1417 = vadd.f32 %v1385, -0.28449672
  %v1418 = vadd.f32 %v1386, -0.28449672
  %v1419 = vadd.f32 %v1387, -0.28449672
  %v1420 = vadd.f32 %v1388, -0.28449672
  %v1421 = vadd.f32 %v1389, -0.28449672
  %v1422 = vmul.f32 %v1390, %v1198
  %v1423 = vmul.f32 %v1391, %v1199
  %v1424 = vmul.f32 %v1392, %v1200
  %v1425 = vmul.f32 %v1393, %v1201
  %v1426 = vmul.f32 %v1394, %v1202
  %v1427 = vmul.f32 %v1395, %v1203
  %v1428 = vmul.f32 %v1396, %v1204
  %v1429 = vmul.f32 %v1397, %v1205
  %v1430 = vmul.f32 %v1398, %v1206
  %v1431 = vmul.f32 %v1399, %v1207
  %v1432 = vmul.f32 %v1400, %v1208
  %v1433 = vmul.f32 %v1401, %v1209
  %v1434 = vmul.f32 %v1402, %v1210
  %v1435 = vmul.f32 %v1403, %v1211
  %v1436 = vmul.f32 %v1404, %v1212
  %v1437 = vmul.f32 %v1405, %v1213
  %v1438 = vmul.f32 %v1406, %v1214
  %v1439 = vmul.f32 %v1407, %v1215
  %v1440 = vmul.f32 %v1408, %v1216
  %v1441 = vmul.f32 %v1409, %v1217
  %v1442 = vmul.f32 %v1410, %v1218
  %v1443 = vmul.f32 %v1411, %v1219
  %v1444 = vmul.f32 %v1412, %v1220
  %v1445 = vmul.f32 %v1413, %v1221
  %v1446 = vmul.f32 %v1414, %v1222
  %v1447 = vmul.f32 %v1415, %v1223
  %v1448 = vmul.f32 %v1416, %v1224
  %v1449 = vmul.f32 %v1417, %v1225
  %v1450 = vmul.f32 %v1418, %v1226
  %v1451 = vmul.f32 %v1419, %v1227
  %v1452 = vmul.f32 %v1420, %v1228
  %v1453 = vmul.f32 %v1421, %v1229
  %v1454 = vadd.f32 %v1422, 0.2548296
  %v1455 = vadd.f32 %v1423, 0.2548296
  %v1456 = vadd.f32 %v1424, 0.2548296
  %v1457 = vadd.f32 %v1425, 0.2548296
  %v1458 = vadd.f32 %v1426, 0.2548296
  %v1459 = vadd.f32 %v1427, 0.2548296
  %v1460 = vadd.f32 %v1428, 0.2548296
  %v1461 = vadd.f32 %v1429, 0.2548296
  %v1462 = vadd.f32 %v1430, 0.2548296
  %v1463 = vadd.f32 %v1431, 0.2548296
  %v1464 = vadd.f32 %v1432, 0.2548296
  %v1465 = vadd.f32 %v1433, 0.2548296
  %v1466 = vadd.f32 %v1434, 0.2548296
  %v1467 = vadd.f32 %v1435, 0.2548296
  %v1468 = vadd.f32 %v1436, 0.2548296
  %v1469 = vadd.f32 %v1437, 0.2548296
  %v1470 = vadd.f32 %v1438, 0.2548296
  %v1471 = vadd.f32 %v1439, 0.2548296
  %v1472 = vadd.f32 %v1440, 0.2548296
  %v1473 = vadd.f32 %v1441, 0.2548296
  %v1474 = vadd.f32 %v1442, 0.2548296
  %v1475 = vadd.f32 %v1443, 0.2548296
  %v1476 = vadd.f32 %v1444, 0.2548296
  %v1477 = vadd.f32 %v1445, 0.2548296
  %v1478 = vadd.f32 %v1446, 0.2548296
  %v1479 = vadd.f32 %v1447, 0.2548296
  %v1480 = vadd.f32 %v1448, 0.2548296
  %v1481 = vadd.f32 %v1449, 0.2548296
  %v1482 = vadd.f32 %v1450, 0.2548296
  %v1483 = vadd.f32 %v1451, 0.2548296
  %v1484 = vadd.f32 %v1452, 0.2548296
  %v1485 = vadd.f32 %v1453, 0.2548296
  %v1486 = vmul.f32 %v1454, %v1198
  %v1487 = vmul.f32 %v1455, %v1199
  %v1488 = vmul.f32 %v1456, %v1200
  %v1489 = vmul.f32 %v1457, %v1201
  %v1490 = vmul.f32 %v1458, %v1202
  %v1491 = vmul.f32 %v1459, %v1203
  %v1492 = vmul.f32 %v1460, %v1204
  %v1493 = vmul.f32 %v1461, %v1205
  %v1494 = vmul.f32 %v1462, %v1206
  %v1495 = vmul.f32 %v1463, %v1207
  %v1496 = vmul.f32 %v1464, %v1208
  %v1497 = vmul.f32 %v1465, %v1209
  %v1498 = vmul.f32 %v1466, %v1210
  %v1499 = vmul.f32 %v1467, %v1211
  %v1500 = vmul.f32 %v1468, %v1212
  %v1501 = vmul.f32 %v1469, %v1213
  %v1502 = vmul.f32 %v1470, %v1214
  %v1503 = vmul.f32 %v1471, %v1215
  %v1504 = vmul.f32 %v1472, %v1216
  %v1505 = vmul.f32 %v1473, %v1217
  %v1506 = vmul.f32 %v1474, %v1218
  %v1507 = vmul.f32 %v1475, %v1219
  %v1508 = vmul.f32 %v1476, %v1220
  %v1509 = vmul.f32 %v1477, %v1221
  %v1510 = vmul.f32 %v1478, %v1222
  %v1511 = vmul.f32 %v1479, %v1223
  %v1512 = vmul.f32 %v1480, %v1224
  %v1513 = vmul.f32 %v1481, %v1225
  %v1514 = vmul.f32 %v1482, %v1226
  %v1515 = vmul.f32 %v1483, %v1227
  %v1516 = vmul.f32 %v1484, %v1228
  %v1517 = vmul.f32 %v1485, %v1229
  %v1518 = vsub.f32 0.0, %v1102
  %v1519 = vsub.f32 0.0, %v1103
  %v1520 = vsub.f32 0.0, %v1104
  %v1521 = vsub.f32 0.0, %v1105
  %v1522 = vsub.f32 0.0, %v1106
  %v1523 = vsub.f32 0.0, %v1107
  %v1524 = vsub.f32 0.0, %v1108
  %v1525 = vsub.f32 0.0, %v1109
  %v1526 = vsub.f32 0.0, %v1110
  %v1527 = vsub.f32 0.0, %v1111
  %v1528 = vsub.f32 0.0, %v1112
  %v1529 = vsub.f32 0.0, %v1113
  %v1530 = vsub.f32 0.0, %v1114
  %v1531 = vsub.f32 0.0, %v1115
  %v1532 = vsub.f32 0.0, %v1116
  %v1533 = vsub.f32 0.0, %v1117
  %v1534 = vsub.f32 0.0, %v1118
  %v1535 = vsub.f32 0.0, %v1119
  %v1536 = vsub.f32 0.0, %v1120
  %v1537 = vsub.f32 0.0, %v1121
  %v1538 = vsub.f32 0.0, %v1122
  %v1539 = vsub.f32 0.0, %v1123
  %v1540 = vsub.f32 0.0, %v1124
  %v1541 = vsub.f32 0.0, %v1125
  %v1542 = vsub.f32 0.0, %v1126
  %v1543 = vsub.f32 0.0, %v1127
  %v1544 = vsub.f32 0.0, %v1128
  %v1545 = vsub.f32 0.0, %v1129
  %v1546 = vsub.f32 0.0, %v1130
  %v1547 = vsub.f32 0.0, %v1131
  %v1548 = vsub.f32 0.0, %v1132
  %v1549 = vsub.f32 0.0, %v1133
  %v1550 = vmul.f32 %v1518, %v1102
  %v1551 = vmul.f32 %v1519, %v1103
  %v1552 = vmul.f32 %v1520, %v1104
  %v1553 = vmul.f32 %v1521, %v1105
  %v1554 = vmul.f32 %v1522, %v1106
  %v1555 = vmul.f32 %v1523, %v1107
  %v1556 = vmul.f32 %v1524, %v1108
  %v1557 = vmul.f32 %v1525, %v1109
  %v1558 = vmul.f32 %v1526, %v1110
  %v1559 = vmul.f32 %v1527, %v1111
  %v1560 = vmul.f32 %v1528, %v1112
  %v1561 = vmul.f32 %v1529, %v1113
  %v1562 = vmul.f32 %v1530, %v1114
  %v1563 = vmul.f32 %v1531, %v1115
  %v1564 = vmul.f32 %v1532, %v1116
  %v1565 = vmul.f32 %v1533, %v1117
  %v1566 = vmul.f32 %v1534, %v1118
  %v1567 = vmul.f32 %v1535, %v1119
  %v1568 = vmul.f32 %v1536, %v1120
  %v1569 = vmul.f32 %v1537, %v1121
  %v1570 = vmul.f32 %v1538, %v1122
  %v1571 = vmul.f32 %v1539, %v1123
  %v1572 = vmul.f32 %v1540, %v1124
  %v1573 = vmul.f32 %v1541, %v1125
  %v1574 = vmul.f32 %v1542, %v1126
  %v1575 = vmul.f32 %v1543, %v1127
  %v1576 = vmul.f32 %v1544, %v1128
  %v1577 = vmul.f32 %v1545, %v1129
  %v1578 = vmul.f32 %v1546, %v1130
  %v1579 = vmul.f32 %v1547, %v1131
  %v1580 = vmul.f32 %v1548, %v1132
  %v1581 = vmul.f32 %v1549, %v1133
  %v1582 = vmul.f32 %v1550, 1.442695
  %v1583 = vpow.pop %v1582
  %v1584 = vmul.f32 %v1551, 1.442695
  %v1585 = vpow.pop %v1584
  %v1586 = vmul.f32 %v1552, 1.442695
  %v1587 = vpow.pop %v1586
  %v1588 = vmul.f32 %v1553, 1.442695
  %v1589 = vpow.pop %v1588
  %v1590 = vmul.f32 %v1554, 1.442695
  %v1591 = vpow.pop %v1590
  %v1592 = vmul.f32 %v1555, 1.442695
  %v1593 = vpow.pop %v1592
  %v1594 = vmul.f32 %v1556, 1.442695
  %v1595 = vpow.pop %v1594
  %v1596 = vmul.f32 %v1557, 1.442695
  %v1597 = vpow.pop %v1596
  %v1598 = vmul.f32 %v1558, 1.442695
  %v1599 = vpow.pop %v1598
  %v1600 = vmul.f32 %v1559, 1.442695
  %v1601 = vpow.pop %v1600
  %v1602 = vmul.f32 %v1560, 1.442695
  %v1603 = vpow.pop %v1602
  %v1604 = vmul.f32 %v1561, 1.442695
  %v1605 = vpow.pop %v1604
  %v1606 = vmul.f32 %v1562, 1.442695
  %v1607 = vpow.pop %v1606
  %v1608 = vmul.f32 %v1563, 1.442695
  %v1609 = vpow.pop %v1608
  %v1610 = vmul.f32 %v1564, 1.442695
  %v1611 = vpow.pop %v1610
  %v1612 = vmul.f32 %v1565, 1.442695
  %v1613 = vpow.pop %v1612
  %v1614 = vmul.f32 %v1566, 1.442695
  %v1615 = vpow.pop %v1614
  %v1616 = vmul.f32 %v1567, 1.442695
  %v1617 = vpow.pop %v1616
  %v1618 = vmul.f32 %v1568, 1.442695
  %v1619 = vpow.pop %v1618
  %v1620 = vmul.f32 %v1569, 1.442695
  %v1621 = vpow.pop %v1620
  %v1622 = vmul.f32 %v1570, 1.442695
  %v1623 = vpow.pop %v1622
  %v1624 = vmul.f32 %v1571, 1.442695
  %v1625 = vpow.pop %v1624
  %v1626 = vmul.f32 %v1572, 1.442695
  %v1627 = vpow.pop %v1626
  %v1628 = vmul.f32 %v1573, 1.442695
  %v1629 = vpow.pop %v1628
  %v1630 = vmul.f32 %v1574, 1.442695
  %v1631 = vpow.pop %v1630
  %v1632 = vmul.f32 %v1575, 1.442695
  %v1633 = vpow.pop %v1632
  %v1634 = vmul.f32 %v1576, 1.442695
  %v1635 = vpow.pop %v1634
  %v1636 = vmul.f32 %v1577, 1.442695
  %v1637 = vpow.pop %v1636
  %v1638 = vmul.f32 %v1578, 1.442695
  %v1639 = vpow.pop %v1638
  %v1640 = vmul.f32 %v1579, 1.442695
  %v1641 = vpow.pop %v1640
  %v1642 = vmul.f32 %v1580, 1.442695
  %v1643 = vpow.pop %v1642
  %v1644 = vmul.f32 %v1581, 1.442695
  %v1645 = vpow.pop %v1644
  %v1646 = vmul.f32 %v1486, %v1583
  %v1647 = vmul.f32 %v1487, %v1585
  %v1648 = vmul.f32 %v1488, %v1587
  %v1649 = vmul.f32 %v1489, %v1589
  %v1650 = vmul.f32 %v1490, %v1591
  %v1651 = vmul.f32 %v1491, %v1593
  %v1652 = vmul.f32 %v1492, %v1595
  %v1653 = vmul.f32 %v1493, %v1597
  %v1654 = vmul.f32 %v1494, %v1599
  %v1655 = vmul.f32 %v1495, %v1601
  %v1656 = vmul.f32 %v1496, %v1603
  %v1657 = vmul.f32 %v1497, %v1605
  %v1658 = vmul.f32 %v1498, %v1607
  %v1659 = vmul.f32 %v1499, %v1609
  %v1660 = vmul.f32 %v1500, %v1611
  %v1661 = vmul.f32 %v1501, %v1613
  %v1662 = vmul.f32 %v1502, %v1615
  %v1663 = vmul.f32 %v1503, %v1617
  %v1664 = vmul.f32 %v1504, %v1619
  %v1665 = vmul.f32 %v1505, %v1621
  %v1666 = vmul.f32 %v1506, %v1623
  %v1667 = vmul.f32 %v1507, %v1625
  %v1668 = vmul.f32 %v1508, %v1627
  %v1669 = vmul.f32 %v1509, %v1629
  %v1670 = vmul.f32 %v1510, %v1631
  %v1671 = vmul.f32 %v1511, %v1633
  %v1672 = vmul.f32 %v1512, %v1635
  %v1673 = vmul.f32 %v1513, %v1637
  %v1674 = vmul.f32 %v1514, %v1639
  %v1675 = vmul.f32 %v1515, %v1641
  %v1676 = vmul.f32 %v1516, %v1643
  %v1677 = vmul.f32 %v1517, %v1645
  %v1678 = vsub.f32 1.0, %v1646
  %v1679 = vsub.f32 1.0, %v1647
  %v1680 = vsub.f32 1.0, %v1648
  %v1681 = vsub.f32 1.0, %v1649
  %v1682 = vsub.f32 1.0, %v1650
  %v1683 = vsub.f32 1.0, %v1651
  %v1684 = vsub.f32 1.0, %v1652
  %v1685 = vsub.f32 1.0, %v1653
  %v1686 = vsub.f32 1.0, %v1654
  %v1687 = vsub.f32 1.0, %v1655
  %v1688 = vsub.f32 1.0, %v1656
  %v1689 = vsub.f32 1.0, %v1657
  %v1690 = vsub.f32 1.0, %v1658
  %v1691 = vsub.f32 1.0, %v1659
  %v1692 = vsub.f32 1.0, %v1660
  %v1693 = vsub.f32 1.0, %v1661
  %v1694 = vsub.f32 1.0, %v1662
  %v1695 = vsub.f32 1.0, %v1663
  %v1696 = vsub.f32 1.0, %v1664
  %v1697 = vsub.f32 1.0, %v1665
  %v1698 = vsub.f32 1.0, %v1666
  %v1699 = vsub.f32 1.0, %v1667
  %v1700 = vsub.f32 1.0, %v1668
  %v1701 = vsub.f32 1.0, %v1669
  %v1702 = vsub.f32 1.0, %v1670
  %v1703 = vsub.f32 1.0, %v1671
  %v1704 = vsub.f32 1.0, %v1672
  %v1705 = vsub.f32 1.0, %v1673
  %v1706 = vsub.f32 1.0, %v1674
  %v1707 = vsub.f32 1.0, %v1675
  %v1708 = vsub.f32 1.0, %v1676
  %v1709 = vsub.f32 1.0, %v1677
  %vm1710 = vcmp.ge.f32.partialorder %v1070, 0.0
  %vm1711 = vcmp.ge.f32.partialorder %v1071, 0.0
  %vm1712 = vcmp.ge.f32.partialorder %v1072, 0.0
  %vm1713 = vcmp.ge.f32.partialorder %v1073, 0.0
  %vm1714 = vcmp.ge.f32.partialorder %v1074, 0.0
  %vm1715 = vcmp.ge.f32.partialorder %v1075, 0.0
  %vm1716 = vcmp.ge.f32.partialorder %v1076, 0.0
  %vm1717 = vcmp.ge.f32.partialorder %v1077, 0.0
  %vm1718 = vcmp.ge.f32.partialorder %v1078, 0.0
  %vm1719 = vcmp.ge.f32.partialorder %v1079, 0.0
  %vm1720 = vcmp.ge.f32.partialorder %v1080, 0.0
  %vm1721 = vcmp.ge.f32.partialorder %v1081, 0.0
  %vm1722 = vcmp.ge.f32.partialorder %v1082, 0.0
  %vm1723 = vcmp.ge.f32.partialorder %v1083, 0.0
  %vm1724 = vcmp.ge.f32.partialorder %v1084, 0.0
  %vm1725 = vcmp.ge.f32.partialorder %v1085, 0.0
  %vm1726 = vcmp.ge.f32.partialorder %v1086, 0.0
  %vm1727 = vcmp.ge.f32.partialorder %v1087, 0.0
  %vm1728 = vcmp.ge.f32.partialorder %v1088, 0.0
  %vm1729 = vcmp.ge.f32.partialorder %v1089, 0.0
  %vm1730 = vcmp.ge.f32.partialorder %v1090, 0.0
  %vm1731 = vcmp.ge.f32.partialorder %v1091, 0.0
  %vm1732 = vcmp.ge.f32.partialorder %v1092, 0.0
  %vm1733 = vcmp.ge.f32.partialorder %v1093, 0.0
  %vm1734 = vcmp.ge.f32.partialorder %v1094, 0.0
  %vm1735 = vcmp.ge.f32.partialorder %v1095, 0.0
  %vm1736 = vcmp.ge.f32.partialorder %v1096, 0.0
  %vm1737 = vcmp.ge.f32.partialorder %v1097, 0.0
  %vm1738 = vcmp.ge.f32.partialorder %v1098, 0.0
  %vm1739 = vcmp.ge.f32.partialorder %v1099, 0.0
  %vm1740 = vcmp.ge.f32.partialorder %v1100, 0.0
  %vm1741 = vcmp.ge.f32.partialorder %v1101, 0.0
  %v1742 = vsub.f32 0.0, %v1678
  %v1743 = vsub.f32 0.0, %v1679
  %v1744 = vsub.f32 0.0, %v1680
  %v1745 = vsub.f32 0.0, %v1681
  %v1746 = vsub.f32 0.0, %v1682
  %v1747 = vsub.f32 0.0, %v1683
  %v1748 = vsub.f32 0.0, %v1684
  %v1749 = vsub.f32 0.0, %v1685
  %v1750 = vsub.f32 0.0, %v1686
  %v1751 = vsub.f32 0.0, %v1687
  %v1752 = vsub.f32 0.0, %v1688
  %v1753 = vsub.f32 0.0, %v1689
  %v1754 = vsub.f32 0.0, %v1690
  %v1755 = vsub.f32 0.0, %v1691
  %v1756 = vsub.f32 0.0, %v1692
  %v1757 = vsub.f32 0.0, %v1693
  %v1758 = vsub.f32 0.0, %v1694
  %v1759 = vsub.f32 0.0, %v1695
  %v1760 = vsub.f32 0.0, %v1696
  %v1761 = vsub.f32 0.0, %v1697
  %v1762 = vsub.f32 0.0, %v1698
  %v1763 = vsub.f32 0.0, %v1699
  %v1764 = vsub.f32 0.0, %v1700
  %v1765 = vsub.f32 0.0, %v1701
  %v1766 = vsub.f32 0.0, %v1702
  %v1767 = vsub.f32 0.0, %v1703
  %v1768 = vsub.f32 0.0, %v1704
  %v1769 = vsub.f32 0.0, %v1705
  %v1770 = vsub.f32 0.0, %v1706
  %v1771 = vsub.f32 0.0, %v1707
  %v1772 = vsub.f32 0.0, %v1708
  %v1773 = vsub.f32 0.0, %v1709
  %v1774 = vsel %vm1710, %v1678, %v1742
  %v1775 = vsel %vm1711, %v1679, %v1743
  %v1776 = vsel %vm1712, %v1680, %v1744
  %v1777 = vsel %vm1713, %v1681, %v1745
  %v1778 = vsel %vm1714, %v1682, %v1746
  %v1779 = vsel %vm1715, %v1683, %v1747
  %v1780 = vsel %vm1716, %v1684, %v1748
  %v1781 = vsel %vm1717, %v1685, %v1749
  %v1782 = vsel %vm1718, %v1686, %v1750
  %v1783 = vsel %vm1719, %v1687, %v1751
  %v1784 = vsel %vm1720, %v1688, %v1752
  %v1785 = vsel %vm1721, %v1689, %v1753
  %v1786 = vsel %vm1722, %v1690, %v1754
  %v1787 = vsel %vm1723, %v1691, %v1755
  %v1788 = vsel %vm1724, %v1692, %v1756
  %v1789 = vsel %vm1725, %v1693, %v1757
  %v1790 = vsel %vm1726, %v1694, %v1758
  %v1791 = vsel %vm1727, %v1695, %v1759
  %v1792 = vsel %vm1728, %v1696, %v1760
  %v1793 = vsel %vm1729, %v1697, %v1761
  %v1794 = vsel %vm1730, %v1698, %v1762
  %v1795 = vsel %vm1731, %v1699, %v1763
  %v1796 = vsel %vm1732, %v1700, %v1764
  %v1797 = vsel %vm1733, %v1701, %v1765
  %v1798 = vsel %vm1734, %v1702, %v1766
  %v1799 = vsel %vm1735, %v1703, %v1767
  %v1800 = vsel %vm1736, %v1704, %v1768
  %v1801 = vsel %vm1737, %v1705, %v1769
  %v1802 = vsel %vm1738, %v1706, %v1770
  %v1803 = vsel %vm1739, %v1707, %v1771
  %v1804 = vsel %vm1740, %v1708, %v1772
  %v1805 = vsel %vm1741, %v1709, %v1773
  %v1806 = vsub.f32 %v1006, %v1774
  %v1807 = vsub.f32 %v1007, %v1775
  %v1808 = vsub.f32 %v1008, %v1776
  %v1809 = vsub.f32 %v1009, %v1777
  %v1810 = vsub.f32 %v1010, %v1778
  %v1811 = vsub.f32 %v1011, %v1779
  %v1812 = vsub.f32 %v1012, %v1780
  %v1813 = vsub.f32 %v1013, %v1781
  %v1814 = vsub.f32 %v1014, %v1782
  %v1815 = vsub.f32 %v1015, %v1783
  %v1816 = vsub.f32 %v1016, %v1784
  %v1817 = vsub.f32 %v1017, %v1785
  %v1818 = vsub.f32 %v1018, %v1786
  %v1819 = vsub.f32 %v1019, %v1787
  %v1820 = vsub.f32 %v1020, %v1788
  %v1821 = vsub.f32 %v1021, %v1789
  %v1822 = vsub.f32 %v1022, %v1790
  %v1823 = vsub.f32 %v1023, %v1791
  %v1824 = vsub.f32 %v1024, %v1792
  %v1825 = vsub.f32 %v1025, %v1793
  %v1826 = vsub.f32 %v1026, %v1794
  %v1827 = vsub.f32 %v1027, %v1795
  %v1828 = vsub.f32 %v1028, %v1796
  %v1829 = vsub.f32 %v1029, %v1797
  %v1830 = vsub.f32 %v1030, %v1798
  %v1831 = vsub.f32 %v1031, %v1799
  %v1832 = vsub.f32 %v1032, %v1800
  %v1833 = vsub.f32 %v1033, %v1801
  %v1834 = vsub.f32 %v1034, %v1802
  %v1835 = vsub.f32 %v1035, %v1803
  %v1836 = vsub.f32 %v1036, %v1804
  %v1837 = vsub.f32 %v1037, %v1805
  %v1838 = vmul.f32 %v1806, 0.5
  %v1839 = vmul.f32 %v1807, 0.5
  %v1840 = vmul.f32 %v1808, 0.5
  %v1841 = vmul.f32 %v1809, 0.5
  %v1842 = vmul.f32 %v1810, 0.5
  %v1843 = vmul.f32 %v1811, 0.5
  %v1844 = vmul.f32 %v1812, 0.5
  %v1845 = vmul.f32 %v1813, 0.5
  %v1846 = vmul.f32 %v1814, 0.5
  %v1847 = vmul.f32 %v1815, 0.5
  %v1848 = vmul.f32 %v1816, 0.5
  %v1849 = vmul.f32 %v1817, 0.5
  %v1850 = vmul.f32 %v1818, 0.5
  %v1851 = vmul.f32 %v1819, 0.5
  %v1852 = vmul.f32 %v1820, 0.5
  %v1853 = vmul.f32 %v1821, 0.5
  %v1854 = vmul.f32 %v1822, 0.5
  %v1855 = vmul.f32 %v1823, 0.5
  %v1856 = vmul.f32 %v1824, 0.5
  %v1857 = vmul.f32 %v1825, 0.5
  %v1858 = vmul.f32 %v1826, 0.5
  %v1859 = vmul.f32 %v1827, 0.5
  %v1860 = vmul.f32 %v1828, 0.5
  %v1861 = vmul.f32 %v1829, 0.5
  %v1862 = vmul.f32 %v1830, 0.5
  %v1863 = vmul.f32 %v1831, 0.5
  %v1864 = vmul.f32 %v1832, 0.5
  %v1865 = vmul.f32 %v1833, 0.5
  %v1866 = vmul.f32 %v1834, 0.5
  %v1867 = vmul.f32 %v1835, 0.5
  %v1868 = vmul.f32 %v1836, 0.5
  %v1869 = vmul.f32 %v1837, 0.5
  %v1870 = vand.u32 2147483647, %v1838
  %v1871 = vand.u32 2147483647, %v1839
  %v1872 = vand.u32 2147483647, %v1840
  %v1873 = vand.u32 2147483647, %v1841
  %v1874 = vand.u32 2147483647, %v1842
  %v1875 = vand.u32 2147483647, %v1843
  %v1876 = vand.u32 2147483647, %v1844
  %v1877 = vand.u32 2147483647, %v1845
  %v1878 = vand.u32 2147483647, %v1846
  %v1879 = vand.u32 2147483647, %v1847
  %v1880 = vand.u32 2147483647, %v1848
  %v1881 = vand.u32 2147483647, %v1849
  %v1882 = vand.u32 2147483647, %v1850
  %v1883 = vand.u32 2147483647, %v1851
  %v1884 = vand.u32 2147483647, %v1852
  %v1885 = vand.u32 2147483647, %v1853
  %v1886 = vand.u32 2147483647, %v1854
  %v1887 = vand.u32 2147483647, %v1855
  %v1888 = vand.u32 2147483647, %v1856
  %v1889 = vand.u32 2147483647, %v1857
  %v1890 = vand.u32 2147483647, %v1858
  %v1891 = vand.u32 2147483647, %v1859
  %v1892 = vand.u32 2147483647, %v1860
  %v1893 = vand.u32 2147483647, %v1861
  %v1894 = vand.u32 2147483647, %v1862
  %v1895 = vand.u32 2147483647, %v1863
  %v1896 = vand.u32 2147483647, %v1864
  %v1897 = vand.u32 2147483647, %v1865
  %v1898 = vand.u32 2147483647, %v1866
  %v1899 = vand.u32 2147483647, %v1867
  %v1900 = vand.u32 2147483647, %v1868
  %v1901 = vand.u32 2147483647, %v1869
  %v1902 = vmax.f32 %v1870, 1e-06
  %v1903 = vmax.f32 %v1871, 1e-06
  %v1904 = vmax.f32 %v1872, 1e-06
  %v1905 = vmax.f32 %v1873, 1e-06
  %v1906 = vmax.f32 %v1874, 1e-06
  %v1907 = vmax.f32 %v1875, 1e-06
  %v1908 = vmax.f32 %v1876, 1e-06
  %v1909 = vmax.f32 %v1877, 1e-06
  %v1910 = vmax.f32 %v1878, 1e-06
  %v1911 = vmax.f32 %v1879, 1e-06
  %v1912 = vmax.f32 %v1880, 1e-06
  %v1913 = vmax.f32 %v1881, 1e-06
  %v1914 = vmax.f32 %v1882, 1e-06
  %v1915 = vmax.f32 %v1883, 1e-06
  %v1916 = vmax.f32 %v1884, 1e-06
  %v1917 = vmax.f32 %v1885, 1e-06
  %v1918 = vmax.f32 %v1886, 1e-06
  %v1919 = vmax.f32 %v1887, 1e-06
  %v1920 = vmax.f32 %v1888, 1e-06
  %v1921 = vmax.f32 %v1889, 1e-06
  %v1922 = vmax.f32 %v1890, 1e-06
  %v1923 = vmax.f32 %v1891, 1e-06
  %v1924 = vmax.f32 %v1892, 1e-06
  %v1925 = vmax.f32 %v1893, 1e-06
  %v1926 = vmax.f32 %v1894, 1e-06
  %v1927 = vmax.f32 %v1895, 1e-06
  %v1928 = vmax.f32 %v1896, 1e-06
  %v1929 = vmax.f32 %v1897, 1e-06
  %v1930 = vmax.f32 %v1898, 1e-06
  %v1931 = vmax.f32 %v1899, 1e-06
  %v1932 = vmax.f32 %v1900, 1e-06
  %v1933 = vmax.f32 %v1901, 1e-06
  %1934 = vst [vmem:[%s3] sm:$0xff] %v1902
  %1935 = vst [vmem:[%s3 + $0x8] sm:$0xff] %v1903
  %1936 = vst [vmem:[%s3 + $0x10] sm:$0xff] %v1904
  %1937 = vst [vmem:[%s3 + $0x18] sm:$0xff] %v1905
  %1938 = vst [vmem:[%s3 + $0x20] sm:$0xff] %v1906
  %1939 = vst [vmem:[%s3 + $0x28] sm:$0xff] %v1907
  %1940 = vst [vmem:[%s3 + $0x30] sm:$0xff] %v1908
  %1941 = vst [vmem:[%s3 + $0x38] sm:$0xff] %v1909
  %1942 = vst [vmem:[%s3 + $0x40] sm:$0xff] %v1910
  %1943 = vst [vmem:[%s3 + $0x48] sm:$0xff] %v1911
  %1944 = vst [vmem:[%s3 + $0x50] sm:$0xff] %v1912
  %1945 = vst [vmem:[%s3 + $0x58] sm:$0xff] %v1913
  %1946 = vst [vmem:[%s3 + $0x60] sm:$0xff] %v1914
  %1947 = vst [vmem:[%s3 + $0x68] sm:$0xff] %v1915
  %1948 = vst [vmem:[%s3 + $0x70] sm:$0xff] %v1916
  %1949 = vst [vmem:[%s3 + $0x78] sm:$0xff] %v1917
  %1950 = vst [vmem:[%s3 + $0x80] sm:$0xff] %v1918
  %1951 = vst [vmem:[%s3 + $0x88] sm:$0xff] %v1919
  %1952 = vst [vmem:[%s3 + $0x90] sm:$0xff] %v1920
  %1953 = vst [vmem:[%s3 + $0x98] sm:$0xff] %v1921
  %1954 = vst [vmem:[%s3 + $0xa0] sm:$0xff] %v1922
  %1955 = vst [vmem:[%s3 + $0xa8] sm:$0xff] %v1923
  %1956 = vst [vmem:[%s3 + $0xb0] sm:$0xff] %v1924
  %1957 = vst [vmem:[%s3 + $0xb8] sm:$0xff] %v1925
  %1958 = vst [vmem:[%s3 + $0xc0] sm:$0xff] %v1926
  %1959 = vst [vmem:[%s3 + $0xc8] sm:$0xff] %v1927
  %1960 = vst [vmem:[%s3 + $0xd0] sm:$0xff] %v1928
  %1961 = vst [vmem:[%s3 + $0xd8] sm:$0xff] %v1929
  %1962 = vst [vmem:[%s3 + $0xe0] sm:$0xff] %v1930
  %1963 = vst [vmem:[%s3 + $0xe8] sm:$0xff] %v1931
  %1964 = vst [vmem:[%s3 + $0xf0] sm:$0xff] %v1932
  %1965 = vst [vmem:[%s3 + $0xf8] sm:$0xff] %v1933
  // Predicated region
  $region14: #{context4_forward.5} parent=0 // pred_check
    _
  $region15: #{context4_forward.5} parent=0 // pred_check_branch
    %1967 = sbr.rel (0) target = $region17
  $region16: #{context4_forward.5} parent=0 // pred_region
    _
  $region17: #{context4_forward.5} parent=0 // pred_fallthru
    _
  // Predicated region
  $region18: #{context4_forward.5} parent=0 // pred_check
    _
  $region19: #{context4_forward.5} parent=0 // pred_check_branch
    %1969 = sbr.rel (0) target = $region21
  $region20: #{context4_forward.5} parent=0 // pred_region
    _
  $region21: #{context4_forward.5} parent=0 // pred_fallthru
    _

// kernel: context4_forward.4
$region0: #{context4_forward.4}
  #allocation0 [shape = 'u32[]', space=smem, size = 0x4, offset = 0x4, fixed_abs, tag = 'smem constant byte address 0x4 - core index']
  #allocation1 [shape = 'u32[144,128]{1,0:T(1,128)}', space=vmem, size = 0x12000, scoped, tag = 'internal scratch']
  %s0 = inlined_call_operand.hbm [shape: bf16[8192,64], index: 0, kind: input, shape index: {}]
  %s1 = inlined_call_operand.vmem [shape: bf16[64,64], index: 1, kind: input, shape index: {}]
  %s2 = inlined_call_operand.vmem [shape: f32[1,64], index: 2, kind: input, shape index: {}]
  %s3 = inlined_call_operand.vmem [shape: bf16[64,96], index: 3, kind: input, shape index: {}]
  %s4 = inlined_call_operand.vmem [shape: f32[1,96], index: 4, kind: input, shape index: {}]
  %s5 = inlined_call_operand.vmem [shape: bf16[96,2], index: 5, kind: input, shape index: {}]
  %s6 = inlined_call_operand.vmem [shape: f32[1,2], index: 6, kind: input, shape index: {}]
  %s7 = inlined_call_operand.vmem [shape: f32[8192,2], index: 7, kind: output, shape index: {}]
  %s8 = sld [smem:[#allocation0]]
  $region65: #{context4_forward.4} parent=0
    _
  %s10 = ssub.s32 1, %s8
  %s11 = scalar_select 0, %s10, %s8
  $region1: #{context4_forward.4} parent=0
    #allocation2 [shape = 'u8[1048576]{0}', space=vmem, size = 0x100000, scoped, tag = 'input window, operand 0']
    #allocation3 [shape = 's32[2]{0}', space=sflag, size = 0x8, scoped, tag = 'scoped memory for context4_forward.4']
    %12 = vsyncpa [#allocation3], 0
    %s13 = scalar_lea.sflag [#allocation3], 1
    %14 = vsyncpa %s13, 0
    loop: start=0, step=1, limit=6
    $region2: #{context4_forward.4} parent=1 // loop_pre_header
      _
    $region3: #{context4_forward.4} parent=1 // loop_header
      %s16 = sphi 0, %s20
      %p17 = scmp.ge.s32.totalorder %s16, 6
      %s26 = sphi 0, %s28
      %s29 = sphi 0, %s26
      %s30 = sphi 0, %s29
      %s46 = sphi 0, %s30
      %s50 = sphi 0, %s50
      %s52 = sphi 0, %s50
      %s53 = sphi 0, %s52
      %s67 = sphi 0, %s53
      %s71 = sphi 0, %s71
      %s73 = sphi 0, %s71
      %s74 = sphi 0, %s73
      %s88 = sphi 0, %s74
      %s92 = sphi 0, %s92
      %s94 = sphi 0, %s92
      %s95 = sphi 0, %s94
      %s109 = sphi 0, %s95
      %s113 = sphi 0, %s113
      %s115 = sphi 0, %s113
      %s116 = sphi 0, %s115
      %s130 = sphi 0, %s116
      %s134 = sphi 0, %s134
      %s136 = sphi 0, %s134
      %s137 = sphi 0, %s136
      %s151 = sphi 0, %s137
      %s155 = sphi 0, %s155
      %s157 = sphi 0, %s155
      %s158 = sphi 0, %s157
      %s172 = sphi 0, %s158
      %s178 = sphi 0, %s180
      %s181 = sphi 0, %s178
      %s182 = sphi 0, %s181
      %s198 = sphi 0, %s182
    $region4: #{context4_forward.4} parent=1 // loop_header_branch
      %19 = sbr.rel (%p17) target = $region8
    $region5: #{context4_forward.4} parent=1 // loop_body
      %s21 = ssub.s32 %s16, 1
      %s22 = ssub.s32 %s16, 2
      %s23 = sadd.s32 %s16, 1
      %s24 = ssub.s32 %s16, %s23
      %p25 = scmp.eq.s32.totalorder %s24, 0
      %s27 = sadd.s32 %s26, 1
      %s28 = scalar_select %p25, %s26, %s27
      %p31 = pneg %p25
      %p32 = scmp.eq.s32.totalorder %s16, 3
      %p33 = por %p31, %p32
      %p34 = scmp.ne.s32.totalorder %s26, %s29
      %p35 = scmp.eq.s32.totalorder %s16, 0
      %p36 = por %p34, %p35
      %p37 = scmp.ne.s32.totalorder %s26, %s29
      %p38 = scmp.eq.s32.totalorder %s21, 3
      %p39 = por %p37, %p38
      %p40 = scmp.ne.s32.totalorder %s29, %s30
      %p41 = scmp.eq.s32.totalorder %s21, 0
      %p42 = por %p40, %p41
      %p43 = scmp.ne.s32.totalorder %s29, %s30
      %p44 = scmp.eq.s32.totalorder %s22, 3
      %p45 = por %p43, %p44
      %p47 = scmp.ne.s32.totalorder %s30, %s46
      %p48 = scmp.eq.s32.totalorder %s22, 0
      %p49 = por %p47, %p48
      %s51 = sadd.s32 %s50, 1
      %p54 = scmp.eq.s32.totalorder %s16, 3
      %p55 = scmp.ne.s32.totalorder %s50, %s52
      %p56 = scmp.eq.s32.totalorder %s16, 0
      %p57 = por %p55, %p56
      %p58 = scmp.ne.s32.totalorder %s50, %s52
      %p59 = scmp.eq.s32.totalorder %s21, 3
      %p60 = por %p58, %p59
      %p61 = scmp.ne.s32.totalorder %s52, %s53
      %p62 = scmp.eq.s32.totalorder %s21, 0
      %p63 = por %p61, %p62
      %p64 = scmp.ne.s32.totalorder %s52, %s53
      %p65 = scmp.eq.s32.totalorder %s22, 3
      %p66 = por %p64, %p65
      %p68 = scmp.ne.s32.totalorder %s53, %s67
      %p69 = scmp.eq.s32.totalorder %s22, 0
      %p70 = por %p68, %p69
      %s72 = sadd.s32 %s71, 1
      %p75 = scmp.eq.s32.totalorder %s16, 3
      %p76 = scmp.ne.s32.totalorder %s71, %s73
      %p77 = scmp.eq.s32.totalorder %s16, 0
      %p78 = por %p76, %p77
      %p79 = scmp.ne.s32.totalorder %s71, %s73
      %p80 = scmp.eq.s32.totalorder %s21, 3
      %p81 = por %p79, %p80
      %p82 = scmp.ne.s32.totalorder %s73, %s74
      %p83 = scmp.eq.s32.totalorder %s21, 0
      %p84 = por %p82, %p83
      %p85 = scmp.ne.s32.totalorder %s73, %s74
      %p86 = scmp.eq.s32.totalorder %s22, 3
      %p87 = por %p85, %p86
      %p89 = scmp.ne.s32.totalorder %s74, %s88
      %p90 = scmp.eq.s32.totalorder %s22, 0
      %p91 = por %p89, %p90
      %s93 = sadd.s32 %s92, 1
      %p96 = scmp.eq.s32.totalorder %s16, 3
      %p97 = scmp.ne.s32.totalorder %s92, %s94
      %p98 = scmp.eq.s32.totalorder %s16, 0
      %p99 = por %p97, %p98
      %p100 = scmp.ne.s32.totalorder %s92, %s94
      %p101 = scmp.eq.s32.totalorder %s21, 3
      %p102 = por %p100, %p101
      %p103 = scmp.ne.s32.totalorder %s94, %s95
      %p104 = scmp.eq.s32.totalorder %s21, 0
      %p105 = por %p103, %p104
      %p106 = scmp.ne.s32.totalorder %s94, %s95
      %p107 = scmp.eq.s32.totalorder %s22, 3
      %p108 = por %p106, %p107
      %p110 = scmp.ne.s32.totalorder %s95, %s109
      %p111 = scmp.eq.s32.totalorder %s22, 0
      %p112 = por %p110, %p111
      %s114 = sadd.s32 %s113, 1
      %p117 = scmp.eq.s32.totalorder %s16, 3
      %p118 = scmp.ne.s32.totalorder %s113, %s115
      %p119 = scmp.eq.s32.totalorder %s16, 0
      %p120 = por %p118, %p119
      %p121 = scmp.ne.s32.totalorder %s113, %s115
      %p122 = scmp.eq.s32.totalorder %s21, 3
      %p123 = por %p121, %p122
      %p124 = scmp.ne.s32.totalorder %s115, %s116
      %p125 = scmp.eq.s32.totalorder %s21, 0
      %p126 = por %p124, %p125
      %p127 = scmp.ne.s32.totalorder %s115, %s116
      %p128 = scmp.eq.s32.totalorder %s22, 3
      %p129 = por %p127, %p128
      %p131 = scmp.ne.s32.totalorder %s116, %s130
      %p132 = scmp.eq.s32.totalorder %s22, 0
      %p133 = por %p131, %p132
      %s135 = sadd.s32 %s134, 1
      %p138 = scmp.eq.s32.totalorder %s16, 3
      %p139 = scmp.ne.s32.totalorder %s134, %s136
      %p140 = scmp.eq.s32.totalorder %s16, 0
      %p141 = por %p139, %p140
      %p142 = scmp.ne.s32.totalorder %s134, %s136
      %p143 = scmp.eq.s32.totalorder %s21, 3
      %p144 = por %p142, %p143
      %p145 = scmp.ne.s32.totalorder %s136, %s137
      %p146 = scmp.eq.s32.totalorder %s21, 0
      %p147 = por %p145, %p146
      %p148 = scmp.ne.s32.totalorder %s136, %s137
      %p149 = scmp.eq.s32.totalorder %s22, 3
      %p150 = por %p148, %p149
      %p152 = scmp.ne.s32.totalorder %s137, %s151
      %p153 = scmp.eq.s32.totalorder %s22, 0
      %p154 = por %p152, %p153
      %s156 = sadd.s32 %s155, 1
      %p159 = scmp.eq.s32.totalorder %s16, 3
      %p160 = scmp.ne.s32.totalorder %s155, %s157
      %p161 = scmp.eq.s32.totalorder %s16, 0
      %p162 = por %p160, %p161
      %p163 = scmp.ne.s32.totalorder %s155, %s157
      %p164 = scmp.eq.s32.totalorder %s21, 3
      %p165 = por %p163, %p164
      %p166 = scmp.ne.s32.totalorder %s157, %s158
      %p167 = scmp.eq.s32.totalorder %s21, 0
      %p168 = por %p166, %p167
      %p169 = scmp.ne.s32.totalorder %s157, %s158
      %p170 = scmp.eq.s32.totalorder %s22, 3
      %p171 = por %p169, %p170
      %p173 = scmp.ne.s32.totalorder %s158, %s172
      %p174 = scmp.eq.s32.totalorder %s22, 0
      %p175 = por %p173, %p174
      %s176 = ssub.s32 %s16, %s23
      %p177 = scmp.eq.s32.totalorder %s176, 0
      %s179 = sadd.s32 %s178, 1
      %s180 = scalar_select %p177, %s178, %s179
      %p183 = pneg %p177
      %p184 = scmp.eq.s32.totalorder %s16, 3
      %p185 = por %p183, %p184
      %p186 = scmp.ne.s32.totalorder %s178, %s181
      %p187 = scmp.eq.s32.totalorder %s16, 0
      %p188 = por %p186, %p187
      %p189 = scmp.ne.s32.totalorder %s178, %s181
      %p190 = scmp.eq.s32.totalorder %s21, 3
      %p191 = por %p189, %p190
      %p192 = scmp.ne.s32.totalorder %s181, %s182
      %p193 = scmp.eq.s32.totalorder %s21, 0
      %p194 = por %p192, %p193
      %p195 = scmp.ne.s32.totalorder %s181, %s182
      %p196 = scmp.eq.s32.totalorder %s22, 3
      %p197 = por %p195, %p196
      %p199 = scmp.ne.s32.totalorder %s182, %s198
      %p200 = scmp.eq.s32.totalorder %s22, 0
      %p201 = por %p199, %p200
      %p202 = scmp.le.s32.totalorder 1, %s16
      %p203 = scmp.lt.s32.totalorder %s16, 5
      %p204 = pnand %p202, %p203
      %p205 = pneg %p204
      // Predicated region
      $region9: #{context4_forward.4} parent=5 // pred_check
        _
      $region10: #{context4_forward.4} parent=5 // pred_check_branch
        %207 = sbr.rel (%p204) target = $region12
      $region11: #{context4_forward.4} parent=5 // pred_region
        %s208 = ssub.s32 %s16, 1
        // Predicated region
        $region13: #{context4_forward.4} parent=11 // pred_check
          %p209 = pneg %p63
        $region14: #{context4_forward.4} parent=11 // pred_check_branch
          %211 = sbr.rel (%p209) target = $region16
        $region15: #{context4_forward.4} parent=11 // pred_region
          _
        $region16: #{context4_forward.4} parent=11 // pred_fallthru
          _
        // Predicated region
        $region17: #{context4_forward.4} parent=11 // pred_check
          %p212 = pneg %p84
        $region18: #{context4_forward.4} parent=11 // pred_check_branch
          %214 = sbr.rel (%p212) target = $region20
        $region19: #{context4_forward.4} parent=11 // pred_region
          _
        $region20: #{context4_forward.4} parent=11 // pred_fallthru
          _
        // Predicated region
        $region21: #{context4_forward.4} parent=11 // pred_check
          %p215 = pneg %p105
        $region22: #{context4_forward.4} parent=11 // pred_check_branch
          %217 = sbr.rel (%p215) target = $region24
        $region23: #{context4_forward.4} parent=11 // pred_region
          _
        $region24: #{context4_forward.4} parent=11 // pred_fallthru
          _
        // Predicated region
        $region25: #{context4_forward.4} parent=11 // pred_check
          %p218 = pneg %p126
        $region26: #{context4_forward.4} parent=11 // pred_check_branch
          %220 = sbr.rel (%p218) target = $region28
        $region27: #{context4_forward.4} parent=11 // pred_region
          _
        $region28: #{context4_forward.4} parent=11 // pred_fallthru
          _
        // Predicated region
        $region29: #{context4_forward.4} parent=11 // pred_check
          %p221 = pneg %p147
        $region30: #{context4_forward.4} parent=11 // pred_check_branch
          %223 = sbr.rel (%p221) target = $region32
        $region31: #{context4_forward.4} parent=11 // pred_region
          _
        $region32: #{context4_forward.4} parent=11 // pred_fallthru
          _
        // Predicated region
        $region33: #{context4_forward.4} parent=11 // pred_check
          %p224 = pneg %p168
        $region34: #{context4_forward.4} parent=11 // pred_check_branch
          %226 = sbr.rel (%p224) target = $region36
        $region35: #{context4_forward.4} parent=11 // pred_region
          _
        $region36: #{context4_forward.4} parent=11 // pred_fallthru
          _
      $region12: #{context4_forward.4} parent=5 // pred_fallthru
        _
      %p227 = scmp.lt.s32.totalorder %s16, 4
      // Predicated region
      $region37: #{context4_forward.4} parent=5 // pred_check
        %p228 = pneg %p227
      $region38: #{context4_forward.4} parent=5 // pred_check_branch
        %230 = sbr.rel (%p228) target = $region40
      $region39: #{context4_forward.4} parent=5 // pred_region
        // Predicated region
        $region41: #{context4_forward.4} parent=39 // pred_check
          %p231 = pneg %p36
        $region42: #{context4_forward.4} parent=39 // pred_check_branch
          %233 = sbr.rel (%p231) target = $region44
        $region43: #{context4_forward.4} parent=39 // pred_region
          %s234 = sand.u32 %s26, 1
          %s235 = scalar_lea.sflag [#allocation3], %s234
          %s236 = sand.u32 %s26, 1
          %s237 = smul.addr %s236, 1024
          %s238 = scalar_lea.vmem [#allocation2], %s237
          %s239 = smul.u32 256, %s16
          %s241 = ssub.s32 16384, 16384
          %242 = vsyncadd %s235, %s241
          %s243 = smul.addr %s239, 64
          %s244 = scalar_lea.hbm %s0, %s243
          %s245 = sshll.u32 %s238, 4
          %s246 = int_to_ptr.vmem [resolvable:$true] %s245
          %251 = dma.hbm_to_vmem [thread:$0]  %s244, 16384, %s246, %s235, 64, 64, 4
        $region44: #{context4_forward.4} parent=39 // pred_fallthru
          _
      $region40: #{context4_forward.4} parent=5 // pred_fallthru
        _
      %p252 = scmp.le.s32.totalorder 1, %s16
      %p253 = scmp.lt.s32.totalorder %s16, 5
      %p254 = pnand %p252, %p253
      %p255 = pneg %p254
      // Predicated region
      $region45: #{context4_forward.4} parent=5 // pred_check
        _
      $region46: #{context4_forward.4} parent=5 // pred_check_branch
        %257 = sbr.rel (%p254) target = $region48
      $region47: #{context4_forward.4} parent=5 // pred_region
        %s258 = ssub.s32 %s16, 1
        %s259 = sand.u32 %s29, 1
        %s260 = scalar_lea.sflag [#allocation3], %s259
        %s261 = sand.u32 %s29, 1
        %s262 = smul.addr %s261, 1024
        %s263 = scalar_lea.vmem [#allocation2], %s262
        // Predicated region
        $region49: #{context4_forward.4} parent=47 // pred_check
          %p264 = pneg %p42
        $region50: #{context4_forward.4} parent=47 // pred_check_branch
          %266 = sbr.rel (%p264) target = $region52
        $region51: #{context4_forward.4} parent=47 // pred_region
          %267 = dma.done %s260, 16384
        $region52: #{context4_forward.4} parent=47 // pred_fallthru
          _
        %s268 = sand.u32 %s29, 1
        %s269 = scalar_lea.sflag [#allocation3], %s268
        %s270 = sand.u32 %s29, 1
        %s271 = smul.addr %s270, 1024
        %s272 = scalar_lea.vmem [#allocation2], %s271
        %p273 = pneg %p42
        %p274 = pneg %p39
        %p275 = pneg %p63
        %p276 = pneg %p60
        %p277 = pneg %p84
        %p278 = pneg %p81
        %p279 = pneg %p105
        %p280 = pneg %p102
        %p281 = pneg %p126
        %p282 = pneg %p123
        %p283 = pneg %p147
        %p284 = pneg %p144
        %p285 = pneg %p168
        %p286 = pneg %p165
        %p287 = pneg %p194
        %p288 = pneg %p191
        %s289 = smul.u32 256, %s21
        %p290 = scmp.lt.s32.totalorder %s289, 1023
        %s291 = scalar_select %p290, %s289, 1023
        %s292 = smul.addr %s291, 8
        %s293 = scalar_lea.vmem %s7, %s292
        %s294 = smul.u32 256, %s21
        %s295 = smul.u32 256, %s21
        %p296 = scmp.lt.s32.totalorder %s295, 1023
        %s297 = scalar_select %p296, %s295, 1023
        %s298 = smul.addr %s297, 8
        %s299 = scalar_lea.vmem %s7, %s298
        %s300 = smul.u32 256, %s21
        %v302 = vld [vmem:[%s263] sm:$0xf]
        %v303 = vld [vmem:[%s263 + $0x4] sm:$0xf]
        %v304 = vld [vmem:[%s263 + $0x8] sm:$0xf]
        %v305 = vld [vmem:[%s263 + $0xc] sm:$0xf]
        %v306 = vld [vmem:[%s263 + $0x10] sm:$0xf]
        %v307 = vld [vmem:[%s263 + $0x14] sm:$0xf]
        %v308 = vld [vmem:[%s263 + $0x18] sm:$0xf]
        %v309 = vld [vmem:[%s263 + $0x1c] sm:$0xf]
        %v310 = vld [vmem:[%s263 + $0x20] sm:$0xf]
        %v311 = vld [vmem:[%s263 + $0x24] sm:$0xf]
        %v312 = vld [vmem:[%s263 + $0x28] sm:$0xf]
        %v313 = vld [vmem:[%s263 + $0x2c] sm:$0xf]
        %v314 = vld [vmem:[%s263 + $0x30] sm:$0xf]
        %v315 = vld [vmem:[%s263 + $0x34] sm:$0xf]
        %v316 = vld [vmem:[%s263 + $0x38] sm:$0xf]
        %v317 = vld [vmem:[%s263 + $0x3c] sm:$0xf]
        %v318 = vld [vmem:[%s263 + $0x40] sm:$0xf]
        %v319 = vld [vmem:[%s263 + $0x44] sm:$0xf]
        %v320 = vld [vmem:[%s263 + $0x48] sm:$0xf]
        %v321 = vld [vmem:[%s263 + $0x4c] sm:$0xf]
        %v322 = vld [vmem:[%s263 + $0x50] sm:$0xf]
        %v323 = vld [vmem:[%s263 + $0x54] sm:$0xf]
        %v324 = vld [vmem:[%s263 + $0x58] sm:$0xf]
        %v325 = vld [vmem:[%s263 + $0x5c] sm:$0xf]
        %v326 = vld [vmem:[%s263 + $0x60] sm:$0xf]
        %v327 = vld [vmem:[%s263 + $0x64] sm:$0xf]
        %v328 = vld [vmem:[%s263 + $0x68] sm:$0xf]
        %v329 = vld [vmem:[%s263 + $0x6c] sm:$0xf]
        %v330 = vld [vmem:[%s263 + $0x70] sm:$0xf]
        %v331 = vld [vmem:[%s263 + $0x74] sm:$0xf]
        %v332 = vld [vmem:[%s263 + $0x78] sm:$0xf]
        %v333 = vld [vmem:[%s263 + $0x7c] sm:$0xf]
        %v334 = vld [vmem:[%s263 + $0x80] sm:$0xf]
        %v335 = vld [vmem:[%s263 + $0x84] sm:$0xf]
        %v336 = vld [vmem:[%s263 + $0x88] sm:$0xf]
        %v337 = vld [vmem:[%s263 + $0x8c] sm:$0xf]
        %v338 = vld [vmem:[%s263 + $0x90] sm:$0xf]
        %v339 = vld [vmem:[%s263 + $0x94] sm:$0xf]
        %v340 = vld [vmem:[%s263 + $0x98] sm:$0xf]
        %v341 = vld [vmem:[%s263 + $0x9c] sm:$0xf]
        %v342 = vld [vmem:[%s263 + $0xa0] sm:$0xf]
        %v343 = vld [vmem:[%s263 + $0xa4] sm:$0xf]
        %v344 = vld [vmem:[%s263 + $0xa8] sm:$0xf]
        %v345 = vld [vmem:[%s263 + $0xac] sm:$0xf]
        %v346 = vld [vmem:[%s263 + $0xb0] sm:$0xf]
        %v347 = vld [vmem:[%s263 + $0xb4] sm:$0xf]
        %v348 = vld [vmem:[%s263 + $0xb8] sm:$0xf]
        %v349 = vld [vmem:[%s263 + $0xbc] sm:$0xf]
        %v350 = vld [vmem:[%s263 + $0xc0] sm:$0xf]
        %v351 = vld [vmem:[%s263 + $0xc4] sm:$0xf]
        %v352 = vld [vmem:[%s263 + $0xc8] sm:$0xf]
        %v353 = vld [vmem:[%s263 + $0xcc] sm:$0xf]
        %v354 = vld [vmem:[%s263 + $0xd0] sm:$0xf]
        %v355 = vld [vmem:[%s263 + $0xd4] sm:$0xf]
        %v356 = vld [vmem:[%s263 + $0xd8] sm:$0xf]
        %v357 = vld [vmem:[%s263 + $0xdc] sm:$0xf]
        %v358 = vld [vmem:[%s263 + $0xe0] sm:$0xf]
        %v359 = vld [vmem:[%s263 + $0xe4] sm:$0xf]
        %v360 = vld [vmem:[%s263 + $0xe8] sm:$0xf]
        %v361 = vld [vmem:[%s263 + $0xec] sm:$0xf]
        %v362 = vld [vmem:[%s263 + $0xf0] sm:$0xf]
        %v363 = vld [vmem:[%s263 + $0xf4] sm:$0xf]
        %v364 = vld [vmem:[%s263 + $0xf8] sm:$0xf]
        %v365 = vld [vmem:[%s263 + $0xfc] sm:$0xf]
        %v366 = vld [vmem:[%s263 + $0x100] sm:$0xf]
        %v367 = vld [vmem:[%s263 + $0x104] sm:$0xf]
        %v368 = vld [vmem:[%s263 + $0x108] sm:$0xf]
        %v369 = vld [vmem:[%s263 + $0x10c] sm:$0xf]
        %v370 = vld [vmem:[%s263 + $0x110] sm:$0xf]
        %v371 = vld [vmem:[%s263 + $0x114] sm:$0xf]
        %v372 = vld [vmem:[%s263 + $0x118] sm:$0xf]
        %v373 = vld [vmem:[%s263 + $0x11c] sm:$0xf]
        %v374 = vld [vmem:[%s263 + $0x120] sm:$0xf]
        %v375 = vld [vmem:[%s263 + $0x124] sm:$0xf]
        %v376 = vld [vmem:[%s263 + $0x128] sm:$0xf]
        %v377 = vld [vmem:[%s263 + $0x12c] sm:$0xf]
        %v378 = vld [vmem:[%s263 + $0x130] sm:$0xf]
        %v379 = vld [vmem:[%s263 + $0x134] sm:$0xf]
        %v380 = vld [vmem:[%s263 + $0x138] sm:$0xf]
        %v381 = vld [vmem:[%s263 + $0x13c] sm:$0xf]
        %v382 = vld [vmem:[%s263 + $0x140] sm:$0xf]
        %v383 = vld [vmem:[%s263 + $0x144] sm:$0xf]
        %v384 = vld [vmem:[%s263 + $0x148] sm:$0xf]
        %v385 = vld [vmem:[%s263 + $0x14c] sm:$0xf]
        %v386 = vld [vmem:[%s263 + $0x150] sm:$0xf]
        %v387 = vld [vmem:[%s263 + $0x154] sm:$0xf]
        %v388 = vld [vmem:[%s263 + $0x158] sm:$0xf]
        %v389 = vld [vmem:[%s263 + $0x15c] sm:$0xf]
        %v390 = vld [vmem:[%s263 + $0x160] sm:$0xf]
        %v391 = vld [vmem:[%s263 + $0x164] sm:$0xf]
        %v392 = vld [vmem:[%s263 + $0x168] sm:$0xf]
        %v393 = vld [vmem:[%s263 + $0x16c] sm:$0xf]
        %v394 = vld [vmem:[%s263 + $0x170] sm:$0xf]
        %v395 = vld [vmem:[%s263 + $0x174] sm:$0xf]
        %v396 = vld [vmem:[%s263 + $0x178] sm:$0xf]
        %v397 = vld [vmem:[%s263 + $0x17c] sm:$0xf]
        %v398 = vld [vmem:[%s263 + $0x180] sm:$0xf]
        %v399 = vld [vmem:[%s263 + $0x184] sm:$0xf]
        %v400 = vld [vmem:[%s263 + $0x188] sm:$0xf]
        %v401 = vld [vmem:[%s263 + $0x18c] sm:$0xf]
        %v402 = vld [vmem:[%s263 + $0x190] sm:$0xf]
        %v403 = vld [vmem:[%s263 + $0x194] sm:$0xf]
        %v404 = vld [vmem:[%s263 + $0x198] sm:$0xf]
        %v405 = vld [vmem:[%s263 + $0x19c] sm:$0xf]
        %v406 = vld [vmem:[%s263 + $0x1a0] sm:$0xf]
        %v407 = vld [vmem:[%s263 + $0x1a4] sm:$0xf]
        %v408 = vld [vmem:[%s263 + $0x1a8] sm:$0xf]
        %v409 = vld [vmem:[%s263 + $0x1ac] sm:$0xf]
        %v410 = vld [vmem:[%s263 + $0x1b0] sm:$0xf]
        %v411 = vld [vmem:[%s263 + $0x1b4] sm:$0xf]
        %v412 = vld [vmem:[%s263 + $0x1b8] sm:$0xf]
        %v413 = vld [vmem:[%s263 + $0x1bc] sm:$0xf]
        %v414 = vld [vmem:[%s263 + $0x1c0] sm:$0xf]
        %v415 = vld [vmem:[%s263 + $0x1c4] sm:$0xf]
        %v416 = vld [vmem:[%s263 + $0x1c8] sm:$0xf]
        %v417 = vld [vmem:[%s263 + $0x1cc] sm:$0xf]
        %v418 = vld [vmem:[%s263 + $0x1d0] sm:$0xf]
        %v419 = vld [vmem:[%s263 + $0x1d4] sm:$0xf]
        %v420 = vld [vmem:[%s263 + $0x1d8] sm:$0xf]
        %v421 = vld [vmem:[%s263 + $0x1dc] sm:$0xf]
        %v422 = vld [vmem:[%s263 + $0x1e0] sm:$0xf]
        %v423 = vld [vmem:[%s263 + $0x1e4] sm:$0xf]
        %v424 = vld [vmem:[%s263 + $0x1e8] sm:$0xf]
        %v425 = vld [vmem:[%s263 + $0x1ec] sm:$0xf]
        %v426 = vld [vmem:[%s263 + $0x1f0] sm:$0xf]
        %v427 = vld [vmem:[%s263 + $0x1f4] sm:$0xf]
        %v428 = vld [vmem:[%s263 + $0x1f8] sm:$0xf]
        %v429 = vld [vmem:[%s263 + $0x1fc] sm:$0xf]
        %v430 = vld [vmem:[%s263 + $0x200] sm:$0xf]
        %v431 = vld [vmem:[%s263 + $0x204] sm:$0xf]
        %v432 = vld [vmem:[%s263 + $0x208] sm:$0xf]
        %v433 = vld [vmem:[%s263 + $0x20c] sm:$0xf]
        %v434 = vld [vmem:[%s263 + $0x210] sm:$0xf]
        %v435 = vld [vmem:[%s263 + $0x214] sm:$0xf]
        %v436 = vld [vmem:[%s263 + $0x218] sm:$0xf]
        %v437 = vld [vmem:[%s263 + $0x21c] sm:$0xf]
        %v438 = vld [vmem:[%s263 + $0x220] sm:$0xf]
        %v439 = vld [vmem:[%s263 + $0x224] sm:$0xf]
        %v440 = vld [vmem:[%s263 + $0x228] sm:$0xf]
        %v441 = vld [vmem:[%s263 + $0x22c] sm:$0xf]
        %v442 = vld [vmem:[%s263 + $0x230] sm:$0xf]
        %v443 = vld [vmem:[%s263 + $0x234] sm:$0xf]
        %v444 = vld [vmem:[%s263 + $0x238] sm:$0xf]
        %v445 = vld [vmem:[%s263 + $0x23c] sm:$0xf]
        %v446 = vld [vmem:[%s263 + $0x240] sm:$0xf]
        %v447 = vld [vmem:[%s263 + $0x244] sm:$0xf]
        %v448 = vld [vmem:[%s263 + $0x248] sm:$0xf]
        %v449 = vld [vmem:[%s263 + $0x24c] sm:$0xf]
        %v450 = vld [vmem:[%s263 + $0x250] sm:$0xf]
        %v451 = vld [vmem:[%s263 + $0x254] sm:$0xf]
        %v452 = vld [vmem:[%s263 + $0x258] sm:$0xf]
        %v453 = vld [vmem:[%s263 + $0x25c] sm:$0xf]
        %v454 = vld [vmem:[%s263 + $0x260] sm:$0xf]
        %v455 = vld [vmem:[%s263 + $0x264] sm:$0xf]
        %v456 = vld [vmem:[%s263 + $0x268] sm:$0xf]
        %v457 = vld [vmem:[%s263 + $0x26c] sm:$0xf]
        %v458 = vld [vmem:[%s263 + $0x270] sm:$0xf]
        %v459 = vld [vmem:[%s263 + $0x274] sm:$0xf]
        %v460 = vld [vmem:[%s263 + $0x278] sm:$0xf]
        %v461 = vld [vmem:[%s263 + $0x27c] sm:$0xf]
        %v462 = vld [vmem:[%s263 + $0x280] sm:$0xf]
        %v463 = vld [vmem:[%s263 + $0x284] sm:$0xf]
        %v464 = vld [vmem:[%s263 + $0x288] sm:$0xf]
        %v465 = vld [vmem:[%s263 + $0x28c] sm:$0xf]
        %v466 = vld [vmem:[%s263 + $0x290] sm:$0xf]
        %v467 = vld [vmem:[%s263 + $0x294] sm:$0xf]
        %v468 = vld [vmem:[%s263 + $0x298] sm:$0xf]
        %v469 = vld [vmem:[%s263 + $0x29c] sm:$0xf]
        %v470 = vld [vmem:[%s263 + $0x2a0] sm:$0xf]
        %v471 = vld [vmem:[%s263 + $0x2a4] sm:$0xf]
        %v472 = vld [vmem:[%s263 + $0x2a8] sm:$0xf]
        %v473 = vld [vmem:[%s263 + $0x2ac] sm:$0xf]
        %v474 = vld [vmem:[%s263 + $0x2b0] sm:$0xf]
        %v475 = vld [vmem:[%s263 + $0x2b4] sm:$0xf]
        %v476 = vld [vmem:[%s263 + $0x2b8] sm:$0xf]
        %v477 = vld [vmem:[%s263 + $0x2bc] sm:$0xf]
        %v478 = vld [vmem:[%s263 + $0x2c0] sm:$0xf]
        %v479 = vld [vmem:[%s263 + $0x2c4] sm:$0xf]
        %v480 = vld [vmem:[%s263 + $0x2c8] sm:$0xf]
        %v481 = vld [vmem:[%s263 + $0x2cc] sm:$0xf]
        %v482 = vld [vmem:[%s263 + $0x2d0] sm:$0xf]
        %v483 = vld [vmem:[%s263 + $0x2d4] sm:$0xf]
        %v484 = vld [vmem:[%s263 + $0x2d8] sm:$0xf]
        %v485 = vld [vmem:[%s263 + $0x2dc] sm:$0xf]
        %v486 = vld [vmem:[%s263 + $0x2e0] sm:$0xf]
        %v487 = vld [vmem:[%s263 + $0x2e4] sm:$0xf]
        %v488 = vld [vmem:[%s263 + $0x2e8] sm:$0xf]
        %v489 = vld [vmem:[%s263 + $0x2ec] sm:$0xf]
        %v490 = vld [vmem:[%s263 + $0x2f0] sm:$0xf]
        %v491 = vld [vmem:[%s263 + $0x2f4] sm:$0xf]
        %v492 = vld [vmem:[%s263 + $0x2f8] sm:$0xf]
        %v493 = vld [vmem:[%s263 + $0x2fc] sm:$0xf]
        %v494 = vld [vmem:[%s263 + $0x300] sm:$0xf]
        %v495 = vld [vmem:[%s263 + $0x304] sm:$0xf]
        %v496 = vld [vmem:[%s263 + $0x308] sm:$0xf]
        %v497 = vld [vmem:[%s263 + $0x30c] sm:$0xf]
        %v498 = vld [vmem:[%s263 + $0x310] sm:$0xf]
        %v499 = vld [vmem:[%s263 + $0x314] sm:$0xf]
        %v500 = vld [vmem:[%s263 + $0x318] sm:$0xf]
        %v501 = vld [vmem:[%s263 + $0x31c] sm:$0xf]
        %v502 = vld [vmem:[%s263 + $0x320] sm:$0xf]
        %v503 = vld [vmem:[%s263 + $0x324] sm:$0xf]
        %v504 = vld [vmem:[%s263 + $0x328] sm:$0xf]
        %v505 = vld [vmem:[%s263 + $0x32c] sm:$0xf]
        %v506 = vld [vmem:[%s263 + $0x330] sm:$0xf]
        %v507 = vld [vmem:[%s263 + $0x334] sm:$0xf]
        %v508 = vld [vmem:[%s263 + $0x338] sm:$0xf]
        %v509 = vld [vmem:[%s263 + $0x33c] sm:$0xf]
        %v510 = vld [vmem:[%s263 + $0x340] sm:$0xf]
        %v511 = vld [vmem:[%s263 + $0x344] sm:$0xf]
        %v512 = vld [vmem:[%s263 + $0x348] sm:$0xf]
        %v513 = vld [vmem:[%s263 + $0x34c] sm:$0xf]
        %v514 = vld [vmem:[%s263 + $0x350] sm:$0xf]
        %v515 = vld [vmem:[%s263 + $0x354] sm:$0xf]
        %v516 = vld [vmem:[%s263 + $0x358] sm:$0xf]
        %v517 = vld [vmem:[%s263 + $0x35c] sm:$0xf]
        %v518 = vld [vmem:[%s263 + $0x360] sm:$0xf]
        %v519 = vld [vmem:[%s263 + $0x364] sm:$0xf]
        %v520 = vld [vmem:[%s263 + $0x368] sm:$0xf]
        %v521 = vld [vmem:[%s263 + $0x36c] sm:$0xf]
        %v522 = vld [vmem:[%s263 + $0x370] sm:$0xf]
        %v523 = vld [vmem:[%s263 + $0x374] sm:$0xf]
        %v524 = vld [vmem:[%s263 + $0x378] sm:$0xf]
        %v525 = vld [vmem:[%s263 + $0x37c] sm:$0xf]
        %v526 = vld [vmem:[%s263 + $0x380] sm:$0xf]
        %v527 = vld [vmem:[%s263 + $0x384] sm:$0xf]
        %v528 = vld [vmem:[%s263 + $0x388] sm:$0xf]
        %v529 = vld [vmem:[%s263 + $0x38c] sm:$0xf]
        %v530 = vld [vmem:[%s263 + $0x390] sm:$0xf]
        %v531 = vld [vmem:[%s263 + $0x394] sm:$0xf]
        %v532 = vld [vmem:[%s263 + $0x398] sm:$0xf]
        %v533 = vld [vmem:[%s263 + $0x39c] sm:$0xf]
        %v534 = vld [vmem:[%s263 + $0x3a0] sm:$0xf]
        %v535 = vld [vmem:[%s263 + $0x3a4] sm:$0xf]
        %v536 = vld [vmem:[%s263 + $0x3a8] sm:$0xf]
        %v537 = vld [vmem:[%s263 + $0x3ac] sm:$0xf]
        %v538 = vld [vmem:[%s263 + $0x3b0] sm:$0xf]
        %v539 = vld [vmem:[%s263 + $0x3b4] sm:$0xf]
        %v540 = vld [vmem:[%s263 + $0x3b8] sm:$0xf]
        %v541 = vld [vmem:[%s263 + $0x3bc] sm:$0xf]
        %v542 = vld [vmem:[%s263 + $0x3c0] sm:$0xf]
        %v543 = vld [vmem:[%s263 + $0x3c4] sm:$0xf]
        %v544 = vld [vmem:[%s263 + $0x3c8] sm:$0xf]
        %v545 = vld [vmem:[%s263 + $0x3cc] sm:$0xf]
        %v546 = vld [vmem:[%s263 + $0x3d0] sm:$0xf]
        %v547 = vld [vmem:[%s263 + $0x3d4] sm:$0xf]
        %v548 = vld [vmem:[%s263 + $0x3d8] sm:$0xf]
        %v549 = vld [vmem:[%s263 + $0x3dc] sm:$0xf]
        %v550 = vld [vmem:[%s263 + $0x3e0] sm:$0xf]
        %v551 = vld [vmem:[%s263 + $0x3e4] sm:$0xf]
        %v552 = vld [vmem:[%s263 + $0x3e8] sm:$0xf]
        %v553 = vld [vmem:[%s263 + $0x3ec] sm:$0xf]
        %v554 = vld [vmem:[%s263 + $0x3f0] sm:$0xf]
        %v555 = vld [vmem:[%s263 + $0x3f4] sm:$0xf]
        %v556 = vld [vmem:[%s263 + $0x3f8] sm:$0xf]
        %v557 = vld [vmem:[%s263 + $0x3fc] sm:$0xf]
        %v558 = vld [vmem:[%s1] sm:$0xf]
        %v559 = vld [vmem:[%s1 + $0x4] sm:$0xf]
        %v560 = vld [vmem:[%s1 + $0x8] sm:$0xf]
        %v561 = vld [vmem:[%s1 + $0xc] sm:$0xf]
        %v562 = vld [vmem:[%s1 + $0x10] sm:$0xf]
        %v563 = vld [vmem:[%s1 + $0x14] sm:$0xf]
        %v564 = vld [vmem:[%s1 + $0x18] sm:$0xf]
        %v565 = vld [vmem:[%s1 + $0x1c] sm:$0xf]
        %v566 = vld [vmem:[%s2] sm:$0x1]
        %v568 = vlaneseq
        %v569 = vshrl.u32 %v568, 7
        %v570 = vsub.s32 0, %v569
        %v571 = vrot.slane %v566, %v570
        %v829 = vunpack.c.l.b16 %v302
        %v830 = vunpack.c.l.b16 %v303
        %v831 = vunpack.c.l.b16 %v304
        %v832 = vunpack.c.l.b16 %v305
        %v833 = vunpack.c.l.b16 %v306
        %v834 = vunpack.c.l.b16 %v307
        %v835 = vunpack.c.l.b16 %v308
        %v836 = vunpack.c.l.b16 %v309
        %v837 = vunpack.c.l.b16 %v310
        %v838 = vunpack.c.l.b16 %v311
        %v839 = vunpack.c.l.b16 %v312
        %v840 = vunpack.c.l.b16 %v313
        %v841 = vunpack.c.l.b16 %v314
        %v842 = vunpack.c.l.b16 %v315
        %v843 = vunpack.c.l.b16 %v316
        %v844 = vunpack.c.l.b16 %v317
        %v845 = vunpack.c.l.b16 %v318
        %v846 = vunpack.c.l.b16 %v319
        %v847 = vunpack.c.l.b16 %v320
        %v848 = vunpack.c.l.b16 %v321
        %v849 = vunpack.c.l.b16 %v322
        %v850 = vunpack.c.l.b16 %v323
        %v851 = vunpack.c.l.b16 %v324
        %v852 = vunpack.c.l.b16 %v325
        %v853 = vunpack.c.l.b16 %v326
        %v854 = vunpack.c.l.b16 %v327
        %v855 = vunpack.c.l.b16 %v328
        %v856 = vunpack.c.l.b16 %v329
        %v857 = vunpack.c.l.b16 %v330
        %v858 = vunpack.c.l.b16 %v331
        %v859 = vunpack.c.l.b16 %v332
        %v860 = vunpack.c.l.b16 %v333
        %v861 = vunpack.c.l.b16 %v334
        %v862 = vunpack.c.l.b16 %v335
        %v863 = vunpack.c.l.b16 %v336
        %v864 = vunpack.c.l.b16 %v337
        %v865 = vunpack.c.l.b16 %v338
        %v866 = vunpack.c.l.b16 %v339
        %v867 = vunpack.c.l.b16 %v340
        %v868 = vunpack.c.l.b16 %v341
        %v869 = vunpack.c.l.b16 %v342
        %v870 = vunpack.c.l.b16 %v343
        %v871 = vunpack.c.l.b16 %v344
        %v872 = vunpack.c.l.b16 %v345
        %v873 = vunpack.c.l.b16 %v346
        %v874 = vunpack.c.l.b16 %v347
        %v875 = vunpack.c.l.b16 %v348
        %v876 = vunpack.c.l.b16 %v349
        %v877 = vunpack.c.l.b16 %v350
        %v878 = vunpack.c.l.b16 %v351
        %v879 = vunpack.c.l.b16 %v352
        %v880 = vunpack.c.l.b16 %v353
        %v881 = vunpack.c.l.b16 %v354
        %v882 = vunpack.c.l.b16 %v355
        %v883 = vunpack.c.l.b16 %v356
        %v884 = vunpack.c.l.b16 %v357
        %v885 = vunpack.c.l.b16 %v358
        %v886 = vunpack.c.l.b16 %v359
        %v887 = vunpack.c.l.b16 %v360
        %v888 = vunpack.c.l.b16 %v361
        %v889 = vunpack.c.l.b16 %v362
        %v890 = vunpack.c.l.b16 %v363
        %v891 = vunpack.c.l.b16 %v364
        %v892 = vunpack.c.l.b16 %v365
        %v893 = vunpack.c.l.b16 %v366
        %v894 = vunpack.c.l.b16 %v367
        %v895 = vunpack.c.l.b16 %v368
        %v896 = vunpack.c.l.b16 %v369
        %v897 = vunpack.c.l.b16 %v370
        %v898 = vunpack.c.l.b16 %v371
        %v899 = vunpack.c.l.b16 %v372
        %v900 = vunpack.c.l.b16 %v373
        %v901 = vunpack.c.l.b16 %v374
        %v902 = vunpack.c.l.b16 %v375
        %v903 = vunpack.c.l.b16 %v376
        %v904 = vunpack.c.l.b16 %v377
        %v905 = vunpack.c.l.b16 %v378
        %v906 = vunpack.c.l.b16 %v379
        %v907 = vunpack.c.l.b16 %v380
        %v908 = vunpack.c.l.b16 %v381
        %v909 = vunpack.c.l.b16 %v382
        %v910 = vunpack.c.l.b16 %v383
        %v911 = vunpack.c.l.b16 %v384
        %v912 = vunpack.c.l.b16 %v385
        %v913 = vunpack.c.l.b16 %v386
        %v914 = vunpack.c.l.b16 %v387
        %v915 = vunpack.c.l.b16 %v388
        %v916 = vunpack.c.l.b16 %v389
        %v917 = vunpack.c.l.b16 %v390
        %v918 = vunpack.c.l.b16 %v391
        %v919 = vunpack.c.l.b16 %v392
        %v920 = vunpack.c.l.b16 %v393
        %v921 = vunpack.c.l.b16 %v394
        %v922 = vunpack.c.l.b16 %v395
        %v923 = vunpack.c.l.b16 %v396
        %v924 = vunpack.c.l.b16 %v397
        %v925 = vunpack.c.l.b16 %v398
        %v926 = vunpack.c.l.b16 %v399
        %v927 = vunpack.c.l.b16 %v400
        %v928 = vunpack.c.l.b16 %v401
        %v929 = vunpack.c.l.b16 %v402
        %v930 = vunpack.c.l.b16 %v403
        %v931 = vunpack.c.l.b16 %v404
        %v932 = vunpack.c.l.b16 %v405
        %v933 = vunpack.c.l.b16 %v406
        %v934 = vunpack.c.l.b16 %v407
        %v935 = vunpack.c.l.b16 %v408
        %v936 = vunpack.c.l.b16 %v409
        %v937 = vunpack.c.l.b16 %v410
        %v938 = vunpack.c.l.b16 %v411
        %v939 = vunpack.c.l.b16 %v412
        %v940 = vunpack.c.l.b16 %v413
        %v941 = vunpack.c.l.b16 %v414
        %v942 = vunpack.c.l.b16 %v415
        %v943 = vunpack.c.l.b16 %v416
        %v944 = vunpack.c.l.b16 %v417
        %v945 = vunpack.c.l.b16 %v418
        %v946 = vunpack.c.l.b16 %v419
        %v947 = vunpack.c.l.b16 %v420
        %v948 = vunpack.c.l.b16 %v421
        %v949 = vunpack.c.l.b16 %v422
        %v950 = vunpack.c.l.b16 %v423
        %v951 = vunpack.c.l.b16 %v424
        %v952 = vunpack.c.l.b16 %v425
        %v953 = vunpack.c.l.b16 %v426
        %v954 = vunpack.c.l.b16 %v427
        %v955 = vunpack.c.l.b16 %v428
        %v956 = vunpack.c.l.b16 %v429
        %v957 = vunpack.c.l.b16 %v430
        %v958 = vunpack.c.l.b16 %v431
        %v959 = vunpack.c.l.b16 %v432
        %v960 = vunpack.c.l.b16 %v433
        %v961 = vunpack.c.l.b16 %v434
        %v962 = vunpack.c.l.b16 %v435
        %v963 = vunpack.c.l.b16 %v436
        %v964 = vunpack.c.l.b16 %v437
        %v965 = vunpack.c.l.b16 %v438
        %v966 = vunpack.c.l.b16 %v439
        %v967 = vunpack.c.l.b16 %v440
        %v968 = vunpack.c.l.b16 %v441
        %v969 = vunpack.c.l.b16 %v442
        %v970 = vunpack.c.l.b16 %v443
        %v971 = vunpack.c.l.b16 %v444
        %v972 = vunpack.c.l.b16 %v445
        %v973 = vunpack.c.l.b16 %v446
        %v974 = vunpack.c.l.b16 %v447
        %v975 = vunpack.c.l.b16 %v448
        %v976 = vunpack.c.l.b16 %v449
        %v977 = vunpack.c.l.b16 %v450
        %v978 = vunpack.c.l.b16 %v451
        %v979 = vunpack.c.l.b16 %v452
        %v980 = vunpack.c.l.b16 %v453
        %v981 = vunpack.c.l.b16 %v454
        %v982 = vunpack.c.l.b16 %v455
        %v983 = vunpack.c.l.b16 %v456
        %v984 = vunpack.c.l.b16 %v457
        %v985 = vunpack.c.l.b16 %v458
        %v986 = vunpack.c.l.b16 %v459
        %v987 = vunpack.c.l.b16 %v460
        %v988 = vunpack.c.l.b16 %v461
        %v989 = vunpack.c.l.b16 %v462
        %v990 = vunpack.c.l.b16 %v463
        %v991 = vunpack.c.l.b16 %v464
        %v992 = vunpack.c.l.b16 %v465
        %v993 = vunpack.c.l.b16 %v466
        %v994 = vunpack.c.l.b16 %v467
        %v995 = vunpack.c.l.b16 %v468
        %v996 = vunpack.c.l.b16 %v469
        %v997 = vunpack.c.l.b16 %v470
        %v998 = vunpack.c.l.b16 %v471
        %v999 = vunpack.c.l.b16 %v472
        %v1000 = vunpack.c.l.b16 %v473
        %v1001 = vunpack.c.l.b16 %v474
        %v1002 = vunpack.c.l.b16 %v475
        %v1003 = vunpack.c.l.b16 %v476
        %v1004 = vunpack.c.l.b16 %v477
        %v1005 = vunpack.c.l.b16 %v478
        %v1006 = vunpack.c.l.b16 %v479
        %v1007 = vunpack.c.l.b16 %v480
        %v1008 = vunpack.c.l.b16 %v481
        %v1009 = vunpack.c.l.b16 %v482
        %v1010 = vunpack.c.l.b16 %v483
        %v1011 = vunpack.c.l.b16 %v484
        %v1012 = vunpack.c.l.b16 %v485
        %v1013 = vunpack.c.l.b16 %v486
        %v1014 = vunpack.c.l.b16 %v487
        %v1015 = vunpack.c.l.b16 %v488
        %v1016 = vunpack.c.l.b16 %v489
        %v1017 = vunpack.c.l.b16 %v490
        %v1018 = vunpack.c.l.b16 %v491
        %v1019 = vunpack.c.l.b16 %v492
        %v1020 = vunpack.c.l.b16 %v493
        %v1021 = vunpack.c.l.b16 %v494
        %v1022 = vunpack.c.l.b16 %v495
        %v1023 = vunpack.c.l.b16 %v496
        %v1024 = vunpack.c.l.b16 %v497
        %v1025 = vunpack.c.l.b16 %v498
        %v1026 = vunpack.c.l.b16 %v499
        %v1027 = vunpack.c.l.b16 %v500
        %v1028 = vunpack.c.l.b16 %v501
        %v1029 = vunpack.c.l.b16 %v502
        %v1030 = vunpack.c.l.b16 %v503
        %v1031 = vunpack.c.l.b16 %v504
        %v1032 = vunpack.c.l.b16 %v505
        %v1033 = vunpack.c.l.b16 %v506
        %v1034 = vunpack.c.l.b16 %v507
        %v1035 = vunpack.c.l.b16 %v508
        %v1036 = vunpack.c.l.b16 %v509
        %v1037 = vunpack.c.l.b16 %v510
        %v1038 = vunpack.c.l.b16 %v511
        %v1039 = vunpack.c.l.b16 %v512
        %v1040 = vunpack.c.l.b16 %v513
        %v1041 = vunpack.c.l.b16 %v514
        %v1042 = vunpack.c.l.b16 %v515
        %v1043 = vunpack.c.l.b16 %v516
        %v1044 = vunpack.c.l.b16 %v517
        %v1045 = vunpack.c.l.b16 %v518
        %v1046 = vunpack.c.l.b16 %v519
        %v1047 = vunpack.c.l.b16 %v520
        %v1048 = vunpack.c.l.b16 %v521
        %v1049 = vunpack.c.l.b16 %v522
        %v1050 = vunpack.c.l.b16 %v523
        %v1051 = vunpack.c.l.b16 %v524
        %v1052 = vunpack.c.l.b16 %v525
        %v1053 = vunpack.c.l.b16 %v526
        %v1054 = vunpack.c.l.b16 %v527
        %v1055 = vunpack.c.l.b16 %v528
        %v1056 = vunpack.c.l.b16 %v529
        %v1057 = vunpack.c.l.b16 %v530
        %v1058 = vunpack.c.l.b16 %v531
        %v1059 = vunpack.c.l.b16 %v532
        %v1060 = vunpack.c.l.b16 %v533
        %v1061 = vunpack.c.l.b16 %v534
        %v1062 = vunpack.c.l.b16 %v535
        %v1063 = vunpack.c.l.b16 %v536
        %v1064 = vunpack.c.l.b16 %v537
        %v1065 = vunpack.c.l.b16 %v538
        %v1066 = vunpack.c.l.b16 %v539
        %v1067 = vunpack.c.l.b16 %v540
        %v1068 = vunpack.c.l.b16 %v541
        %v1069 = vunpack.c.l.b16 %v542
        %v1070 = vunpack.c.l.b16 %v543
        %v1071 = vunpack.c.l.b16 %v544
        %v1072 = vunpack.c.l.b16 %v545
        %v1073 = vunpack.c.l.b16 %v546
        %v1074 = vunpack.c.l.b16 %v547
        %v1075 = vunpack.c.l.b16 %v548
        %v1076 = vunpack.c.l.b16 %v549
        %v1077 = vunpack.c.l.b16 %v550
        %v1078 = vunpack.c.l.b16 %v551
        %v1079 = vunpack.c.l.b16 %v552
        %v1080 = vunpack.c.l.b16 %v553
        %v1081 = vunpack.c.l.b16 %v554
        %v1082 = vunpack.c.l.b16 %v555
        %v1083 = vunpack.c.l.b16 %v556
        %v1084 = vunpack.c.l.b16 %v557
        %v1085 = vpack.c.b16 %v830, %v829
        %v1086 = vpack.c.b16 %v832, %v831
        %v1087 = vpack.c.b16 %v834, %v833
        %v1088 = vpack.c.b16 %v836, %v835
        %v1089 = vpack.c.b16 %v838, %v837
        %v1090 = vpack.c.b16 %v840, %v839
        %v1091 = vpack.c.b16 %v842, %v841
        %v1092 = vpack.c.b16 %v844, %v843
        %v1093 = vpack.c.b16 %v846, %v845
        %v1094 = vpack.c.b16 %v848, %v847
        %v1095 = vpack.c.b16 %v850, %v849
        %v1096 = vpack.c.b16 %v852, %v851
        %v1097 = vpack.c.b16 %v854, %v853
        %v1098 = vpack.c.b16 %v856, %v855
        %v1099 = vpack.c.b16 %v858, %v857
        %v1100 = vpack.c.b16 %v860, %v859
        %v1101 = vpack.c.b16 %v862, %v861
        %v1102 = vpack.c.b16 %v864, %v863
        %v1103 = vpack.c.b16 %v866, %v865
        %v1104 = vpack.c.b16 %v868, %v867
        %v1105 = vpack.c.b16 %v870, %v869
        %v1106 = vpack.c.b16 %v872, %v871
        %v1107 = vpack.c.b16 %v874, %v873
        %v1108 = vpack.c.b16 %v876, %v875
        %v1109 = vpack.c.b16 %v878, %v877
        %v1110 = vpack.c.b16 %v880, %v879
        %v1111 = vpack.c.b16 %v882, %v881
        %v1112 = vpack.c.b16 %v884, %v883
        %v1113 = vpack.c.b16 %v886, %v885
        %v1114 = vpack.c.b16 %v888, %v887
        %v1115 = vpack.c.b16 %v890, %v889
        %v1116 = vpack.c.b16 %v892, %v891
        %v1117 = vpack.c.b16 %v894, %v893
        %v1118 = vpack.c.b16 %v896, %v895
        %v1119 = vpack.c.b16 %v898, %v897
        %v1120 = vpack.c.b16 %v900, %v899
        %v1121 = vpack.c.b16 %v902, %v901
        %v1122 = vpack.c.b16 %v904, %v903
        %v1123 = vpack.c.b16 %v906, %v905
        %v1124 = vpack.c.b16 %v908, %v907
        %v1125 = vpack.c.b16 %v910, %v909
        %v1126 = vpack.c.b16 %v912, %v911
        %v1127 = vpack.c.b16 %v914, %v913
        %v1128 = vpack.c.b16 %v916, %v915
        %v1129 = vpack.c.b16 %v918, %v917
        %v1130 = vpack.c.b16 %v920, %v919
        %v1131 = vpack.c.b16 %v922, %v921
        %v1132 = vpack.c.b16 %v924, %v923
        %v1133 = vpack.c.b16 %v926, %v925
        %v1134 = vpack.c.b16 %v928, %v927
        %v1135 = vpack.c.b16 %v930, %v929
        %v1136 = vpack.c.b16 %v932, %v931
        %v1137 = vpack.c.b16 %v934, %v933
        %v1138 = vpack.c.b16 %v936, %v935
        %v1139 = vpack.c.b16 %v938, %v937
        %v1140 = vpack.c.b16 %v940, %v939
        %v1141 = vpack.c.b16 %v942, %v941
        %v1142 = vpack.c.b16 %v944, %v943
        %v1143 = vpack.c.b16 %v946, %v945
        %v1144 = vpack.c.b16 %v948, %v947
        %v1145 = vpack.c.b16 %v950, %v949
        %v1146 = vpack.c.b16 %v952, %v951
        %v1147 = vpack.c.b16 %v954, %v953
        %v1148 = vpack.c.b16 %v956, %v955
        %v1149 = vpack.c.b16 %v958, %v957
        %v1150 = vpack.c.b16 %v960, %v959
        %v1151 = vpack.c.b16 %v962, %v961
        %v1152 = vpack.c.b16 %v964, %v963
        %v1153 = vpack.c.b16 %v966, %v965
        %v1154 = vpack.c.b16 %v968, %v967
        %v1155 = vpack.c.b16 %v970, %v969
        %v1156 = vpack.c.b16 %v972, %v971
        %v1157 = vpack.c.b16 %v974, %v973
        %v1158 = vpack.c.b16 %v976, %v975
        %v1159 = vpack.c.b16 %v978, %v977
        %v1160 = vpack.c.b16 %v980, %v979
        %v1161 = vpack.c.b16 %v982, %v981
        %v1162 = vpack.c.b16 %v984, %v983
        %v1163 = vpack.c.b16 %v986, %v985
        %v1164 = vpack.c.b16 %v988, %v987
        %v1165 = vpack.c.b16 %v990, %v989
        %v1166 = vpack.c.b16 %v992, %v991
        %v1167 = vpack.c.b16 %v994, %v993
        %v1168 = vpack.c.b16 %v996, %v995
        %v1169 = vpack.c.b16 %v998, %v997
        %v1170 = vpack.c.b16 %v1000, %v999
        %v1171 = vpack.c.b16 %v1002, %v1001
        %v1172 = vpack.c.b16 %v1004, %v1003
        %v1173 = vpack.c.b16 %v1006, %v1005
        %v1174 = vpack.c.b16 %v1008, %v1007
        %v1175 = vpack.c.b16 %v1010, %v1009
        %v1176 = vpack.c.b16 %v1012, %v1011
        %v1177 = vpack.c.b16 %v1014, %v1013
        %v1178 = vpack.c.b16 %v1016, %v1015
        %v1179 = vpack.c.b16 %v1018, %v1017
        %v1180 = vpack.c.b16 %v1020, %v1019
        %v1181 = vpack.c.b16 %v1022, %v1021
        %v1182 = vpack.c.b16 %v1024, %v1023
        %v1183 = vpack.c.b16 %v1026, %v1025
        %v1184 = vpack.c.b16 %v1028, %v1027
        %v1185 = vpack.c.b16 %v1030, %v1029
        %v1186 = vpack.c.b16 %v1032, %v1031
        %v1187 = vpack.c.b16 %v1034, %v1033
        %v1188 = vpack.c.b16 %v1036, %v1035
        %v1189 = vpack.c.b16 %v1038, %v1037
        %v1190 = vpack.c.b16 %v1040, %v1039
        %v1191 = vpack.c.b16 %v1042, %v1041
        %v1192 = vpack.c.b16 %v1044, %v1043
        %v1193 = vpack.c.b16 %v1046, %v1045
        %v1194 = vpack.c.b16 %v1048, %v1047
        %v1195 = vpack.c.b16 %v1050, %v1049
        %v1196 = vpack.c.b16 %v1052, %v1051
        %v1197 = vpack.c.b16 %v1054, %v1053
        %v1198 = vpack.c.b16 %v1056, %v1055
        %v1199 = vpack.c.b16 %v1058, %v1057
        %v1200 = vpack.c.b16 %v1060, %v1059
        %v1201 = vpack.c.b16 %v1062, %v1061
        %v1202 = vpack.c.b16 %v1064, %v1063
        %v1203 = vpack.c.b16 %v1066, %v1065
        %v1204 = vpack.c.b16 %v1068, %v1067
        %v1205 = vpack.c.b16 %v1070, %v1069
        %v1206 = vpack.c.b16 %v1072, %v1071
        %v1207 = vpack.c.b16 %v1074, %v1073
        %v1208 = vpack.c.b16 %v1076, %v1075
        %v1209 = vpack.c.b16 %v1078, %v1077
        %v1210 = vpack.c.b16 %v1080, %v1079
        %v1211 = vpack.c.b16 %v1082, %v1081
        %v1212 = vpack.c.b16 %v1084, %v1083
        %v1221 = vunpack.c.l.b16 %v558
        %v1222 = vunpack.c.l.b16 %v559
        %v1223 = vunpack.c.l.b16 %v560
        %v1224 = vunpack.c.l.b16 %v561
        %v1225 = vunpack.c.l.b16 %v562
        %v1226 = vunpack.c.l.b16 %v563
        %v1227 = vunpack.c.l.b16 %v564
        %v1228 = vunpack.c.l.b16 %v565
        %v1229 = vpack.c.b16 %v1222, %v1221
        %v1230 = vpack.c.b16 %v1224, %v1223
        %v1231 = vpack.c.b16 %v1226, %v1225
        %v1232 = vpack.c.b16 %v1228, %v1227
        %vm1237 = vcmask 523264
        %v1239 = vsel %vm1237, %v1085, 0
        %v1242 = vsel %vm1237, %v1086, 0
        %v1245 = vsel %vm1237, %v1087, 0
        %v1248 = vsel %vm1237, %v1088, 0
        %v1251 = vsel %vm1237, %v1089, 0
        %v1254 = vsel %vm1237, %v1090, 0
        %v1257 = vsel %vm1237, %v1091, 0
        %v1260 = vsel %vm1237, %v1092, 0
        %v1263 = vsel %vm1237, %v1093, 0
        %v1266 = vsel %vm1237, %v1094, 0
        %v1269 = vsel %vm1237, %v1095, 0
        %v1272 = vsel %vm1237, %v1096, 0
        %v1275 = vsel %vm1237, %v1097, 0
        %v1278 = vsel %vm1237, %v1098, 0
        %v1281 = vsel %vm1237, %v1099, 0
        %v1284 = vsel %vm1237, %v1100, 0
        %v1287 = vsel %vm1237, %v1101, 0
        %v1290 = vsel %vm1237, %v1102, 0
        %v1293 = vsel %vm1237, %v1103, 0
        %v1296 = vsel %vm1237, %v1104, 0
        %v1299 = vsel %vm1237, %v1105, 0
        %v1302 = vsel %vm1237, %v1106, 0
        %v1305 = vsel %vm1237, %v1107, 0
        %v1308 = vsel %vm1237, %v1108, 0
        %v1311 = vsel %vm1237, %v1109, 0
        %v1314 = vsel %vm1237, %v1110, 0
        %v1317 = vsel %vm1237, %v1111, 0
        %v1320 = vsel %vm1237, %v1112, 0
        %v1323 = vsel %vm1237, %v1113, 0
        %v1326 = vsel %vm1237, %v1114, 0
        %v1329 = vsel %vm1237, %v1115, 0
        %v1332 = vsel %vm1237, %v1116, 0
        %v1335 = vsel %vm1237, %v1117, 0
        %v1338 = vsel %vm1237, %v1118, 0
        %v1341 = vsel %vm1237, %v1119, 0
        %v1344 = vsel %vm1237, %v1120, 0
        %v1347 = vsel %vm1237, %v1121, 0
        %v1350 = vsel %vm1237, %v1122, 0
        %v1353 = vsel %vm1237, %v1123, 0
        %v1356 = vsel %vm1237, %v1124, 0
        %v1359 = vsel %vm1237, %v1125, 0
        %v1362 = vsel %vm1237, %v1126, 0
        %v1365 = vsel %vm1237, %v1127, 0
        %v1368 = vsel %vm1237, %v1128, 0
        %v1371 = vsel %vm1237, %v1129, 0
        %v1374 = vsel %vm1237, %v1130, 0
        %v1377 = vsel %vm1237, %v1131, 0
        %v1380 = vsel %vm1237, %v1132, 0
        %v1383 = vsel %vm1237, %v1133, 0
        %v1386 = vsel %vm1237, %v1134, 0
        %v1389 = vsel %vm1237, %v1135, 0
        %v1392 = vsel %vm1237, %v1136, 0
        %v1395 = vsel %vm1237, %v1137, 0
        %v1398 = vsel %vm1237, %v1138, 0
        %v1401 = vsel %vm1237, %v1139, 0
        %v1404 = vsel %vm1237, %v1140, 0
        %v1407 = vsel %vm1237, %v1141, 0
        %v1410 = vsel %vm1237, %v1142, 0
        %v1413 = vsel %vm1237, %v1143, 0
        %v1416 = vsel %vm1237, %v1144, 0
        %v1419 = vsel %vm1237, %v1145, 0
        %v1422 = vsel %vm1237, %v1146, 0
        %v1425 = vsel %vm1237, %v1147, 0
        %v1428 = vsel %vm1237, %v1148, 0
        %v1431 = vsel %vm1237, %v1149, 0
        %v1434 = vsel %vm1237, %v1150, 0
        %v1437 = vsel %vm1237, %v1151, 0
        %v1440 = vsel %vm1237, %v1152, 0
        %v1443 = vsel %vm1237, %v1153, 0
        %v1446 = vsel %vm1237, %v1154, 0
        %v1449 = vsel %vm1237, %v1155, 0
        %v1452 = vsel %vm1237, %v1156, 0
        %v1455 = vsel %vm1237, %v1157, 0
        %v1458 = vsel %vm1237, %v1158, 0
        %v1461 = vsel %vm1237, %v1159, 0
        %v1464 = vsel %vm1237, %v1160, 0
        %v1467 = vsel %vm1237, %v1161, 0
        %v1470 = vsel %vm1237, %v1162, 0
        %v1473 = vsel %vm1237, %v1163, 0
        %v1476 = vsel %vm1237, %v1164, 0
        %v1479 = vsel %vm1237, %v1165, 0
        %v1482 = vsel %vm1237, %v1166, 0
        %v1485 = vsel %vm1237, %v1167, 0
        %v1488 = vsel %vm1237, %v1168, 0
        %v1491 = vsel %vm1237, %v1169, 0
        %v1494 = vsel %vm1237, %v1170, 0
        %v1497 = vsel %vm1237, %v1171, 0
        %v1500 = vsel %vm1237, %v1172, 0
        %v1503 = vsel %vm1237, %v1173, 0
        %v1506 = vsel %vm1237, %v1174, 0
        %v1509 = vsel %vm1237, %v1175, 0
        %v1512 = vsel %vm1237, %v1176, 0
        %v1515 = vsel %vm1237, %v1177, 0
        %v1518 = vsel %vm1237, %v1178, 0
        %v1521 = vsel %vm1237, %v1179, 0
        %v1524 = vsel %vm1237, %v1180, 0
        %v1527 = vsel %vm1237, %v1181, 0
        %v1530 = vsel %vm1237, %v1182, 0
        %v1533 = vsel %vm1237, %v1183, 0
        %v1536 = vsel %vm1237, %v1184, 0
        %v1539 = vsel %vm1237, %v1185, 0
        %v1542 = vsel %vm1237, %v1186, 0
        %v1545 = vsel %vm1237, %v1187, 0
        %v1548 = vsel %vm1237, %v1188, 0
        %v1551 = vsel %vm1237, %v1189, 0
        %v1554 = vsel %vm1237, %v1190, 0
        %v1557 = vsel %vm1237, %v1191, 0
        %v1560 = vsel %vm1237, %v1192, 0
        %v1563 = vsel %vm1237, %v1193, 0
        %v1566 = vsel %vm1237, %v1194, 0
        %v1569 = vsel %vm1237, %v1195, 0
        %v1572 = vsel %vm1237, %v1196, 0
        %v1575 = vsel %vm1237, %v1197, 0
        %v1578 = vsel %vm1237, %v1198, 0
        %v1581 = vsel %vm1237, %v1199, 0
        %v1584 = vsel %vm1237, %v1200, 0
        %v1587 = vsel %vm1237, %v1201, 0
        %v1590 = vsel %vm1237, %v1202, 0
        %v1593 = vsel %vm1237, %v1203, 0
        %v1596 = vsel %vm1237, %v1204, 0
        %v1599 = vsel %vm1237, %v1205, 0
        %v1602 = vsel %vm1237, %v1206, 0
        %v1605 = vsel %vm1237, %v1207, 0
        %v1608 = vsel %vm1237, %v1208, 0
        %v1611 = vsel %vm1237, %v1209, 0
        %v1614 = vsel %vm1237, %v1210, 0
        %v1617 = vsel %vm1237, %v1211, 0
        %v1620 = vsel %vm1237, %v1212, 0
        %1622 = vmatprep.subr.bf16.mxu0 0
        %1623 = vmatpush1.bf16.msra.mxu0 0
        %1624 = vmatprep.subr.bf16.mxu0 0
        %1625 = vmatpush1.bf16.msra.mxu0 0
        %1626 = vmatprep.subr.bf16.mxu0 0
        %1627 = vmatpush1.bf16.msra.mxu0 0
        %1628 = vmatprep.subr.bf16.mxu0 0
        %1629 = vmatpush1.bf16.msra.mxu0 0
        %1630 = vmatprep.subr.bf16.mxu0 0
        %1631 = vmatpush1.bf16.msra.mxu0 %v1232
        %1632 = vmatprep.subr.bf16.mxu0 0
        %1633 = vmatpush1.bf16.msra.mxu0 %v1231
        %1634 = vmatprep.subr.bf16.mxu0 0
        %1635 = vmatpush1.bf16.msra.mxu0 %v1230
        %1636 = vmatprep.subr.bf16.mxu0 0
        %1637 = vmatpush1.bf16.msra.mxu0 %v1229
        %1638 = vmatprep.subr.bf16.mxu0 0
        %1639 = vmatpush2.bf16.msra.mxu0 0
        %1640 = vmatprep.subr.bf16.mxu0 0
        %1641 = vmatpush2.bf16.msra.mxu0 0
        %1642 = vmatprep.subr.bf16.mxu0 0
        %1643 = vmatpush2.bf16.msra.mxu0 0
        %1644 = vmatprep.subr.bf16.mxu0 0
        %1645 = vmatpush2.bf16.msra.mxu0 0
        %1646 = vmatprep.subr.bf16.mxu0 0
        %1647 = vmatpush2.bf16.msra.mxu0 0
        %1648 = vmatprep.subr.bf16.mxu0 0
        %1649 = vmatpush2.bf16.msra.mxu0 0
        %1650 = vmatprep.subr.bf16.mxu0 0
        %1651 = vmatpush2.bf16.msra.mxu0 0
        %1652 = vmatprep.subr.bf16.mxu0 0
        %1653 = vmatpush2.bf16.msra.mxu0 0
        %1654 = vmatprep.mubr.bf16.mxu0 0
        %1655 = vmatmul.mubr.bf16.gmra.mxu0 %v1239
        %v1656 = vpop.f32.mrf.mxu0
        %v1657 = vadd.f32 %v571, %v1656
        %v1658 = vpop.f32.mrf.mxu0
        %v1659 = vpop.f32.mrf.mxu0
        %v1660 = vadd.f32 %v571, %v1659
        %v1661 = vpop.f32.mrf.mxu0
        %1662 = vmatprep.mubr.bf16.mxu0 0
        %1663 = vmatmul.mubr.bf16.gmra.mxu0 %v1242
        %v1664 = vpop.f32.mrf.mxu0
        %v1665 = vadd.f32 %v571, %v1664
        %v1666 = vpop.f32.mrf.mxu0
        %v1667 = vpop.f32.mrf.mxu0
        %v1668 = vadd.f32 %v571, %v1667
        %v1669 = vpop.f32.mrf.mxu0
        %1670 = vmatprep.mubr.bf16.mxu0 0
        %1671 = vmatmul.mubr.bf16.gmra.mxu0 %v1245
        %v1672 = vpop.f32.mrf.mxu0
        %v1673 = vadd.f32 %v571, %v1672
        %v1674 = vpop.f32.mrf.mxu0
        %v1675 = vpop.f32.mrf.mxu0
        %v1676 = vadd.f32 %v571, %v1675
        %v1677 = vpop.f32.mrf.mxu0
        %1678 = vmatprep.mubr.bf16.mxu0 0
        %1679 = vmatmul.mubr.bf16.gmra.mxu0 %v1248
        %v1680 = vpop.f32.mrf.mxu0
        %v1681 = vadd.f32 %v571, %v1680
        %v1682 = vpop.f32.mrf.mxu0
        %v1683 = vpop.f32.mrf.mxu0
        %v1684 = vadd.f32 %v571, %v1683
        %v1685 = vpop.f32.mrf.mxu0
        %1686 = vmatprep.mubr.bf16.mxu0 0
        %1687 = vmatmul.mubr.bf16.gmra.mxu0 %v1251
        %v1688 = vpop.f32.mrf.mxu0
        %v1689 = vadd.f32 %v571, %v1688
        %v1690 = vpop.f32.mrf.mxu0
        %v1691 = vpop.f32.mrf.mxu0
        %v1692 = vadd.f32 %v571, %v1691
        %v1693 = vpop.f32.mrf.mxu0
        %1694 = vmatprep.mubr.bf16.mxu0 0
        %1695 = vmatmul.mubr.bf16.gmra.mxu0 %v1254
        %v1696 = vpop.f32.mrf.mxu0
        %v1697 = vadd.f32 %v571, %v1696
        %v1698 = vpop.f32.mrf.mxu0
        %v1699 = vpop.f32.mrf.mxu0
        %v1700 = vadd.f32 %v571, %v1699
        %v1701 = vpop.f32.mrf.mxu0
        %1702 = vmatprep.mubr.bf16.mxu0 0
        %1703 = vmatmul.mubr.bf16.gmra.mxu0 %v1257
        %v1704 = vpop.f32.mrf.mxu0
        %v1705 = vadd.f32 %v571, %v1704
        %v1706 = vpop.f32.mrf.mxu0
        %v1707 = vpop.f32.mrf.mxu0
        %v1708 = vadd.f32 %v571, %v1707
        %v1709 = vpop.f32.mrf.mxu0
        %1710 = vmatprep.mubr.bf16.mxu0 0
        %1711 = vmatmul.mubr.bf16.gmra.mxu0 %v1260
        %v1712 = vpop.f32.mrf.mxu0
        %v1713 = vadd.f32 %v571, %v1712
        %v1714 = vpop.f32.mrf.mxu0
        %v1715 = vpop.f32.mrf.mxu0
        %v1716 = vadd.f32 %v571, %v1715
        %v1717 = vpop.f32.mrf.mxu0
        %1718 = vmatprep.mubr.bf16.mxu0 0
        %1719 = vmatmul.mubr.bf16.gmra.mxu0 %v1263
        %v1720 = vpop.f32.mrf.mxu0
        %v1721 = vadd.f32 %v571, %v1720
        %v1722 = vpop.f32.mrf.mxu0
        %v1723 = vpop.f32.mrf.mxu0
        %v1724 = vadd.f32 %v571, %v1723
        %v1725 = vpop.f32.mrf.mxu0
        %1726 = vmatprep.mubr.bf16.mxu0 0
        %1727 = vmatmul.mubr.bf16.gmra.mxu0 %v1266
        %v1728 = vpop.f32.mrf.mxu0
        %v1729 = vadd.f32 %v571, %v1728
        %v1730 = vpop.f32.mrf.mxu0
        %v1731 = vpop.f32.mrf.mxu0
        %v1732 = vadd.f32 %v571, %v1731
        %v1733 = vpop.f32.mrf.mxu0
        %1734 = vmatprep.mubr.bf16.mxu0 0
        %1735 = vmatmul.mubr.bf16.gmra.mxu0 %v1269
        %v1736 = vpop.f32.mrf.mxu0
        %v1737 = vadd.f32 %v571, %v1736
        %v1738 = vpop.f32.mrf.mxu0
        %v1739 = vpop.f32.mrf.mxu0
        %v1740 = vadd.f32 %v571, %v1739
        %v1741 = vpop.f32.mrf.mxu0
        %1742 = vmatprep.mubr.bf16.mxu0 0
        %1743 = vmatmul.mubr.bf16.gmra.mxu0 %v1272
        %v1744 = vpop.f32.mrf.mxu0
        %v1745 = vadd.f32 %v571, %v1744
        %v1746 = vpop.f32.mrf.mxu0
        %v1747 = vpop.f32.mrf.mxu0
        %v1748 = vadd.f32 %v571, %v1747
        %v1749 = vpop.f32.mrf.mxu0
        %1750 = vmatprep.mubr.bf16.mxu0 0
        %1751 = vmatmul.mubr.bf16.gmra.mxu0 %v1275
        %v1752 = vpop.f32.mrf.mxu0
        %v1753 = vadd.f32 %v571, %v1752
        %v1754 = vpop.f32.mrf.mxu0
        %v1755 = vpop.f32.mrf.mxu0
        %v1756 = vadd.f32 %v571, %v1755
        %v1757 = vpop.f32.mrf.mxu0
        %1758 = vmatprep.mubr.bf16.mxu0 0
        %1759 = vmatmul.mubr.bf16.gmra.mxu0 %v1278
        %v1760 = vpop.f32.mrf.mxu0
        %v1761 = vadd.f32 %v571, %v1760
        %v1762 = vpop.f32.mrf.mxu0
        %v1763 = vpop.f32.mrf.mxu0
        %v1764 = vadd.f32 %v571, %v1763
        %v1765 = vpop.f32.mrf.mxu0
        %1766 = vmatprep.mubr.bf16.mxu0 0
        %1767 = vmatmul.mubr.bf16.gmra.mxu0 %v1281
        %v1768 = vpop.f32.mrf.mxu0
        %v1769 = vadd.f32 %v571, %v1768
        %v1770 = vpop.f32.mrf.mxu0
        %v1771 = vpop.f32.mrf.mxu0
        %v1772 = vadd.f32 %v571, %v1771
        %v1773 = vpop.f32.mrf.mxu0
        %1774 = vmatprep.mubr.bf16.mxu0 0
        %1775 = vmatmul.mubr.bf16.gmra.mxu0 %v1284
        %v1776 = vpop.f32.mrf.mxu0
        %v1777 = vadd.f32 %v571, %v1776
        %v1778 = vpop.f32.mrf.mxu0
        %v1779 = vpop.f32.mrf.mxu0
        %v1780 = vadd.f32 %v571, %v1779
        %v1781 = vpop.f32.mrf.mxu0
        %1782 = vmatprep.mubr.bf16.mxu0 0
        %1783 = vmatmul.mubr.bf16.gmra.mxu0 %v1287
        %v1784 = vpop.f32.mrf.mxu0
        %v1785 = vadd.f32 %v571, %v1784
        %v1786 = vpop.f32.mrf.mxu0
        %v1787 = vpop.f32.mrf.mxu0
        %v1788 = vadd.f32 %v571, %v1787
        %v1789 = vpop.f32.mrf.mxu0
        %1790 = vmatprep.mubr.bf16.mxu0 0
        %1791 = vmatmul.mubr.bf16.gmra.mxu0 %v1290
        %v1792 = vpop.f32.mrf.mxu0
        %v1793 = vadd.f32 %v571, %v1792
        %v1794 = vpop.f32.mrf.mxu0
        %v1795 = vpop.f32.mrf.mxu0
        %v1796 = vadd.f32 %v571, %v1795
        %v1797 = vpop.f32.mrf.mxu0
        %1798 = vmatprep.mubr.bf16.mxu0 0
        %1799 = vmatmul.mubr.bf16.gmra.mxu0 %v1293
        %v1800 = vpop.f32.mrf.mxu0
        %v1801 = vadd.f32 %v571, %v1800
        %v1802 = vpop.f32.mrf.mxu0
        %v1803 = vpop.f32.mrf.mxu0
        %v1804 = vadd.f32 %v571, %v1803
        %v1805 = vpop.f32.mrf.mxu0
        %1806 = vmatprep.mubr.bf16.mxu0 0
        %1807 = vmatmul.mubr.bf16.gmra.mxu0 %v1296
        %v1808 = vpop.f32.mrf.mxu0
        %v1809 = vadd.f32 %v571, %v1808
        %v1810 = vpop.f32.mrf.mxu0
        %v1811 = vpop.f32.mrf.mxu0
        %v1812 = vadd.f32 %v571, %v1811
        %v1813 = vpop.f32.mrf.mxu0
        %1814 = vmatprep.mubr.bf16.mxu0 0
        %1815 = vmatmul.mubr.bf16.gmra.mxu0 %v1299
        %v1816 = vpop.f32.mrf.mxu0
        %v1817 = vadd.f32 %v571, %v1816
        %v1818 = vpop.f32.mrf.mxu0
        %v1819 = vpop.f32.mrf.mxu0
        %v1820 = vadd.f32 %v571, %v1819
        %v1821 = vpop.f32.mrf.mxu0
        %1822 = vmatprep.mubr.bf16.mxu0 0
        %1823 = vmatmul.mubr.bf16.gmra.mxu0 %v1302
        %v1824 = vpop.f32.mrf.mxu0
        %v1825 = vadd.f32 %v571, %v1824
        %v1826 = vpop.f32.mrf.mxu0
        %v1827 = vpop.f32.mrf.mxu0
        %v1828 = vadd.f32 %v571, %v1827
        %v1829 = vpop.f32.mrf.mxu0
        %1830 = vmatprep.mubr.bf16.mxu0 0
        %1831 = vmatmul.mubr.bf16.gmra.mxu0 %v1305
        %v1832 = vpop.f32.mrf.mxu0
        %v1833 = vadd.f32 %v571, %v1832
        %v1834 = vpop.f32.mrf.mxu0
        %v1835 = vpop.f32.mrf.mxu0
        %v1836 = vadd.f32 %v571, %v1835
        %v1837 = vpop.f32.mrf.mxu0
        %1838 = vmatprep.mubr.bf16.mxu0 0
        %1839 = vmatmul.mubr.bf16.gmra.mxu0 %v1308
        %v1840 = vpop.f32.mrf.mxu0
        %v1841 = vadd.f32 %v571, %v1840
        %v1842 = vpop.f32.mrf.mxu0
        %v1843 = vpop.f32.mrf.mxu0
        %v1844 = vadd.f32 %v571, %v1843
        %v1845 = vpop.f32.mrf.mxu0
        %1846 = vmatprep.mubr.bf16.mxu0 0
        %1847 = vmatmul.mubr.bf16.gmra.mxu0 %v1311
        %v1848 = vpop.f32.mrf.mxu0
        %v1849 = vadd.f32 %v571, %v1848
        %v1850 = vpop.f32.mrf.mxu0
        %v1851 = vpop.f32.mrf.mxu0
        %v1852 = vadd.f32 %v571, %v1851
        %v1853 = vpop.f32.mrf.mxu0
        %1854 = vmatprep.mubr.bf16.mxu0 0
        %1855 = vmatmul.mubr.bf16.gmra.mxu0 %v1314
        %v1856 = vpop.f32.mrf.mxu0
        %v1857 = vadd.f32 %v571, %v1856
        %v1858 = vpop.f32.mrf.mxu0
        %v1859 = vpop.f32.mrf.mxu0
        %v1860 = vadd.f32 %v571, %v1859
        %v1861 = vpop.f32.mrf.mxu0
        %1862 = vmatprep.mubr.bf16.mxu0 0
        %1863 = vmatmul.mubr.bf16.gmra.mxu0 %v1317
        %v1864 = vpop.f32.mrf.mxu0
        %v1865 = vadd.f32 %v571, %v1864
        %v1866 = vpop.f32.mrf.mxu0
        %v1867 = vpop.f32.mrf.mxu0
        %v1868 = vadd.f32 %v571, %v1867
        %v1869 = vpop.f32.mrf.mxu0
        %1870 = vmatprep.mubr.bf16.mxu0 0
        %1871 = vmatmul.mubr.bf16.gmra.mxu0 %v1320
        %v1872 = vpop.f32.mrf.mxu0
        %v1873 = vadd.f32 %v571, %v1872
        %v1874 = vpop.f32.mrf.mxu0
        %v1875 = vpop.f32.mrf.mxu0
        %v1876 = vadd.f32 %v571, %v1875
        %v1877 = vpop.f32.mrf.mxu0
        %1878 = vmatprep.mubr.bf16.mxu0 0
        %1879 = vmatmul.mubr.bf16.gmra.mxu0 %v1323
        %v1880 = vpop.f32.mrf.mxu0
        %v1881 = vadd.f32 %v571, %v1880
        %v1882 = vpop.f32.mrf.mxu0
        %v1883 = vpop.f32.mrf.mxu0
        %v1884 = vadd.f32 %v571, %v1883
        %v1885 = vpop.f32.mrf.mxu0
        %1886 = vmatprep.mubr.bf16.mxu0 0
        %1887 = vmatmul.mubr.bf16.gmra.mxu0 %v1326
        %v1888 = vpop.f32.mrf.mxu0
        %v1889 = vadd.f32 %v571, %v1888
        %v1890 = vpop.f32.mrf.mxu0
        %v1891 = vpop.f32.mrf.mxu0
        %v1892 = vadd.f32 %v571, %v1891
        %v1893 = vpop.f32.mrf.mxu0
        %1894 = vmatprep.mubr.bf16.mxu0 0
        %1895 = vmatmul.mubr.bf16.gmra.mxu0 %v1329
        %v1896 = vpop.f32.mrf.mxu0
        %v1897 = vadd.f32 %v571, %v1896
        %v1898 = vpop.f32.mrf.mxu0
        %v1899 = vpop.f32.mrf.mxu0
        %v1900 = vadd.f32 %v571, %v1899
        %v1901 = vpop.f32.mrf.mxu0
        %1902 = vmatprep.mubr.bf16.mxu0 0
        %1903 = vmatmul.mubr.bf16.gmra.mxu0 %v1332
        %v1904 = vpop.f32.mrf.mxu0
        %v1905 = vadd.f32 %v571, %v1904
        %v1906 = vpop.f32.mrf.mxu0
        %v1907 = vpop.f32.mrf.mxu0
        %v1908 = vadd.f32 %v571, %v1907
        %v1909 = vpop.f32.mrf.mxu0
        %1910 = vmatprep.mubr.bf16.mxu0 0
        %1911 = vmatmul.mubr.bf16.gmra.mxu0 %v1335
        %v1912 = vpop.f32.mrf.mxu0
        %v1913 = vadd.f32 %v571, %v1912
        %v1914 = vpop.f32.mrf.mxu0
        %v1915 = vpop.f32.mrf.mxu0
        %v1916 = vadd.f32 %v571, %v1915
        %v1917 = vpop.f32.mrf.mxu0
        %1918 = vmatprep.mubr.bf16.mxu0 0
        %1919 = vmatmul.mubr.bf16.gmra.mxu0 %v1338
        %v1920 = vpop.f32.mrf.mxu0
        %v1921 = vadd.f32 %v571, %v1920
        %v1922 = vpop.f32.mrf.mxu0
        %v1923 = vpop.f32.mrf.mxu0
        %v1924 = vadd.f32 %v571, %v1923
        %v1925 = vpop.f32.mrf.mxu0
        %1926 = vmatprep.mubr.bf16.mxu0 0
        %1927 = vmatmul.mubr.bf16.gmra.mxu0 %v1341
        %v1928 = vpop.f32.mrf.mxu0
        %v1929 = vadd.f32 %v571, %v1928
        %v1930 = vpop.f32.mrf.mxu0
        %v1931 = vpop.f32.mrf.mxu0
        %v1932 = vadd.f32 %v571, %v1931
        %v1933 = vpop.f32.mrf.mxu0
        %1934 = vmatprep.mubr.bf16.mxu0 0
        %1935 = vmatmul.mubr.bf16.gmra.mxu0 %v1344
        %v1936 = vpop.f32.mrf.mxu0
        %v1937 = vadd.f32 %v571, %v1936
        %v1938 = vpop.f32.mrf.mxu0
        %v1939 = vpop.f32.mrf.mxu0
        %v1940 = vadd.f32 %v571, %v1939
        %v1941 = vpop.f32.mrf.mxu0
        %1942 = vmatprep.mubr.bf16.mxu0 0
        %1943 = vmatmul.mubr.bf16.gmra.mxu0 %v1347
        %v1944 = vpop.f32.mrf.mxu0
        %v1945 = vadd.f32 %v571, %v1944
        %v1946 = vpop.f32.mrf.mxu0
        %v1947 = vpop.f32.mrf.mxu0
        %v1948 = vadd.f32 %v571, %v1947
        %v1949 = vpop.f32.mrf.mxu0
        %1950 = vmatprep.mubr.bf16.mxu0 0
        %1951 = vmatmul.mubr.bf16.gmra.mxu0 %v1350
        %v1952 = vpop.f32.mrf.mxu0
        %v1953 = vadd.f32 %v571, %v1952
        %v1954 = vpop.f32.mrf.mxu0
        %v1955 = vpop.f32.mrf.mxu0
        %v1956 = vadd.f32 %v571, %v1955
        %v1957 = vpop.f32.mrf.mxu0
        %1958 = vmatprep.mubr.bf16.mxu0 0
        %1959 = vmatmul.mubr.bf16.gmra.mxu0 %v1353
        %v1960 = vpop.f32.mrf.mxu0
        %v1961 = vadd.f32 %v571, %v1960
        %v1962 = vpop.f32.mrf.mxu0
        %v1963 = vpop.f32.mrf.mxu0
        %v1964 = vadd.f32 %v571, %v1963
        %v1965 = vpop.f32.mrf.mxu0
        %1966 = vmatprep.mubr.bf16.mxu0 0
        %1967 = vmatmul.mubr.bf16.gmra.mxu0 %v1356
        %v1968 = vpop.f32.mrf.mxu0
        %v1969 = vadd.f32 %v571, %v1968
        %v1970 = vpop.f32.mrf.mxu0
        %v1971 = vpop.f32.mrf.mxu0
        %v1972 = vadd.f32 %v571, %v1971
        %v1973 = vpop.f32.mrf.mxu0
        %1974 = vmatprep.mubr.bf16.mxu0 0
        %1975 = vmatmul.mubr.bf16.gmra.mxu0 %v1359
        %v1976 = vpop.f32.mrf.mxu0
        %v1977 = vadd.f32 %v571, %v1976
        %v1978 = vpop.f32.mrf.mxu0
        %v1979 = vpop.f32.mrf.mxu0
        %v1980 = vadd.f32 %v571, %v1979
        %v1981 = vpop.f32.mrf.mxu0
        %1982 = vmatprep.mubr.bf16.mxu0 0
        %1983 = vmatmul.mubr.bf16.gmra.mxu0 %v1362
        %v1984 = vpop.f32.mrf.mxu0
        %v1985 = vadd.f32 %v571, %v1984
        %v1986 = vpop.f32.mrf.mxu0
        %v1987 = vpop.f32.mrf.mxu0
        %v1988 = vadd.f32 %v571, %v1987
        %v1989 = vpop.f32.mrf.mxu0
        %1990 = vmatprep.mubr.bf16.mxu0 0
        %1991 = vmatmul.mubr.bf16.gmra.mxu0 %v1365
        %v1992 = vpop.f32.mrf.mxu0
        %v1993 = vadd.f32 %v571, %v1992
        %v1994 = vpop.f32.mrf.mxu0
        %v1995 = vpop.f32.mrf.mxu0
        %v1996 = vadd.f32 %v571, %v1995
        %v1997 = vpop.f32.mrf.mxu0
        %1998 = vmatprep.mubr.bf16.mxu0 0
        %1999 = vmatmul.mubr.bf16.gmra.mxu0 %v1368
        %v2000 = vpop.f32.mrf.mxu0
        %v2001 = vadd.f32 %v571, %v2000
        %v2002 = vpop.f32.mrf.mxu0
        %v2003 = vpop.f32.mrf.mxu0
        %v2004 = vadd.f32 %v571, %v2003
        %v2005 = vpop.f32.mrf.mxu0
        %2006 = vmatprep.mubr.bf16.mxu0 0
        %2007 = vmatmul.mubr.bf16.gmra.mxu0 %v1371
        %v2008 = vpop.f32.mrf.mxu0
        %v2009 = vadd.f32 %v571, %v2008
        %v2010 = vpop.f32.mrf.mxu0
        %v2011 = vpop.f32.mrf.mxu0
        %v2012 = vadd.f32 %v571, %v2011
        %v2013 = vpop.f32.mrf.mxu0
        %2014 = vmatprep.mubr.bf16.mxu0 0
        %2015 = vmatmul.mubr.bf16.gmra.mxu0 %v1374
        %v2016 = vpop.f32.mrf.mxu0
        %v2017 = vadd.f32 %v571, %v2016
        %v2018 = vpop.f32.mrf.mxu0
        %v2019 = vpop.f32.mrf.mxu0
        %v2020 = vadd.f32 %v571, %v2019
        %v2021 = vpop.f32.mrf.mxu0
        %2022 = vmatprep.mubr.bf16.mxu0 0
        %2023 = vmatmul.mubr.bf16.gmra.mxu0 %v1377
        %v2024 = vpop.f32.mrf.mxu0
        %v2025 = vadd.f32 %v571, %v2024
        %v2026 = vpop.f32.mrf.mxu0
        %v2027 = vpop.f32.mrf.mxu0
        %v2028 = vadd.f32 %v571, %v2027
        %v2029 = vpop.f32.mrf.mxu0
        %2030 = vmatprep.mubr.bf16.mxu0 0
        %2031 = vmatmul.mubr.bf16.gmra.mxu0 %v1380
        %v2032 = vpop.f32.mrf.mxu0
        %v2033 = vadd.f32 %v571, %v2032
        %v2034 = vpop.f32.mrf.mxu0
        %v2035 = vpop.f32.mrf.mxu0
        %v2036 = vadd.f32 %v571, %v2035
        %v2037 = vpop.f32.mrf.mxu0
        %2038 = vmatprep.mubr.bf16.mxu0 0
        %2039 = vmatmul.mubr.bf16.gmra.mxu0 %v1383
        %v2040 = vpop.f32.mrf.mxu0
        %v2041 = vadd.f32 %v571, %v2040
        %v2042 = vpop.f32.mrf.mxu0
        %v2043 = vpop.f32.mrf.mxu0
        %v2044 = vadd.f32 %v571, %v2043
        %v2045 = vpop.f32.mrf.mxu0
        %2046 = vmatprep.mubr.bf16.mxu0 0
        %2047 = vmatmul.mubr.bf16.gmra.mxu0 %v1386
        %v2048 = vpop.f32.mrf.mxu0
        %v2049 = vadd.f32 %v571, %v2048
        %v2050 = vpop.f32.mrf.mxu0
        %v2051 = vpop.f32.mrf.mxu0
        %v2052 = vadd.f32 %v571, %v2051
        %v2053 = vpop.f32.mrf.mxu0
        %2054 = vmatprep.mubr.bf16.mxu0 0
        %2055 = vmatmul.mubr.bf16.gmra.mxu0 %v1389
        %v2056 = vpop.f32.mrf.mxu0
        %v2057 = vadd.f32 %v571, %v2056
        %v2058 = vpop.f32.mrf.mxu0
        %v2059 = vpop.f32.mrf.mxu0
        %v2060 = vadd.f32 %v571, %v2059
        %v2061 = vpop.f32.mrf.mxu0
        %2062 = vmatprep.mubr.bf16.mxu0 0
        %2063 = vmatmul.mubr.bf16.gmra.mxu0 %v1392
        %v2064 = vpop.f32.mrf.mxu0
        %v2065 = vadd.f32 %v571, %v2064
        %v2066 = vpop.f32.mrf.mxu0
        %v2067 = vpop.f32.mrf.mxu0
        %v2068 = vadd.f32 %v571, %v2067
        %v2069 = vpop.f32.mrf.mxu0
        %2070 = vmatprep.mubr.bf16.mxu0 0
        %2071 = vmatmul.mubr.bf16.gmra.mxu0 %v1395
        %v2072 = vpop.f32.mrf.mxu0
        %v2073 = vadd.f32 %v571, %v2072
        %v2074 = vpop.f32.mrf.mxu0
        %v2075 = vpop.f32.mrf.mxu0
        %v2076 = vadd.f32 %v571, %v2075
        %v2077 = vpop.f32.mrf.mxu0
        %2078 = vmatprep.mubr.bf16.mxu0 0
        %2079 = vmatmul.mubr.bf16.gmra.mxu0 %v1398
        %v2080 = vpop.f32.mrf.mxu0
        %v2081 = vadd.f32 %v571, %v2080
        %v2082 = vpop.f32.mrf.mxu0
        %v2083 = vpop.f32.mrf.mxu0
        %v2084 = vadd.f32 %v571, %v2083
        %v2085 = vpop.f32.mrf.mxu0
        %2086 = vmatprep.mubr.bf16.mxu0 0
        %2087 = vmatmul.mubr.bf16.gmra.mxu0 %v1401
        %v2088 = vpop.f32.mrf.mxu0
        %v2089 = vadd.f32 %v571, %v2088
        %v2090 = vpop.f32.mrf.mxu0
        %v2091 = vpop.f32.mrf.mxu0
        %v2092 = vadd.f32 %v571, %v2091
        %v2093 = vpop.f32.mrf.mxu0
        %2094 = vmatprep.mubr.bf16.mxu0 0
        %2095 = vmatmul.mubr.bf16.gmra.mxu0 %v1404
        %v2096 = vpop.f32.mrf.mxu0
        %v2097 = vadd.f32 %v571, %v2096
        %v2098 = vpop.f32.mrf.mxu0
        %v2099 = vpop.f32.mrf.mxu0
        %v2100 = vadd.f32 %v571, %v2099
        %v2101 = vpop.f32.mrf.mxu0
        %2102 = vmatprep.mubr.bf16.mxu0 0
        %2103 = vmatmul.mubr.bf16.gmra.mxu0 %v1407
        %v2104 = vpop.f32.mrf.mxu0
        %v2105 = vadd.f32 %v571, %v2104
        %v2106 = vpop.f32.mrf.mxu0
        %v2107 = vpop.f32.mrf.mxu0
        %v2108 = vadd.f32 %v571, %v2107
        %v2109 = vpop.f32.mrf.mxu0
        %2110 = vmatprep.mubr.bf16.mxu0 0
        %2111 = vmatmul.mubr.bf16.gmra.mxu0 %v1410
        %v2112 = vpop.f32.mrf.mxu0
        %v2113 = vadd.f32 %v571, %v2112
        %v2114 = vpop.f32.mrf.mxu0
        %v2115 = vpop.f32.mrf.mxu0
        %v2116 = vadd.f32 %v571, %v2115
        %v2117 = vpop.f32.mrf.mxu0
        %2118 = vmatprep.mubr.bf16.mxu0 0
        %2119 = vmatmul.mubr.bf16.gmra.mxu0 %v1413
        %v2120 = vpop.f32.mrf.mxu0
        %v2121 = vadd.f32 %v571, %v2120
        %v2122 = vpop.f32.mrf.mxu0
        %v2123 = vpop.f32.mrf.mxu0
        %v2124 = vadd.f32 %v571, %v2123
        %v2125 = vpop.f32.mrf.mxu0
        %2126 = vmatprep.mubr.bf16.mxu0 0
        %2127 = vmatmul.mubr.bf16.gmra.mxu0 %v1416
        %v2128 = vpop.f32.mrf.mxu0
        %v2129 = vadd.f32 %v571, %v2128
        %v2130 = vpop.f32.mrf.mxu0
        %v2131 = vpop.f32.mrf.mxu0
        %v2132 = vadd.f32 %v571, %v2131
        %v2133 = vpop.f32.mrf.mxu0
        %2134 = vmatprep.mubr.bf16.mxu0 0
        %2135 = vmatmul.mubr.bf16.gmra.mxu0 %v1419
        %v2136 = vpop.f32.mrf.mxu0
        %v2137 = vadd.f32 %v571, %v2136
        %v2138 = vpop.f32.mrf.mxu0
        %v2139 = vpop.f32.mrf.mxu0
        %v2140 = vadd.f32 %v571, %v2139
        %v2141 = vpop.f32.mrf.mxu0
        %2142 = vmatprep.mubr.bf16.mxu0 0
        %2143 = vmatmul.mubr.bf16.gmra.mxu0 %v1422
        %v2144 = vpop.f32.mrf.mxu0
        %v2145 = vadd.f32 %v571, %v2144
        %v2146 = vpop.f32.mrf.mxu0
        %v2147 = vpop.f32.mrf.mxu0
        %v2148 = vadd.f32 %v571, %v2147
        %v2149 = vpop.f32.mrf.mxu0
        %2150 = vmatprep.mubr.bf16.mxu0 0
        %2151 = vmatmul.mubr.bf16.gmra.mxu0 %v1425
        %v2152 = vpop.f32.mrf.mxu0
        %v2153 = vadd.f32 %v571, %v2152
        %v2154 = vpop.f32.mrf.mxu0
        %v2155 = vpop.f32.mrf.mxu0
        %v2156 = vadd.f32 %v571, %v2155
        %v2157 = vpop.f32.mrf.mxu0
        %2158 = vmatprep.mubr.bf16.mxu0 0
        %2159 = vmatmul.mubr.bf16.gmra.mxu0 %v1428
        %v2160 = vpop.f32.mrf.mxu0
        %v2161 = vadd.f32 %v571, %v2160
        %v2162 = vpop.f32.mrf.mxu0
        %v2163 = vpop.f32.mrf.mxu0
        %v2164 = vadd.f32 %v571, %v2163
        %v2165 = vpop.f32.mrf.mxu0
        %2166 = vmatprep.mubr.bf16.mxu0 0
        %2167 = vmatmul.mubr.bf16.gmra.mxu0 %v1431
        %v2168 = vpop.f32.mrf.mxu0
        %v2169 = vadd.f32 %v571, %v2168
        %v2170 = vpop.f32.mrf.mxu0
        %v2171 = vpop.f32.mrf.mxu0
        %v2172 = vadd.f32 %v571, %v2171
        %v2173 = vpop.f32.mrf.mxu0
        %2174 = vmatprep.mubr.bf16.mxu0 0
        %2175 = vmatmul.mubr.bf16.gmra.mxu0 %v1434
        %v2176 = vpop.f32.mrf.mxu0
        %v2177 = vadd.f32 %v571, %v2176
        %v2178 = vpop.f32.mrf.mxu0
        %v2179 = vpop.f32.mrf.mxu0
        %v2180 = vadd.f32 %v571, %v2179
        %v2181 = vpop.f32.mrf.mxu0
        %2182 = vmatprep.mubr.bf16.mxu0 0
        %2183 = vmatmul.mubr.bf16.gmra.mxu0 %v1437
        %v2184 = vpop.f32.mrf.mxu0
        %v2185 = vadd.f32 %v571, %v2184
        %v2186 = vpop.f32.mrf.mxu0
        %v2187 = vpop.f32.mrf.mxu0
        %v2188 = vadd.f32 %v571, %v2187
        %v2189 = vpop.f32.mrf.mxu0
        %2190 = vmatprep.mubr.bf16.mxu0 0
        %2191 = vmatmul.mubr.bf16.gmra.mxu0 %v1440
        %v2192 = vpop.f32.mrf.mxu0
        %v2193 = vadd.f32 %v571, %v2192
        %v2194 = vpop.f32.mrf.mxu0
        %v2195 = vpop.f32.mrf.mxu0
        %v2196 = vadd.f32 %v571, %v2195
        %v2197 = vpop.f32.mrf.mxu0
        %2198 = vmatprep.mubr.bf16.mxu0 0
        %2199 = vmatmul.mubr.bf16.gmra.mxu0 %v1443
        %v2200 = vpop.f32.mrf.mxu0
        %v2201 = vadd.f32 %v571, %v2200
        %v2202 = vpop.f32.mrf.mxu0
        %v2203 = vpop.f32.mrf.mxu0
        %v2204 = vadd.f32 %v571, %v2203
        %v2205 = vpop.f32.mrf.mxu0
        %2206 = vmatprep.mubr.bf16.mxu0 0
        %2207 = vmatmul.mubr.bf16.gmra.mxu0 %v1446
        %v2208 = vpop.f32.mrf.mxu0
        %v2209 = vadd.f32 %v571, %v2208
        %v2210 = vpop.f32.mrf.mxu0
        %v2211 = vpop.f32.mrf.mxu0
        %v2212 = vadd.f32 %v571, %v2211
        %v2213 = vpop.f32.mrf.mxu0
        %2214 = vmatprep.mubr.bf16.mxu0 0
        %2215 = vmatmul.mubr.bf16.gmra.mxu0 %v1449
        %v2216 = vpop.f32.mrf.mxu0
        %v2217 = vadd.f32 %v571, %v2216
        %v2218 = vpop.f32.mrf.mxu0
        %v2219 = vpop.f32.mrf.mxu0
        %v2220 = vadd.f32 %v571, %v2219
        %v2221 = vpop.f32.mrf.mxu0
        %2222 = vmatprep.mubr.bf16.mxu0 0
        %2223 = vmatmul.mubr.bf16.gmra.mxu0 %v1452
        %v2224 = vpop.f32.mrf.mxu0
        %v2225 = vadd.f32 %v571, %v2224
        %v2226 = vpop.f32.mrf.mxu0
        %v2227 = vpop.f32.mrf.mxu0
        %v2228 = vadd.f32 %v571, %v2227
        %v2229 = vpop.f32.mrf.mxu0
        %2230 = vmatprep.mubr.bf16.mxu0 0
        %2231 = vmatmul.mubr.bf16.gmra.mxu0 %v1455
        %v2232 = vpop.f32.mrf.mxu0
        %v2233 = vadd.f32 %v571, %v2232
        %v2234 = vpop.f32.mrf.mxu0
        %v2235 = vpop.f32.mrf.mxu0
        %v2236 = vadd.f32 %v571, %v2235
        %v2237 = vpop.f32.mrf.mxu0
        %2238 = vmatprep.mubr.bf16.mxu0 0
        %2239 = vmatmul.mubr.bf16.gmra.mxu0 %v1458
        %v2240 = vpop.f32.mrf.mxu0
        %v2241 = vadd.f32 %v571, %v2240
        %v2242 = vpop.f32.mrf.mxu0
        %v2243 = vpop.f32.mrf.mxu0
        %v2244 = vadd.f32 %v571, %v2243
        %v2245 = vpop.f32.mrf.mxu0
        %2246 = vmatprep.mubr.bf16.mxu0 0
        %2247 = vmatmul.mubr.bf16.gmra.mxu0 %v1461
        %v2248 = vpop.f32.mrf.mxu0
        %v2249 = vadd.f32 %v571, %v2248
        %v2250 = vpop.f32.mrf.mxu0
        %v2251 = vpop.f32.mrf.mxu0
        %v2252 = vadd.f32 %v571, %v2251
        %v2253 = vpop.f32.mrf.mxu0
        %2254 = vmatprep.mubr.bf16.mxu0 0
        %2255 = vmatmul.mubr.bf16.gmra.mxu0 %v1464
        %v2256 = vpop.f32.mrf.mxu0
        %v2257 = vadd.f32 %v571, %v2256
        %v2258 = vpop.f32.mrf.mxu0
        %v2259 = vpop.f32.mrf.mxu0
        %v2260 = vadd.f32 %v571, %v2259
        %v2261 = vpop.f32.mrf.mxu0
        %2262 = vmatprep.mubr.bf16.mxu0 0
        %2263 = vmatmul.mubr.bf16.gmra.mxu0 %v1467
        %v2264 = vpop.f32.mrf.mxu0
        %v2265 = vadd.f32 %v571, %v2264
        %v2266 = vpop.f32.mrf.mxu0
        %v2267 = vpop.f32.mrf.mxu0
        %v2268 = vadd.f32 %v571, %v2267
        %v2269 = vpop.f32.mrf.mxu0
        %2270 = vmatprep.mubr.bf16.mxu0 0
        %2271 = vmatmul.mubr.bf16.gmra.mxu0 %v1470
        %v2272 = vpop.f32.mrf.mxu0
        %v2273 = vadd.f32 %v571, %v2272
        %v2274 = vpop.f32.mrf.mxu0
        %v2275 = vpop.f32.mrf.mxu0
        %v2276 = vadd.f32 %v571, %v2275
        %v2277 = vpop.f32.mrf.mxu0
        %2278 = vmatprep.mubr.bf16.mxu0 0
        %2279 = vmatmul.mubr.bf16.gmra.mxu0 %v1473
        %v2280 = vpop.f32.mrf.mxu0
        %v2281 = vadd.f32 %v571, %v2280
        %v2282 = vpop.f32.mrf.mxu0
        %v2283 = vpop.f32.mrf.mxu0
        %v2284 = vadd.f32 %v571, %v2283
        %v2285 = vpop.f32.mrf.mxu0
        %2286 = vmatprep.mubr.bf16.mxu0 0
        %2287 = vmatmul.mubr.bf16.gmra.mxu0 %v1476
        %v2288 = vpop.f32.mrf.mxu0
        %v2289 = vadd.f32 %v571, %v2288
        %v2290 = vpop.f32.mrf.mxu0
        %v2291 = vpop.f32.mrf.mxu0
        %v2292 = vadd.f32 %v571, %v2291
        %v2293 = vpop.f32.mrf.mxu0
        %2294 = vmatprep.mubr.bf16.mxu0 0
        %2295 = vmatmul.mubr.bf16.gmra.mxu0 %v1479
        %v2296 = vpop.f32.mrf.mxu0
        %v2297 = vadd.f32 %v571, %v2296
        %v2298 = vpop.f32.mrf.mxu0
        %v2299 = vpop.f32.mrf.mxu0
        %v2300 = vadd.f32 %v571, %v2299
        %v2301 = vpop.f32.mrf.mxu0
        %2302 = vmatprep.mubr.bf16.mxu0 0
        %2303 = vmatmul.mubr.bf16.gmra.mxu0 %v1482
        %v2304 = vpop.f32.mrf.mxu0
        %v2305 = vadd.f32 %v571, %v2304
        %v2306 = vpop.f32.mrf.mxu0
        %v2307 = vpop.f32.mrf.mxu0
        %v2308 = vadd.f32 %v571, %v2307
        %v2309 = vpop.f32.mrf.mxu0
        %2310 = vmatprep.mubr.bf16.mxu0 0
        %2311 = vmatmul.mubr.bf16.gmra.mxu0 %v1485
        %v2312 = vpop.f32.mrf.mxu0
        %v2313 = vadd.f32 %v571, %v2312
        %v2314 = vpop.f32.mrf.mxu0
        %v2315 = vpop.f32.mrf.mxu0
        %v2316 = vadd.f32 %v571, %v2315
        %v2317 = vpop.f32.mrf.mxu0
        %2318 = vmatprep.mubr.bf16.mxu0 0
        %2319 = vmatmul.mubr.bf16.gmra.mxu0 %v1488
        %v2320 = vpop.f32.mrf.mxu0
        %v2321 = vadd.f32 %v571, %v2320
        %v2322 = vpop.f32.mrf.mxu0
        %v2323 = vpop.f32.mrf.mxu0
        %v2324 = vadd.f32 %v571, %v2323
        %v2325 = vpop.f32.mrf.mxu0
        %2326 = vmatprep.mubr.bf16.mxu0 0
        %2327 = vmatmul.mubr.bf16.gmra.mxu0 %v1491
        %v2328 = vpop.f32.mrf.mxu0
        %v2329 = vadd.f32 %v571, %v2328
        %v2330 = vpop.f32.mrf.mxu0
        %v2331 = vpop.f32.mrf.mxu0
        %v2332 = vadd.f32 %v571, %v2331
        %v2333 = vpop.f32.mrf.mxu0
        %2334 = vmatprep.mubr.bf16.mxu0 0
        %2335 = vmatmul.mubr.bf16.gmra.mxu0 %v1494
        %v2336 = vpop.f32.mrf.mxu0
        %v2337 = vadd.f32 %v571, %v2336
        %v2338 = vpop.f32.mrf.mxu0
        %v2339 = vpop.f32.mrf.mxu0
        %v2340 = vadd.f32 %v571, %v2339
        %v2341 = vpop.f32.mrf.mxu0
        %2342 = vmatprep.mubr.bf16.mxu0 0
        %2343 = vmatmul.mubr.bf16.gmra.mxu0 %v1497
        %v2344 = vpop.f32.mrf.mxu0
        %v2345 = vadd.f32 %v571, %v2344
        %v2346 = vpop.f32.mrf.mxu0
        %v2347 = vpop.f32.mrf.mxu0
        %v2348 = vadd.f32 %v571, %v2347
        %v2349 = vpop.f32.mrf.mxu0
        %2350 = vmatprep.mubr.bf16.mxu0 0
        %2351 = vmatmul.mubr.bf16.gmra.mxu0 %v1500
        %v2352 = vpop.f32.mrf.mxu0
        %v2353 = vadd.f32 %v571, %v2352
        %v2354 = vpop.f32.mrf.mxu0
        %v2355 = vpop.f32.mrf.mxu0
        %v2356 = vadd.f32 %v571, %v2355
        %v2357 = vpop.f32.mrf.mxu0
        %2358 = vmatprep.mubr.bf16.mxu0 0
        %2359 = vmatmul.mubr.bf16.gmra.mxu0 %v1503
        %v2360 = vpop.f32.mrf.mxu0
        %v2361 = vadd.f32 %v571, %v2360
        %v2362 = vpop.f32.mrf.mxu0
        %v2363 = vpop.f32.mrf.mxu0
        %v2364 = vadd.f32 %v571, %v2363
        %v2365 = vpop.f32.mrf.mxu0
        %2366 = vmatprep.mubr.bf16.mxu0 0
        %2367 = vmatmul.mubr.bf16.gmra.mxu0 %v1506
        %v2368 = vpop.f32.mrf.mxu0
        %v2369 = vadd.f32 %v571, %v2368
        %v2370 = vpop.f32.mrf.mxu0
        %v2371 = vpop.f32.mrf.mxu0
        %v2372 = vadd.f32 %v571, %v2371
        %v2373 = vpop.f32.mrf.mxu0
        %2374 = vmatprep.mubr.bf16.mxu0 0
        %2375 = vmatmul.mubr.bf16.gmra.mxu0 %v1509
        %v2376 = vpop.f32.mrf.mxu0
        %v2377 = vadd.f32 %v571, %v2376
        %v2378 = vpop.f32.mrf.mxu0
        %v2379 = vpop.f32.mrf.mxu0
        %v2380 = vadd.f32 %v571, %v2379
        %v2381 = vpop.f32.mrf.mxu0
        %2382 = vmatprep.mubr.bf16.mxu0 0
        %2383 = vmatmul.mubr.bf16.gmra.mxu0 %v1512
        %v2384 = vpop.f32.mrf.mxu0
        %v2385 = vadd.f32 %v571, %v2384
        %v2386 = vpop.f32.mrf.mxu0
        %v2387 = vpop.f32.mrf.mxu0
        %v2388 = vadd.f32 %v571, %v2387
        %v2389 = vpop.f32.mrf.mxu0
        %2390 = vmatprep.mubr.bf16.mxu0 0
        %2391 = vmatmul.mubr.bf16.gmra.mxu0 %v1515
        %v2392 = vpop.f32.mrf.mxu0
        %v2393 = vadd.f32 %v571, %v2392
        %v2394 = vpop.f32.mrf.mxu0
        %v2395 = vpop.f32.mrf.mxu0
        %v2396 = vadd.f32 %v571, %v2395
        %v2397 = vpop.f32.mrf.mxu0
        %2398 = vmatprep.mubr.bf16.mxu0 0
        %2399 = vmatmul.mubr.bf16.gmra.mxu0 %v1518
        %v2400 = vpop.f32.mrf.mxu0
        %v2401 = vadd.f32 %v571, %v2400
        %v2402 = vpop.f32.mrf.mxu0
        %v2403 = vpop.f32.mrf.mxu0
        %v2404 = vadd.f32 %v571, %v2403
        %v2405 = vpop.f32.mrf.mxu0
        %2406 = vmatprep.mubr.bf16.mxu0 0
        %2407 = vmatmul.mubr.bf16.gmra.mxu0 %v1521
        %v2408 = vpop.f32.mrf.mxu0
        %v2409 = vadd.f32 %v571, %v2408
        %v2410 = vpop.f32.mrf.mxu0
        %v2411 = vpop.f32.mrf.mxu0
        %v2412 = vadd.f32 %v571, %v2411
        %v2413 = vpop.f32.mrf.mxu0
        %2414 = vmatprep.mubr.bf16.mxu0 0
        %2415 = vmatmul.mubr.bf16.gmra.mxu0 %v1524
        %v2416 = vpop.f32.mrf.mxu0
        %v2417 = vadd.f32 %v571, %v2416
        %v2418 = vpop.f32.mrf.mxu0
        %v2419 = vpop.f32.mrf.mxu0
        %v2420 = vadd.f32 %v571, %v2419
        %v2421 = vpop.f32.mrf.mxu0
        %2422 = vmatprep.mubr.bf16.mxu0 0
        %2423 = vmatmul.mubr.bf16.gmra.mxu0 %v1527
        %v2424 = vpop.f32.mrf.mxu0
        %v2425 = vadd.f32 %v571, %v2424
        %v2426 = vpop.f32.mrf.mxu0
        %v2427 = vpop.f32.mrf.mxu0
        %v2428 = vadd.f32 %v571, %v2427
        %v2429 = vpop.f32.mrf.mxu0
        %2430 = vmatprep.mubr.bf16.mxu0 0
        %2431 = vmatmul.mubr.bf16.gmra.mxu0 %v1530
        %v2432 = vpop.f32.mrf.mxu0
        %v2433 = vadd.f32 %v571, %v2432
        %v2434 = vpop.f32.mrf.mxu0
        %v2435 = vpop.f32.mrf.mxu0
        %v2436 = vadd.f32 %v571, %v2435
        %v2437 = vpop.f32.mrf.mxu0
        %2438 = vmatprep.mubr.bf16.mxu0 0
        %2439 = vmatmul.mubr.bf16.gmra.mxu0 %v1533
        %v2440 = vpop.f32.mrf.mxu0
        %v2441 = vadd.f32 %v571, %v2440
        %v2442 = vpop.f32.mrf.mxu0
        %v2443 = vpop.f32.mrf.mxu0
        %v2444 = vadd.f32 %v571, %v2443
        %v2445 = vpop.f32.mrf.mxu0
        %2446 = vmatprep.mubr.bf16.mxu0 0
        %2447 = vmatmul.mubr.bf16.gmra.mxu0 %v1536
        %v2448 = vpop.f32.mrf.mxu0
        %v2449 = vadd.f32 %v571, %v2448
        %v2450 = vpop.f32.mrf.mxu0
        %v2451 = vpop.f32.mrf.mxu0
        %v2452 = vadd.f32 %v571, %v2451
        %v2453 = vpop.f32.mrf.mxu0
        %2454 = vmatprep.mubr.bf16.mxu0 0
        %2455 = vmatmul.mubr.bf16.gmra.mxu0 %v1539
        %v2456 = vpop.f32.mrf.mxu0
        %v2457 = vadd.f32 %v571, %v2456
        %v2458 = vpop.f32.mrf.mxu0
        %v2459 = vpop.f32.mrf.mxu0
        %v2460 = vadd.f32 %v571, %v2459
        %v2461 = vpop.f32.mrf.mxu0
        %2462 = vmatprep.mubr.bf16.mxu0 0
        %2463 = vmatmul.mubr.bf16.gmra.mxu0 %v1542
        %v2464 = vpop.f32.mrf.mxu0
        %v2465 = vadd.f32 %v571, %v2464
        %v2466 = vpop.f32.mrf.mxu0
        %v2467 = vpop.f32.mrf.mxu0
        %v2468 = vadd.f32 %v571, %v2467
        %v2469 = vpop.f32.mrf.mxu0
        %2470 = vmatprep.mubr.bf16.mxu0 0
        %2471 = vmatmul.mubr.bf16.gmra.mxu0 %v1545
        %v2472 = vpop.f32.mrf.mxu0
        %v2473 = vadd.f32 %v571, %v2472
        %v2474 = vpop.f32.mrf.mxu0
        %v2475 = vpop.f32.mrf.mxu0
        %v2476 = vadd.f32 %v571, %v2475
        %v2477 = vpop.f32.mrf.mxu0
        %2478 = vmatprep.mubr.bf16.mxu0 0
        %2479 = vmatmul.mubr.bf16.gmra.mxu0 %v1548
        %v2480 = vpop.f32.mrf.mxu0
        %v2481 = vadd.f32 %v571, %v2480
        %v2482 = vpop.f32.mrf.mxu0
        %v2483 = vpop.f32.mrf.mxu0
        %v2484 = vadd.f32 %v571, %v2483
        %v2485 = vpop.f32.mrf.mxu0
        %2486 = vmatprep.mubr.bf16.mxu0 0
        %2487 = vmatmul.mubr.bf16.gmra.mxu0 %v1551
        %v2488 = vpop.f32.mrf.mxu0
        %v2489 = vadd.f32 %v571, %v2488
        %v2490 = vpop.f32.mrf.mxu0
        %v2491 = vpop.f32.mrf.mxu0
        %v2492 = vadd.f32 %v571, %v2491
        %v2493 = vpop.f32.mrf.mxu0
        %2494 = vmatprep.mubr.bf16.mxu0 0
        %2495 = vmatmul.mubr.bf16.gmra.mxu0 %v1554
        %v2496 = vpop.f32.mrf.mxu0
        %v2497 = vadd.f32 %v571, %v2496
        %v2498 = vpop.f32.mrf.mxu0
        %v2499 = vpop.f32.mrf.mxu0
        %v2500 = vadd.f32 %v571, %v2499
        %v2501 = vpop.f32.mrf.mxu0
        %2502 = vmatprep.mubr.bf16.mxu0 0
        %2503 = vmatmul.mubr.bf16.gmra.mxu0 %v1557
        %v2504 = vpop.f32.mrf.mxu0
        %v2505 = vadd.f32 %v571, %v2504
        %v2506 = vpop.f32.mrf.mxu0
        %v2507 = vpop.f32.mrf.mxu0
        %v2508 = vadd.f32 %v571, %v2507
        %v2509 = vpop.f32.mrf.mxu0
        %2510 = vmatprep.mubr.bf16.mxu0 0
        %2511 = vmatmul.mubr.bf16.gmra.mxu0 %v1560
        %v2512 = vpop.f32.mrf.mxu0
        %v2513 = vadd.f32 %v571, %v2512
        %v2514 = vpop.f32.mrf.mxu0
        %v2515 = vpop.f32.mrf.mxu0
        %v2516 = vadd.f32 %v571, %v2515
        %v2517 = vpop.f32.mrf.mxu0
        %2518 = vmatprep.mubr.bf16.mxu0 0
        %2519 = vmatmul.mubr.bf16.gmra.mxu0 %v1563
        %v2520 = vpop.f32.mrf.mxu0
        %v2521 = vadd.f32 %v571, %v2520
        %v2522 = vpop.f32.mrf.mxu0
        %v2523 = vpop.f32.mrf.mxu0
        %v2524 = vadd.f32 %v571, %v2523
        %v2525 = vpop.f32.mrf.mxu0
        %2526 = vmatprep.mubr.bf16.mxu0 0
        %2527 = vmatmul.mubr.bf16.gmra.mxu0 %v1566
        %v2528 = vpop.f32.mrf.mxu0
        %v2529 = vadd.f32 %v571, %v2528
        %v2530 = vpop.f32.mrf.mxu0
        %v2531 = vpop.f32.mrf.mxu0
        %v2532 = vadd.f32 %v571, %v2531
        %v2533 = vpop.f32.mrf.mxu0
        %2534 = vmatprep.mubr.bf16.mxu0 0
        %2535 = vmatmul.mubr.bf16.gmra.mxu0 %v1569
        %v2536 = vpop.f32.mrf.mxu0
        %v2537 = vadd.f32 %v571, %v2536
        %v2538 = vpop.f32.mrf.mxu0
        %v2539 = vpop.f32.mrf.mxu0
        %v2540 = vadd.f32 %v571, %v2539
        %v2541 = vpop.f32.mrf.mxu0
        %2542 = vmatprep.mubr.bf16.mxu0 0
        %2543 = vmatmul.mubr.bf16.gmra.mxu0 %v1572
        %v2544 = vpop.f32.mrf.mxu0
        %v2545 = vadd.f32 %v571, %v2544
        %v2546 = vpop.f32.mrf.mxu0
        %v2547 = vpop.f32.mrf.mxu0
        %v2548 = vadd.f32 %v571, %v2547
        %v2549 = vpop.f32.mrf.mxu0
        %2550 = vmatprep.mubr.bf16.mxu0 0
        %2551 = vmatmul.mubr.bf16.gmra.mxu0 %v1575
        %v2552 = vpop.f32.mrf.mxu0
        %v2553 = vadd.f32 %v571, %v2552
        %v2554 = vpop.f32.mrf.mxu0
        %v2555 = vpop.f32.mrf.mxu0
        %v2556 = vadd.f32 %v571, %v2555
        %v2557 = vpop.f32.mrf.mxu0
        %2558 = vmatprep.mubr.bf16.mxu0 0
        %2559 = vmatmul.mubr.bf16.gmra.mxu0 %v1578
        %v2560 = vpop.f32.mrf.mxu0
        %v2561 = vadd.f32 %v571, %v2560
        %v2562 = vpop.f32.mrf.mxu0
        %v2563 = vpop.f32.mrf.mxu0
        %v2564 = vadd.f32 %v571, %v2563
        %v2565 = vpop.f32.mrf.mxu0
        %2566 = vmatprep.mubr.bf16.mxu0 0
        %2567 = vmatmul.mubr.bf16.gmra.mxu0 %v1581
        %v2568 = vpop.f32.mrf.mxu0
        %v2569 = vadd.f32 %v571, %v2568
        %v2570 = vpop.f32.mrf.mxu0
        %v2571 = vpop.f32.mrf.mxu0
        %v2572 = vadd.f32 %v571, %v2571
        %v2573 = vpop.f32.mrf.mxu0
        %2574 = vmatprep.mubr.bf16.mxu0 0
        %2575 = vmatmul.mubr.bf16.gmra.mxu0 %v1584
        %v2576 = vpop.f32.mrf.mxu0
        %v2577 = vadd.f32 %v571, %v2576
        %v2578 = vpop.f32.mrf.mxu0
        %v2579 = vpop.f32.mrf.mxu0
        %v2580 = vadd.f32 %v571, %v2579
        %v2581 = vpop.f32.mrf.mxu0
        %2582 = vmatprep.mubr.bf16.mxu0 0
        %2583 = vmatmul.mubr.bf16.gmra.mxu0 %v1587
        %v2584 = vpop.f32.mrf.mxu0
        %v2585 = vadd.f32 %v571, %v2584
        %v2586 = vpop.f32.mrf.mxu0
        %v2587 = vpop.f32.mrf.mxu0
        %v2588 = vadd.f32 %v571, %v2587
        %v2589 = vpop.f32.mrf.mxu0
        %2590 = vmatprep.mubr.bf16.mxu0 0
        %2591 = vmatmul.mubr.bf16.gmra.mxu0 %v1590
        %v2592 = vpop.f32.mrf.mxu0
        %v2593 = vadd.f32 %v571, %v2592
        %v2594 = vpop.f32.mrf.mxu0
        %v2595 = vpop.f32.mrf.mxu0
        %v2596 = vadd.f32 %v571, %v2595
        %v2597 = vpop.f32.mrf.mxu0
        %2598 = vmatprep.mubr.bf16.mxu0 0
        %2599 = vmatmul.mubr.bf16.gmra.mxu0 %v1593
        %v2600 = vpop.f32.mrf.mxu0
        %v2601 = vadd.f32 %v571, %v2600
        %v2602 = vpop.f32.mrf.mxu0
        %v2603 = vpop.f32.mrf.mxu0
        %v2604 = vadd.f32 %v571, %v2603
        %v2605 = vpop.f32.mrf.mxu0
        %2606 = vmatprep.mubr.bf16.mxu0 0
        %2607 = vmatmul.mubr.bf16.gmra.mxu0 %v1596
        %v2608 = vpop.f32.mrf.mxu0
        %v2609 = vadd.f32 %v571, %v2608
        %v2610 = vpop.f32.mrf.mxu0
        %v2611 = vpop.f32.mrf.mxu0
        %v2612 = vadd.f32 %v571, %v2611
        %v2613 = vpop.f32.mrf.mxu0
        %2614 = vmatprep.mubr.bf16.mxu0 0
        %2615 = vmatmul.mubr.bf16.gmra.mxu0 %v1599
        %v2616 = vpop.f32.mrf.mxu0
        %v2617 = vadd.f32 %v571, %v2616
        %v2618 = vpop.f32.mrf.mxu0
        %v2619 = vpop.f32.mrf.mxu0
        %v2620 = vadd.f32 %v571, %v2619
        %v2621 = vpop.f32.mrf.mxu0
        %2622 = vmatprep.mubr.bf16.mxu0 0
        %2623 = vmatmul.mubr.bf16.gmra.mxu0 %v1602
        %v2624 = vpop.f32.mrf.mxu0
        %v2625 = vadd.f32 %v571, %v2624
        %v2626 = vpop.f32.mrf.mxu0
        %v2627 = vpop.f32.mrf.mxu0
        %v2628 = vadd.f32 %v571, %v2627
        %v2629 = vpop.f32.mrf.mxu0
        %2630 = vmatprep.mubr.bf16.mxu0 0
        %2631 = vmatmul.mubr.bf16.gmra.mxu0 %v1605
        %v2632 = vpop.f32.mrf.mxu0
        %v2633 = vadd.f32 %v571, %v2632
        %v2634 = vpop.f32.mrf.mxu0
        %v2635 = vpop.f32.mrf.mxu0
        %v2636 = vadd.f32 %v571, %v2635
        %v2637 = vpop.f32.mrf.mxu0
        %2638 = vmatprep.mubr.bf16.mxu0 0
        %2639 = vmatmul.mubr.bf16.gmra.mxu0 %v1608
        %v2640 = vpop.f32.mrf.mxu0
        %v2641 = vadd.f32 %v571, %v2640
        %v2642 = vpop.f32.mrf.mxu0
        %v2643 = vpop.f32.mrf.mxu0
        %v2644 = vadd.f32 %v571, %v2643
        %v2645 = vpop.f32.mrf.mxu0
        %2646 = vmatprep.mubr.bf16.mxu0 0
        %2647 = vmatmul.mubr.bf16.gmra.mxu0 %v1611
        %v2648 = vpop.f32.mrf.mxu0
        %v2649 = vadd.f32 %v571, %v2648
        %v2650 = vpop.f32.mrf.mxu0
        %v2651 = vpop.f32.mrf.mxu0
        %v2652 = vadd.f32 %v571, %v2651
        %v2653 = vpop.f32.mrf.mxu0
        %2654 = vmatprep.mubr.bf16.mxu0 0
        %2655 = vmatmul.mubr.bf16.gmra.mxu0 %v1614
        %v2656 = vpop.f32.mrf.mxu0
        %v2657 = vadd.f32 %v571, %v2656
        %v2658 = vpop.f32.mrf.mxu0
        %v2659 = vpop.f32.mrf.mxu0
        %v2660 = vadd.f32 %v571, %v2659
        %v2661 = vpop.f32.mrf.mxu0
        %2662 = vmatprep.mubr.bf16.mxu0 0
        %2663 = vmatmul.mubr.bf16.gmra.mxu0 %v1617
        %v2664 = vpop.f32.mrf.mxu0
        %v2665 = vadd.f32 %v571, %v2664
        %v2666 = vpop.f32.mrf.mxu0
        %v2667 = vpop.f32.mrf.mxu0
        %v2668 = vadd.f32 %v571, %v2667
        %v2669 = vpop.f32.mrf.mxu0
        %2670 = vmatprep.mubr.bf16.mxu0 0
        %2671 = vmatmul.mubr.bf16.gmra.mxu0 %v1620
        %v2672 = vpop.f32.mrf.mxu0
        %v2673 = vadd.f32 %v571, %v2672
        %v2674 = vpop.f32.mrf.mxu0
        %v2675 = vpop.f32.mrf.mxu0
        %v2676 = vadd.f32 %v571, %v2675
        %v2677 = vpop.f32.mrf.mxu0
        %2678 = vdwg.mxu0
        %vm2679 = vcmp.ge.f32.partialorder %v1657, 0.0
        %vm2680 = vcmp.ge.f32.partialorder %v1660, 0.0
        %vm2681 = vcmp.ge.f32.partialorder %v1665, 0.0
        %vm2682 = vcmp.ge.f32.partialorder %v1668, 0.0
        %vm2683 = vcmp.ge.f32.partialorder %v1673, 0.0
        %vm2684 = vcmp.ge.f32.partialorder %v1676, 0.0
        %vm2685 = vcmp.ge.f32.partialorder %v1681, 0.0
        %vm2686 = vcmp.ge.f32.partialorder %v1684, 0.0
        %vm2687 = vcmp.ge.f32.partialorder %v1689, 0.0
        %vm2688 = vcmp.ge.f32.partialorder %v1692, 0.0
        %vm2689 = vcmp.ge.f32.partialorder %v1697, 0.0
        %vm2690 = vcmp.ge.f32.partialorder %v1700, 0.0
        %vm2691 = vcmp.ge.f32.partialorder %v1705, 0.0
        %vm2692 = vcmp.ge.f32.partialorder %v1708, 0.0
        %vm2693 = vcmp.ge.f32.partialorder %v1713, 0.0
        %vm2694 = vcmp.ge.f32.partialorder %v1716, 0.0
        %vm2695 = vcmp.ge.f32.partialorder %v1721, 0.0
        %vm2696 = vcmp.ge.f32.partialorder %v1724, 0.0
        %vm2697 = vcmp.ge.f32.partialorder %v1729, 0.0
        %vm2698 = vcmp.ge.f32.partialorder %v1732, 0.0
        %vm2699 = vcmp.ge.f32.partialorder %v1737, 0.0
        %vm2700 = vcmp.ge.f32.partialorder %v1740, 0.0
        %vm2701 = vcmp.ge.f32.partialorder %v1745, 0.0
        %vm2702 = vcmp.ge.f32.partialorder %v1748, 0.0
        %vm2703 = vcmp.ge.f32.partialorder %v1753, 0.0
        %vm2704 = vcmp.ge.f32.partialorder %v1756, 0.0
        %vm2705 = vcmp.ge.f32.partialorder %v1761, 0.0
        %vm2706 = vcmp.ge.f32.partialorder %v1764, 0.0
        %vm2707 = vcmp.ge.f32.partialorder %v1769, 0.0
        %vm2708 = vcmp.ge.f32.partialorder %v1772, 0.0
        %vm2709 = vcmp.ge.f32.partialorder %v1777, 0.0
        %vm2710 = vcmp.ge.f32.partialorder %v1780, 0.0
        %vm2711 = vcmp.ge.f32.partialorder %v1785, 0.0
        %vm2712 = vcmp.ge.f32.partialorder %v1788, 0.0
        %vm2713 = vcmp.ge.f32.partialorder %v1793, 0.0
        %vm2714 = vcmp.ge.f32.partialorder %v1796, 0.0
        %vm2715 = vcmp.ge.f32.partialorder %v1801, 0.0
        %vm2716 = vcmp.ge.f32.partialorder %v1804, 0.0
        %vm2717 = vcmp.ge.f32.partialorder %v1809, 0.0
        %vm2718 = vcmp.ge.f32.partialorder %v1812, 0.0
        %vm2719 = vcmp.ge.f32.partialorder %v1817, 0.0
        %vm2720 = vcmp.ge.f32.partialorder %v1820, 0.0
        %vm2721 = vcmp.ge.f32.partialorder %v1825, 0.0
        %vm2722 = vcmp.ge.f32.partialorder %v1828, 0.0
        %vm2723 = vcmp.ge.f32.partialorder %v1833, 0.0
        %vm2724 = vcmp.ge.f32.partialorder %v1836, 0.0
        %vm2725 = vcmp.ge.f32.partialorder %v1841, 0.0
        %vm2726 = vcmp.ge.f32.partialorder %v1844, 0.0
        %vm2727 = vcmp.ge.f32.partialorder %v1849, 0.0
        %vm2728 = vcmp.ge.f32.partialorder %v1852, 0.0
        %vm2729 = vcmp.ge.f32.partialorder %v1857, 0.0
        %vm2730 = vcmp.ge.f32.partialorder %v1860, 0.0
        %vm2731 = vcmp.ge.f32.partialorder %v1865, 0.0
        %vm2732 = vcmp.ge.f32.partialorder %v1868, 0.0
        %vm2733 = vcmp.ge.f32.partialorder %v1873, 0.0
        %vm2734 = vcmp.ge.f32.partialorder %v1876, 0.0
        %vm2735 = vcmp.ge.f32.partialorder %v1881, 0.0
        %vm2736 = vcmp.ge.f32.partialorder %v1884, 0.0
        %vm2737 = vcmp.ge.f32.partialorder %v1889, 0.0
        %vm2738 = vcmp.ge.f32.partialorder %v1892, 0.0
        %vm2739 = vcmp.ge.f32.partialorder %v1897, 0.0
        %vm2740 = vcmp.ge.f32.partialorder %v1900, 0.0
        %vm2741 = vcmp.ge.f32.partialorder %v1905, 0.0
        %vm2742 = vcmp.ge.f32.partialorder %v1908, 0.0
        %vm2743 = vcmp.ge.f32.partialorder %v1913, 0.0
        %vm2744 = vcmp.ge.f32.partialorder %v1916, 0.0
        %vm2745 = vcmp.ge.f32.partialorder %v1921, 0.0
        %vm2746 = vcmp.ge.f32.partialorder %v1924, 0.0
        %vm2747 = vcmp.ge.f32.partialorder %v1929, 0.0
        %vm2748 = vcmp.ge.f32.partialorder %v1932, 0.0
        %vm2749 = vcmp.ge.f32.partialorder %v1937, 0.0
        %vm2750 = vcmp.ge.f32.partialorder %v1940, 0.0
        %vm2751 = vcmp.ge.f32.partialorder %v1945, 0.0
        %vm2752 = vcmp.ge.f32.partialorder %v1948, 0.0
        %vm2753 = vcmp.ge.f32.partialorder %v1953, 0.0
        %vm2754 = vcmp.ge.f32.partialorder %v1956, 0.0
        %vm2755 = vcmp.ge.f32.partialorder %v1961, 0.0
        %vm2756 = vcmp.ge.f32.partialorder %v1964, 0.0
        %vm2757 = vcmp.ge.f32.partialorder %v1969, 0.0
        %vm2758 = vcmp.ge.f32.partialorder %v1972, 0.0
        %vm2759 = vcmp.ge.f32.partialorder %v1977, 0.0
        %vm2760 = vcmp.ge.f32.partialorder %v1980, 0.0
        %vm2761 = vcmp.ge.f32.partialorder %v1985, 0.0
        %vm2762 = vcmp.ge.f32.partialorder %v1988, 0.0
        %vm2763 = vcmp.ge.f32.partialorder %v1993, 0.0
        %vm2764 = vcmp.ge.f32.partialorder %v1996, 0.0
        %vm2765 = vcmp.ge.f32.partialorder %v2001, 0.0
        %vm2766 = vcmp.ge.f32.partialorder %v2004, 0.0
        %vm2767 = vcmp.ge.f32.partialorder %v2009, 0.0
        %vm2768 = vcmp.ge.f32.partialorder %v2012, 0.0
        %vm2769 = vcmp.ge.f32.partialorder %v2017, 0.0
        %vm2770 = vcmp.ge.f32.partialorder %v2020, 0.0
        %vm2771 = vcmp.ge.f32.partialorder %v2025, 0.0
        %vm2772 = vcmp.ge.f32.partialorder %v2028, 0.0
        %vm2773 = vcmp.ge.f32.partialorder %v2033, 0.0
        %vm2774 = vcmp.ge.f32.partialorder %v2036, 0.0
        %vm2775 = vcmp.ge.f32.partialorder %v2041, 0.0
        %vm2776 = vcmp.ge.f32.partialorder %v2044, 0.0
        %vm2777 = vcmp.ge.f32.partialorder %v2049, 0.0
        %vm2778 = vcmp.ge.f32.partialorder %v2052, 0.0
        %vm2779 = vcmp.ge.f32.partialorder %v2057, 0.0
        %vm2780 = vcmp.ge.f32.partialorder %v2060, 0.0
        %vm2781 = vcmp.ge.f32.partialorder %v2065, 0.0
        %vm2782 = vcmp.ge.f32.partialorder %v2068, 0.0
        %vm2783 = vcmp.ge.f32.partialorder %v2073, 0.0
        %vm2784 = vcmp.ge.f32.partialorder %v2076, 0.0
        %vm2785 = vcmp.ge.f32.partialorder %v2081, 0.0
        %vm2786 = vcmp.ge.f32.partialorder %v2084, 0.0
        %vm2787 = vcmp.ge.f32.partialorder %v2089, 0.0
        %vm2788 = vcmp.ge.f32.partialorder %v2092, 0.0
        %vm2789 = vcmp.ge.f32.partialorder %v2097, 0.0
        %vm2790 = vcmp.ge.f32.partialorder %v2100, 0.0
        %vm2791 = vcmp.ge.f32.partialorder %v2105, 0.0
        %vm2792 = vcmp.ge.f32.partialorder %v2108, 0.0
        %vm2793 = vcmp.ge.f32.partialorder %v2113, 0.0
        %vm2794 = vcmp.ge.f32.partialorder %v2116, 0.0
        %vm2795 = vcmp.ge.f32.partialorder %v2121, 0.0
        %vm2796 = vcmp.ge.f32.partialorder %v2124, 0.0
        %vm2797 = vcmp.ge.f32.partialorder %v2129, 0.0
        %vm2798 = vcmp.ge.f32.partialorder %v2132, 0.0
        %vm2799 = vcmp.ge.f32.partialorder %v2137, 0.0
        %vm2800 = vcmp.ge.f32.partialorder %v2140, 0.0
        %vm2801 = vcmp.ge.f32.partialorder %v2145, 0.0
        %vm2802 = vcmp.ge.f32.partialorder %v2148, 0.0
        %vm2803 = vcmp.ge.f32.partialorder %v2153, 0.0
        %vm2804 = vcmp.ge.f32.partialorder %v2156, 0.0
        %vm2805 = vcmp.ge.f32.partialorder %v2161, 0.0
        %vm2806 = vcmp.ge.f32.partialorder %v2164, 0.0
        %vm2807 = vcmp.ge.f32.partialorder %v2169, 0.0
        %vm2808 = vcmp.ge.f32.partialorder %v2172, 0.0
        %vm2809 = vcmp.ge.f32.partialorder %v2177, 0.0
        %vm2810 = vcmp.ge.f32.partialorder %v2180, 0.0
        %vm2811 = vcmp.ge.f32.partialorder %v2185, 0.0
        %vm2812 = vcmp.ge.f32.partialorder %v2188, 0.0
        %vm2813 = vcmp.ge.f32.partialorder %v2193, 0.0
        %vm2814 = vcmp.ge.f32.partialorder %v2196, 0.0
        %vm2815 = vcmp.ge.f32.partialorder %v2201, 0.0
        %vm2816 = vcmp.ge.f32.partialorder %v2204, 0.0
        %vm2817 = vcmp.ge.f32.partialorder %v2209, 0.0
        %vm2818 = vcmp.ge.f32.partialorder %v2212, 0.0
        %vm2819 = vcmp.ge.f32.partialorder %v2217, 0.0
        %vm2820 = vcmp.ge.f32.partialorder %v2220, 0.0
        %vm2821 = vcmp.ge.f32.partialorder %v2225, 0.0
        %vm2822 = vcmp.ge.f32.partialorder %v2228, 0.0
        %vm2823 = vcmp.ge.f32.partialorder %v2233, 0.0
        %vm2824 = vcmp.ge.f32.partialorder %v2236, 0.0
        %vm2825 = vcmp.ge.f32.partialorder %v2241, 0.0
        %vm2826 = vcmp.ge.f32.partialorder %v2244, 0.0
        %vm2827 = vcmp.ge.f32.partialorder %v2249, 0.0
        %vm2828 = vcmp.ge.f32.partialorder %v2252, 0.0
        %vm2829 = vcmp.ge.f32.partialorder %v2257, 0.0
        %vm2830 = vcmp.ge.f32.partialorder %v2260, 0.0
        %vm2831 = vcmp.ge.f32.partialorder %v2265, 0.0
        %vm2832 = vcmp.ge.f32.partialorder %v2268, 0.0
        %vm2833 = vcmp.ge.f32.partialorder %v2273, 0.0
        %vm2834 = vcmp.ge.f32.partialorder %v2276, 0.0
        %vm2835 = vcmp.ge.f32.partialorder %v2281, 0.0
        %vm2836 = vcmp.ge.f32.partialorder %v2284, 0.0
        %vm2837 = vcmp.ge.f32.partialorder %v2289, 0.0
        %vm2838 = vcmp.ge.f32.partialorder %v2292, 0.0
        %vm2839 = vcmp.ge.f32.partialorder %v2297, 0.0
        %vm2840 = vcmp.ge.f32.partialorder %v2300, 0.0
        %vm2841 = vcmp.ge.f32.partialorder %v2305, 0.0
        %vm2842 = vcmp.ge.f32.partialorder %v2308, 0.0
        %vm2843 = vcmp.ge.f32.partialorder %v2313, 0.0
        %vm2844 = vcmp.ge.f32.partialorder %v2316, 0.0
        %vm2845 = vcmp.ge.f32.partialorder %v2321, 0.0
        %vm2846 = vcmp.ge.f32.partialorder %v2324, 0.0
        %vm2847 = vcmp.ge.f32.partialorder %v2329, 0.0
        %vm2848 = vcmp.ge.f32.partialorder %v2332, 0.0
        %vm2849 = vcmp.ge.f32.partialorder %v2337, 0.0
        %vm2850 = vcmp.ge.f32.partialorder %v2340, 0.0
        %vm2851 = vcmp.ge.f32.partialorder %v2345, 0.0
        %vm2852 = vcmp.ge.f32.partialorder %v2348, 0.0
        %vm2853 = vcmp.ge.f32.partialorder %v2353, 0.0
        %vm2854 = vcmp.ge.f32.partialorder %v2356, 0.0
        %vm2855 = vcmp.ge.f32.partialorder %v2361, 0.0
        %vm2856 = vcmp.ge.f32.partialorder %v2364, 0.0
        %vm2857 = vcmp.ge.f32.partialorder %v2369, 0.0
        %vm2858 = vcmp.ge.f32.partialorder %v2372, 0.0
        %vm2859 = vcmp.ge.f32.partialorder %v2377, 0.0
        %vm2860 = vcmp.ge.f32.partialorder %v2380, 0.0
        %vm2861 = vcmp.ge.f32.partialorder %v2385, 0.0
        %vm2862 = vcmp.ge.f32.partialorder %v2388, 0.0
        %vm2863 = vcmp.ge.f32.partialorder %v2393, 0.0
        %vm2864 = vcmp.ge.f32.partialorder %v2396, 0.0
        %vm2865 = vcmp.ge.f32.partialorder %v2401, 0.0
        %vm2866 = vcmp.ge.f32.partialorder %v2404, 0.0
        %vm2867 = vcmp.ge.f32.partialorder %v2409, 0.0
        %vm2868 = vcmp.ge.f32.partialorder %v2412, 0.0
        %vm2869 = vcmp.ge.f32.partialorder %v2417, 0.0
        %vm2870 = vcmp.ge.f32.partialorder %v2420, 0.0
        %vm2871 = vcmp.ge.f32.partialorder %v2425, 0.0
        %vm2872 = vcmp.ge.f32.partialorder %v2428, 0.0
        %vm2873 = vcmp.ge.f32.partialorder %v2433, 0.0
        %vm2874 = vcmp.ge.f32.partialorder %v2436, 0.0
        %vm2875 = vcmp.ge.f32.partialorder %v2441, 0.0
        %vm2876 = vcmp.ge.f32.partialorder %v2444, 0.0
        %vm2877 = vcmp.ge.f32.partialorder %v2449, 0.0
        %vm2878 = vcmp.ge.f32.partialorder %v2452, 0.0
        %vm2879 = vcmp.ge.f32.partialorder %v2457, 0.0
        %vm2880 = vcmp.ge.f32.partialorder %v2460, 0.0
        %vm2881 = vcmp.ge.f32.partialorder %v2465, 0.0
        %vm2882 = vcmp.ge.f32.partialorder %v2468, 0.0
        %vm2883 = vcmp.ge.f32.partialorder %v2473, 0.0
        %vm2884 = vcmp.ge.f32.partialorder %v2476, 0.0
        %vm2885 = vcmp.ge.f32.partialorder %v2481, 0.0
        %vm2886 = vcmp.ge.f32.partialorder %v2484, 0.0
        %vm2887 = vcmp.ge.f32.partialorder %v2489, 0.0
        %vm2888 = vcmp.ge.f32.partialorder %v2492, 0.0
        %vm2889 = vcmp.ge.f32.partialorder %v2497, 0.0
        %vm2890 = vcmp.ge.f32.partialorder %v2500, 0.0
        %vm2891 = vcmp.ge.f32.partialorder %v2505, 0.0
        %vm2892 = vcmp.ge.f32.partialorder %v2508, 0.0
        %vm2893 = vcmp.ge.f32.partialorder %v2513, 0.0
        %vm2894 = vcmp.ge.f32.partialorder %v2516, 0.0
        %vm2895 = vcmp.ge.f32.partialorder %v2521, 0.0
        %vm2896 = vcmp.ge.f32.partialorder %v2524, 0.0
        %vm2897 = vcmp.ge.f32.partialorder %v2529, 0.0
        %vm2898 = vcmp.ge.f32.partialorder %v2532, 0.0
        %vm2899 = vcmp.ge.f32.partialorder %v2537, 0.0
        %vm2900 = vcmp.ge.f32.partialorder %v2540, 0.0
        %vm2901 = vcmp.ge.f32.partialorder %v2545, 0.0
        %vm2902 = vcmp.ge.f32.partialorder %v2548, 0.0
        %vm2903 = vcmp.ge.f32.partialorder %v2553, 0.0
        %vm2904 = vcmp.ge.f32.partialorder %v2556, 0.0
        %vm2905 = vcmp.ge.f32.partialorder %v2561, 0.0
        %vm2906 = vcmp.ge.f32.partialorder %v2564, 0.0
        %vm2907 = vcmp.ge.f32.partialorder %v2569, 0.0
        %vm2908 = vcmp.ge.f32.partialorder %v2572, 0.0
        %vm2909 = vcmp.ge.f32.partialorder %v2577, 0.0
        %vm2910 = vcmp.ge.f32.partialorder %v2580, 0.0
        %vm2911 = vcmp.ge.f32.partialorder %v2585, 0.0
        %vm2912 = vcmp.ge.f32.partialorder %v2588, 0.0
        %vm2913 = vcmp.ge.f32.partialorder %v2593, 0.0
        %vm2914 = vcmp.ge.f32.partialorder %v2596, 0.0
        %vm2915 = vcmp.ge.f32.partialorder %v2601, 0.0
        %vm2916 = vcmp.ge.f32.partialorder %v2604, 0.0
        %vm2917 = vcmp.ge.f32.partialorder %v2609, 0.0
        %vm2918 = vcmp.ge.f32.partialorder %v2612, 0.0
        %vm2919 = vcmp.ge.f32.partialorder %v2617, 0.0
        %vm2920 = vcmp.ge.f32.partialorder %v2620, 0.0
        %vm2921 = vcmp.ge.f32.partialorder %v2625, 0.0
        %vm2922 = vcmp.ge.f32.partialorder %v2628, 0.0
        %vm2923 = vcmp.ge.f32.partialorder %v2633, 0.0
        %vm2924 = vcmp.ge.f32.partialorder %v2636, 0.0
        %vm2925 = vcmp.ge.f32.partialorder %v2641, 0.0
        %vm2926 = vcmp.ge.f32.partialorder %v2644, 0.0
        %vm2927 = vcmp.ge.f32.partialorder %v2649, 0.0
        %vm2928 = vcmp.ge.f32.partialorder %v2652, 0.0
        %vm2929 = vcmp.ge.f32.partialorder %v2657, 0.0
        %vm2930 = vcmp.ge.f32.partialorder %v2660, 0.0
        %vm2931 = vcmp.ge.f32.partialorder %v2665, 0.0
        %vm2932 = vcmp.ge.f32.partialorder %v2668, 0.0
        %vm2933 = vcmp.ge.f32.partialorder %v2673, 0.0
        %vm2934 = vcmp.ge.f32.partialorder %v2676, 0.0
        %v2935 = vmul.f32 %v1657, 0.01
        %v2936 = vmul.f32 %v1660, 0.01
        %v2937 = vmul.f32 %v1665, 0.01
        %v2938 = vmul.f32 %v1668, 0.01
        %v2939 = vmul.f32 %v1673, 0.01
        %v2940 = vmul.f32 %v1676, 0.01
        %v2941 = vmul.f32 %v1681, 0.01
        %v2942 = vmul.f32 %v1684, 0.01
        %v2943 = vmul.f32 %v1689, 0.01
        %v2944 = vmul.f32 %v1692, 0.01
        %v2945 = vmul.f32 %v1697, 0.01
        %v2946 = vmul.f32 %v1700, 0.01
        %v2947 = vmul.f32 %v1705, 0.01
        %v2948 = vmul.f32 %v1708, 0.01
        %v2949 = vmul.f32 %v1713, 0.01
        %v2950 = vmul.f32 %v1716, 0.01
        %v2951 = vmul.f32 %v1721, 0.01
        %v2952 = vmul.f32 %v1724, 0.01
        %v2953 = vmul.f32 %v1729, 0.01
        %v2954 = vmul.f32 %v1732, 0.01
        %v2955 = vmul.f32 %v1737, 0.01
        %v2956 = vmul.f32 %v1740, 0.01
        %v2957 = vmul.f32 %v1745, 0.01
        %v2958 = vmul.f32 %v1748, 0.01
        %v2959 = vmul.f32 %v1753, 0.01
        %v2960 = vmul.f32 %v1756, 0.01
        %v2961 = vmul.f32 %v1761, 0.01
        %v2962 = vmul.f32 %v1764, 0.01
        %v2963 = vmul.f32 %v1769, 0.01
        %v2964 = vmul.f32 %v1772, 0.01
        %v2965 = vmul.f32 %v1777, 0.01
        %v2966 = vmul.f32 %v1780, 0.01
        %v2967 = vmul.f32 %v1785, 0.01
        %v2968 = vmul.f32 %v1788, 0.01
        %v2969 = vmul.f32 %v1793, 0.01
        %v2970 = vmul.f32 %v1796, 0.01
        %v2971 = vmul.f32 %v1801, 0.01
        %v2972 = vmul.f32 %v1804, 0.01
        %v2973 = vmul.f32 %v1809, 0.01
        %v2974 = vmul.f32 %v1812, 0.01
        %v2975 = vmul.f32 %v1817, 0.01
        %v2976 = vmul.f32 %v1820, 0.01
        %v2977 = vmul.f32 %v1825, 0.01
        %v2978 = vmul.f32 %v1828, 0.01
        %v2979 = vmul.f32 %v1833, 0.01
        %v2980 = vmul.f32 %v1836, 0.01
        %v2981 = vmul.f32 %v1841, 0.01
        %v2982 = vmul.f32 %v1844, 0.01
        %v2983 = vmul.f32 %v1849, 0.01
        %v2984 = vmul.f32 %v1852, 0.01
        %v2985 = vmul.f32 %v1857, 0.01
        %v2986 = vmul.f32 %v1860, 0.01
        %v2987 = vmul.f32 %v1865, 0.01
        %v2988 = vmul.f32 %v1868, 0.01
        %v2989 = vmul.f32 %v1873, 0.01
        %v2990 = vmul.f32 %v1876, 0.01
        %v2991 = vmul.f32 %v1881, 0.01
        %v2992 = vmul.f32 %v1884, 0.01
        %v2993 = vmul.f32 %v1889, 0.01
        %v2994 = vmul.f32 %v1892, 0.01
        %v2995 = vmul.f32 %v1897, 0.01
        %v2996 = vmul.f32 %v1900, 0.01
        %v2997 = vmul.f32 %v1905, 0.01
        %v2998 = vmul.f32 %v1908, 0.01
        %v2999 = vmul.f32 %v1913, 0.01
        %v3000 = vmul.f32 %v1916, 0.01
        %v3001 = vmul.f32 %v1921, 0.01
        %v3002 = vmul.f32 %v1924, 0.01
        %v3003 = vmul.f32 %v1929, 0.01
        %v3004 = vmul.f32 %v1932, 0.01
        %v3005 = vmul.f32 %v1937, 0.01
        %v3006 = vmul.f32 %v1940, 0.01
        %v3007 = vmul.f32 %v1945, 0.01
        %v3008 = vmul.f32 %v1948, 0.01
        %v3009 = vmul.f32 %v1953, 0.01
        %v3010 = vmul.f32 %v1956, 0.01
        %v3011 = vmul.f32 %v1961, 0.01
        %v3012 = vmul.f32 %v1964, 0.01
        %v3013 = vmul.f32 %v1969, 0.01
        %v3014 = vmul.f32 %v1972, 0.01
        %v3015 = vmul.f32 %v1977, 0.01
        %v3016 = vmul.f32 %v1980, 0.01
        %v3017 = vmul.f32 %v1985, 0.01
        %v3018 = vmul.f32 %v1988, 0.01
        %v3019 = vmul.f32 %v1993, 0.01
        %v3020 = vmul.f32 %v1996, 0.01
        %v3021 = vmul.f32 %v2001, 0.01
        %v3022 = vmul.f32 %v2004, 0.01
        %v3023 = vmul.f32 %v2009, 0.01
        %v3024 = vmul.f32 %v2012, 0.01
        %v3025 = vmul.f32 %v2017, 0.01
        %v3026 = vmul.f32 %v2020, 0.01
        %v3027 = vmul.f32 %v2025, 0.01
        %v3028 = vmul.f32 %v2028, 0.01
        %v3029 = vmul.f32 %v2033, 0.01
        %v3030 = vmul.f32 %v2036, 0.01
        %v3031 = vmul.f32 %v2041, 0.01
        %v3032 = vmul.f32 %v2044, 0.01
        %v3033 = vmul.f32 %v2049, 0.01
        %v3034 = vmul.f32 %v2052, 0.01
        %v3035 = vmul.f32 %v2057, 0.01
        %v3036 = vmul.f32 %v2060, 0.01
        %v3037 = vmul.f32 %v2065, 0.01
        %v3038 = vmul.f32 %v2068, 0.01
        %v3039 = vmul.f32 %v2073, 0.01
        %v3040 = vmul.f32 %v2076, 0.01
        %v3041 = vmul.f32 %v2081, 0.01
        %v3042 = vmul.f32 %v2084, 0.01
        %v3043 = vmul.f32 %v2089, 0.01
        %v3044 = vmul.f32 %v2092, 0.01
        %v3045 = vmul.f32 %v2097, 0.01
        %v3046 = vmul.f32 %v2100, 0.01
        %v3047 = vmul.f32 %v2105, 0.01
        %v3048 = vmul.f32 %v2108, 0.01
        %v3049 = vmul.f32 %v2113, 0.01
        %v3050 = vmul.f32 %v2116, 0.01
        %v3051 = vmul.f32 %v2121, 0.01
        %v3052 = vmul.f32 %v2124, 0.01
        %v3053 = vmul.f32 %v2129, 0.01
        %v3054 = vmul.f32 %v2132, 0.01
        %v3055 = vmul.f32 %v2137, 0.01
        %v3056 = vmul.f32 %v2140, 0.01
        %v3057 = vmul.f32 %v2145, 0.01
        %v3058 = vmul.f32 %v2148, 0.01
        %v3059 = vmul.f32 %v2153, 0.01
        %v3060 = vmul.f32 %v2156, 0.01
        %v3061 = vmul.f32 %v2161, 0.01
        %v3062 = vmul.f32 %v2164, 0.01
        %v3063 = vmul.f32 %v2169, 0.01
        %v3064 = vmul.f32 %v2172, 0.01
        %v3065 = vmul.f32 %v2177, 0.01
        %v3066 = vmul.f32 %v2180, 0.01
        %v3067 = vmul.f32 %v2185, 0.01
        %v3068 = vmul.f32 %v2188, 0.01
        %v3069 = vmul.f32 %v2193, 0.01
        %v3070 = vmul.f32 %v2196, 0.01
        %v3071 = vmul.f32 %v2201, 0.01
        %v3072 = vmul.f32 %v2204, 0.01
        %v3073 = vmul.f32 %v2209, 0.01
        %v3074 = vmul.f32 %v2212, 0.01
        %v3075 = vmul.f32 %v2217, 0.01
        %v3076 = vmul.f32 %v2220, 0.01
        %v3077 = vmul.f32 %v2225, 0.01
        %v3078 = vmul.f32 %v2228, 0.01
        %v3079 = vmul.f32 %v2233, 0.01
        %v3080 = vmul.f32 %v2236, 0.01
        %v3081 = vmul.f32 %v2241, 0.01
        %v3082 = vmul.f32 %v2244, 0.01
        %v3083 = vmul.f32 %v2249, 0.01
        %v3084 = vmul.f32 %v2252, 0.01
        %v3085 = vmul.f32 %v2257, 0.01
        %v3086 = vmul.f32 %v2260, 0.01
        %v3087 = vmul.f32 %v2265, 0.01
        %v3088 = vmul.f32 %v2268, 0.01
        %v3089 = vmul.f32 %v2273, 0.01
        %v3090 = vmul.f32 %v2276, 0.01
        %v3091 = vmul.f32 %v2281, 0.01
        %v3092 = vmul.f32 %v2284, 0.01
        %v3093 = vmul.f32 %v2289, 0.01
        %v3094 = vmul.f32 %v2292, 0.01
        %v3095 = vmul.f32 %v2297, 0.01
        %v3096 = vmul.f32 %v2300, 0.01
        %v3097 = vmul.f32 %v2305, 0.01
        %v3098 = vmul.f32 %v2308, 0.01
        %v3099 = vmul.f32 %v2313, 0.01
        %v3100 = vmul.f32 %v2316, 0.01
        %v3101 = vmul.f32 %v2321, 0.01
        %v3102 = vmul.f32 %v2324, 0.01
        %v3103 = vmul.f32 %v2329, 0.01
        %v3104 = vmul.f32 %v2332, 0.01
        %v3105 = vmul.f32 %v2337, 0.01
        %v3106 = vmul.f32 %v2340, 0.01
        %v3107 = vmul.f32 %v2345, 0.01
        %v3108 = vmul.f32 %v2348, 0.01
        %v3109 = vmul.f32 %v2353, 0.01
        %v3110 = vmul.f32 %v2356, 0.01
        %v3111 = vmul.f32 %v2361, 0.01
        %v3112 = vmul.f32 %v2364, 0.01
        %v3113 = vmul.f32 %v2369, 0.01
        %v3114 = vmul.f32 %v2372, 0.01
        %v3115 = vmul.f32 %v2377, 0.01
        %v3116 = vmul.f32 %v2380, 0.01
        %v3117 = vmul.f32 %v2385, 0.01
        %v3118 = vmul.f32 %v2388, 0.01
        %v3119 = vmul.f32 %v2393, 0.01
        %v3120 = vmul.f32 %v2396, 0.01
        %v3121 = vmul.f32 %v2401, 0.01
        %v3122 = vmul.f32 %v2404, 0.01
        %v3123 = vmul.f32 %v2409, 0.01
        %v3124 = vmul.f32 %v2412, 0.01
        %v3125 = vmul.f32 %v2417, 0.01
        %v3126 = vmul.f32 %v2420, 0.01
        %v3127 = vmul.f32 %v2425, 0.01
        %v3128 = vmul.f32 %v2428, 0.01
        %v3129 = vmul.f32 %v2433, 0.01
        %v3130 = vmul.f32 %v2436, 0.01
        %v3131 = vmul.f32 %v2441, 0.01
        %v3132 = vmul.f32 %v2444, 0.01
        %v3133 = vmul.f32 %v2449, 0.01
        %v3134 = vmul.f32 %v2452, 0.01
        %v3135 = vmul.f32 %v2457, 0.01
        %v3136 = vmul.f32 %v2460, 0.01
        %v3137 = vmul.f32 %v2465, 0.01
        %v3138 = vmul.f32 %v2468, 0.01
        %v3139 = vmul.f32 %v2473, 0.01
        %v3140 = vmul.f32 %v2476, 0.01
        %v3141 = vmul.f32 %v2481, 0.01
        %v3142 = vmul.f32 %v2484, 0.01
        %v3143 = vmul.f32 %v2489, 0.01
        %v3144 = vmul.f32 %v2492, 0.01
        %v3145 = vmul.f32 %v2497, 0.01
        %v3146 = vmul.f32 %v2500, 0.01
        %v3147 = vmul.f32 %v2505, 0.01
        %v3148 = vmul.f32 %v2508, 0.01
        %v3149 = vmul.f32 %v2513, 0.01
        %v3150 = vmul.f32 %v2516, 0.01
        %v3151 = vmul.f32 %v2521, 0.01
        %v3152 = vmul.f32 %v2524, 0.01
        %v3153 = vmul.f32 %v2529, 0.01
        %v3154 = vmul.f32 %v2532, 0.01
        %v3155 = vmul.f32 %v2537, 0.01
        %v3156 = vmul.f32 %v2540, 0.01
        %v3157 = vmul.f32 %v2545, 0.01
        %v3158 = vmul.f32 %v2548, 0.01
        %v3159 = vmul.f32 %v2553, 0.01
        %v3160 = vmul.f32 %v2556, 0.01
        %v3161 = vmul.f32 %v2561, 0.01
        %v3162 = vmul.f32 %v2564, 0.01
        %v3163 = vmul.f32 %v2569, 0.01
        %v3164 = vmul.f32 %v2572, 0.01
        %v3165 = vmul.f32 %v2577, 0.01
        %v3166 = vmul.f32 %v2580, 0.01
        %v3167 = vmul.f32 %v2585, 0.01
        %v3168 = vmul.f32 %v2588, 0.01
        %v3169 = vmul.f32 %v2593, 0.01
        %v3170 = vmul.f32 %v2596, 0.01
        %v3171 = vmul.f32 %v2601, 0.01
        %v3172 = vmul.f32 %v2604, 0.01
        %v3173 = vmul.f32 %v2609, 0.01
        %v3174 = vmul.f32 %v2612, 0.01
        %v3175 = vmul.f32 %v2617, 0.01
        %v3176 = vmul.f32 %v2620, 0.01
        %v3177 = vmul.f32 %v2625, 0.01
        %v3178 = vmul.f32 %v2628, 0.01
        %v3179 = vmul.f32 %v2633, 0.01
        %v3180 = vmul.f32 %v2636, 0.01
        %v3181 = vmul.f32 %v2641, 0.01
        %v3182 = vmul.f32 %v2644, 0.01
        %v3183 = vmul.f32 %v2649, 0.01
        %v3184 = vmul.f32 %v2652, 0.01
        %v3185 = vmul.f32 %v2657, 0.01
        %v3186 = vmul.f32 %v2660, 0.01
        %v3187 = vmul.f32 %v2665, 0.01
        %v3188 = vmul.f32 %v2668, 0.01
        %v3189 = vmul.f32 %v2673, 0.01
        %v3190 = vmul.f32 %v2676, 0.01
        %v3191 = vsel %vm2679, %v1657, %v2935
        %v3192 = vsel %vm2680, %v1660, %v2936
        %v3193 = vsel %vm2681, %v1665, %v2937
        %v3194 = vsel %vm2682, %v1668, %v2938
        %v3195 = vsel %vm2683, %v1673, %v2939
        %v3196 = vsel %vm2684, %v1676, %v2940
        %v3197 = vsel %vm2685, %v1681, %v2941
        %v3198 = vsel %vm2686, %v1684, %v2942
        %v3199 = vsel %vm2687, %v1689, %v2943
        %v3200 = vsel %vm2688, %v1692, %v2944
        %v3201 = vsel %vm2689, %v1697, %v2945
        %v3202 = vsel %vm2690, %v1700, %v2946
        %v3203 = vsel %vm2691, %v1705, %v2947
        %v3204 = vsel %vm2692, %v1708, %v2948
        %v3205 = vsel %vm2693, %v1713, %v2949
        %v3206 = vsel %vm2694, %v1716, %v2950
        %v3207 = vsel %vm2695, %v1721, %v2951
        %v3208 = vsel %vm2696, %v1724, %v2952
        %v3209 = vsel %vm2697, %v1729, %v2953
        %v3210 = vsel %vm2698, %v1732, %v2954
        %v3211 = vsel %vm2699, %v1737, %v2955
        %v3212 = vsel %vm2700, %v1740, %v2956
        %v3213 = vsel %vm2701, %v1745, %v2957
        %v3214 = vsel %vm2702, %v1748, %v2958
        %v3215 = vsel %vm2703, %v1753, %v2959
        %v3216 = vsel %vm2704, %v1756, %v2960
        %v3217 = vsel %vm2705, %v1761, %v2961
        %v3218 = vsel %vm2706, %v1764, %v2962
        %v3219 = vsel %vm2707, %v1769, %v2963
        %v3220 = vsel %vm2708, %v1772, %v2964
        %v3221 = vsel %vm2709, %v1777, %v2965
        %v3222 = vsel %vm2710, %v1780, %v2966
        %v3223 = vsel %vm2711, %v1785, %v2967
        %v3224 = vsel %vm2712, %v1788, %v2968
        %v3225 = vsel %vm2713, %v1793, %v2969
        %v3226 = vsel %vm2714, %v1796, %v2970
        %v3227 = vsel %vm2715, %v1801, %v2971
        %v3228 = vsel %vm2716, %v1804, %v2972
        %v3229 = vsel %vm2717, %v1809, %v2973
        %v3230 = vsel %vm2718, %v1812, %v2974
        %v3231 = vsel %vm2719, %v1817, %v2975
        %v3232 = vsel %vm2720, %v1820, %v2976
        %v3233 = vsel %vm2721, %v1825, %v2977
        %v3234 = vsel %vm2722, %v1828, %v2978
        %v3235 = vsel %vm2723, %v1833, %v2979
        %v3236 = vsel %vm2724, %v1836, %v2980
        %v3237 = vsel %vm2725, %v1841, %v2981
        %v3238 = vsel %vm2726, %v1844, %v2982
        %v3239 = vsel %vm2727, %v1849, %v2983
        %v3240 = vsel %vm2728, %v1852, %v2984
        %v3241 = vsel %vm2729, %v1857, %v2985
        %v3242 = vsel %vm2730, %v1860, %v2986
        %v3243 = vsel %vm2731, %v1865, %v2987
        %v3244 = vsel %vm2732, %v1868, %v2988
        %v3245 = vsel %vm2733, %v1873, %v2989
        %v3246 = vsel %vm2734, %v1876, %v2990
        %v3247 = vsel %vm2735, %v1881, %v2991
        %v3248 = vsel %vm2736, %v1884, %v2992
        %v3249 = vsel %vm2737, %v1889, %v2993
        %v3250 = vsel %vm2738, %v1892, %v2994
        %v3251 = vsel %vm2739, %v1897, %v2995
        %v3252 = vsel %vm2740, %v1900, %v2996
        %v3253 = vsel %vm2741, %v1905, %v2997
        %v3254 = vsel %vm2742, %v1908, %v2998
        %v3255 = vsel %vm2743, %v1913, %v2999
        %v3256 = vsel %vm2744, %v1916, %v3000
        %v3257 = vsel %vm2745, %v1921, %v3001
        %v3258 = vsel %vm2746, %v1924, %v3002
        %v3259 = vsel %vm2747, %v1929, %v3003
        %v3260 = vsel %vm2748, %v1932, %v3004
        %v3261 = vsel %vm2749, %v1937, %v3005
        %v3262 = vsel %vm2750, %v1940, %v3006
        %v3263 = vsel %vm2751, %v1945, %v3007
        %v3264 = vsel %vm2752, %v1948, %v3008
        %v3265 = vsel %vm2753, %v1953, %v3009
        %v3266 = vsel %vm2754, %v1956, %v3010
        %v3267 = vsel %vm2755, %v1961, %v3011
        %v3268 = vsel %vm2756, %v1964, %v3012
        %v3269 = vsel %vm2757, %v1969, %v3013
        %v3270 = vsel %vm2758, %v1972, %v3014
        %v3271 = vsel %vm2759, %v1977, %v3015
        %v3272 = vsel %vm2760, %v1980, %v3016
        %v3273 = vsel %vm2761, %v1985, %v3017
        %v3274 = vsel %vm2762, %v1988, %v3018
        %v3275 = vsel %vm2763, %v1993, %v3019
        %v3276 = vsel %vm2764, %v1996, %v3020
        %v3277 = vsel %vm2765, %v2001, %v3021
        %v3278 = vsel %vm2766, %v2004, %v3022
        %v3279 = vsel %vm2767, %v2009, %v3023
        %v3280 = vsel %vm2768, %v2012, %v3024
        %v3281 = vsel %vm2769, %v2017, %v3025
        %v3282 = vsel %vm2770, %v2020, %v3026
        %v3283 = vsel %vm2771, %v2025, %v3027
        %v3284 = vsel %vm2772, %v2028, %v3028
        %v3285 = vsel %vm2773, %v2033, %v3029
        %v3286 = vsel %vm2774, %v2036, %v3030
        %v3287 = vsel %vm2775, %v2041, %v3031
        %v3288 = vsel %vm2776, %v2044, %v3032
        %v3289 = vsel %vm2777, %v2049, %v3033
        %v3290 = vsel %vm2778, %v2052, %v3034
        %v3291 = vsel %vm2779, %v2057, %v3035
        %v3292 = vsel %vm2780, %v2060, %v3036
        %v3293 = vsel %vm2781, %v2065, %v3037
        %v3294 = vsel %vm2782, %v2068, %v3038
        %v3295 = vsel %vm2783, %v2073, %v3039
        %v3296 = vsel %vm2784, %v2076, %v3040
        %v3297 = vsel %vm2785, %v2081, %v3041
        %v3298 = vsel %vm2786, %v2084, %v3042
        %v3299 = vsel %vm2787, %v2089, %v3043
        %v3300 = vsel %vm2788, %v2092, %v3044
        %v3301 = vsel %vm2789, %v2097, %v3045
        %v3302 = vsel %vm2790, %v2100, %v3046
        %v3303 = vsel %vm2791, %v2105, %v3047
        %v3304 = vsel %vm2792, %v2108, %v3048
        %v3305 = vsel %vm2793, %v2113, %v3049
        %v3306 = vsel %vm2794, %v2116, %v3050
        %v3307 = vsel %vm2795, %v2121, %v3051
        %v3308 = vsel %vm2796, %v2124, %v3052
        %v3309 = vsel %vm2797, %v2129, %v3053
        %v3310 = vsel %vm2798, %v2132, %v3054
        %v3311 = vsel %vm2799, %v2137, %v3055
        %v3312 = vsel %vm2800, %v2140, %v3056
        %v3313 = vsel %vm2801, %v2145, %v3057
        %v3314 = vsel %vm2802, %v2148, %v3058
        %v3315 = vsel %vm2803, %v2153, %v3059
        %v3316 = vsel %vm2804, %v2156, %v3060
        %v3317 = vsel %vm2805, %v2161, %v3061
        %v3318 = vsel %vm2806, %v2164, %v3062
        %v3319 = vsel %vm2807, %v2169, %v3063
        %v3320 = vsel %vm2808, %v2172, %v3064
        %v3321 = vsel %vm2809, %v2177, %v3065
        %v3322 = vsel %vm2810, %v2180, %v3066
        %v3323 = vsel %vm2811, %v2185, %v3067
        %v3324 = vsel %vm2812, %v2188, %v3068
        %v3325 = vsel %vm2813, %v2193, %v3069
        %v3326 = vsel %vm2814, %v2196, %v3070
        %v3327 = vsel %vm2815, %v2201, %v3071
        %v3328 = vsel %vm2816, %v2204, %v3072
        %v3329 = vsel %vm2817, %v2209, %v3073
        %v3330 = vsel %vm2818, %v2212, %v3074
        %v3331 = vsel %vm2819, %v2217, %v3075
        %v3332 = vsel %vm2820, %v2220, %v3076
        %v3333 = vsel %vm2821, %v2225, %v3077
        %v3334 = vsel %vm2822, %v2228, %v3078
        %v3335 = vsel %vm2823, %v2233, %v3079
        %v3336 = vsel %vm2824, %v2236, %v3080
        %v3337 = vsel %vm2825, %v2241, %v3081
        %v3338 = vsel %vm2826, %v2244, %v3082
        %v3339 = vsel %vm2827, %v2249, %v3083
        %v3340 = vsel %vm2828, %v2252, %v3084
        %v3341 = vsel %vm2829, %v2257, %v3085
        %v3342 = vsel %vm2830, %v2260, %v3086
        %v3343 = vsel %vm2831, %v2265, %v3087
        %v3344 = vsel %vm2832, %v2268, %v3088
        %v3345 = vsel %vm2833, %v2273, %v3089
        %v3346 = vsel %vm2834, %v2276, %v3090
        %v3347 = vsel %vm2835, %v2281, %v3091
        %v3348 = vsel %vm2836, %v2284, %v3092
        %v3349 = vsel %vm2837, %v2289, %v3093
        %v3350 = vsel %vm2838, %v2292, %v3094
        %v3351 = vsel %vm2839, %v2297, %v3095
        %v3352 = vsel %vm2840, %v2300, %v3096
        %v3353 = vsel %vm2841, %v2305, %v3097
        %v3354 = vsel %vm2842, %v2308, %v3098
        %v3355 = vsel %vm2843, %v2313, %v3099
        %v3356 = vsel %vm2844, %v2316, %v3100
        %v3357 = vsel %vm2845, %v2321, %v3101
        %v3358 = vsel %vm2846, %v2324, %v3102
        %v3359 = vsel %vm2847, %v2329, %v3103
        %v3360 = vsel %vm2848, %v2332, %v3104
        %v3361 = vsel %vm2849, %v2337, %v3105
        %v3362 = vsel %vm2850, %v2340, %v3106
        %v3363 = vsel %vm2851, %v2345, %v3107
        %v3364 = vsel %vm2852, %v2348, %v3108
        %v3365 = vsel %vm2853, %v2353, %v3109
        %v3366 = vsel %vm2854, %v2356, %v3110
        %v3367 = vsel %vm2855, %v2361, %v3111
        %v3368 = vsel %vm2856, %v2364, %v3112
        %v3369 = vsel %vm2857, %v2369, %v3113
        %v3370 = vsel %vm2858, %v2372, %v3114
        %v3371 = vsel %vm2859, %v2377, %v3115
        %v3372 = vsel %vm2860, %v2380, %v3116
        %v3373 = vsel %vm2861, %v2385, %v3117
        %v3374 = vsel %vm2862, %v2388, %v3118
        %v3375 = vsel %vm2863, %v2393, %v3119
        %v3376 = vsel %vm2864, %v2396, %v3120
        %v3377 = vsel %vm2865, %v2401, %v3121
        %v3378 = vsel %vm2866, %v2404, %v3122
        %v3379 = vsel %vm2867, %v2409, %v3123
        %v3380 = vsel %vm2868, %v2412, %v3124
        %v3381 = vsel %vm2869, %v2417, %v3125
        %v3382 = vsel %vm2870, %v2420, %v3126
        %v3383 = vsel %vm2871, %v2425, %v3127
        %v3384 = vsel %vm2872, %v2428, %v3128
        %v3385 = vsel %vm2873, %v2433, %v3129
        %v3386 = vsel %vm2874, %v2436, %v3130
        %v3387 = vsel %vm2875, %v2441, %v3131
        %v3388 = vsel %vm2876, %v2444, %v3132
        %v3389 = vsel %vm2877, %v2449, %v3133
        %v3390 = vsel %vm2878, %v2452, %v3134
        %v3391 = vsel %vm2879, %v2457, %v3135
        %v3392 = vsel %vm2880, %v2460, %v3136
        %v3393 = vsel %vm2881, %v2465, %v3137
        %v3394 = vsel %vm2882, %v2468, %v3138
        %v3395 = vsel %vm2883, %v2473, %v3139
        %v3396 = vsel %vm2884, %v2476, %v3140
        %v3397 = vsel %vm2885, %v2481, %v3141
        %v3398 = vsel %vm2886, %v2484, %v3142
        %v3399 = vsel %vm2887, %v2489, %v3143
        %v3400 = vsel %vm2888, %v2492, %v3144
        %v3401 = vsel %vm2889, %v2497, %v3145
        %v3402 = vsel %vm2890, %v2500, %v3146
        %v3403 = vsel %vm2891, %v2505, %v3147
        %v3404 = vsel %vm2892, %v2508, %v3148
        %v3405 = vsel %vm2893, %v2513, %v3149
        %v3406 = vsel %vm2894, %v2516, %v3150
        %v3407 = vsel %vm2895, %v2521, %v3151
        %v3408 = vsel %vm2896, %v2524, %v3152
        %v3409 = vsel %vm2897, %v2529, %v3153
        %v3410 = vsel %vm2898, %v2532, %v3154
        %v3411 = vsel %vm2899, %v2537, %v3155
        %v3412 = vsel %vm2900, %v2540, %v3156
        %v3413 = vsel %vm2901, %v2545, %v3157
        %v3414 = vsel %vm2902, %v2548, %v3158
        %v3415 = vsel %vm2903, %v2553, %v3159
        %v3416 = vsel %vm2904, %v2556, %v3160
        %v3417 = vsel %vm2905, %v2561, %v3161
        %v3418 = vsel %vm2906, %v2564, %v3162
        %v3419 = vsel %vm2907, %v2569, %v3163
        %v3420 = vsel %vm2908, %v2572, %v3164
        %v3421 = vsel %vm2909, %v2577, %v3165
        %v3422 = vsel %vm2910, %v2580, %v3166
        %v3423 = vsel %vm2911, %v2585, %v3167
        %v3424 = vsel %vm2912, %v2588, %v3168
        %v3425 = vsel %vm2913, %v2593, %v3169
        %v3426 = vsel %vm2914, %v2596, %v3170
        %v3427 = vsel %vm2915, %v2601, %v3171
        %v3428 = vsel %vm2916, %v2604, %v3172
        %v3429 = vsel %vm2917, %v2609, %v3173
        %v3430 = vsel %vm2918, %v2612, %v3174
        %v3431 = vsel %vm2919, %v2617, %v3175
        %v3432 = vsel %vm2920, %v2620, %v3176
        %v3433 = vsel %vm2921, %v2625, %v3177
        %v3434 = vsel %vm2922, %v2628, %v3178
        %v3435 = vsel %vm2923, %v2633, %v3179
        %v3436 = vsel %vm2924, %v2636, %v3180
        %v3437 = vsel %vm2925, %v2641, %v3181
        %v3438 = vsel %vm2926, %v2644, %v3182
        %v3439 = vsel %vm2927, %v2649, %v3183
        %v3440 = vsel %vm2928, %v2652, %v3184
        %v3441 = vsel %vm2929, %v2657, %v3185
        %v3442 = vsel %vm2930, %v2660, %v3186
        %v3443 = vsel %vm2931, %v2665, %v3187
        %v3444 = vsel %vm2932, %v2668, %v3188
        %v3445 = vsel %vm2933, %v2673, %v3189
        %v3446 = vsel %vm2934, %v2676, %v3190
        %v3447 = vpack.c.bf16 %v3192, %v3191
        %v3448 = vpack.c.bf16 %v3194, %v3193
        %v3449 = vpack.c.bf16 %v3196, %v3195
        %v3450 = vpack.c.bf16 %v3198, %v3197
        %v3451 = vpack.c.bf16 %v3200, %v3199
        %v3452 = vpack.c.bf16 %v3202, %v3201
        %v3453 = vpack.c.bf16 %v3204, %v3203
        %v3454 = vpack.c.bf16 %v3206, %v3205
        %v3455 = vpack.c.bf16 %v3208, %v3207
        %v3456 = vpack.c.bf16 %v3210, %v3209
        %v3457 = vpack.c.bf16 %v3212, %v3211
        %v3458 = vpack.c.bf16 %v3214, %v3213
        %v3459 = vpack.c.bf16 %v3216, %v3215
        %v3460 = vpack.c.bf16 %v3218, %v3217
        %v3461 = vpack.c.bf16 %v3220, %v3219
        %v3462 = vpack.c.bf16 %v3222, %v3221
        %v3463 = vpack.c.bf16 %v3224, %v3223
        %v3464 = vpack.c.bf16 %v3226, %v3225
        %v3465 = vpack.c.bf16 %v3228, %v3227
        %v3466 = vpack.c.bf16 %v3230, %v3229
        %v3467 = vpack.c.bf16 %v3232, %v3231
        %v3468 = vpack.c.bf16 %v3234, %v3233
        %v3469 = vpack.c.bf16 %v3236, %v3235
        %v3470 = vpack.c.bf16 %v3238, %v3237
        %v3471 = vpack.c.bf16 %v3240, %v3239
        %v3472 = vpack.c.bf16 %v3242, %v3241
        %v3473 = vpack.c.bf16 %v3244, %v3243
        %v3474 = vpack.c.bf16 %v3246, %v3245
        %v3475 = vpack.c.bf16 %v3248, %v3247
        %v3476 = vpack.c.bf16 %v3250, %v3249
        %v3477 = vpack.c.bf16 %v3252, %v3251
        %v3478 = vpack.c.bf16 %v3254, %v3253
        %v3479 = vpack.c.bf16 %v3256, %v3255
        %v3480 = vpack.c.bf16 %v3258, %v3257
        %v3481 = vpack.c.bf16 %v3260, %v3259
        %v3482 = vpack.c.bf16 %v3262, %v3261
        %v3483 = vpack.c.bf16 %v3264, %v3263
        %v3484 = vpack.c.bf16 %v3266, %v3265
        %v3485 = vpack.c.bf16 %v3268, %v3267
        %v3486 = vpack.c.bf16 %v3270, %v3269
        %v3487 = vpack.c.bf16 %v3272, %v3271
        %v3488 = vpack.c.bf16 %v3274, %v3273
        %v3489 = vpack.c.bf16 %v3276, %v3275
        %v3490 = vpack.c.bf16 %v3278, %v3277
        %v3491 = vpack.c.bf16 %v3280, %v3279
        %v3492 = vpack.c.bf16 %v3282, %v3281
        %v3493 = vpack.c.bf16 %v3284, %v3283
        %v3494 = vpack.c.bf16 %v3286, %v3285
        %v3495 = vpack.c.bf16 %v3288, %v3287
        %v3496 = vpack.c.bf16 %v3290, %v3289
        %v3497 = vpack.c.bf16 %v3292, %v3291
        %v3498 = vpack.c.bf16 %v3294, %v3293
        %v3499 = vpack.c.bf16 %v3296, %v3295
        %v3500 = vpack.c.bf16 %v3298, %v3297
        %v3501 = vpack.c.bf16 %v3300, %v3299
        %v3502 = vpack.c.bf16 %v3302, %v3301
        %v3503 = vpack.c.bf16 %v3304, %v3303
        %v3504 = vpack.c.bf16 %v3306, %v3305
        %v3505 = vpack.c.bf16 %v3308, %v3307
        %v3506 = vpack.c.bf16 %v3310, %v3309
        %v3507 = vpack.c.bf16 %v3312, %v3311
        %v3508 = vpack.c.bf16 %v3314, %v3313
        %v3509 = vpack.c.bf16 %v3316, %v3315
        %v3510 = vpack.c.bf16 %v3318, %v3317
        %v3511 = vpack.c.bf16 %v3320, %v3319
        %v3512 = vpack.c.bf16 %v3322, %v3321
        %v3513 = vpack.c.bf16 %v3324, %v3323
        %v3514 = vpack.c.bf16 %v3326, %v3325
        %v3515 = vpack.c.bf16 %v3328, %v3327
        %v3516 = vpack.c.bf16 %v3330, %v3329
        %v3517 = vpack.c.bf16 %v3332, %v3331
        %v3518 = vpack.c.bf16 %v3334, %v3333
        %v3519 = vpack.c.bf16 %v3336, %v3335
        %v3520 = vpack.c.bf16 %v3338, %v3337
        %v3521 = vpack.c.bf16 %v3340, %v3339
        %v3522 = vpack.c.bf16 %v3342, %v3341
        %v3523 = vpack.c.bf16 %v3344, %v3343
        %v3524 = vpack.c.bf16 %v3346, %v3345
        %v3525 = vpack.c.bf16 %v3348, %v3347
        %v3526 = vpack.c.bf16 %v3350, %v3349
        %v3527 = vpack.c.bf16 %v3352, %v3351
        %v3528 = vpack.c.bf16 %v3354, %v3353
        %v3529 = vpack.c.bf16 %v3356, %v3355
        %v3530 = vpack.c.bf16 %v3358, %v3357
        %v3531 = vpack.c.bf16 %v3360, %v3359
        %v3532 = vpack.c.bf16 %v3362, %v3361
        %v3533 = vpack.c.bf16 %v3364, %v3363
        %v3534 = vpack.c.bf16 %v3366, %v3365
        %v3535 = vpack.c.bf16 %v3368, %v3367
        %v3536 = vpack.c.bf16 %v3370, %v3369
        %v3537 = vpack.c.bf16 %v3372, %v3371
        %v3538 = vpack.c.bf16 %v3374, %v3373
        %v3539 = vpack.c.bf16 %v3376, %v3375
        %v3540 = vpack.c.bf16 %v3378, %v3377
        %v3541 = vpack.c.bf16 %v3380, %v3379
        %v3542 = vpack.c.bf16 %v3382, %v3381
        %v3543 = vpack.c.bf16 %v3384, %v3383
        %v3544 = vpack.c.bf16 %v3386, %v3385
        %v3545 = vpack.c.bf16 %v3388, %v3387
        %v3546 = vpack.c.bf16 %v3390, %v3389
        %v3547 = vpack.c.bf16 %v3392, %v3391
        %v3548 = vpack.c.bf16 %v3394, %v3393
        %v3549 = vpack.c.bf16 %v3396, %v3395
        %v3550 = vpack.c.bf16 %v3398, %v3397
        %v3551 = vpack.c.bf16 %v3400, %v3399
        %v3552 = vpack.c.bf16 %v3402, %v3401
        %v3553 = vpack.c.bf16 %v3404, %v3403
        %v3554 = vpack.c.bf16 %v3406, %v3405
        %v3555 = vpack.c.bf16 %v3408, %v3407
        %v3556 = vpack.c.bf16 %v3410, %v3409
        %v3557 = vpack.c.bf16 %v3412, %v3411
        %v3558 = vpack.c.bf16 %v3414, %v3413
        %v3559 = vpack.c.bf16 %v3416, %v3415
        %v3560 = vpack.c.bf16 %v3418, %v3417
        %v3561 = vpack.c.bf16 %v3420, %v3419
        %v3562 = vpack.c.bf16 %v3422, %v3421
        %v3563 = vpack.c.bf16 %v3424, %v3423
        %v3564 = vpack.c.bf16 %v3426, %v3425
        %v3565 = vpack.c.bf16 %v3428, %v3427
        %v3566 = vpack.c.bf16 %v3430, %v3429
        %v3567 = vpack.c.bf16 %v3432, %v3431
        %v3568 = vpack.c.bf16 %v3434, %v3433
        %v3569 = vpack.c.bf16 %v3436, %v3435
        %v3570 = vpack.c.bf16 %v3438, %v3437
        %v3571 = vpack.c.bf16 %v3440, %v3439
        %v3572 = vpack.c.bf16 %v3442, %v3441
        %v3573 = vpack.c.bf16 %v3444, %v3443
        %v3574 = vpack.c.bf16 %v3446, %v3445
        %v3575 = vld [vmem:[%s3] sm:$0xf]
        %v3576 = vld [vmem:[%s3 + $0x4] sm:$0xf]
        %v3577 = vld [vmem:[%s3 + $0x8] sm:$0xf]
        %v3578 = vld [vmem:[%s3 + $0xc] sm:$0xf]
        %v3579 = vld [vmem:[%s3 + $0x10] sm:$0xf]
        %v3580 = vld [vmem:[%s3 + $0x14] sm:$0xf]
        %v3581 = vld [vmem:[%s3 + $0x18] sm:$0xf]
        %v3582 = vld [vmem:[%s3 + $0x1c] sm:$0xf]
        %v3583 = vld [vmem:[%s4] sm:$0x1]
        %v3585 = vlaneseq
        %v3586 = vshrl.u32 %v3585, 7
        %v3587 = vsub.s32 0, %v3586
        %v3588 = vrot.slane %v3583, %v3587
        %v3598 = vunpack.c.l.b16 %v3575
        %v3599 = vunpack.c.l.b16 %v3576
        %v3600 = vunpack.c.l.b16 %v3577
        %v3601 = vunpack.c.l.b16 %v3578
        %v3602 = vunpack.c.l.b16 %v3579
        %v3603 = vunpack.c.l.b16 %v3580
        %v3604 = vunpack.c.l.b16 %v3581
        %v3605 = vunpack.c.l.b16 %v3582
        %v3606 = vpack.c.b16 %v3599, %v3598
        %v3607 = vpack.c.b16 %v3601, %v3600
        %v3608 = vpack.c.b16 %v3603, %v3602
        %v3609 = vpack.c.b16 %v3605, %v3604
        %v3615 = vsel %vm1237, %v3447, 0
        %v3618 = vsel %vm1237, %v3448, 0
        %v3621 = vsel %vm1237, %v3449, 0
        %v3624 = vsel %vm1237, %v3450, 0
        %v3627 = vsel %vm1237, %v3451, 0
        %v3630 = vsel %vm1237, %v3452, 0
        %v3633 = vsel %vm1237, %v3453, 0
        %v3636 = vsel %vm1237, %v3454, 0
        %v3639 = vsel %vm1237, %v3455, 0
        %v3642 = vsel %vm1237, %v3456, 0
        %v3645 = vsel %vm1237, %v3457, 0
        %v3648 = vsel %vm1237, %v3458, 0
        %v3651 = vsel %vm1237, %v3459, 0
        %v3654 = vsel %vm1237, %v3460, 0
        %v3657 = vsel %vm1237, %v3461, 0
        %v3660 = vsel %vm1237, %v3462, 0
        %v3663 = vsel %vm1237, %v3463, 0
        %v3666 = vsel %vm1237, %v3464, 0
        %v3669 = vsel %vm1237, %v3465, 0
        %v3672 = vsel %vm1237, %v3466, 0
        %v3675 = vsel %vm1237, %v3467, 0
        %v3678 = vsel %vm1237, %v3468, 0
        %v3681 = vsel %vm1237, %v3469, 0
        %v3684 = vsel %vm1237, %v3470, 0
        %v3687 = vsel %vm1237, %v3471, 0
        %v3690 = vsel %vm1237, %v3472, 0
        %v3693 = vsel %vm1237, %v3473, 0
        %v3696 = vsel %vm1237, %v3474, 0
        %v3699 = vsel %vm1237, %v3475, 0
        %v3702 = vsel %vm1237, %v3476, 0
        %v3705 = vsel %vm1237, %v3477, 0
        %v3708 = vsel %vm1237, %v3478, 0
        %v3711 = vsel %vm1237, %v3479, 0
        %v3714 = vsel %vm1237, %v3480, 0
        %v3717 = vsel %vm1237, %v3481, 0
        %v3720 = vsel %vm1237, %v3482, 0
        %v3723 = vsel %vm1237, %v3483, 0
        %v3726 = vsel %vm1237, %v3484, 0
        %v3729 = vsel %vm1237, %v3485, 0
        %v3732 = vsel %vm1237, %v3486, 0
        %v3735 = vsel %vm1237, %v3487, 0
        %v3738 = vsel %vm1237, %v3488, 0
        %v3741 = vsel %vm1237, %v3489, 0
        %v3744 = vsel %vm1237, %v3490, 0
        %v3747 = vsel %vm1237, %v3491, 0
        %v3750 = vsel %vm1237, %v3492, 0
        %v3753 = vsel %vm1237, %v3493, 0
        %v3756 = vsel %vm1237, %v3494, 0
        %v3759 = vsel %vm1237, %v3495, 0
        %v3762 = vsel %vm1237, %v3496, 0
        %v3765 = vsel %vm1237, %v3497, 0
        %v3768 = vsel %vm1237, %v3498, 0
        %v3771 = vsel %vm1237, %v3499, 0
        %v3774 = vsel %vm1237, %v3500, 0
        %v3777 = vsel %vm1237, %v3501, 0
        %v3780 = vsel %vm1237, %v3502, 0
        %v3783 = vsel %vm1237, %v3503, 0
        %v3786 = vsel %vm1237, %v3504, 0
        %v3789 = vsel %vm1237, %v3505, 0
        %v3792 = vsel %vm1237, %v3506, 0
        %v3795 = vsel %vm1237, %v3507, 0
        %v3798 = vsel %vm1237, %v3508, 0
        %v3801 = vsel %vm1237, %v3509, 0
        %v3804 = vsel %vm1237, %v3510, 0
        %v3807 = vsel %vm1237, %v3511, 0
        %v3810 = vsel %vm1237, %v3512, 0
        %v3813 = vsel %vm1237, %v3513, 0
        %v3816 = vsel %vm1237, %v3514, 0
        %v3819 = vsel %vm1237, %v3515, 0
        %v3822 = vsel %vm1237, %v3516, 0
        %v3825 = vsel %vm1237, %v3517, 0
        %v3828 = vsel %vm1237, %v3518, 0
        %v3831 = vsel %vm1237, %v3519, 0
        %v3834 = vsel %vm1237, %v3520, 0
        %v3837 = vsel %vm1237, %v3521, 0
        %v3840 = vsel %vm1237, %v3522, 0
        %v3843 = vsel %vm1237, %v3523, 0
        %v3846 = vsel %vm1237, %v3524, 0
        %v3849 = vsel %vm1237, %v3525, 0
        %v3852 = vsel %vm1237, %v3526, 0
        %v3855 = vsel %vm1237, %v3527, 0
        %v3858 = vsel %vm1237, %v3528, 0
        %v3861 = vsel %vm1237, %v3529, 0
        %v3864 = vsel %vm1237, %v3530, 0
        %v3867 = vsel %vm1237, %v3531, 0
        %v3870 = vsel %vm1237, %v3532, 0
        %v3873 = vsel %vm1237, %v3533, 0
        %v3876 = vsel %vm1237, %v3534, 0
        %v3879 = vsel %vm1237, %v3535, 0
        %v3882 = vsel %vm1237, %v3536, 0
        %v3885 = vsel %vm1237, %v3537, 0
        %v3888 = vsel %vm1237, %v3538, 0
        %v3891 = vsel %vm1237, %v3539, 0
        %v3894 = vsel %vm1237, %v3540, 0
        %v3897 = vsel %vm1237, %v3541, 0
        %v3900 = vsel %vm1237, %v3542, 0
        %v3903 = vsel %vm1237, %v3543, 0
        %v3906 = vsel %vm1237, %v3544, 0
        %v3909 = vsel %vm1237, %v3545, 0
        %v3912 = vsel %vm1237, %v3546, 0
        %v3915 = vsel %vm1237, %v3547, 0
        %v3918 = vsel %vm1237, %v3548, 0
        %v3921 = vsel %vm1237, %v3549, 0
        %v3924 = vsel %vm1237, %v3550, 0
        %v3927 = vsel %vm1237, %v3551, 0
        %v3930 = vsel %vm1237, %v3552, 0
        %v3933 = vsel %vm1237, %v3553, 0
        %v3936 = vsel %vm1237, %v3554, 0
        %v3939 = vsel %vm1237, %v3555, 0
        %v3942 = vsel %vm1237, %v3556, 0
        %v3945 = vsel %vm1237, %v3557, 0
        %v3948 = vsel %vm1237, %v3558, 0
        %v3951 = vsel %vm1237, %v3559, 0
        %v3954 = vsel %vm1237, %v3560, 0
        %v3957 = vsel %vm1237, %v3561, 0
        %v3960 = vsel %vm1237, %v3562, 0
        %v3963 = vsel %vm1237, %v3563, 0
        %v3966 = vsel %vm1237, %v3564, 0
        %v3969 = vsel %vm1237, %v3565, 0
        %v3972 = vsel %vm1237, %v3566, 0
        %v3975 = vsel %vm1237, %v3567, 0
        %v3978 = vsel %vm1237, %v3568, 0
        %v3981 = vsel %vm1237, %v3569, 0
        %v3984 = vsel %vm1237, %v3570, 0
        %v3987 = vsel %vm1237, %v3571, 0
        %v3990 = vsel %vm1237, %v3572, 0
        %v3993 = vsel %vm1237, %v3573, 0
        %v3996 = vsel %vm1237, %v3574, 0
        %3998 = vmatprep.subr.bf16.mxu0 0
        %3999 = vmatpush1.bf16.msra.mxu0 0
        %4000 = vmatprep.subr.bf16.mxu0 0
        %4001 = vmatpush1.bf16.msra.mxu0 0
        %4002 = vmatprep.subr.bf16.mxu0 0
        %4003 = vmatpush1.bf16.msra.mxu0 0
        %4004 = vmatprep.subr.bf16.mxu0 0
        %4005 = vmatpush1.bf16.msra.mxu0 0
        %4006 = vmatprep.subr.bf16.mxu0 0
        %4007 = vmatpush1.bf16.msra.mxu0 %v3609
        %4008 = vmatprep.subr.bf16.mxu0 0
        %4009 = vmatpush1.bf16.msra.mxu0 %v3608
        %4010 = vmatprep.subr.bf16.mxu0 0
        %4011 = vmatpush1.bf16.msra.mxu0 %v3607
        %4012 = vmatprep.subr.bf16.mxu0 0
        %4013 = vmatpush1.bf16.msra.mxu0 %v3606
        %4014 = vmatprep.subr.bf16.mxu0 0
        %4015 = vmatpush2.bf16.msra.mxu0 0
        %4016 = vmatprep.subr.bf16.mxu0 0
        %4017 = vmatpush2.bf16.msra.mxu0 0
        %4018 = vmatprep.subr.bf16.mxu0 0
        %4019 = vmatpush2.bf16.msra.mxu0 0
        %4020 = vmatprep.subr.bf16.mxu0 0
        %4021 = vmatpush2.bf16.msra.mxu0 0
        %4022 = vmatprep.subr.bf16.mxu0 0
        %4023 = vmatpush2.bf16.msra.mxu0 0
        %4024 = vmatprep.subr.bf16.mxu0 0
        %4025 = vmatpush2.bf16.msra.mxu0 0
        %4026 = vmatprep.subr.bf16.mxu0 0
        %4027 = vmatpush2.bf16.msra.mxu0 0
        %4028 = vmatprep.subr.bf16.mxu0 0
        %4029 = vmatpush2.bf16.msra.mxu0 0
        %4030 = vmatprep.mubr.bf16.mxu0 0
        %4031 = vmatmul.mubr.bf16.gmra.mxu0 %v3615
        %v4032 = vpop.f32.mrf.mxu0
        %v4033 = vadd.f32 %v3588, %v4032
        %v4034 = vpop.f32.mrf.mxu0
        %v4035 = vpop.f32.mrf.mxu0
        %v4036 = vadd.f32 %v3588, %v4035
        %v4037 = vpop.f32.mrf.mxu0
        %4038 = vmatprep.mubr.bf16.mxu0 0
        %4039 = vmatmul.mubr.bf16.gmra.mxu0 %v3618
        %v4040 = vpop.f32.mrf.mxu0
        %v4041 = vadd.f32 %v3588, %v4040
        %v4042 = vpop.f32.mrf.mxu0
        %v4043 = vpop.f32.mrf.mxu0
        %v4044 = vadd.f32 %v3588, %v4043
        %v4045 = vpop.f32.mrf.mxu0
        %4046 = vmatprep.mubr.bf16.mxu0 0
        %4047 = vmatmul.mubr.bf16.gmra.mxu0 %v3621
        %v4048 = vpop.f32.mrf.mxu0
        %v4049 = vadd.f32 %v3588, %v4048
        %v4050 = vpop.f32.mrf.mxu0
        %v4051 = vpop.f32.mrf.mxu0
        %v4052 = vadd.f32 %v3588, %v4051
        %v4053 = vpop.f32.mrf.mxu0
        %4054 = vmatprep.mubr.bf16.mxu0 0
        %4055 = vmatmul.mubr.bf16.gmra.mxu0 %v3624
        %v4056 = vpop.f32.mrf.mxu0
        %v4057 = vadd.f32 %v3588, %v4056
        %v4058 = vpop.f32.mrf.mxu0
        %v4059 = vpop.f32.mrf.mxu0
        %v4060 = vadd.f32 %v3588, %v4059
        %v4061 = vpop.f32.mrf.mxu0
        %4062 = vmatprep.mubr.bf16.mxu0 0
        %4063 = vmatmul.mubr.bf16.gmra.mxu0 %v3627
        %v4064 = vpop.f32.mrf.mxu0
        %v4065 = vadd.f32 %v3588, %v4064
        %v4066 = vpop.f32.mrf.mxu0
        %v4067 = vpop.f32.mrf.mxu0
        %v4068 = vadd.f32 %v3588, %v4067
        %v4069 = vpop.f32.mrf.mxu0
        %4070 = vmatprep.mubr.bf16.mxu0 0
        %4071 = vmatmul.mubr.bf16.gmra.mxu0 %v3630
        %v4072 = vpop.f32.mrf.mxu0
        %v4073 = vadd.f32 %v3588, %v4072
        %v4074 = vpop.f32.mrf.mxu0
        %v4075 = vpop.f32.mrf.mxu0
        %v4076 = vadd.f32 %v3588, %v4075
        %v4077 = vpop.f32.mrf.mxu0
        %4078 = vmatprep.mubr.bf16.mxu0 0
        %4079 = vmatmul.mubr.bf16.gmra.mxu0 %v3633
        %v4080 = vpop.f32.mrf.mxu0
        %v4081 = vadd.f32 %v3588, %v4080
        %v4082 = vpop.f32.mrf.mxu0
        %v4083 = vpop.f32.mrf.mxu0
        %v4084 = vadd.f32 %v3588, %v4083
        %v4085 = vpop.f32.mrf.mxu0
        %4086 = vmatprep.mubr.bf16.mxu0 0
        %4087 = vmatmul.mubr.bf16.gmra.mxu0 %v3636
        %v4088 = vpop.f32.mrf.mxu0
        %v4089 = vadd.f32 %v3588, %v4088
        %v4090 = vpop.f32.mrf.mxu0
        %v4091 = vpop.f32.mrf.mxu0
        %v4092 = vadd.f32 %v3588, %v4091
        %v4093 = vpop.f32.mrf.mxu0
        %4094 = vmatprep.mubr.bf16.mxu0 0
        %4095 = vmatmul.mubr.bf16.gmra.mxu0 %v3639
        %v4096 = vpop.f32.mrf.mxu0
        %v4097 = vadd.f32 %v3588, %v4096
        %v4098 = vpop.f32.mrf.mxu0
        %v4099 = vpop.f32.mrf.mxu0
        %v4100 = vadd.f32 %v3588, %v4099
        %v4101 = vpop.f32.mrf.mxu0
        %4102 = vmatprep.mubr.bf16.mxu0 0
        %4103 = vmatmul.mubr.bf16.gmra.mxu0 %v3642
        %v4104 = vpop.f32.mrf.mxu0
        %v4105 = vadd.f32 %v3588, %v4104
        %v4106 = vpop.f32.mrf.mxu0
        %v4107 = vpop.f32.mrf.mxu0
        %v4108 = vadd.f32 %v3588, %v4107
        %v4109 = vpop.f32.mrf.mxu0
        %4110 = vmatprep.mubr.bf16.mxu0 0
        %4111 = vmatmul.mubr.bf16.gmra.mxu0 %v3645
        %v4112 = vpop.f32.mrf.mxu0
        %v4113 = vadd.f32 %v3588, %v4112
        %v4114 = vpop.f32.mrf.mxu0
        %v4115 = vpop.f32.mrf.mxu0
        %v4116 = vadd.f32 %v3588, %v4115
        %v4117 = vpop.f32.mrf.mxu0
        %4118 = vmatprep.mubr.bf16.mxu0 0
        %4119 = vmatmul.mubr.bf16.gmra.mxu0 %v3648
        %v4120 = vpop.f32.mrf.mxu0
        %v4121 = vadd.f32 %v3588, %v4120
        %v4122 = vpop.f32.mrf.mxu0
        %v4123 = vpop.f32.mrf.mxu0
        %v4124 = vadd.f32 %v3588, %v4123
        %v4125 = vpop.f32.mrf.mxu0
        %4126 = vmatprep.mubr.bf16.mxu0 0
        %4127 = vmatmul.mubr.bf16.gmra.mxu0 %v3651
        %v4128 = vpop.f32.mrf.mxu0
        %v4129 = vadd.f32 %v3588, %v4128
        %v4130 = vpop.f32.mrf.mxu0
        %v4131 = vpop.f32.mrf.mxu0
        %v4132 = vadd.f32 %v3588, %v4131
        %v4133 = vpop.f32.mrf.mxu0
        %4134 = vmatprep.mubr.bf16.mxu0 0
        %4135 = vmatmul.mubr.bf16.gmra.mxu0 %v3654
        %v4136 = vpop.f32.mrf.mxu0
        %v4137 = vadd.f32 %v3588, %v4136
        %v4138 = vpop.f32.mrf.mxu0
        %v4139 = vpop.f32.mrf.mxu0
        %v4140 = vadd.f32 %v3588, %v4139
        %v4141 = vpop.f32.mrf.mxu0
        %4142 = vmatprep.mubr.bf16.mxu0 0
        %4143 = vmatmul.mubr.bf16.gmra.mxu0 %v3657
        %v4144 = vpop.f32.mrf.mxu0
        %v4145 = vadd.f32 %v3588, %v4144
        %v4146 = vpop.f32.mrf.mxu0
        %v4147 = vpop.f32.mrf.mxu0
        %v4148 = vadd.f32 %v3588, %v4147
        %v4149 = vpop.f32.mrf.mxu0
        %4150 = vmatprep.mubr.bf16.mxu0 0
        %4151 = vmatmul.mubr.bf16.gmra.mxu0 %v3660
        %v4152 = vpop.f32.mrf.mxu0
        %v4153 = vadd.f32 %v3588, %v4152
        %v4154 = vpop.f32.mrf.mxu0
        %v4155 = vpop.f32.mrf.mxu0
        %v4156 = vadd.f32 %v3588, %v4155
        %v4157 = vpop.f32.mrf.mxu0
        %4158 = vmatprep.mubr.bf16.mxu0 0
        %4159 = vmatmul.mubr.bf16.gmra.mxu0 %v3663
        %v4160 = vpop.f32.mrf.mxu0
        %v4161 = vadd.f32 %v3588, %v4160
        %v4162 = vpop.f32.mrf.mxu0
        %v4163 = vpop.f32.mrf.mxu0
        %v4164 = vadd.f32 %v3588, %v4163
        %v4165 = vpop.f32.mrf.mxu0
        %4166 = vmatprep.mubr.bf16.mxu0 0
        %4167 = vmatmul.mubr.bf16.gmra.mxu0 %v3666
        %v4168 = vpop.f32.mrf.mxu0
        %v4169 = vadd.f32 %v3588, %v4168
        %v4170 = vpop.f32.mrf.mxu0
        %v4171 = vpop.f32.mrf.mxu0
        %v4172 = vadd.f32 %v3588, %v4171
        %v4173 = vpop.f32.mrf.mxu0
        %4174 = vmatprep.mubr.bf16.mxu0 0
        %4175 = vmatmul.mubr.bf16.gmra.mxu0 %v3669
        %v4176 = vpop.f32.mrf.mxu0
        %v4177 = vadd.f32 %v3588, %v4176
        %v4178 = vpop.f32.mrf.mxu0
        %v4179 = vpop.f32.mrf.mxu0
        %v4180 = vadd.f32 %v3588, %v4179
        %v4181 = vpop.f32.mrf.mxu0
        %4182 = vmatprep.mubr.bf16.mxu0 0
        %4183 = vmatmul.mubr.bf16.gmra.mxu0 %v3672
        %v4184 = vpop.f32.mrf.mxu0
        %v4185 = vadd.f32 %v3588, %v4184
        %v4186 = vpop.f32.mrf.mxu0
        %v4187 = vpop.f32.mrf.mxu0
        %v4188 = vadd.f32 %v3588, %v4187
        %v4189 = vpop.f32.mrf.mxu0
        %4190 = vmatprep.mubr.bf16.mxu0 0
        %4191 = vmatmul.mubr.bf16.gmra.mxu0 %v3675
        %v4192 = vpop.f32.mrf.mxu0
        %v4193 = vadd.f32 %v3588, %v4192
        %v4194 = vpop.f32.mrf.mxu0
        %v4195 = vpop.f32.mrf.mxu0
        %v4196 = vadd.f32 %v3588, %v4195
        %v4197 = vpop.f32.mrf.mxu0
        %4198 = vmatprep.mubr.bf16.mxu0 0
        %4199 = vmatmul.mubr.bf16.gmra.mxu0 %v3678
        %v4200 = vpop.f32.mrf.mxu0
        %v4201 = vadd.f32 %v3588, %v4200
        %v4202 = vpop.f32.mrf.mxu0
        %v4203 = vpop.f32.mrf.mxu0
        %v4204 = vadd.f32 %v3588, %v4203
        %v4205 = vpop.f32.mrf.mxu0
        %4206 = vmatprep.mubr.bf16.mxu0 0
        %4207 = vmatmul.mubr.bf16.gmra.mxu0 %v3681
        %v4208 = vpop.f32.mrf.mxu0
        %v4209 = vadd.f32 %v3588, %v4208
        %v4210 = vpop.f32.mrf.mxu0
        %v4211 = vpop.f32.mrf.mxu0
        %v4212 = vadd.f32 %v3588, %v4211
        %v4213 = vpop.f32.mrf.mxu0
        %4214 = vmatprep.mubr.bf16.mxu0 0
        %4215 = vmatmul.mubr.bf16.gmra.mxu0 %v3684
        %v4216 = vpop.f32.mrf.mxu0
        %v4217 = vadd.f32 %v3588, %v4216
        %v4218 = vpop.f32.mrf.mxu0
        %v4219 = vpop.f32.mrf.mxu0
        %v4220 = vadd.f32 %v3588, %v4219
        %v4221 = vpop.f32.mrf.mxu0
        %4222 = vmatprep.mubr.bf16.mxu0 0
        %4223 = vmatmul.mubr.bf16.gmra.mxu0 %v3687
        %v4224 = vpop.f32.mrf.mxu0
        %v4225 = vadd.f32 %v3588, %v4224
        %v4226 = vpop.f32.mrf.mxu0
        %v4227 = vpop.f32.mrf.mxu0
        %v4228 = vadd.f32 %v3588, %v4227
        %v4229 = vpop.f32.mrf.mxu0
        %4230 = vmatprep.mubr.bf16.mxu0 0
        %4231 = vmatmul.mubr.bf16.gmra.mxu0 %v3690
        %v4232 = vpop.f32.mrf.mxu0
        %v4233 = vadd.f32 %v3588, %v4232
        %v4234 = vpop.f32.mrf.mxu0
        %v4235 = vpop.f32.mrf.mxu0
        %v4236 = vadd.f32 %v3588, %v4235
        %v4237 = vpop.f32.mrf.mxu0
        %4238 = vmatprep.mubr.bf16.mxu0 0
        %4239 = vmatmul.mubr.bf16.gmra.mxu0 %v3693
        %v4240 = vpop.f32.mrf.mxu0
        %v4241 = vadd.f32 %v3588, %v4240
        %v4242 = vpop.f32.mrf.mxu0
        %v4243 = vpop.f32.mrf.mxu0
        %v4244 = vadd.f32 %v3588, %v4243
        %v4245 = vpop.f32.mrf.mxu0
        %4246 = vmatprep.mubr.bf16.mxu0 0
        %4247 = vmatmul.mubr.bf16.gmra.mxu0 %v3696
        %v4248 = vpop.f32.mrf.mxu0
        %v4249 = vadd.f32 %v3588, %v4248
        %v4250 = vpop.f32.mrf.mxu0
        %v4251 = vpop.f32.mrf.mxu0
        %v4252 = vadd.f32 %v3588, %v4251
        %v4253 = vpop.f32.mrf.mxu0
        %4254 = vmatprep.mubr.bf16.mxu0 0
        %4255 = vmatmul.mubr.bf16.gmra.mxu0 %v3699
        %v4256 = vpop.f32.mrf.mxu0
        %v4257 = vadd.f32 %v3588, %v4256
        %v4258 = vpop.f32.mrf.mxu0
        %v4259 = vpop.f32.mrf.mxu0
        %v4260 = vadd.f32 %v3588, %v4259
        %v4261 = vpop.f32.mrf.mxu0
        %4262 = vmatprep.mubr.bf16.mxu0 0
        %4263 = vmatmul.mubr.bf16.gmra.mxu0 %v3702
        %v4264 = vpop.f32.mrf.mxu0
        %v4265 = vadd.f32 %v3588, %v4264
        %v4266 = vpop.f32.mrf.mxu0
        %v4267 = vpop.f32.mrf.mxu0
        %v4268 = vadd.f32 %v3588, %v4267
        %v4269 = vpop.f32.mrf.mxu0
        %4270 = vmatprep.mubr.bf16.mxu0 0
        %4271 = vmatmul.mubr.bf16.gmra.mxu0 %v3705
        %v4272 = vpop.f32.mrf.mxu0
        %v4273 = vadd.f32 %v3588, %v4272
        %v4274 = vpop.f32.mrf.mxu0
        %v4275 = vpop.f32.mrf.mxu0
        %v4276 = vadd.f32 %v3588, %v4275
        %v4277 = vpop.f32.mrf.mxu0
        %4278 = vmatprep.mubr.bf16.mxu0 0
        %4279 = vmatmul.mubr.bf16.gmra.mxu0 %v3708
        %v4280 = vpop.f32.mrf.mxu0
        %v4281 = vadd.f32 %v3588, %v4280
        %v4282 = vpop.f32.mrf.mxu0
        %v4283 = vpop.f32.mrf.mxu0
        %v4284 = vadd.f32 %v3588, %v4283
        %v4285 = vpop.f32.mrf.mxu0
        %4286 = vmatprep.mubr.bf16.mxu0 0
        %4287 = vmatmul.mubr.bf16.gmra.mxu0 %v3711
        %v4288 = vpop.f32.mrf.mxu0
        %v4289 = vadd.f32 %v3588, %v4288
        %v4290 = vpop.f32.mrf.mxu0
        %v4291 = vpop.f32.mrf.mxu0
        %v4292 = vadd.f32 %v3588, %v4291
        %v4293 = vpop.f32.mrf.mxu0
        %4294 = vmatprep.mubr.bf16.mxu0 0
        %4295 = vmatmul.mubr.bf16.gmra.mxu0 %v3714
        %v4296 = vpop.f32.mrf.mxu0
        %v4297 = vadd.f32 %v3588, %v4296
        %v4298 = vpop.f32.mrf.mxu0
        %v4299 = vpop.f32.mrf.mxu0
        %v4300 = vadd.f32 %v3588, %v4299
        %v4301 = vpop.f32.mrf.mxu0
        %4302 = vmatprep.mubr.bf16.mxu0 0
        %4303 = vmatmul.mubr.bf16.gmra.mxu0 %v3717
        %v4304 = vpop.f32.mrf.mxu0
        %v4305 = vadd.f32 %v3588, %v4304
        %v4306 = vpop.f32.mrf.mxu0
        %v4307 = vpop.f32.mrf.mxu0
        %v4308 = vadd.f32 %v3588, %v4307
        %v4309 = vpop.f32.mrf.mxu0
        %4310 = vmatprep.mubr.bf16.mxu0 0
        %4311 = vmatmul.mubr.bf16.gmra.mxu0 %v3720
        %v4312 = vpop.f32.mrf.mxu0
        %v4313 = vadd.f32 %v3588, %v4312
        %v4314 = vpop.f32.mrf.mxu0
        %v4315 = vpop.f32.mrf.mxu0
        %v4316 = vadd.f32 %v3588, %v4315
        %v4317 = vpop.f32.mrf.mxu0
        %4318 = vmatprep.mubr.bf16.mxu0 0
        %4319 = vmatmul.mubr.bf16.gmra.mxu0 %v3723
        %v4320 = vpop.f32.mrf.mxu0
        %v4321 = vadd.f32 %v3588, %v4320
        %v4322 = vpop.f32.mrf.mxu0
        %v4323 = vpop.f32.mrf.mxu0
        %v4324 = vadd.f32 %v3588, %v4323
        %v4325 = vpop.f32.mrf.mxu0
        %4326 = vmatprep.mubr.bf16.mxu0 0
        %4327 = vmatmul.mubr.bf16.gmra.mxu0 %v3726
        %v4328 = vpop.f32.mrf.mxu0
        %v4329 = vadd.f32 %v3588, %v4328
        %v4330 = vpop.f32.mrf.mxu0
        %v4331 = vpop.f32.mrf.mxu0
        %v4332 = vadd.f32 %v3588, %v4331
        %v4333 = vpop.f32.mrf.mxu0
        %4334 = vmatprep.mubr.bf16.mxu0 0
        %4335 = vmatmul.mubr.bf16.gmra.mxu0 %v3729
        %v4336 = vpop.f32.mrf.mxu0
        %v4337 = vadd.f32 %v3588, %v4336
        %v4338 = vpop.f32.mrf.mxu0
        %v4339 = vpop.f32.mrf.mxu0
        %v4340 = vadd.f32 %v3588, %v4339
        %v4341 = vpop.f32.mrf.mxu0
        %4342 = vmatprep.mubr.bf16.mxu0 0
        %4343 = vmatmul.mubr.bf16.gmra.mxu0 %v3732
        %v4344 = vpop.f32.mrf.mxu0
        %v4345 = vadd.f32 %v3588, %v4344
        %v4346 = vpop.f32.mrf.mxu0
        %v4347 = vpop.f32.mrf.mxu0
        %v4348 = vadd.f32 %v3588, %v4347
        %v4349 = vpop.f32.mrf.mxu0
        %4350 = vmatprep.mubr.bf16.mxu0 0
        %4351 = vmatmul.mubr.bf16.gmra.mxu0 %v3735
        %v4352 = vpop.f32.mrf.mxu0
        %v4353 = vadd.f32 %v3588, %v4352
        %v4354 = vpop.f32.mrf.mxu0
        %v4355 = vpop.f32.mrf.mxu0
        %v4356 = vadd.f32 %v3588, %v4355
        %v4357 = vpop.f32.mrf.mxu0
        %4358 = vmatprep.mubr.bf16.mxu0 0
        %4359 = vmatmul.mubr.bf16.gmra.mxu0 %v3738
        %v4360 = vpop.f32.mrf.mxu0
        %v4361 = vadd.f32 %v3588, %v4360
        %v4362 = vpop.f32.mrf.mxu0
        %v4363 = vpop.f32.mrf.mxu0
        %v4364 = vadd.f32 %v3588, %v4363
        %v4365 = vpop.f32.mrf.mxu0
        %4366 = vmatprep.mubr.bf16.mxu0 0
        %4367 = vmatmul.mubr.bf16.gmra.mxu0 %v3741
        %v4368 = vpop.f32.mrf.mxu0
        %v4369 = vadd.f32 %v3588, %v4368
        %v4370 = vpop.f32.mrf.mxu0
        %v4371 = vpop.f32.mrf.mxu0
        %v4372 = vadd.f32 %v3588, %v4371
        %v4373 = vpop.f32.mrf.mxu0
        %4374 = vmatprep.mubr.bf16.mxu0 0
        %4375 = vmatmul.mubr.bf16.gmra.mxu0 %v3744
        %v4376 = vpop.f32.mrf.mxu0
        %v4377 = vadd.f32 %v3588, %v4376
        %v4378 = vpop.f32.mrf.mxu0
        %v4379 = vpop.f32.mrf.mxu0
        %v4380 = vadd.f32 %v3588, %v4379
        %v4381 = vpop.f32.mrf.mxu0
        %4382 = vmatprep.mubr.bf16.mxu0 0
        %4383 = vmatmul.mubr.bf16.gmra.mxu0 %v3747
        %v4384 = vpop.f32.mrf.mxu0
        %v4385 = vadd.f32 %v3588, %v4384
        %v4386 = vpop.f32.mrf.mxu0
        %v4387 = vpop.f32.mrf.mxu0
        %v4388 = vadd.f32 %v3588, %v4387
        %v4389 = vpop.f32.mrf.mxu0
        %4390 = vmatprep.mubr.bf16.mxu0 0
        %4391 = vmatmul.mubr.bf16.gmra.mxu0 %v3750
        %v4392 = vpop.f32.mrf.mxu0
        %v4393 = vadd.f32 %v3588, %v4392
        %v4394 = vpop.f32.mrf.mxu0
        %v4395 = vpop.f32.mrf.mxu0
        %v4396 = vadd.f32 %v3588, %v4395
        %v4397 = vpop.f32.mrf.mxu0
        %4398 = vmatprep.mubr.bf16.mxu0 0
        %4399 = vmatmul.mubr.bf16.gmra.mxu0 %v3753
        %v4400 = vpop.f32.mrf.mxu0
        %v4401 = vadd.f32 %v3588, %v4400
        %v4402 = vpop.f32.mrf.mxu0
        %v4403 = vpop.f32.mrf.mxu0
        %v4404 = vadd.f32 %v3588, %v4403
        %v4405 = vpop.f32.mrf.mxu0
        %4406 = vmatprep.mubr.bf16.mxu0 0
        %4407 = vmatmul.mubr.bf16.gmra.mxu0 %v3756
        %v4408 = vpop.f32.mrf.mxu0
        %v4409 = vadd.f32 %v3588, %v4408
        %v4410 = vpop.f32.mrf.mxu0
        %v4411 = vpop.f32.mrf.mxu0
        %v4412 = vadd.f32 %v3588, %v4411
        %v4413 = vpop.f32.mrf.mxu0
        %4414 = vmatprep.mubr.bf16.mxu0 0
        %4415 = vmatmul.mubr.bf16.gmra.mxu0 %v3759
        %v4416 = vpop.f32.mrf.mxu0
        %v4417 = vadd.f32 %v3588, %v4416
        %v4418 = vpop.f32.mrf.mxu0
        %v4419 = vpop.f32.mrf.mxu0
        %v4420 = vadd.f32 %v3588, %v4419
        %v4421 = vpop.f32.mrf.mxu0
        %4422 = vmatprep.mubr.bf16.mxu0 0
        %4423 = vmatmul.mubr.bf16.gmra.mxu0 %v3762
        %v4424 = vpop.f32.mrf.mxu0
        %v4425 = vadd.f32 %v3588, %v4424
        %v4426 = vpop.f32.mrf.mxu0
        %v4427 = vpop.f32.mrf.mxu0
        %v4428 = vadd.f32 %v3588, %v4427
        %v4429 = vpop.f32.mrf.mxu0
        %4430 = vmatprep.mubr.bf16.mxu0 0
        %4431 = vmatmul.mubr.bf16.gmra.mxu0 %v3765
        %v4432 = vpop.f32.mrf.mxu0
        %v4433 = vadd.f32 %v3588, %v4432
        %v4434 = vpop.f32.mrf.mxu0
        %v4435 = vpop.f32.mrf.mxu0
        %v4436 = vadd.f32 %v3588, %v4435
        %v4437 = vpop.f32.mrf.mxu0
        %4438 = vmatprep.mubr.bf16.mxu0 0
        %4439 = vmatmul.mubr.bf16.gmra.mxu0 %v3768
        %v4440 = vpop.f32.mrf.mxu0
        %v4441 = vadd.f32 %v3588, %v4440
        %v4442 = vpop.f32.mrf.mxu0
        %v4443 = vpop.f32.mrf.mxu0
        %v4444 = vadd.f32 %v3588, %v4443
        %v4445 = vpop.f32.mrf.mxu0
        %4446 = vmatprep.mubr.bf16.mxu0 0
        %4447 = vmatmul.mubr.bf16.gmra.mxu0 %v3771
        %v4448 = vpop.f32.mrf.mxu0
        %v4449 = vadd.f32 %v3588, %v4448
        %v4450 = vpop.f32.mrf.mxu0
        %v4451 = vpop.f32.mrf.mxu0
        %v4452 = vadd.f32 %v3588, %v4451
        %v4453 = vpop.f32.mrf.mxu0
        %4454 = vmatprep.mubr.bf16.mxu0 0
        %4455 = vmatmul.mubr.bf16.gmra.mxu0 %v3774
        %v4456 = vpop.f32.mrf.mxu0
        %v4457 = vadd.f32 %v3588, %v4456
        %v4458 = vpop.f32.mrf.mxu0
        %v4459 = vpop.f32.mrf.mxu0
        %v4460 = vadd.f32 %v3588, %v4459
        %v4461 = vpop.f32.mrf.mxu0
        %4462 = vmatprep.mubr.bf16.mxu0 0
        %4463 = vmatmul.mubr.bf16.gmra.mxu0 %v3777
        %v4464 = vpop.f32.mrf.mxu0
        %v4465 = vadd.f32 %v3588, %v4464
        %v4466 = vpop.f32.mrf.mxu0
        %v4467 = vpop.f32.mrf.mxu0
        %v4468 = vadd.f32 %v3588, %v4467
        %v4469 = vpop.f32.mrf.mxu0
        %4470 = vmatprep.mubr.bf16.mxu0 0
        %4471 = vmatmul.mubr.bf16.gmra.mxu0 %v3780
        %v4472 = vpop.f32.mrf.mxu0
        %v4473 = vadd.f32 %v3588, %v4472
        %v4474 = vpop.f32.mrf.mxu0
        %v4475 = vpop.f32.mrf.mxu0
        %v4476 = vadd.f32 %v3588, %v4475
        %v4477 = vpop.f32.mrf.mxu0
        %4478 = vmatprep.mubr.bf16.mxu0 0
        %4479 = vmatmul.mubr.bf16.gmra.mxu0 %v3783
        %v4480 = vpop.f32.mrf.mxu0
        %v4481 = vadd.f32 %v3588, %v4480
        %v4482 = vpop.f32.mrf.mxu0
        %v4483 = vpop.f32.mrf.mxu0
        %v4484 = vadd.f32 %v3588, %v4483
        %v4485 = vpop.f32.mrf.mxu0
        %4486 = vmatprep.mubr.bf16.mxu0 0
        %4487 = vmatmul.mubr.bf16.gmra.mxu0 %v3786
        %v4488 = vpop.f32.mrf.mxu0
        %v4489 = vadd.f32 %v3588, %v4488
        %v4490 = vpop.f32.mrf.mxu0
        %v4491 = vpop.f32.mrf.mxu0
        %v4492 = vadd.f32 %v3588, %v4491
        %v4493 = vpop.f32.mrf.mxu0
        %4494 = vmatprep.mubr.bf16.mxu0 0
        %4495 = vmatmul.mubr.bf16.gmra.mxu0 %v3789
        %v4496 = vpop.f32.mrf.mxu0
        %v4497 = vadd.f32 %v3588, %v4496
        %v4498 = vpop.f32.mrf.mxu0
        %v4499 = vpop.f32.mrf.mxu0
        %v4500 = vadd.f32 %v3588, %v4499
        %v4501 = vpop.f32.mrf.mxu0
        %4502 = vmatprep.mubr.bf16.mxu0 0
        %4503 = vmatmul.mubr.bf16.gmra.mxu0 %v3792
        %v4504 = vpop.f32.mrf.mxu0
        %v4505 = vadd.f32 %v3588, %v4504
        %v4506 = vpop.f32.mrf.mxu0
        %v4507 = vpop.f32.mrf.mxu0
        %v4508 = vadd.f32 %v3588, %v4507
        %v4509 = vpop.f32.mrf.mxu0
        %4510 = vmatprep.mubr.bf16.mxu0 0
        %4511 = vmatmul.mubr.bf16.gmra.mxu0 %v3795
        %v4512 = vpop.f32.mrf.mxu0
        %v4513 = vadd.f32 %v3588, %v4512
        %v4514 = vpop.f32.mrf.mxu0
        %v4515 = vpop.f32.mrf.mxu0
        %v4516 = vadd.f32 %v3588, %v4515
        %v4517 = vpop.f32.mrf.mxu0
        %4518 = vmatprep.mubr.bf16.mxu0 0
        %4519 = vmatmul.mubr.bf16.gmra.mxu0 %v3798
        %v4520 = vpop.f32.mrf.mxu0
        %v4521 = vadd.f32 %v3588, %v4520
        %v4522 = vpop.f32.mrf.mxu0
        %v4523 = vpop.f32.mrf.mxu0
        %v4524 = vadd.f32 %v3588, %v4523
        %v4525 = vpop.f32.mrf.mxu0
        %4526 = vmatprep.mubr.bf16.mxu0 0
        %4527 = vmatmul.mubr.bf16.gmra.mxu0 %v3801
        %v4528 = vpop.f32.mrf.mxu0
        %v4529 = vadd.f32 %v3588, %v4528
        %v4530 = vpop.f32.mrf.mxu0
        %v4531 = vpop.f32.mrf.mxu0
        %v4532 = vadd.f32 %v3588, %v4531
        %v4533 = vpop.f32.mrf.mxu0
        %4534 = vmatprep.mubr.bf16.mxu0 0
        %4535 = vmatmul.mubr.bf16.gmra.mxu0 %v3804
        %v4536 = vpop.f32.mrf.mxu0
        %v4537 = vadd.f32 %v3588, %v4536
        %v4538 = vpop.f32.mrf.mxu0
        %v4539 = vpop.f32.mrf.mxu0
        %v4540 = vadd.f32 %v3588, %v4539
        %v4541 = vpop.f32.mrf.mxu0
        %4542 = vmatprep.mubr.bf16.mxu0 0
        %4543 = vmatmul.mubr.bf16.gmra.mxu0 %v3807
        %v4544 = vpop.f32.mrf.mxu0
        %v4545 = vadd.f32 %v3588, %v4544
        %v4546 = vpop.f32.mrf.mxu0
        %v4547 = vpop.f32.mrf.mxu0
        %v4548 = vadd.f32 %v3588, %v4547
        %v4549 = vpop.f32.mrf.mxu0
        %4550 = vmatprep.mubr.bf16.mxu0 0
        %4551 = vmatmul.mubr.bf16.gmra.mxu0 %v3810
        %v4552 = vpop.f32.mrf.mxu0
        %v4553 = vadd.f32 %v3588, %v4552
        %v4554 = vpop.f32.mrf.mxu0
        %v4555 = vpop.f32.mrf.mxu0
        %v4556 = vadd.f32 %v3588, %v4555
        %v4557 = vpop.f32.mrf.mxu0
        %4558 = vmatprep.mubr.bf16.mxu0 0
        %4559 = vmatmul.mubr.bf16.gmra.mxu0 %v3813
        %v4560 = vpop.f32.mrf.mxu0
        %v4561 = vadd.f32 %v3588, %v4560
        %v4562 = vpop.f32.mrf.mxu0
        %v4563 = vpop.f32.mrf.mxu0
        %v4564 = vadd.f32 %v3588, %v4563
        %v4565 = vpop.f32.mrf.mxu0
        %4566 = vmatprep.mubr.bf16.mxu0 0
        %4567 = vmatmul.mubr.bf16.gmra.mxu0 %v3816
        %v4568 = vpop.f32.mrf.mxu0
        %v4569 = vadd.f32 %v3588, %v4568
        %v4570 = vpop.f32.mrf.mxu0
        %v4571 = vpop.f32.mrf.mxu0
        %v4572 = vadd.f32 %v3588, %v4571
        %v4573 = vpop.f32.mrf.mxu0
        %4574 = vmatprep.mubr.bf16.mxu0 0
        %4575 = vmatmul.mubr.bf16.gmra.mxu0 %v3819
        %v4576 = vpop.f32.mrf.mxu0
        %v4577 = vadd.f32 %v3588, %v4576
        %v4578 = vpop.f32.mrf.mxu0
        %v4579 = vpop.f32.mrf.mxu0
        %v4580 = vadd.f32 %v3588, %v4579
        %v4581 = vpop.f32.mrf.mxu0
        %4582 = vmatprep.mubr.bf16.mxu0 0
        %4583 = vmatmul.mubr.bf16.gmra.mxu0 %v3822
        %v4584 = vpop.f32.mrf.mxu0
        %v4585 = vadd.f32 %v3588, %v4584
        %v4586 = vpop.f32.mrf.mxu0
        %v4587 = vpop.f32.mrf.mxu0
        %v4588 = vadd.f32 %v3588, %v4587
        %v4589 = vpop.f32.mrf.mxu0
        %4590 = vmatprep.mubr.bf16.mxu0 0
        %4591 = vmatmul.mubr.bf16.gmra.mxu0 %v3825
        %v4592 = vpop.f32.mrf.mxu0
        %v4593 = vadd.f32 %v3588, %v4592
        %v4594 = vpop.f32.mrf.mxu0
        %v4595 = vpop.f32.mrf.mxu0
        %v4596 = vadd.f32 %v3588, %v4595
        %v4597 = vpop.f32.mrf.mxu0
        %4598 = vmatprep.mubr.bf16.mxu0 0
        %4599 = vmatmul.mubr.bf16.gmra.mxu0 %v3828
        %v4600 = vpop.f32.mrf.mxu0
        %v4601 = vadd.f32 %v3588, %v4600
        %v4602 = vpop.f32.mrf.mxu0
        %v4603 = vpop.f32.mrf.mxu0
        %v4604 = vadd.f32 %v3588, %v4603
        %v4605 = vpop.f32.mrf.mxu0
        %4606 = vmatprep.mubr.bf16.mxu0 0
        %4607 = vmatmul.mubr.bf16.gmra.mxu0 %v3831
        %v4608 = vpop.f32.mrf.mxu0
        %v4609 = vadd.f32 %v3588, %v4608
        %v4610 = vpop.f32.mrf.mxu0
        %v4611 = vpop.f32.mrf.mxu0
        %v4612 = vadd.f32 %v3588, %v4611
        %v4613 = vpop.f32.mrf.mxu0
        %4614 = vmatprep.mubr.bf16.mxu0 0
        %4615 = vmatmul.mubr.bf16.gmra.mxu0 %v3834
        %v4616 = vpop.f32.mrf.mxu0
        %v4617 = vadd.f32 %v3588, %v4616
        %v4618 = vpop.f32.mrf.mxu0
        %v4619 = vpop.f32.mrf.mxu0
        %v4620 = vadd.f32 %v3588, %v4619
        %v4621 = vpop.f32.mrf.mxu0
        %4622 = vmatprep.mubr.bf16.mxu0 0
        %4623 = vmatmul.mubr.bf16.gmra.mxu0 %v3837
        %v4624 = vpop.f32.mrf.mxu0
        %v4625 = vadd.f32 %v3588, %v4624
        %v4626 = vpop.f32.mrf.mxu0
        %v4627 = vpop.f32.mrf.mxu0
        %v4628 = vadd.f32 %v3588, %v4627
        %v4629 = vpop.f32.mrf.mxu0
        %4630 = vmatprep.mubr.bf16.mxu0 0
        %4631 = vmatmul.mubr.bf16.gmra.mxu0 %v3840
        %v4632 = vpop.f32.mrf.mxu0
        %v4633 = vadd.f32 %v3588, %v4632
        %v4634 = vpop.f32.mrf.mxu0
        %v4635 = vpop.f32.mrf.mxu0
        %v4636 = vadd.f32 %v3588, %v4635
        %v4637 = vpop.f32.mrf.mxu0
        %4638 = vmatprep.mubr.bf16.mxu0 0
        %4639 = vmatmul.mubr.bf16.gmra.mxu0 %v3843
        %v4640 = vpop.f32.mrf.mxu0
        %v4641 = vadd.f32 %v3588, %v4640
        %v4642 = vpop.f32.mrf.mxu0
        %v4643 = vpop.f32.mrf.mxu0
        %v4644 = vadd.f32 %v3588, %v4643
        %v4645 = vpop.f32.mrf.mxu0
        %4646 = vmatprep.mubr.bf16.mxu0 0
        %4647 = vmatmul.mubr.bf16.gmra.mxu0 %v3846
        %v4648 = vpop.f32.mrf.mxu0
        %v4649 = vadd.f32 %v3588, %v4648
        %v4650 = vpop.f32.mrf.mxu0
        %v4651 = vpop.f32.mrf.mxu0
        %v4652 = vadd.f32 %v3588, %v4651
        %v4653 = vpop.f32.mrf.mxu0
        %4654 = vmatprep.mubr.bf16.mxu0 0
        %4655 = vmatmul.mubr.bf16.gmra.mxu0 %v3849
        %v4656 = vpop.f32.mrf.mxu0
        %v4657 = vadd.f32 %v3588, %v4656
        %v4658 = vpop.f32.mrf.mxu0
        %v4659 = vpop.f32.mrf.mxu0
        %v4660 = vadd.f32 %v3588, %v4659
        %v4661 = vpop.f32.mrf.mxu0
        %4662 = vmatprep.mubr.bf16.mxu0 0
        %4663 = vmatmul.mubr.bf16.gmra.mxu0 %v3852
        %v4664 = vpop.f32.mrf.mxu0
        %v4665 = vadd.f32 %v3588, %v4664
        %v4666 = vpop.f32.mrf.mxu0
        %v4667 = vpop.f32.mrf.mxu0
        %v4668 = vadd.f32 %v3588, %v4667
        %v4669 = vpop.f32.mrf.mxu0
        %4670 = vmatprep.mubr.bf16.mxu0 0
        %4671 = vmatmul.mubr.bf16.gmra.mxu0 %v3855
        %v4672 = vpop.f32.mrf.mxu0
        %v4673 = vadd.f32 %v3588, %v4672
        %v4674 = vpop.f32.mrf.mxu0
        %v4675 = vpop.f32.mrf.mxu0
        %v4676 = vadd.f32 %v3588, %v4675
        %v4677 = vpop.f32.mrf.mxu0
        %4678 = vmatprep.mubr.bf16.mxu0 0
        %4679 = vmatmul.mubr.bf16.gmra.mxu0 %v3858
        %v4680 = vpop.f32.mrf.mxu0
        %v4681 = vadd.f32 %v3588, %v4680
        %v4682 = vpop.f32.mrf.mxu0
        %v4683 = vpop.f32.mrf.mxu0
        %v4684 = vadd.f32 %v3588, %v4683
        %v4685 = vpop.f32.mrf.mxu0
        %4686 = vmatprep.mubr.bf16.mxu0 0
        %4687 = vmatmul.mubr.bf16.gmra.mxu0 %v3861
        %v4688 = vpop.f32.mrf.mxu0
        %v4689 = vadd.f32 %v3588, %v4688
        %v4690 = vpop.f32.mrf.mxu0
        %v4691 = vpop.f32.mrf.mxu0
        %v4692 = vadd.f32 %v3588, %v4691
        %v4693 = vpop.f32.mrf.mxu0
        %4694 = vmatprep.mubr.bf16.mxu0 0
        %4695 = vmatmul.mubr.bf16.gmra.mxu0 %v3864
        %v4696 = vpop.f32.mrf.mxu0
        %v4697 = vadd.f32 %v3588, %v4696
        %v4698 = vpop.f32.mrf.mxu0
        %v4699 = vpop.f32.mrf.mxu0
        %v4700 = vadd.f32 %v3588, %v4699
        %v4701 = vpop.f32.mrf.mxu0
        %4702 = vmatprep.mubr.bf16.mxu0 0
        %4703 = vmatmul.mubr.bf16.gmra.mxu0 %v3867
        %v4704 = vpop.f32.mrf.mxu0
        %v4705 = vadd.f32 %v3588, %v4704
        %v4706 = vpop.f32.mrf.mxu0
        %v4707 = vpop.f32.mrf.mxu0
        %v4708 = vadd.f32 %v3588, %v4707
        %v4709 = vpop.f32.mrf.mxu0
        %4710 = vmatprep.mubr.bf16.mxu0 0
        %4711 = vmatmul.mubr.bf16.gmra.mxu0 %v3870
        %v4712 = vpop.f32.mrf.mxu0
        %v4713 = vadd.f32 %v3588, %v4712
        %v4714 = vpop.f32.mrf.mxu0
        %v4715 = vpop.f32.mrf.mxu0
        %v4716 = vadd.f32 %v3588, %v4715
        %v4717 = vpop.f32.mrf.mxu0
        %4718 = vmatprep.mubr.bf16.mxu0 0
        %4719 = vmatmul.mubr.bf16.gmra.mxu0 %v3873
        %v4720 = vpop.f32.mrf.mxu0
        %v4721 = vadd.f32 %v3588, %v4720
        %v4722 = vpop.f32.mrf.mxu0
        %v4723 = vpop.f32.mrf.mxu0
        %v4724 = vadd.f32 %v3588, %v4723
        %v4725 = vpop.f32.mrf.mxu0
        %4726 = vmatprep.mubr.bf16.mxu0 0
        %4727 = vmatmul.mubr.bf16.gmra.mxu0 %v3876
        %v4728 = vpop.f32.mrf.mxu0
        %v4729 = vadd.f32 %v3588, %v4728
        %v4730 = vpop.f32.mrf.mxu0
        %v4731 = vpop.f32.mrf.mxu0
        %v4732 = vadd.f32 %v3588, %v4731
        %v4733 = vpop.f32.mrf.mxu0
        %4734 = vmatprep.mubr.bf16.mxu0 0
        %4735 = vmatmul.mubr.bf16.gmra.mxu0 %v3879
        %v4736 = vpop.f32.mrf.mxu0
        %v4737 = vadd.f32 %v3588, %v4736
        %v4738 = vpop.f32.mrf.mxu0
        %v4739 = vpop.f32.mrf.mxu0
        %v4740 = vadd.f32 %v3588, %v4739
        %v4741 = vpop.f32.mrf.mxu0
        %4742 = vmatprep.mubr.bf16.mxu0 0
        %4743 = vmatmul.mubr.bf16.gmra.mxu0 %v3882
        %v4744 = vpop.f32.mrf.mxu0
        %v4745 = vadd.f32 %v3588, %v4744
        %v4746 = vpop.f32.mrf.mxu0
        %v4747 = vpop.f32.mrf.mxu0
        %v4748 = vadd.f32 %v3588, %v4747
        %v4749 = vpop.f32.mrf.mxu0
        %4750 = vmatprep.mubr.bf16.mxu0 0
        %4751 = vmatmul.mubr.bf16.gmra.mxu0 %v3885
        %v4752 = vpop.f32.mrf.mxu0
        %v4753 = vadd.f32 %v3588, %v4752
        %v4754 = vpop.f32.mrf.mxu0
        %v4755 = vpop.f32.mrf.mxu0
        %v4756 = vadd.f32 %v3588, %v4755
        %v4757 = vpop.f32.mrf.mxu0
        %4758 = vmatprep.mubr.bf16.mxu0 0
        %4759 = vmatmul.mubr.bf16.gmra.mxu0 %v3888
        %v4760 = vpop.f32.mrf.mxu0
        %v4761 = vadd.f32 %v3588, %v4760
        %v4762 = vpop.f32.mrf.mxu0
        %v4763 = vpop.f32.mrf.mxu0
        %v4764 = vadd.f32 %v3588, %v4763
        %v4765 = vpop.f32.mrf.mxu0
        %4766 = vmatprep.mubr.bf16.mxu0 0
        %4767 = vmatmul.mubr.bf16.gmra.mxu0 %v3891
        %v4768 = vpop.f32.mrf.mxu0
        %v4769 = vadd.f32 %v3588, %v4768
        %v4770 = vpop.f32.mrf.mxu0
        %v4771 = vpop.f32.mrf.mxu0
        %v4772 = vadd.f32 %v3588, %v4771
        %v4773 = vpop.f32.mrf.mxu0
        %4774 = vmatprep.mubr.bf16.mxu0 0
        %4775 = vmatmul.mubr.bf16.gmra.mxu0 %v3894
        %v4776 = vpop.f32.mrf.mxu0
        %v4777 = vadd.f32 %v3588, %v4776
        %v4778 = vpop.f32.mrf.mxu0
        %v4779 = vpop.f32.mrf.mxu0
        %v4780 = vadd.f32 %v3588, %v4779
        %v4781 = vpop.f32.mrf.mxu0
        %4782 = vmatprep.mubr.bf16.mxu0 0
        %4783 = vmatmul.mubr.bf16.gmra.mxu0 %v3897
        %v4784 = vpop.f32.mrf.mxu0
        %v4785 = vadd.f32 %v3588, %v4784
        %v4786 = vpop.f32.mrf.mxu0
        %v4787 = vpop.f32.mrf.mxu0
        %v4788 = vadd.f32 %v3588, %v4787
        %v4789 = vpop.f32.mrf.mxu0
        %4790 = vmatprep.mubr.bf16.mxu0 0
        %4791 = vmatmul.mubr.bf16.gmra.mxu0 %v3900
        %v4792 = vpop.f32.mrf.mxu0
        %v4793 = vadd.f32 %v3588, %v4792
        %v4794 = vpop.f32.mrf.mxu0
        %v4795 = vpop.f32.mrf.mxu0
        %v4796 = vadd.f32 %v3588, %v4795
        %v4797 = vpop.f32.mrf.mxu0
        %4798 = vmatprep.mubr.bf16.mxu0 0
        %4799 = vmatmul.mubr.bf16.gmra.mxu0 %v3903
        %v4800 = vpop.f32.mrf.mxu0
        %v4801 = vadd.f32 %v3588, %v4800
        %v4802 = vpop.f32.mrf.mxu0
        %v4803 = vpop.f32.mrf.mxu0
        %v4804 = vadd.f32 %v3588, %v4803
        %v4805 = vpop.f32.mrf.mxu0
        %4806 = vmatprep.mubr.bf16.mxu0 0
        %4807 = vmatmul.mubr.bf16.gmra.mxu0 %v3906
        %v4808 = vpop.f32.mrf.mxu0
        %v4809 = vadd.f32 %v3588, %v4808
        %v4810 = vpop.f32.mrf.mxu0
        %v4811 = vpop.f32.mrf.mxu0
        %v4812 = vadd.f32 %v3588, %v4811
        %v4813 = vpop.f32.mrf.mxu0
        %4814 = vmatprep.mubr.bf16.mxu0 0
        %4815 = vmatmul.mubr.bf16.gmra.mxu0 %v3909
        %v4816 = vpop.f32.mrf.mxu0
        %v4817 = vadd.f32 %v3588, %v4816
        %v4818 = vpop.f32.mrf.mxu0
        %v4819 = vpop.f32.mrf.mxu0
        %v4820 = vadd.f32 %v3588, %v4819
        %v4821 = vpop.f32.mrf.mxu0
        %4822 = vmatprep.mubr.bf16.mxu0 0
        %4823 = vmatmul.mubr.bf16.gmra.mxu0 %v3912
        %v4824 = vpop.f32.mrf.mxu0
        %v4825 = vadd.f32 %v3588, %v4824
        %v4826 = vpop.f32.mrf.mxu0
        %v4827 = vpop.f32.mrf.mxu0
        %v4828 = vadd.f32 %v3588, %v4827
        %v4829 = vpop.f32.mrf.mxu0
        %4830 = vmatprep.mubr.bf16.mxu0 0
        %4831 = vmatmul.mubr.bf16.gmra.mxu0 %v3915
        %v4832 = vpop.f32.mrf.mxu0
        %v4833 = vadd.f32 %v3588, %v4832
        %v4834 = vpop.f32.mrf.mxu0
        %v4835 = vpop.f32.mrf.mxu0
        %v4836 = vadd.f32 %v3588, %v4835
        %v4837 = vpop.f32.mrf.mxu0
        %4838 = vmatprep.mubr.bf16.mxu0 0
        %4839 = vmatmul.mubr.bf16.gmra.mxu0 %v3918
        %v4840 = vpop.f32.mrf.mxu0
        %v4841 = vadd.f32 %v3588, %v4840
        %v4842 = vpop.f32.mrf.mxu0
        %v4843 = vpop.f32.mrf.mxu0
        %v4844 = vadd.f32 %v3588, %v4843
        %v4845 = vpop.f32.mrf.mxu0
        %4846 = vmatprep.mubr.bf16.mxu0 0
        %4847 = vmatmul.mubr.bf16.gmra.mxu0 %v3921
        %v4848 = vpop.f32.mrf.mxu0
        %v4849 = vadd.f32 %v3588, %v4848
        %v4850 = vpop.f32.mrf.mxu0
        %v4851 = vpop.f32.mrf.mxu0
        %v4852 = vadd.f32 %v3588, %v4851
        %v4853 = vpop.f32.mrf.mxu0
        %4854 = vmatprep.mubr.bf16.mxu0 0
        %4855 = vmatmul.mubr.bf16.gmra.mxu0 %v3924
        %v4856 = vpop.f32.mrf.mxu0
        %v4857 = vadd.f32 %v3588, %v4856
        %v4858 = vpop.f32.mrf.mxu0
        %v4859 = vpop.f32.mrf.mxu0
        %v4860 = vadd.f32 %v3588, %v4859
        %v4861 = vpop.f32.mrf.mxu0
        %4862 = vmatprep.mubr.bf16.mxu0 0
        %4863 = vmatmul.mubr.bf16.gmra.mxu0 %v3927
        %v4864 = vpop.f32.mrf.mxu0
        %v4865 = vadd.f32 %v3588, %v4864
        %v4866 = vpop.f32.mrf.mxu0
        %v4867 = vpop.f32.mrf.mxu0
        %v4868 = vadd.f32 %v3588, %v4867
        %v4869 = vpop.f32.mrf.mxu0
        %4870 = vmatprep.mubr.bf16.mxu0 0
        %4871 = vmatmul.mubr.bf16.gmra.mxu0 %v3930
        %v4872 = vpop.f32.mrf.mxu0
        %v4873 = vadd.f32 %v3588, %v4872
        %v4874 = vpop.f32.mrf.mxu0
        %v4875 = vpop.f32.mrf.mxu0
        %v4876 = vadd.f32 %v3588, %v4875
        %v4877 = vpop.f32.mrf.mxu0
        %4878 = vmatprep.mubr.bf16.mxu0 0
        %4879 = vmatmul.mubr.bf16.gmra.mxu0 %v3933
        %v4880 = vpop.f32.mrf.mxu0
        %v4881 = vadd.f32 %v3588, %v4880
        %v4882 = vpop.f32.mrf.mxu0
        %v4883 = vpop.f32.mrf.mxu0
        %v4884 = vadd.f32 %v3588, %v4883
        %v4885 = vpop.f32.mrf.mxu0
        %4886 = vmatprep.mubr.bf16.mxu0 0
        %4887 = vmatmul.mubr.bf16.gmra.mxu0 %v3936
        %v4888 = vpop.f32.mrf.mxu0
        %v4889 = vadd.f32 %v3588, %v4888
        %v4890 = vpop.f32.mrf.mxu0
        %v4891 = vpop.f32.mrf.mxu0
        %v4892 = vadd.f32 %v3588, %v4891
        %v4893 = vpop.f32.mrf.mxu0
        %4894 = vmatprep.mubr.bf16.mxu0 0
        %4895 = vmatmul.mubr.bf16.gmra.mxu0 %v3939
        %v4896 = vpop.f32.mrf.mxu0
        %v4897 = vadd.f32 %v3588, %v4896
        %v4898 = vpop.f32.mrf.mxu0
        %v4899 = vpop.f32.mrf.mxu0
        %v4900 = vadd.f32 %v3588, %v4899
        %v4901 = vpop.f32.mrf.mxu0
        %4902 = vmatprep.mubr.bf16.mxu0 0
        %4903 = vmatmul.mubr.bf16.gmra.mxu0 %v3942
        %v4904 = vpop.f32.mrf.mxu0
        %v4905 = vadd.f32 %v3588, %v4904
        %v4906 = vpop.f32.mrf.mxu0
        %v4907 = vpop.f32.mrf.mxu0
        %v4908 = vadd.f32 %v3588, %v4907
        %v4909 = vpop.f32.mrf.mxu0
        %4910 = vmatprep.mubr.bf16.mxu0 0
        %4911 = vmatmul.mubr.bf16.gmra.mxu0 %v3945
        %v4912 = vpop.f32.mrf.mxu0
        %v4913 = vadd.f32 %v3588, %v4912
        %v4914 = vpop.f32.mrf.mxu0
        %v4915 = vpop.f32.mrf.mxu0
        %v4916 = vadd.f32 %v3588, %v4915
        %v4917 = vpop.f32.mrf.mxu0
        %4918 = vmatprep.mubr.bf16.mxu0 0
        %4919 = vmatmul.mubr.bf16.gmra.mxu0 %v3948
        %v4920 = vpop.f32.mrf.mxu0
        %v4921 = vadd.f32 %v3588, %v4920
        %v4922 = vpop.f32.mrf.mxu0
        %v4923 = vpop.f32.mrf.mxu0
        %v4924 = vadd.f32 %v3588, %v4923
        %v4925 = vpop.f32.mrf.mxu0
        %4926 = vmatprep.mubr.bf16.mxu0 0
        %4927 = vmatmul.mubr.bf16.gmra.mxu0 %v3951
        %v4928 = vpop.f32.mrf.mxu0
        %v4929 = vadd.f32 %v3588, %v4928
        %v4930 = vpop.f32.mrf.mxu0
        %v4931 = vpop.f32.mrf.mxu0
        %v4932 = vadd.f32 %v3588, %v4931
        %v4933 = vpop.f32.mrf.mxu0
        %4934 = vmatprep.mubr.bf16.mxu0 0
        %4935 = vmatmul.mubr.bf16.gmra.mxu0 %v3954
        %v4936 = vpop.f32.mrf.mxu0
        %v4937 = vadd.f32 %v3588, %v4936
        %v4938 = vpop.f32.mrf.mxu0
        %v4939 = vpop.f32.mrf.mxu0
        %v4940 = vadd.f32 %v3588, %v4939
        %v4941 = vpop.f32.mrf.mxu0
        %4942 = vmatprep.mubr.bf16.mxu0 0
        %4943 = vmatmul.mubr.bf16.gmra.mxu0 %v3957
        %v4944 = vpop.f32.mrf.mxu0
        %v4945 = vadd.f32 %v3588, %v4944
        %v4946 = vpop.f32.mrf.mxu0
        %v4947 = vpop.f32.mrf.mxu0
        %v4948 = vadd.f32 %v3588, %v4947
        %v4949 = vpop.f32.mrf.mxu0
        %4950 = vmatprep.mubr.bf16.mxu0 0
        %4951 = vmatmul.mubr.bf16.gmra.mxu0 %v3960
        %v4952 = vpop.f32.mrf.mxu0
        %v4953 = vadd.f32 %v3588, %v4952
        %v4954 = vpop.f32.mrf.mxu0
        %v4955 = vpop.f32.mrf.mxu0
        %v4956 = vadd.f32 %v3588, %v4955
        %v4957 = vpop.f32.mrf.mxu0
        %4958 = vmatprep.mubr.bf16.mxu0 0
        %4959 = vmatmul.mubr.bf16.gmra.mxu0 %v3963
        %v4960 = vpop.f32.mrf.mxu0
        %v4961 = vadd.f32 %v3588, %v4960
        %v4962 = vpop.f32.mrf.mxu0
        %v4963 = vpop.f32.mrf.mxu0
        %v4964 = vadd.f32 %v3588, %v4963
        %v4965 = vpop.f32.mrf.mxu0
        %4966 = vmatprep.mubr.bf16.mxu0 0
        %4967 = vmatmul.mubr.bf16.gmra.mxu0 %v3966
        %v4968 = vpop.f32.mrf.mxu0
        %v4969 = vadd.f32 %v3588, %v4968
        %v4970 = vpop.f32.mrf.mxu0
        %v4971 = vpop.f32.mrf.mxu0
        %v4972 = vadd.f32 %v3588, %v4971
        %v4973 = vpop.f32.mrf.mxu0
        %4974 = vmatprep.mubr.bf16.mxu0 0
        %4975 = vmatmul.mubr.bf16.gmra.mxu0 %v3969
        %v4976 = vpop.f32.mrf.mxu0
        %v4977 = vadd.f32 %v3588, %v4976
        %v4978 = vpop.f32.mrf.mxu0
        %v4979 = vpop.f32.mrf.mxu0
        %v4980 = vadd.f32 %v3588, %v4979
        %v4981 = vpop.f32.mrf.mxu0
        %4982 = vmatprep.mubr.bf16.mxu0 0
        %4983 = vmatmul.mubr.bf16.gmra.mxu0 %v3972
        %v4984 = vpop.f32.mrf.mxu0
        %v4985 = vadd.f32 %v3588, %v4984
        %v4986 = vpop.f32.mrf.mxu0
        %v4987 = vpop.f32.mrf.mxu0
        %v4988 = vadd.f32 %v3588, %v4987
        %v4989 = vpop.f32.mrf.mxu0
        %4990 = vmatprep.mubr.bf16.mxu0 0
        %4991 = vmatmul.mubr.bf16.gmra.mxu0 %v3975
        %v4992 = vpop.f32.mrf.mxu0
        %v4993 = vadd.f32 %v3588, %v4992
        %v4994 = vpop.f32.mrf.mxu0
        %v4995 = vpop.f32.mrf.mxu0
        %v4996 = vadd.f32 %v3588, %v4995
        %v4997 = vpop.f32.mrf.mxu0
        %4998 = vmatprep.mubr.bf16.mxu0 0
        %4999 = vmatmul.mubr.bf16.gmra.mxu0 %v3978
        %v5000 = vpop.f32.mrf.mxu0
        %v5001 = vadd.f32 %v3588, %v5000
        %v5002 = vpop.f32.mrf.mxu0
        %v5003 = vpop.f32.mrf.mxu0
        %v5004 = vadd.f32 %v3588, %v5003
        %v5005 = vpop.f32.mrf.mxu0
        %5006 = vmatprep.mubr.bf16.mxu0 0
        %5007 = vmatmul.mubr.bf16.gmra.mxu0 %v3981
        %v5008 = vpop.f32.mrf.mxu0
        %v5009 = vadd.f32 %v3588, %v5008
        %v5010 = vpop.f32.mrf.mxu0
        %v5011 = vpop.f32.mrf.mxu0
        %v5012 = vadd.f32 %v3588, %v5011
        %v5013 = vpop.f32.mrf.mxu0
        %5014 = vmatprep.mubr.bf16.mxu0 0
        %5015 = vmatmul.mubr.bf16.gmra.mxu0 %v3984
        %v5016 = vpop.f32.mrf.mxu0
        %v5017 = vadd.f32 %v3588, %v5016
        %v5018 = vpop.f32.mrf.mxu0
        %v5019 = vpop.f32.mrf.mxu0
        %v5020 = vadd.f32 %v3588, %v5019
        %v5021 = vpop.f32.mrf.mxu0
        %5022 = vmatprep.mubr.bf16.mxu0 0
        %5023 = vmatmul.mubr.bf16.gmra.mxu0 %v3987
        %v5024 = vpop.f32.mrf.mxu0
        %v5025 = vadd.f32 %v3588, %v5024
        %v5026 = vpop.f32.mrf.mxu0
        %v5027 = vpop.f32.mrf.mxu0
        %v5028 = vadd.f32 %v3588, %v5027
        %v5029 = vpop.f32.mrf.mxu0
        %5030 = vmatprep.mubr.bf16.mxu0 0
        %5031 = vmatmul.mubr.bf16.gmra.mxu0 %v3990
        %v5032 = vpop.f32.mrf.mxu0
        %v5033 = vadd.f32 %v3588, %v5032
        %v5034 = vpop.f32.mrf.mxu0
        %v5035 = vpop.f32.mrf.mxu0
        %v5036 = vadd.f32 %v3588, %v5035
        %v5037 = vpop.f32.mrf.mxu0
        %5038 = vmatprep.mubr.bf16.mxu0 0
        %5039 = vmatmul.mubr.bf16.gmra.mxu0 %v3993
        %v5040 = vpop.f32.mrf.mxu0
        %v5041 = vadd.f32 %v3588, %v5040
        %v5042 = vpop.f32.mrf.mxu0
        %v5043 = vpop.f32.mrf.mxu0
        %v5044 = vadd.f32 %v3588, %v5043
        %v5045 = vpop.f32.mrf.mxu0
        %5046 = vmatprep.mubr.bf16.mxu0 0
        %5047 = vmatmul.mubr.bf16.gmra.mxu0 %v3996
        %v5048 = vpop.f32.mrf.mxu0
        %v5049 = vadd.f32 %v3588, %v5048
        %v5050 = vpop.f32.mrf.mxu0
        %v5051 = vpop.f32.mrf.mxu0
        %v5052 = vadd.f32 %v3588, %v5051
        %v5053 = vpop.f32.mrf.mxu0
        %5054 = vdwg.mxu0
        %vm5055 = vcmp.ge.f32.partialorder %v4033, 0.0
        %vm5056 = vcmp.ge.f32.partialorder %v4036, 0.0
        %vm5057 = vcmp.ge.f32.partialorder %v4041, 0.0
        %vm5058 = vcmp.ge.f32.partialorder %v4044, 0.0
        %vm5059 = vcmp.ge.f32.partialorder %v4049, 0.0
        %vm5060 = vcmp.ge.f32.partialorder %v4052, 0.0
        %vm5061 = vcmp.ge.f32.partialorder %v4057, 0.0
        %vm5062 = vcmp.ge.f32.partialorder %v4060, 0.0
        %vm5063 = vcmp.ge.f32.partialorder %v4065, 0.0
        %vm5064 = vcmp.ge.f32.partialorder %v4068, 0.0
        %vm5065 = vcmp.ge.f32.partialorder %v4073, 0.0
        %vm5066 = vcmp.ge.f32.partialorder %v4076, 0.0
        %vm5067 = vcmp.ge.f32.partialorder %v4081, 0.0
        %vm5068 = vcmp.ge.f32.partialorder %v4084, 0.0
        %vm5069 = vcmp.ge.f32.partialorder %v4089, 0.0
        %vm5070 = vcmp.ge.f32.partialorder %v4092, 0.0
        %vm5071 = vcmp.ge.f32.partialorder %v4097, 0.0
        %vm5072 = vcmp.ge.f32.partialorder %v4100, 0.0
        %vm5073 = vcmp.ge.f32.partialorder %v4105, 0.0
        %vm5074 = vcmp.ge.f32.partialorder %v4108, 0.0
        %vm5075 = vcmp.ge.f32.partialorder %v4113, 0.0
        %vm5076 = vcmp.ge.f32.partialorder %v4116, 0.0
        %vm5077 = vcmp.ge.f32.partialorder %v4121, 0.0
        %vm5078 = vcmp.ge.f32.partialorder %v4124, 0.0
        %vm5079 = vcmp.ge.f32.partialorder %v4129, 0.0
        %vm5080 = vcmp.ge.f32.partialorder %v4132, 0.0
        %vm5081 = vcmp.ge.f32.partialorder %v4137, 0.0
        %vm5082 = vcmp.ge.f32.partialorder %v4140, 0.0
        %vm5083 = vcmp.ge.f32.partialorder %v4145, 0.0
        %vm5084 = vcmp.ge.f32.partialorder %v4148, 0.0
        %vm5085 = vcmp.ge.f32.partialorder %v4153, 0.0
        %vm5086 = vcmp.ge.f32.partialorder %v4156, 0.0
        %vm5087 = vcmp.ge.f32.partialorder %v4161, 0.0
        %vm5088 = vcmp.ge.f32.partialorder %v4164, 0.0
        %vm5089 = vcmp.ge.f32.partialorder %v4169, 0.0
        %vm5090 = vcmp.ge.f32.partialorder %v4172, 0.0
        %vm5091 = vcmp.ge.f32.partialorder %v4177, 0.0
        %vm5092 = vcmp.ge.f32.partialorder %v4180, 0.0
        %vm5093 = vcmp.ge.f32.partialorder %v4185, 0.0
        %vm5094 = vcmp.ge.f32.partialorder %v4188, 0.0
        %vm5095 = vcmp.ge.f32.partialorder %v4193, 0.0
        %vm5096 = vcmp.ge.f32.partialorder %v4196, 0.0
        %vm5097 = vcmp.ge.f32.partialorder %v4201, 0.0
        %vm5098 = vcmp.ge.f32.partialorder %v4204, 0.0
        %vm5099 = vcmp.ge.f32.partialorder %v4209, 0.0
        %vm5100 = vcmp.ge.f32.partialorder %v4212, 0.0
        %vm5101 = vcmp.ge.f32.partialorder %v4217, 0.0
        %vm5102 = vcmp.ge.f32.partialorder %v4220, 0.0
        %vm5103 = vcmp.ge.f32.partialorder %v4225, 0.0
        %vm5104 = vcmp.ge.f32.partialorder %v4228, 0.0
        %vm5105 = vcmp.ge.f32.partialorder %v4233, 0.0
        %vm5106 = vcmp.ge.f32.partialorder %v4236, 0.0
        %vm5107 = vcmp.ge.f32.partialorder %v4241, 0.0
        %vm5108 = vcmp.ge.f32.partialorder %v4244, 0.0
        %vm5109 = vcmp.ge.f32.partialorder %v4249, 0.0
        %vm5110 = vcmp.ge.f32.partialorder %v4252, 0.0
        %vm5111 = vcmp.ge.f32.partialorder %v4257, 0.0
        %vm5112 = vcmp.ge.f32.partialorder %v4260, 0.0
        %vm5113 = vcmp.ge.f32.partialorder %v4265, 0.0
        %vm5114 = vcmp.ge.f32.partialorder %v4268, 0.0
        %vm5115 = vcmp.ge.f32.partialorder %v4273, 0.0
        %vm5116 = vcmp.ge.f32.partialorder %v4276, 0.0
        %vm5117 = vcmp.ge.f32.partialorder %v4281, 0.0
        %vm5118 = vcmp.ge.f32.partialorder %v4284, 0.0
        %vm5119 = vcmp.ge.f32.partialorder %v4289, 0.0
        %vm5120 = vcmp.ge.f32.partialorder %v4292, 0.0
        %vm5121 = vcmp.ge.f32.partialorder %v4297, 0.0
        %vm5122 = vcmp.ge.f32.partialorder %v4300, 0.0
        %vm5123 = vcmp.ge.f32.partialorder %v4305, 0.0
        %vm5124 = vcmp.ge.f32.partialorder %v4308, 0.0
        %vm5125 = vcmp.ge.f32.partialorder %v4313, 0.0
        %vm5126 = vcmp.ge.f32.partialorder %v4316, 0.0
        %vm5127 = vcmp.ge.f32.partialorder %v4321, 0.0
        %vm5128 = vcmp.ge.f32.partialorder %v4324, 0.0
        %vm5129 = vcmp.ge.f32.partialorder %v4329, 0.0
        %vm5130 = vcmp.ge.f32.partialorder %v4332, 0.0
        %vm5131 = vcmp.ge.f32.partialorder %v4337, 0.0
        %vm5132 = vcmp.ge.f32.partialorder %v4340, 0.0
        %vm5133 = vcmp.ge.f32.partialorder %v4345, 0.0
        %vm5134 = vcmp.ge.f32.partialorder %v4348, 0.0
        %vm5135 = vcmp.ge.f32.partialorder %v4353, 0.0
        %vm5136 = vcmp.ge.f32.partialorder %v4356, 0.0
        %vm5137 = vcmp.ge.f32.partialorder %v4361, 0.0
        %vm5138 = vcmp.ge.f32.partialorder %v4364, 0.0
        %vm5139 = vcmp.ge.f32.partialorder %v4369, 0.0
        %vm5140 = vcmp.ge.f32.partialorder %v4372, 0.0
        %vm5141 = vcmp.ge.f32.partialorder %v4377, 0.0
        %vm5142 = vcmp.ge.f32.partialorder %v4380, 0.0
        %vm5143 = vcmp.ge.f32.partialorder %v4385, 0.0
        %vm5144 = vcmp.ge.f32.partialorder %v4388, 0.0
        %vm5145 = vcmp.ge.f32.partialorder %v4393, 0.0
        %vm5146 = vcmp.ge.f32.partialorder %v4396, 0.0
        %vm5147 = vcmp.ge.f32.partialorder %v4401, 0.0
        %vm5148 = vcmp.ge.f32.partialorder %v4404, 0.0
        %vm5149 = vcmp.ge.f32.partialorder %v4409, 0.0
        %vm5150 = vcmp.ge.f32.partialorder %v4412, 0.0
        %vm5151 = vcmp.ge.f32.partialorder %v4417, 0.0
        %vm5152 = vcmp.ge.f32.partialorder %v4420, 0.0
        %vm5153 = vcmp.ge.f32.partialorder %v4425, 0.0
        %vm5154 = vcmp.ge.f32.partialorder %v4428, 0.0
        %vm5155 = vcmp.ge.f32.partialorder %v4433, 0.0
        %vm5156 = vcmp.ge.f32.partialorder %v4436, 0.0
        %vm5157 = vcmp.ge.f32.partialorder %v4441, 0.0
        %vm5158 = vcmp.ge.f32.partialorder %v4444, 0.0
        %vm5159 = vcmp.ge.f32.partialorder %v4449, 0.0
        %vm5160 = vcmp.ge.f32.partialorder %v4452, 0.0
        %vm5161 = vcmp.ge.f32.partialorder %v4457, 0.0
        %vm5162 = vcmp.ge.f32.partialorder %v4460, 0.0
        %vm5163 = vcmp.ge.f32.partialorder %v4465, 0.0
        %vm5164 = vcmp.ge.f32.partialorder %v4468, 0.0
        %vm5165 = vcmp.ge.f32.partialorder %v4473, 0.0
        %vm5166 = vcmp.ge.f32.partialorder %v4476, 0.0
        %vm5167 = vcmp.ge.f32.partialorder %v4481, 0.0
        %vm5168 = vcmp.ge.f32.partialorder %v4484, 0.0
        %vm5169 = vcmp.ge.f32.partialorder %v4489, 0.0
        %vm5170 = vcmp.ge.f32.partialorder %v4492, 0.0
        %vm5171 = vcmp.ge.f32.partialorder %v4497, 0.0
        %vm5172 = vcmp.ge.f32.partialorder %v4500, 0.0
        %vm5173 = vcmp.ge.f32.partialorder %v4505, 0.0
        %vm5174 = vcmp.ge.f32.partialorder %v4508, 0.0
        %vm5175 = vcmp.ge.f32.partialorder %v4513, 0.0
        %vm5176 = vcmp.ge.f32.partialorder %v4516, 0.0
        %vm5177 = vcmp.ge.f32.partialorder %v4521, 0.0
        %vm5178 = vcmp.ge.f32.partialorder %v4524, 0.0
        %vm5179 = vcmp.ge.f32.partialorder %v4529, 0.0
        %vm5180 = vcmp.ge.f32.partialorder %v4532, 0.0
        %vm5181 = vcmp.ge.f32.partialorder %v4537, 0.0
        %vm5182 = vcmp.ge.f32.partialorder %v4540, 0.0
        %vm5183 = vcmp.ge.f32.partialorder %v4545, 0.0
        %vm5184 = vcmp.ge.f32.partialorder %v4548, 0.0
        %vm5185 = vcmp.ge.f32.partialorder %v4553, 0.0
        %vm5186 = vcmp.ge.f32.partialorder %v4556, 0.0
        %vm5187 = vcmp.ge.f32.partialorder %v4561, 0.0
        %vm5188 = vcmp.ge.f32.partialorder %v4564, 0.0
        %vm5189 = vcmp.ge.f32.partialorder %v4569, 0.0
        %vm5190 = vcmp.ge.f32.partialorder %v4572, 0.0
        %vm5191 = vcmp.ge.f32.partialorder %v4577, 0.0
        %vm5192 = vcmp.ge.f32.partialorder %v4580, 0.0
        %vm5193 = vcmp.ge.f32.partialorder %v4585, 0.0
        %vm5194 = vcmp.ge.f32.partialorder %v4588, 0.0
        %vm5195 = vcmp.ge.f32.partialorder %v4593, 0.0
        %vm5196 = vcmp.ge.f32.partialorder %v4596, 0.0
        %vm5197 = vcmp.ge.f32.partialorder %v4601, 0.0
        %vm5198 = vcmp.ge.f32.partialorder %v4604, 0.0
        %vm5199 = vcmp.ge.f32.partialorder %v4609, 0.0
        %vm5200 = vcmp.ge.f32.partialorder %v4612, 0.0
        %vm5201 = vcmp.ge.f32.partialorder %v4617, 0.0
        %vm5202 = vcmp.ge.f32.partialorder %v4620, 0.0
        %vm5203 = vcmp.ge.f32.partialorder %v4625, 0.0
        %vm5204 = vcmp.ge.f32.partialorder %v4628, 0.0
        %vm5205 = vcmp.ge.f32.partialorder %v4633, 0.0
        %vm5206 = vcmp.ge.f32.partialorder %v4636, 0.0
        %vm5207 = vcmp.ge.f32.partialorder %v4641, 0.0
        %vm5208 = vcmp.ge.f32.partialorder %v4644, 0.0
        %vm5209 = vcmp.ge.f32.partialorder %v4649, 0.0
        %vm5210 = vcmp.ge.f32.partialorder %v4652, 0.0
        %vm5211 = vcmp.ge.f32.partialorder %v4657, 0.0
        %vm5212 = vcmp.ge.f32.partialorder %v4660, 0.0
        %vm5213 = vcmp.ge.f32.partialorder %v4665, 0.0
        %vm5214 = vcmp.ge.f32.partialorder %v4668, 0.0
        %vm5215 = vcmp.ge.f32.partialorder %v4673, 0.0
        %vm5216 = vcmp.ge.f32.partialorder %v4676, 0.0
        %vm5217 = vcmp.ge.f32.partialorder %v4681, 0.0
        %vm5218 = vcmp.ge.f32.partialorder %v4684, 0.0
        %vm5219 = vcmp.ge.f32.partialorder %v4689, 0.0
        %vm5220 = vcmp.ge.f32.partialorder %v4692, 0.0
        %vm5221 = vcmp.ge.f32.partialorder %v4697, 0.0
        %vm5222 = vcmp.ge.f32.partialorder %v4700, 0.0
        %vm5223 = vcmp.ge.f32.partialorder %v4705, 0.0
        %vm5224 = vcmp.ge.f32.partialorder %v4708, 0.0
        %vm5225 = vcmp.ge.f32.partialorder %v4713, 0.0
        %vm5226 = vcmp.ge.f32.partialorder %v4716, 0.0
        %vm5227 = vcmp.ge.f32.partialorder %v4721, 0.0
        %vm5228 = vcmp.ge.f32.partialorder %v4724, 0.0
        %vm5229 = vcmp.ge.f32.partialorder %v4729, 0.0
        %vm5230 = vcmp.ge.f32.partialorder %v4732, 0.0
        %vm5231 = vcmp.ge.f32.partialorder %v4737, 0.0
        %vm5232 = vcmp.ge.f32.partialorder %v4740, 0.0
        %vm5233 = vcmp.ge.f32.partialorder %v4745, 0.0
        %vm5234 = vcmp.ge.f32.partialorder %v4748, 0.0
        %vm5235 = vcmp.ge.f32.partialorder %v4753, 0.0
        %vm5236 = vcmp.ge.f32.partialorder %v4756, 0.0
        %vm5237 = vcmp.ge.f32.partialorder %v4761, 0.0
        %vm5238 = vcmp.ge.f32.partialorder %v4764, 0.0
        %vm5239 = vcmp.ge.f32.partialorder %v4769, 0.0
        %vm5240 = vcmp.ge.f32.partialorder %v4772, 0.0
        %vm5241 = vcmp.ge.f32.partialorder %v4777, 0.0
        %vm5242 = vcmp.ge.f32.partialorder %v4780, 0.0
        %vm5243 = vcmp.ge.f32.partialorder %v4785, 0.0
        %vm5244 = vcmp.ge.f32.partialorder %v4788, 0.0
        %vm5245 = vcmp.ge.f32.partialorder %v4793, 0.0
        %vm5246 = vcmp.ge.f32.partialorder %v4796, 0.0
        %vm5247 = vcmp.ge.f32.partialorder %v4801, 0.0
        %vm5248 = vcmp.ge.f32.partialorder %v4804, 0.0
        %vm5249 = vcmp.ge.f32.partialorder %v4809, 0.0
        %vm5250 = vcmp.ge.f32.partialorder %v4812, 0.0
        %vm5251 = vcmp.ge.f32.partialorder %v4817, 0.0
        %vm5252 = vcmp.ge.f32.partialorder %v4820, 0.0
        %vm5253 = vcmp.ge.f32.partialorder %v4825, 0.0
        %vm5254 = vcmp.ge.f32.partialorder %v4828, 0.0
        %vm5255 = vcmp.ge.f32.partialorder %v4833, 0.0
        %vm5256 = vcmp.ge.f32.partialorder %v4836, 0.0
        %vm5257 = vcmp.ge.f32.partialorder %v4841, 0.0
        %vm5258 = vcmp.ge.f32.partialorder %v4844, 0.0
        %vm5259 = vcmp.ge.f32.partialorder %v4849, 0.0
        %vm5260 = vcmp.ge.f32.partialorder %v4852, 0.0
        %vm5261 = vcmp.ge.f32.partialorder %v4857, 0.0
        %vm5262 = vcmp.ge.f32.partialorder %v4860, 0.0
        %vm5263 = vcmp.ge.f32.partialorder %v4865, 0.0
        %vm5264 = vcmp.ge.f32.partialorder %v4868, 0.0
        %vm5265 = vcmp.ge.f32.partialorder %v4873, 0.0
        %vm5266 = vcmp.ge.f32.partialorder %v4876, 0.0
        %vm5267 = vcmp.ge.f32.partialorder %v4881, 0.0
        %vm5268 = vcmp.ge.f32.partialorder %v4884, 0.0
        %vm5269 = vcmp.ge.f32.partialorder %v4889, 0.0
        %vm5270 = vcmp.ge.f32.partialorder %v4892, 0.0
        %vm5271 = vcmp.ge.f32.partialorder %v4897, 0.0
        %vm5272 = vcmp.ge.f32.partialorder %v4900, 0.0
        %vm5273 = vcmp.ge.f32.partialorder %v4905, 0.0
        %vm5274 = vcmp.ge.f32.partialorder %v4908, 0.0
        %vm5275 = vcmp.ge.f32.partialorder %v4913, 0.0
        %vm5276 = vcmp.ge.f32.partialorder %v4916, 0.0
        %vm5277 = vcmp.ge.f32.partialorder %v4921, 0.0
        %vm5278 = vcmp.ge.f32.partialorder %v4924, 0.0
        %vm5279 = vcmp.ge.f32.partialorder %v4929, 0.0
        %vm5280 = vcmp.ge.f32.partialorder %v4932, 0.0
        %vm5281 = vcmp.ge.f32.partialorder %v4937, 0.0
        %vm5282 = vcmp.ge.f32.partialorder %v4940, 0.0
        %vm5283 = vcmp.ge.f32.partialorder %v4945, 0.0
        %vm5284 = vcmp.ge.f32.partialorder %v4948, 0.0
        %vm5285 = vcmp.ge.f32.partialorder %v4953, 0.0
        %vm5286 = vcmp.ge.f32.partialorder %v4956, 0.0
        %vm5287 = vcmp.ge.f32.partialorder %v4961, 0.0
        %vm5288 = vcmp.ge.f32.partialorder %v4964, 0.0
        %vm5289 = vcmp.ge.f32.partialorder %v4969, 0.0
        %vm5290 = vcmp.ge.f32.partialorder %v4972, 0.0
        %vm5291 = vcmp.ge.f32.partialorder %v4977, 0.0
        %vm5292 = vcmp.ge.f32.partialorder %v4980, 0.0
        %vm5293 = vcmp.ge.f32.partialorder %v4985, 0.0
        %vm5294 = vcmp.ge.f32.partialorder %v4988, 0.0
        %vm5295 = vcmp.ge.f32.partialorder %v4993, 0.0
        %vm5296 = vcmp.ge.f32.partialorder %v4996, 0.0
        %vm5297 = vcmp.ge.f32.partialorder %v5001, 0.0
        %vm5298 = vcmp.ge.f32.partialorder %v5004, 0.0
        %vm5299 = vcmp.ge.f32.partialorder %v5009, 0.0
        %vm5300 = vcmp.ge.f32.partialorder %v5012, 0.0
        %vm5301 = vcmp.ge.f32.partialorder %v5017, 0.0
        %vm5302 = vcmp.ge.f32.partialorder %v5020, 0.0
        %vm5303 = vcmp.ge.f32.partialorder %v5025, 0.0
        %vm5304 = vcmp.ge.f32.partialorder %v5028, 0.0
        %vm5305 = vcmp.ge.f32.partialorder %v5033, 0.0
        %vm5306 = vcmp.ge.f32.partialorder %v5036, 0.0
        %vm5307 = vcmp.ge.f32.partialorder %v5041, 0.0
        %vm5308 = vcmp.ge.f32.partialorder %v5044, 0.0
        %vm5309 = vcmp.ge.f32.partialorder %v5049, 0.0
        %vm5310 = vcmp.ge.f32.partialorder %v5052, 0.0
        %v5311 = vmul.f32 %v4033, 0.01
        %v5312 = vmul.f32 %v4036, 0.01
        %v5313 = vmul.f32 %v4041, 0.01
        %v5314 = vmul.f32 %v4044, 0.01
        %v5315 = vmul.f32 %v4049, 0.01
        %v5316 = vmul.f32 %v4052, 0.01
        %v5317 = vmul.f32 %v4057, 0.01
        %v5318 = vmul.f32 %v4060, 0.01
        %v5319 = vmul.f32 %v4065, 0.01
        %v5320 = vmul.f32 %v4068, 0.01
        %v5321 = vmul.f32 %v4073, 0.01
        %v5322 = vmul.f32 %v4076, 0.01
        %v5323 = vmul.f32 %v4081, 0.01
        %v5324 = vmul.f32 %v4084, 0.01
        %v5325 = vmul.f32 %v4089, 0.01
        %v5326 = vmul.f32 %v4092, 0.01
        %v5327 = vmul.f32 %v4097, 0.01
        %v5328 = vmul.f32 %v4100, 0.01
        %v5329 = vmul.f32 %v4105, 0.01
        %v5330 = vmul.f32 %v4108, 0.01
        %v5331 = vmul.f32 %v4113, 0.01
        %v5332 = vmul.f32 %v4116, 0.01
        %v5333 = vmul.f32 %v4121, 0.01
        %v5334 = vmul.f32 %v4124, 0.01
        %v5335 = vmul.f32 %v4129, 0.01
        %v5336 = vmul.f32 %v4132, 0.01
        %v5337 = vmul.f32 %v4137, 0.01
        %v5338 = vmul.f32 %v4140, 0.01
        %v5339 = vmul.f32 %v4145, 0.01
        %v5340 = vmul.f32 %v4148, 0.01
        %v5341 = vmul.f32 %v4153, 0.01
        %v5342 = vmul.f32 %v4156, 0.01
        %v5343 = vmul.f32 %v4161, 0.01
        %v5344 = vmul.f32 %v4164, 0.01
        %v5345 = vmul.f32 %v4169, 0.01
        %v5346 = vmul.f32 %v4172, 0.01
        %v5347 = vmul.f32 %v4177, 0.01
        %v5348 = vmul.f32 %v4180, 0.01
        %v5349 = vmul.f32 %v4185, 0.01
        %v5350 = vmul.f32 %v4188, 0.01
        %v5351 = vmul.f32 %v4193, 0.01
        %v5352 = vmul.f32 %v4196, 0.01
        %v5353 = vmul.f32 %v4201, 0.01
        %v5354 = vmul.f32 %v4204, 0.01
        %v5355 = vmul.f32 %v4209, 0.01
        %v5356 = vmul.f32 %v4212, 0.01
        %v5357 = vmul.f32 %v4217, 0.01
        %v5358 = vmul.f32 %v4220, 0.01
        %v5359 = vmul.f32 %v4225, 0.01
        %v5360 = vmul.f32 %v4228, 0.01
        %v5361 = vmul.f32 %v4233, 0.01
        %v5362 = vmul.f32 %v4236, 0.01
        %v5363 = vmul.f32 %v4241, 0.01
        %v5364 = vmul.f32 %v4244, 0.01
        %v5365 = vmul.f32 %v4249, 0.01
        %v5366 = vmul.f32 %v4252, 0.01
        %v5367 = vmul.f32 %v4257, 0.01
        %v5368 = vmul.f32 %v4260, 0.01
        %v5369 = vmul.f32 %v4265, 0.01
        %v5370 = vmul.f32 %v4268, 0.01
        %v5371 = vmul.f32 %v4273, 0.01
        %v5372 = vmul.f32 %v4276, 0.01
        %v5373 = vmul.f32 %v4281, 0.01
        %v5374 = vmul.f32 %v4284, 0.01
        %v5375 = vmul.f32 %v4289, 0.01
        %v5376 = vmul.f32 %v4292, 0.01
        %v5377 = vmul.f32 %v4297, 0.01
        %v5378 = vmul.f32 %v4300, 0.01
        %v5379 = vmul.f32 %v4305, 0.01
        %v5380 = vmul.f32 %v4308, 0.01
        %v5381 = vmul.f32 %v4313, 0.01
        %v5382 = vmul.f32 %v4316, 0.01
        %v5383 = vmul.f32 %v4321, 0.01
        %v5384 = vmul.f32 %v4324, 0.01
        %v5385 = vmul.f32 %v4329, 0.01
        %v5386 = vmul.f32 %v4332, 0.01
        %v5387 = vmul.f32 %v4337, 0.01
        %v5388 = vmul.f32 %v4340, 0.01
        %v5389 = vmul.f32 %v4345, 0.01
        %v5390 = vmul.f32 %v4348, 0.01
        %v5391 = vmul.f32 %v4353, 0.01
        %v5392 = vmul.f32 %v4356, 0.01
        %v5393 = vmul.f32 %v4361, 0.01
        %v5394 = vmul.f32 %v4364, 0.01
        %v5395 = vmul.f32 %v4369, 0.01
        %v5396 = vmul.f32 %v4372, 0.01
        %v5397 = vmul.f32 %v4377, 0.01
        %v5398 = vmul.f32 %v4380, 0.01
        %v5399 = vmul.f32 %v4385, 0.01
        %v5400 = vmul.f32 %v4388, 0.01
        %v5401 = vmul.f32 %v4393, 0.01
        %v5402 = vmul.f32 %v4396, 0.01
        %v5403 = vmul.f32 %v4401, 0.01
        %v5404 = vmul.f32 %v4404, 0.01
        %v5405 = vmul.f32 %v4409, 0.01
        %v5406 = vmul.f32 %v4412, 0.01
        %v5407 = vmul.f32 %v4417, 0.01
        %v5408 = vmul.f32 %v4420, 0.01
        %v5409 = vmul.f32 %v4425, 0.01
        %v5410 = vmul.f32 %v4428, 0.01
        %v5411 = vmul.f32 %v4433, 0.01
        %v5412 = vmul.f32 %v4436, 0.01
        %v5413 = vmul.f32 %v4441, 0.01
        %v5414 = vmul.f32 %v4444, 0.01
        %v5415 = vmul.f32 %v4449, 0.01
        %v5416 = vmul.f32 %v4452, 0.01
        %v5417 = vmul.f32 %v4457, 0.01
        %v5418 = vmul.f32 %v4460, 0.01
        %v5419 = vmul.f32 %v4465, 0.01
        %v5420 = vmul.f32 %v4468, 0.01
        %v5421 = vmul.f32 %v4473, 0.01
        %v5422 = vmul.f32 %v4476, 0.01
        %v5423 = vmul.f32 %v4481, 0.01
        %v5424 = vmul.f32 %v4484, 0.01
        %v5425 = vmul.f32 %v4489, 0.01
        %v5426 = vmul.f32 %v4492, 0.01
        %v5427 = vmul.f32 %v4497, 0.01
        %v5428 = vmul.f32 %v4500, 0.01
        %v5429 = vmul.f32 %v4505, 0.01
        %v5430 = vmul.f32 %v4508, 0.01
        %v5431 = vmul.f32 %v4513, 0.01
        %v5432 = vmul.f32 %v4516, 0.01
        %v5433 = vmul.f32 %v4521, 0.01
        %v5434 = vmul.f32 %v4524, 0.01
        %v5435 = vmul.f32 %v4529, 0.01
        %v5436 = vmul.f32 %v4532, 0.01
        %v5437 = vmul.f32 %v4537, 0.01
        %v5438 = vmul.f32 %v4540, 0.01
        %v5439 = vmul.f32 %v4545, 0.01
        %v5440 = vmul.f32 %v4548, 0.01
        %v5441 = vmul.f32 %v4553, 0.01
        %v5442 = vmul.f32 %v4556, 0.01
        %v5443 = vmul.f32 %v4561, 0.01
        %v5444 = vmul.f32 %v4564, 0.01
        %v5445 = vmul.f32 %v4569, 0.01
        %v5446 = vmul.f32 %v4572, 0.01
        %v5447 = vmul.f32 %v4577, 0.01
        %v5448 = vmul.f32 %v4580, 0.01
        %v5449 = vmul.f32 %v4585, 0.01
        %v5450 = vmul.f32 %v4588, 0.01
        %v5451 = vmul.f32 %v4593, 0.01
        %v5452 = vmul.f32 %v4596, 0.01
        %v5453 = vmul.f32 %v4601, 0.01
        %v5454 = vmul.f32 %v4604, 0.01
        %v5455 = vmul.f32 %v4609, 0.01
        %v5456 = vmul.f32 %v4612, 0.01
        %v5457 = vmul.f32 %v4617, 0.01
        %v5458 = vmul.f32 %v4620, 0.01
        %v5459 = vmul.f32 %v4625, 0.01
        %v5460 = vmul.f32 %v4628, 0.01
        %v5461 = vmul.f32 %v4633, 0.01
        %v5462 = vmul.f32 %v4636, 0.01
        %v5463 = vmul.f32 %v4641, 0.01
        %v5464 = vmul.f32 %v4644, 0.01
        %v5465 = vmul.f32 %v4649, 0.01
        %v5466 = vmul.f32 %v4652, 0.01
        %v5467 = vmul.f32 %v4657, 0.01
        %v5468 = vmul.f32 %v4660, 0.01
        %v5469 = vmul.f32 %v4665, 0.01
        %v5470 = vmul.f32 %v4668, 0.01
        %v5471 = vmul.f32 %v4673, 0.01
        %v5472 = vmul.f32 %v4676, 0.01
        %v5473 = vmul.f32 %v4681, 0.01
        %v5474 = vmul.f32 %v4684, 0.01
        %v5475 = vmul.f32 %v4689, 0.01
        %v5476 = vmul.f32 %v4692, 0.01
        %v5477 = vmul.f32 %v4697, 0.01
        %v5478 = vmul.f32 %v4700, 0.01
        %v5479 = vmul.f32 %v4705, 0.01
        %v5480 = vmul.f32 %v4708, 0.01
        %v5481 = vmul.f32 %v4713, 0.01
        %v5482 = vmul.f32 %v4716, 0.01
        %v5483 = vmul.f32 %v4721, 0.01
        %v5484 = vmul.f32 %v4724, 0.01
        %v5485 = vmul.f32 %v4729, 0.01
        %v5486 = vmul.f32 %v4732, 0.01
        %v5487 = vmul.f32 %v4737, 0.01
        %v5488 = vmul.f32 %v4740, 0.01
        %v5489 = vmul.f32 %v4745, 0.01
        %v5490 = vmul.f32 %v4748, 0.01
        %v5491 = vmul.f32 %v4753, 0.01
        %v5492 = vmul.f32 %v4756, 0.01
        %v5493 = vmul.f32 %v4761, 0.01
        %v5494 = vmul.f32 %v4764, 0.01
        %v5495 = vmul.f32 %v4769, 0.01
        %v5496 = vmul.f32 %v4772, 0.01
        %v5497 = vmul.f32 %v4777, 0.01
        %v5498 = vmul.f32 %v4780, 0.01
        %v5499 = vmul.f32 %v4785, 0.01
        %v5500 = vmul.f32 %v4788, 0.01
        %v5501 = vmul.f32 %v4793, 0.01
        %v5502 = vmul.f32 %v4796, 0.01
        %v5503 = vmul.f32 %v4801, 0.01
        %v5504 = vmul.f32 %v4804, 0.01
        %v5505 = vmul.f32 %v4809, 0.01
        %v5506 = vmul.f32 %v4812, 0.01
        %v5507 = vmul.f32 %v4817, 0.01
        %v5508 = vmul.f32 %v4820, 0.01
        %v5509 = vmul.f32 %v4825, 0.01
        %v5510 = vmul.f32 %v4828, 0.01
        %v5511 = vmul.f32 %v4833, 0.01
        %v5512 = vmul.f32 %v4836, 0.01
        %v5513 = vmul.f32 %v4841, 0.01
        %v5514 = vmul.f32 %v4844, 0.01
        %v5515 = vmul.f32 %v4849, 0.01
        %v5516 = vmul.f32 %v4852, 0.01
        %v5517 = vmul.f32 %v4857, 0.01
        %v5518 = vmul.f32 %v4860, 0.01
        %v5519 = vmul.f32 %v4865, 0.01
        %v5520 = vmul.f32 %v4868, 0.01
        %v5521 = vmul.f32 %v4873, 0.01
        %v5522 = vmul.f32 %v4876, 0.01
        %v5523 = vmul.f32 %v4881, 0.01
        %v5524 = vmul.f32 %v4884, 0.01
        %v5525 = vmul.f32 %v4889, 0.01
        %v5526 = vmul.f32 %v4892, 0.01
        %v5527 = vmul.f32 %v4897, 0.01
        %v5528 = vmul.f32 %v4900, 0.01
        %v5529 = vmul.f32 %v4905, 0.01
        %v5530 = vmul.f32 %v4908, 0.01
        %v5531 = vmul.f32 %v4913, 0.01
        %v5532 = vmul.f32 %v4916, 0.01
        %v5533 = vmul.f32 %v4921, 0.01
        %v5534 = vmul.f32 %v4924, 0.01
        %v5535 = vmul.f32 %v4929, 0.01
        %v5536 = vmul.f32 %v4932, 0.01
        %v5537 = vmul.f32 %v4937, 0.01
        %v5538 = vmul.f32 %v4940, 0.01
        %v5539 = vmul.f32 %v4945, 0.01
        %v5540 = vmul.f32 %v4948, 0.01
        %v5541 = vmul.f32 %v4953, 0.01
        %v5542 = vmul.f32 %v4956, 0.01
        %v5543 = vmul.f32 %v4961, 0.01
        %v5544 = vmul.f32 %v4964, 0.01
        %v5545 = vmul.f32 %v4969, 0.01
        %v5546 = vmul.f32 %v4972, 0.01
        %v5547 = vmul.f32 %v4977, 0.01
        %v5548 = vmul.f32 %v4980, 0.01
        %v5549 = vmul.f32 %v4985, 0.01
        %v5550 = vmul.f32 %v4988, 0.01
        %v5551 = vmul.f32 %v4993, 0.01
        %v5552 = vmul.f32 %v4996, 0.01
        %v5553 = vmul.f32 %v5001, 0.01
        %v5554 = vmul.f32 %v5004, 0.01
        %v5555 = vmul.f32 %v5009, 0.01
        %v5556 = vmul.f32 %v5012, 0.01
        %v5557 = vmul.f32 %v5017, 0.01
        %v5558 = vmul.f32 %v5020, 0.01
        %v5559 = vmul.f32 %v5025, 0.01
        %v5560 = vmul.f32 %v5028, 0.01
        %v5561 = vmul.f32 %v5033, 0.01
        %v5562 = vmul.f32 %v5036, 0.01
        %v5563 = vmul.f32 %v5041, 0.01
        %v5564 = vmul.f32 %v5044, 0.01
        %v5565 = vmul.f32 %v5049, 0.01
        %v5566 = vmul.f32 %v5052, 0.01
        %v5567 = vsel %vm5055, %v4033, %v5311
        %v5568 = vsel %vm5056, %v4036, %v5312
        %v5569 = vsel %vm5057, %v4041, %v5313
        %v5570 = vsel %vm5058, %v4044, %v5314
        %v5571 = vsel %vm5059, %v4049, %v5315
        %v5572 = vsel %vm5060, %v4052, %v5316
        %v5573 = vsel %vm5061, %v4057, %v5317
        %v5574 = vsel %vm5062, %v4060, %v5318
        %v5575 = vsel %vm5063, %v4065, %v5319
        %v5576 = vsel %vm5064, %v4068, %v5320
        %v5577 = vsel %vm5065, %v4073, %v5321
        %v5578 = vsel %vm5066, %v4076, %v5322
        %v5579 = vsel %vm5067, %v4081, %v5323
        %v5580 = vsel %vm5068, %v4084, %v5324
        %v5581 = vsel %vm5069, %v4089, %v5325
        %v5582 = vsel %vm5070, %v4092, %v5326
        %v5583 = vsel %vm5071, %v4097, %v5327
        %v5584 = vsel %vm5072, %v4100, %v5328
        %v5585 = vsel %vm5073, %v4105, %v5329
        %v5586 = vsel %vm5074, %v4108, %v5330
        %v5587 = vsel %vm5075, %v4113, %v5331
        %v5588 = vsel %vm5076, %v4116, %v5332
        %v5589 = vsel %vm5077, %v4121, %v5333
        %v5590 = vsel %vm5078, %v4124, %v5334
        %v5591 = vsel %vm5079, %v4129, %v5335
        %v5592 = vsel %vm5080, %v4132, %v5336
        %v5593 = vsel %vm5081, %v4137, %v5337
        %v5594 = vsel %vm5082, %v4140, %v5338
        %v5595 = vsel %vm5083, %v4145, %v5339
        %v5596 = vsel %vm5084, %v4148, %v5340
        %v5597 = vsel %vm5085, %v4153, %v5341
        %v5598 = vsel %vm5086, %v4156, %v5342
        %v5599 = vsel %vm5087, %v4161, %v5343
        %v5600 = vsel %vm5088, %v4164, %v5344
        %v5601 = vsel %vm5089, %v4169, %v5345
        %v5602 = vsel %vm5090, %v4172, %v5346
        %v5603 = vsel %vm5091, %v4177, %v5347
        %v5604 = vsel %vm5092, %v4180, %v5348
        %v5605 = vsel %vm5093, %v4185, %v5349
        %v5606 = vsel %vm5094, %v4188, %v5350
        %v5607 = vsel %vm5095, %v4193, %v5351
        %v5608 = vsel %vm5096, %v4196, %v5352
        %v5609 = vsel %vm5097, %v4201, %v5353
        %v5610 = vsel %vm5098, %v4204, %v5354
        %v5611 = vsel %vm5099, %v4209, %v5355
        %v5612 = vsel %vm5100, %v4212, %v5356
        %v5613 = vsel %vm5101, %v4217, %v5357
        %v5614 = vsel %vm5102, %v4220, %v5358
        %v5615 = vsel %vm5103, %v4225, %v5359
        %v5616 = vsel %vm5104, %v4228, %v5360
        %v5617 = vsel %vm5105, %v4233, %v5361
        %v5618 = vsel %vm5106, %v4236, %v5362
        %v5619 = vsel %vm5107, %v4241, %v5363
        %v5620 = vsel %vm5108, %v4244, %v5364
        %v5621 = vsel %vm5109, %v4249, %v5365
        %v5622 = vsel %vm5110, %v4252, %v5366
        %v5623 = vsel %vm5111, %v4257, %v5367
        %v5624 = vsel %vm5112, %v4260, %v5368
        %v5625 = vsel %vm5113, %v4265, %v5369
        %v5626 = vsel %vm5114, %v4268, %v5370
        %v5627 = vsel %vm5115, %v4273, %v5371
        %v5628 = vsel %vm5116, %v4276, %v5372
        %v5629 = vsel %vm5117, %v4281, %v5373
        %v5630 = vsel %vm5118, %v4284, %v5374
        %v5631 = vsel %vm5119, %v4289, %v5375
        %v5632 = vsel %vm5120, %v4292, %v5376
        %v5633 = vsel %vm5121, %v4297, %v5377
        %v5634 = vsel %vm5122, %v4300, %v5378
        %v5635 = vsel %vm5123, %v4305, %v5379
        %v5636 = vsel %vm5124, %v4308, %v5380
        %v5637 = vsel %vm5125, %v4313, %v5381
        %v5638 = vsel %vm5126, %v4316, %v5382
        %v5639 = vsel %vm5127, %v4321, %v5383
        %v5640 = vsel %vm5128, %v4324, %v5384
        %v5641 = vsel %vm5129, %v4329, %v5385
        %v5642 = vsel %vm5130, %v4332, %v5386
        %v5643 = vsel %vm5131, %v4337, %v5387
        %v5644 = vsel %vm5132, %v4340, %v5388
        %v5645 = vsel %vm5133, %v4345, %v5389
        %v5646 = vsel %vm5134, %v4348, %v5390
        %v5647 = vsel %vm5135, %v4353, %v5391
        %v5648 = vsel %vm5136, %v4356, %v5392
        %v5649 = vsel %vm5137, %v4361, %v5393
        %v5650 = vsel %vm5138, %v4364, %v5394
        %v5651 = vsel %vm5139, %v4369, %v5395
        %v5652 = vsel %vm5140, %v4372, %v5396
        %v5653 = vsel %vm5141, %v4377, %v5397
        %v5654 = vsel %vm5142, %v4380, %v5398
        %v5655 = vsel %vm5143, %v4385, %v5399
        %v5656 = vsel %vm5144, %v4388, %v5400
        %v5657 = vsel %vm5145, %v4393, %v5401
        %v5658 = vsel %vm5146, %v4396, %v5402
        %v5659 = vsel %vm5147, %v4401, %v5403
        %v5660 = vsel %vm5148, %v4404, %v5404
        %v5661 = vsel %vm5149, %v4409, %v5405
        %v5662 = vsel %vm5150, %v4412, %v5406
        %v5663 = vsel %vm5151, %v4417, %v5407
        %v5664 = vsel %vm5152, %v4420, %v5408
        %v5665 = vsel %vm5153, %v4425, %v5409
        %v5666 = vsel %vm5154, %v4428, %v5410
        %v5667 = vsel %vm5155, %v4433, %v5411
        %v5668 = vsel %vm5156, %v4436, %v5412
        %v5669 = vsel %vm5157, %v4441, %v5413
        %v5670 = vsel %vm5158, %v4444, %v5414
        %v5671 = vsel %vm5159, %v4449, %v5415
        %v5672 = vsel %vm5160, %v4452, %v5416
        %v5673 = vsel %vm5161, %v4457, %v5417
        %v5674 = vsel %vm5162, %v4460, %v5418
        %v5675 = vsel %vm5163, %v4465, %v5419
        %v5676 = vsel %vm5164, %v4468, %v5420
        %v5677 = vsel %vm5165, %v4473, %v5421
        %v5678 = vsel %vm5166, %v4476, %v5422
        %v5679 = vsel %vm5167, %v4481, %v5423
        %v5680 = vsel %vm5168, %v4484, %v5424
        %v5681 = vsel %vm5169, %v4489, %v5425
        %v5682 = vsel %vm5170, %v4492, %v5426
        %v5683 = vsel %vm5171, %v4497, %v5427
        %v5684 = vsel %vm5172, %v4500, %v5428
        %v5685 = vsel %vm5173, %v4505, %v5429
        %v5686 = vsel %vm5174, %v4508, %v5430
        %v5687 = vsel %vm5175, %v4513, %v5431
        %v5688 = vsel %vm5176, %v4516, %v5432
        %v5689 = vsel %vm5177, %v4521, %v5433
        %v5690 = vsel %vm5178, %v4524, %v5434
        %v5691 = vsel %vm5179, %v4529, %v5435
        %v5692 = vsel %vm5180, %v4532, %v5436
        %v5693 = vsel %vm5181, %v4537, %v5437
        %v5694 = vsel %vm5182, %v4540, %v5438
        %v5695 = vsel %vm5183, %v4545, %v5439
        %v5696 = vsel %vm5184, %v4548, %v5440
        %v5697 = vsel %vm5185, %v4553, %v5441
        %v5698 = vsel %vm5186, %v4556, %v5442
        %v5699 = vsel %vm5187, %v4561, %v5443
        %v5700 = vsel %vm5188, %v4564, %v5444
        %v5701 = vsel %vm5189, %v4569, %v5445
        %v5702 = vsel %vm5190, %v4572, %v5446
        %v5703 = vsel %vm5191, %v4577, %v5447
        %v5704 = vsel %vm5192, %v4580, %v5448
        %v5705 = vsel %vm5193, %v4585, %v5449
        %v5706 = vsel %vm5194, %v4588, %v5450
        %v5707 = vsel %vm5195, %v4593, %v5451
        %v5708 = vsel %vm5196, %v4596, %v5452
        %v5709 = vsel %vm5197, %v4601, %v5453
        %v5710 = vsel %vm5198, %v4604, %v5454
        %v5711 = vsel %vm5199, %v4609, %v5455
        %v5712 = vsel %vm5200, %v4612, %v5456
        %v5713 = vsel %vm5201, %v4617, %v5457
        %v5714 = vsel %vm5202, %v4620, %v5458
        %v5715 = vsel %vm5203, %v4625, %v5459
        %v5716 = vsel %vm5204, %v4628, %v5460
        %v5717 = vsel %vm5205, %v4633, %v5461
        %v5718 = vsel %vm5206, %v4636, %v5462
        %v5719 = vsel %vm5207, %v4641, %v5463
        %v5720 = vsel %vm5208, %v4644, %v5464
        %v5721 = vsel %vm5209, %v4649, %v5465
        %v5722 = vsel %vm5210, %v4652, %v5466
        %v5723 = vsel %vm5211, %v4657, %v5467
        %v5724 = vsel %vm5212, %v4660, %v5468
        %v5725 = vsel %vm5213, %v4665, %v5469
        %v5726 = vsel %vm5214, %v4668, %v5470
        %v5727 = vsel %vm5215, %v4673, %v5471
        %v5728 = vsel %vm5216, %v4676, %v5472
        %v5729 = vsel %vm5217, %v4681, %v5473
        %v5730 = vsel %vm5218, %v4684, %v5474
        %v5731 = vsel %vm5219, %v4689, %v5475
        %v5732 = vsel %vm5220, %v4692, %v5476
        %v5733 = vsel %vm5221, %v4697, %v5477
        %v5734 = vsel %vm5222, %v4700, %v5478
        %v5735 = vsel %vm5223, %v4705, %v5479
        %v5736 = vsel %vm5224, %v4708, %v5480
        %v5737 = vsel %vm5225, %v4713, %v5481
        %v5738 = vsel %vm5226, %v4716, %v5482
        %v5739 = vsel %vm5227, %v4721, %v5483
        %v5740 = vsel %vm5228, %v4724, %v5484
        %v5741 = vsel %vm5229, %v4729, %v5485
        %v5742 = vsel %vm5230, %v4732, %v5486
        %v5743 = vsel %vm5231, %v4737, %v5487
        %v5744 = vsel %vm5232, %v4740, %v5488
        %v5745 = vsel %vm5233, %v4745, %v5489
        %v5746 = vsel %vm5234, %v4748, %v5490
        %v5747 = vsel %vm5235, %v4753, %v5491
        %v5748 = vsel %vm5236, %v4756, %v5492
        %v5749 = vsel %vm5237, %v4761, %v5493
        %v5750 = vsel %vm5238, %v4764, %v5494
        %v5751 = vsel %vm5239, %v4769, %v5495
        %v5752 = vsel %vm5240, %v4772, %v5496
        %v5753 = vsel %vm5241, %v4777, %v5497
        %v5754 = vsel %vm5242, %v4780, %v5498
        %v5755 = vsel %vm5243, %v4785, %v5499
        %v5756 = vsel %vm5244, %v4788, %v5500
        %v5757 = vsel %vm5245, %v4793, %v5501
        %v5758 = vsel %vm5246, %v4796, %v5502
        %v5759 = vsel %vm5247, %v4801, %v5503
        %v5760 = vsel %vm5248, %v4804, %v5504
        %v5761 = vsel %vm5249, %v4809, %v5505
        %v5762 = vsel %vm5250, %v4812, %v5506
        %v5763 = vsel %vm5251, %v4817, %v5507
        %v5764 = vsel %vm5252, %v4820, %v5508
        %v5765 = vsel %vm5253, %v4825, %v5509
        %v5766 = vsel %vm5254, %v4828, %v5510
        %v5767 = vsel %vm5255, %v4833, %v5511
        %v5768 = vsel %vm5256, %v4836, %v5512
        %v5769 = vsel %vm5257, %v4841, %v5513
        %v5770 = vsel %vm5258, %v4844, %v5514
        %v5771 = vsel %vm5259, %v4849, %v5515
        %v5772 = vsel %vm5260, %v4852, %v5516
        %v5773 = vsel %vm5261, %v4857, %v5517
        %v5774 = vsel %vm5262, %v4860, %v5518
        %v5775 = vsel %vm5263, %v4865, %v5519
        %v5776 = vsel %vm5264, %v4868, %v5520
        %v5777 = vsel %vm5265, %v4873, %v5521
        %v5778 = vsel %vm5266, %v4876, %v5522
        %v5779 = vsel %vm5267, %v4881, %v5523
        %v5780 = vsel %vm5268, %v4884, %v5524
        %v5781 = vsel %vm5269, %v4889, %v5525
        %v5782 = vsel %vm5270, %v4892, %v5526
        %v5783 = vsel %vm5271, %v4897, %v5527
        %v5784 = vsel %vm5272, %v4900, %v5528
        %v5785 = vsel %vm5273, %v4905, %v5529
        %v5786 = vsel %vm5274, %v4908, %v5530
        %v5787 = vsel %vm5275, %v4913, %v5531
        %v5788 = vsel %vm5276, %v4916, %v5532
        %v5789 = vsel %vm5277, %v4921, %v5533
        %v5790 = vsel %vm5278, %v4924, %v5534
        %v5791 = vsel %vm5279, %v4929, %v5535
        %v5792 = vsel %vm5280, %v4932, %v5536
        %v5793 = vsel %vm5281, %v4937, %v5537
        %v5794 = vsel %vm5282, %v4940, %v5538
        %v5795 = vsel %vm5283, %v4945, %v5539
        %v5796 = vsel %vm5284, %v4948, %v5540
        %v5797 = vsel %vm5285, %v4953, %v5541
        %v5798 = vsel %vm5286, %v4956, %v5542
        %v5799 = vsel %vm5287, %v4961, %v5543
        %v5800 = vsel %vm5288, %v4964, %v5544
        %v5801 = vsel %vm5289, %v4969, %v5545
        %v5802 = vsel %vm5290, %v4972, %v5546
        %v5803 = vsel %vm5291, %v4977, %v5547
        %v5804 = vsel %vm5292, %v4980, %v5548
        %v5805 = vsel %vm5293, %v4985, %v5549
        %v5806 = vsel %vm5294, %v4988, %v5550
        %v5807 = vsel %vm5295, %v4993, %v5551
        %v5808 = vsel %vm5296, %v4996, %v5552
        %v5809 = vsel %vm5297, %v5001, %v5553
        %v5810 = vsel %vm5298, %v5004, %v5554
        %v5811 = vsel %vm5299, %v5009, %v5555
        %v5812 = vsel %vm5300, %v5012, %v5556
        %v5813 = vsel %vm5301, %v5017, %v5557
        %v5814 = vsel %vm5302, %v5020, %v5558
        %v5815 = vsel %vm5303, %v5025, %v5559
        %v5816 = vsel %vm5304, %v5028, %v5560
        %v5817 = vsel %vm5305, %v5033, %v5561
        %v5818 = vsel %vm5306, %v5036, %v5562
        %v5819 = vsel %vm5307, %v5041, %v5563
        %v5820 = vsel %vm5308, %v5044, %v5564
        %v5821 = vsel %vm5309, %v5049, %v5565
        %v5822 = vsel %vm5310, %v5052, %v5566
        %v5823 = vpack.c.bf16 %v5568, %v5567
        %v5824 = vpack.c.bf16 %v5570, %v5569
        %v5825 = vpack.c.bf16 %v5572, %v5571
        %v5826 = vpack.c.bf16 %v5574, %v5573
        %v5827 = vpack.c.bf16 %v5576, %v5575
        %v5828 = vpack.c.bf16 %v5578, %v5577
        %v5829 = vpack.c.bf16 %v5580, %v5579
        %v5830 = vpack.c.bf16 %v5582, %v5581
        %v5831 = vpack.c.bf16 %v5584, %v5583
        %v5832 = vpack.c.bf16 %v5586, %v5585
        %v5833 = vpack.c.bf16 %v5588, %v5587
        %v5834 = vpack.c.bf16 %v5590, %v5589
        %v5835 = vpack.c.bf16 %v5592, %v5591
        %v5836 = vpack.c.bf16 %v5594, %v5593
        %v5837 = vpack.c.bf16 %v5596, %v5595
        %v5838 = vpack.c.bf16 %v5598, %v5597
        %v5839 = vpack.c.bf16 %v5600, %v5599
        %v5840 = vpack.c.bf16 %v5602, %v5601
        %v5841 = vpack.c.bf16 %v5604, %v5603
        %v5842 = vpack.c.bf16 %v5606, %v5605
        %v5843 = vpack.c.bf16 %v5608, %v5607
        %v5844 = vpack.c.bf16 %v5610, %v5609
        %v5845 = vpack.c.bf16 %v5612, %v5611
        %v5846 = vpack.c.bf16 %v5614, %v5613
        %v5847 = vpack.c.bf16 %v5616, %v5615
        %v5848 = vpack.c.bf16 %v5618, %v5617
        %v5849 = vpack.c.bf16 %v5620, %v5619
        %v5850 = vpack.c.bf16 %v5622, %v5621
        %v5851 = vpack.c.bf16 %v5624, %v5623
        %v5852 = vpack.c.bf16 %v5626, %v5625
        %v5853 = vpack.c.bf16 %v5628, %v5627
        %v5854 = vpack.c.bf16 %v5630, %v5629
        %v5855 = vpack.c.bf16 %v5632, %v5631
        %v5856 = vpack.c.bf16 %v5634, %v5633
        %v5857 = vpack.c.bf16 %v5636, %v5635
        %v5858 = vpack.c.bf16 %v5638, %v5637
        %v5859 = vpack.c.bf16 %v5640, %v5639
        %v5860 = vpack.c.bf16 %v5642, %v5641
        %v5861 = vpack.c.bf16 %v5644, %v5643
        %v5862 = vpack.c.bf16 %v5646, %v5645
        %v5863 = vpack.c.bf16 %v5648, %v5647
        %v5864 = vpack.c.bf16 %v5650, %v5649
        %v5865 = vpack.c.bf16 %v5652, %v5651
        %v5866 = vpack.c.bf16 %v5654, %v5653
        %v5867 = vpack.c.bf16 %v5656, %v5655
        %v5868 = vpack.c.bf16 %v5658, %v5657
        %v5869 = vpack.c.bf16 %v5660, %v5659
        %v5870 = vpack.c.bf16 %v5662, %v5661
        %v5871 = vpack.c.bf16 %v5664, %v5663
        %v5872 = vpack.c.bf16 %v5666, %v5665
        %v5873 = vpack.c.bf16 %v5668, %v5667
        %v5874 = vpack.c.bf16 %v5670, %v5669
        %v5875 = vpack.c.bf16 %v5672, %v5671
        %v5876 = vpack.c.bf16 %v5674, %v5673
        %v5877 = vpack.c.bf16 %v5676, %v5675
        %v5878 = vpack.c.bf16 %v5678, %v5677
        %v5879 = vpack.c.bf16 %v5680, %v5679
        %v5880 = vpack.c.bf16 %v5682, %v5681
        %v5881 = vpack.c.bf16 %v5684, %v5683
        %v5882 = vpack.c.bf16 %v5686, %v5685
        %v5883 = vpack.c.bf16 %v5688, %v5687
        %v5884 = vpack.c.bf16 %v5690, %v5689
        %v5885 = vpack.c.bf16 %v5692, %v5691
        %v5886 = vpack.c.bf16 %v5694, %v5693
        %v5887 = vpack.c.bf16 %v5696, %v5695
        %v5888 = vpack.c.bf16 %v5698, %v5697
        %v5889 = vpack.c.bf16 %v5700, %v5699
        %v5890 = vpack.c.bf16 %v5702, %v5701
        %v5891 = vpack.c.bf16 %v5704, %v5703
        %v5892 = vpack.c.bf16 %v5706, %v5705
        %v5893 = vpack.c.bf16 %v5708, %v5707
        %v5894 = vpack.c.bf16 %v5710, %v5709
        %v5895 = vpack.c.bf16 %v5712, %v5711
        %v5896 = vpack.c.bf16 %v5714, %v5713
        %v5897 = vpack.c.bf16 %v5716, %v5715
        %v5898 = vpack.c.bf16 %v5718, %v5717
        %v5899 = vpack.c.bf16 %v5720, %v5719
        %v5900 = vpack.c.bf16 %v5722, %v5721
        %v5901 = vpack.c.bf16 %v5724, %v5723
        %v5902 = vpack.c.bf16 %v5726, %v5725
        %v5903 = vpack.c.bf16 %v5728, %v5727
        %v5904 = vpack.c.bf16 %v5730, %v5729
        %v5905 = vpack.c.bf16 %v5732, %v5731
        %v5906 = vpack.c.bf16 %v5734, %v5733
        %v5907 = vpack.c.bf16 %v5736, %v5735
        %v5908 = vpack.c.bf16 %v5738, %v5737
        %v5909 = vpack.c.bf16 %v5740, %v5739
        %v5910 = vpack.c.bf16 %v5742, %v5741
        %v5911 = vpack.c.bf16 %v5744, %v5743
        %v5912 = vpack.c.bf16 %v5746, %v5745
        %v5913 = vpack.c.bf16 %v5748, %v5747
        %v5914 = vpack.c.bf16 %v5750, %v5749
        %v5915 = vpack.c.bf16 %v5752, %v5751
        %v5916 = vpack.c.bf16 %v5754, %v5753
        %v5917 = vpack.c.bf16 %v5756, %v5755
        %v5918 = vpack.c.bf16 %v5758, %v5757
        %v5919 = vpack.c.bf16 %v5760, %v5759
        %v5920 = vpack.c.bf16 %v5762, %v5761
        %v5921 = vpack.c.bf16 %v5764, %v5763
        %v5922 = vpack.c.bf16 %v5766, %v5765
        %v5923 = vpack.c.bf16 %v5768, %v5767
        %v5924 = vpack.c.bf16 %v5770, %v5769
        %v5925 = vpack.c.bf16 %v5772, %v5771
        %v5926 = vpack.c.bf16 %v5774, %v5773
        %v5927 = vpack.c.bf16 %v5776, %v5775
        %v5928 = vpack.c.bf16 %v5778, %v5777
        %v5929 = vpack.c.bf16 %v5780, %v5779
        %v5930 = vpack.c.bf16 %v5782, %v5781
        %v5931 = vpack.c.bf16 %v5784, %v5783
        %v5932 = vpack.c.bf16 %v5786, %v5785
        %v5933 = vpack.c.bf16 %v5788, %v5787
        %v5934 = vpack.c.bf16 %v5790, %v5789
        %v5935 = vpack.c.bf16 %v5792, %v5791
        %v5936 = vpack.c.bf16 %v5794, %v5793
        %v5937 = vpack.c.bf16 %v5796, %v5795
        %v5938 = vpack.c.bf16 %v5798, %v5797
        %v5939 = vpack.c.bf16 %v5800, %v5799
        %v5940 = vpack.c.bf16 %v5802, %v5801
        %v5941 = vpack.c.bf16 %v5804, %v5803
        %v5942 = vpack.c.bf16 %v5806, %v5805
        %v5943 = vpack.c.bf16 %v5808, %v5807
        %v5944 = vpack.c.bf16 %v5810, %v5809
        %v5945 = vpack.c.bf16 %v5812, %v5811
        %v5946 = vpack.c.bf16 %v5814, %v5813
        %v5947 = vpack.c.bf16 %v5816, %v5815
        %v5948 = vpack.c.bf16 %v5818, %v5817
        %v5949 = vpack.c.bf16 %v5820, %v5819
        %v5950 = vpack.c.bf16 %v5822, %v5821
        %v5951 = vld [vmem:[%s5] sm:$0xf]
        %v5952 = vld [vmem:[%s5 + $0x4] sm:$0xf]
        %v5953 = vld [vmem:[%s5 + $0x8] sm:$0xf]
        %v5954 = vld [vmem:[%s5 + $0xc] sm:$0xf]
        %v5955 = vld [vmem:[%s5 + $0x10] sm:$0xf]
        %v5956 = vld [vmem:[%s5 + $0x14] sm:$0xf]
        %v5957 = vld [vmem:[%s5 + $0x18] sm:$0xf]
        %v5958 = vld [vmem:[%s5 + $0x1c] sm:$0xf]
        %v5959 = vld [vmem:[%s5 + $0x20] sm:$0xf]
        %v5960 = vld [vmem:[%s5 + $0x24] sm:$0xf]
        %v5961 = vld [vmem:[%s5 + $0x28] sm:$0xf]
        %v5962 = vld [vmem:[%s5 + $0x2c] sm:$0xf]
        %v5963 = vld [vmem:[%s6] sm:$0x1]
        %v5965 = vlaneseq
        %v5966 = vshrl.u32 %v5965, 7
        %v5967 = vsub.s32 0, %v5966
        %v5968 = vrot.slane %v5963, %v5967
        %v5982 = vunpack.c.l.b16 %v5951
        %v5983 = vunpack.c.l.b16 %v5952
        %v5984 = vunpack.c.l.b16 %v5953
        %v5985 = vunpack.c.l.b16 %v5954
        %v5986 = vunpack.c.l.b16 %v5955
        %v5987 = vunpack.c.l.b16 %v5956
        %v5988 = vunpack.c.l.b16 %v5957
        %v5989 = vunpack.c.l.b16 %v5958
        %v5990 = vunpack.c.l.b16 %v5959
        %v5991 = vunpack.c.l.b16 %v5960
        %v5992 = vunpack.c.l.b16 %v5961
        %v5993 = vunpack.c.l.b16 %v5962
        %v5994 = vpack.c.b16 %v5983, %v5982
        %v5995 = vpack.c.b16 %v5985, %v5984
        %v5996 = vpack.c.b16 %v5987, %v5986
        %v5997 = vpack.c.b16 %v5989, %v5988
        %v5998 = vpack.c.b16 %v5991, %v5990
        %v5999 = vpack.c.b16 %v5993, %v5992
        %vm6006 = vcmask 785408
        %v6008 = vsel %vm6006, %v5823, 0
        %v6011 = vsel %vm6006, %v5824, 0
        %v6014 = vsel %vm6006, %v5825, 0
        %v6017 = vsel %vm6006, %v5826, 0
        %v6020 = vsel %vm6006, %v5827, 0
        %v6023 = vsel %vm6006, %v5828, 0
        %v6026 = vsel %vm6006, %v5829, 0
        %v6029 = vsel %vm6006, %v5830, 0
        %v6032 = vsel %vm6006, %v5831, 0
        %v6035 = vsel %vm6006, %v5832, 0
        %v6038 = vsel %vm6006, %v5833, 0
        %v6041 = vsel %vm6006, %v5834, 0
        %v6044 = vsel %vm6006, %v5835, 0
        %v6047 = vsel %vm6006, %v5836, 0
        %v6050 = vsel %vm6006, %v5837, 0
        %v6053 = vsel %vm6006, %v5838, 0
        %v6056 = vsel %vm6006, %v5839, 0
        %v6059 = vsel %vm6006, %v5840, 0
        %v6062 = vsel %vm6006, %v5841, 0
        %v6065 = vsel %vm6006, %v5842, 0
        %v6068 = vsel %vm6006, %v5843, 0
        %v6071 = vsel %vm6006, %v5844, 0
        %v6074 = vsel %vm6006, %v5845, 0
        %v6077 = vsel %vm6006, %v5846, 0
        %v6080 = vsel %vm6006, %v5847, 0
        %v6083 = vsel %vm6006, %v5848, 0
        %v6086 = vsel %vm6006, %v5849, 0
        %v6089 = vsel %vm6006, %v5850, 0
        %v6092 = vsel %vm6006, %v5851, 0
        %v6095 = vsel %vm6006, %v5852, 0
        %v6098 = vsel %vm6006, %v5853, 0
        %v6101 = vsel %vm6006, %v5854, 0
        %v6104 = vsel %vm6006, %v5855, 0
        %v6107 = vsel %vm6006, %v5856, 0
        %v6110 = vsel %vm6006, %v5857, 0
        %v6113 = vsel %vm6006, %v5858, 0
        %v6116 = vsel %vm6006, %v5859, 0
        %v6119 = vsel %vm6006, %v5860, 0
        %v6122 = vsel %vm6006, %v5861, 0
        %v6125 = vsel %vm6006, %v5862, 0
        %v6128 = vsel %vm6006, %v5863, 0
        %v6131 = vsel %vm6006, %v5864, 0
        %v6134 = vsel %vm6006, %v5865, 0
        %v6137 = vsel %vm6006, %v5866, 0
        %v6140 = vsel %vm6006, %v5867, 0
        %v6143 = vsel %vm6006, %v5868, 0
        %v6146 = vsel %vm6006, %v5869, 0
        %v6149 = vsel %vm6006, %v5870, 0
        %v6152 = vsel %vm6006, %v5871, 0
        %v6155 = vsel %vm6006, %v5872, 0
        %v6158 = vsel %vm6006, %v5873, 0
        %v6161 = vsel %vm6006, %v5874, 0
        %v6164 = vsel %vm6006, %v5875, 0
        %v6167 = vsel %vm6006, %v5876, 0
        %v6170 = vsel %vm6006, %v5877, 0
        %v6173 = vsel %vm6006, %v5878, 0
        %v6176 = vsel %vm6006, %v5879, 0
        %v6179 = vsel %vm6006, %v5880, 0
        %v6182 = vsel %vm6006, %v5881, 0
        %v6185 = vsel %vm6006, %v5882, 0
        %v6188 = vsel %vm6006, %v5883, 0
        %v6191 = vsel %vm6006, %v5884, 0
        %v6194 = vsel %vm6006, %v5885, 0
        %v6197 = vsel %vm6006, %v5886, 0
        %v6200 = vsel %vm6006, %v5887, 0
        %v6203 = vsel %vm6006, %v5888, 0
        %v6206 = vsel %vm6006, %v5889, 0
        %v6209 = vsel %vm6006, %v5890, 0
        %v6212 = vsel %vm6006, %v5891, 0
        %v6215 = vsel %vm6006, %v5892, 0
        %v6218 = vsel %vm6006, %v5893, 0
        %v6221 = vsel %vm6006, %v5894, 0
        %v6224 = vsel %vm6006, %v5895, 0
        %v6227 = vsel %vm6006, %v5896, 0
        %v6230 = vsel %vm6006, %v5897, 0
        %v6233 = vsel %vm6006, %v5898, 0
        %v6236 = vsel %vm6006, %v5899, 0
        %v6239 = vsel %vm6006, %v5900, 0
        %v6242 = vsel %vm6006, %v5901, 0
        %v6245 = vsel %vm6006, %v5902, 0
        %v6248 = vsel %vm6006, %v5903, 0
        %v6251 = vsel %vm6006, %v5904, 0
        %v6254 = vsel %vm6006, %v5905, 0
        %v6257 = vsel %vm6006, %v5906, 0
        %v6260 = vsel %vm6006, %v5907, 0
        %v6263 = vsel %vm6006, %v5908, 0
        %v6266 = vsel %vm6006, %v5909, 0
        %v6269 = vsel %vm6006, %v5910, 0
        %v6272 = vsel %vm6006, %v5911, 0
        %v6275 = vsel %vm6006, %v5912, 0
        %v6278 = vsel %vm6006, %v5913, 0
        %v6281 = vsel %vm6006, %v5914, 0
        %v6284 = vsel %vm6006, %v5915, 0
        %v6287 = vsel %vm6006, %v5916, 0
        %v6290 = vsel %vm6006, %v5917, 0
        %v6293 = vsel %vm6006, %v5918, 0
        %v6296 = vsel %vm6006, %v5919, 0
        %v6299 = vsel %vm6006, %v5920, 0
        %v6302 = vsel %vm6006, %v5921, 0
        %v6305 = vsel %vm6006, %v5922, 0
        %v6308 = vsel %vm6006, %v5923, 0
        %v6311 = vsel %vm6006, %v5924, 0
        %v6314 = vsel %vm6006, %v5925, 0
        %v6317 = vsel %vm6006, %v5926, 0
        %v6320 = vsel %vm6006, %v5927, 0
        %v6323 = vsel %vm6006, %v5928, 0
        %v6326 = vsel %vm6006, %v5929, 0
        %v6329 = vsel %vm6006, %v5930, 0
        %v6332 = vsel %vm6006, %v5931, 0
        %v6335 = vsel %vm6006, %v5932, 0
        %v6338 = vsel %vm6006, %v5933, 0
        %v6341 = vsel %vm6006, %v5934, 0
        %v6344 = vsel %vm6006, %v5935, 0
        %v6347 = vsel %vm6006, %v5936, 0
        %v6350 = vsel %vm6006, %v5937, 0
        %v6353 = vsel %vm6006, %v5938, 0
        %v6356 = vsel %vm6006, %v5939, 0
        %v6359 = vsel %vm6006, %v5940, 0
        %v6362 = vsel %vm6006, %v5941, 0
        %v6365 = vsel %vm6006, %v5942, 0
        %v6368 = vsel %vm6006, %v5943, 0
        %v6371 = vsel %vm6006, %v5944, 0
        %v6374 = vsel %vm6006, %v5945, 0
        %v6377 = vsel %vm6006, %v5946, 0
        %v6380 = vsel %vm6006, %v5947, 0
        %v6383 = vsel %vm6006, %v5948, 0
        %v6386 = vsel %vm6006, %v5949, 0
        %v6389 = vsel %vm6006, %v5950, 0
        %6391 = vmatprep.subr.bf16.mxu0 0
        %6392 = vmatpush1.bf16.msra.mxu0 0
        %6393 = vmatprep.subr.bf16.mxu0 0
        %6394 = vmatpush1.bf16.msra.mxu0 0
        %6395 = vmatprep.subr.bf16.mxu0 0
        %6396 = vmatpush1.bf16.msra.mxu0 %v5999
        %6397 = vmatprep.subr.bf16.mxu0 0
        %6398 = vmatpush1.bf16.msra.mxu0 %v5998
        %6399 = vmatprep.subr.bf16.mxu0 0
        %6400 = vmatpush1.bf16.msra.mxu0 %v5997
        %6401 = vmatprep.subr.bf16.mxu0 0
        %6402 = vmatpush1.bf16.msra.mxu0 %v5996
        %6403 = vmatprep.subr.bf16.mxu0 0
        %6404 = vmatpush1.bf16.msra.mxu0 %v5995
        %6405 = vmatprep.subr.bf16.mxu0 0
        %6406 = vmatpush1.bf16.msra.mxu0 %v5994
        %6407 = vmatprep.subr.bf16.mxu0 0
        %6408 = vmatpush2.bf16.msra.mxu0 0
        %6409 = vmatprep.subr.bf16.mxu0 0
        %6410 = vmatpush2.bf16.msra.mxu0 0
        %6411 = vmatprep.subr.bf16.mxu0 0
        %6412 = vmatpush2.bf16.msra.mxu0 0
        %6413 = vmatprep.subr.bf16.mxu0 0
        %6414 = vmatpush2.bf16.msra.mxu0 0
        %6415 = vmatprep.subr.bf16.mxu0 0
        %6416 = vmatpush2.bf16.msra.mxu0 0
        %6417 = vmatprep.subr.bf16.mxu0 0
        %6418 = vmatpush2.bf16.msra.mxu0 0
        %6419 = vmatprep.subr.bf16.mxu0 0
        %6420 = vmatpush2.bf16.msra.mxu0 0
        %6421 = vmatprep.subr.bf16.mxu0 0
        %6422 = vmatpush2.bf16.msra.mxu0 0
        %6423 = vmatprep.mubr.bf16.mxu0 0
        %6424 = vmatmul.mubr.bf16.gmra.mxu0 %v6008
        %v6425 = vpop.f32.mrf.mxu0
        %v6426 = vadd.f32 %v5968, %v6425
        %v6427 = vpop.f32.mrf.mxu0
        %v6428 = vpop.f32.mrf.mxu0
        %v6429 = vadd.f32 %v5968, %v6428
        %v6430 = vpop.f32.mrf.mxu0
        %6431 = vmatprep.mubr.bf16.mxu0 0
        %6432 = vmatmul.mubr.bf16.gmra.mxu0 %v6011
        %v6433 = vpop.f32.mrf.mxu0
        %v6434 = vadd.f32 %v5968, %v6433
        %v6435 = vpop.f32.mrf.mxu0
        %v6436 = vpop.f32.mrf.mxu0
        %v6437 = vadd.f32 %v5968, %v6436
        %v6438 = vpop.f32.mrf.mxu0
        %6439 = vmatprep.mubr.bf16.mxu0 0
        %6440 = vmatmul.mubr.bf16.gmra.mxu0 %v6014
        %v6441 = vpop.f32.mrf.mxu0
        %v6442 = vadd.f32 %v5968, %v6441
        %v6443 = vpop.f32.mrf.mxu0
        %v6444 = vpop.f32.mrf.mxu0
        %v6445 = vadd.f32 %v5968, %v6444
        %v6446 = vpop.f32.mrf.mxu0
        %6447 = vmatprep.mubr.bf16.mxu0 0
        %6448 = vmatmul.mubr.bf16.gmra.mxu0 %v6017
        %v6449 = vpop.f32.mrf.mxu0
        %v6450 = vadd.f32 %v5968, %v6449
        %v6451 = vpop.f32.mrf.mxu0
        %v6452 = vpop.f32.mrf.mxu0
        %v6453 = vadd.f32 %v5968, %v6452
        %v6454 = vpop.f32.mrf.mxu0
        %6455 = vmatprep.mubr.bf16.mxu0 0
        %6456 = vmatmul.mubr.bf16.gmra.mxu0 %v6020
        %v6457 = vpop.f32.mrf.mxu0
        %v6458 = vadd.f32 %v5968, %v6457
        %v6459 = vpop.f32.mrf.mxu0
        %v6460 = vpop.f32.mrf.mxu0
        %v6461 = vadd.f32 %v5968, %v6460
        %v6462 = vpop.f32.mrf.mxu0
        %6463 = vmatprep.mubr.bf16.mxu0 0
        %6464 = vmatmul.mubr.bf16.gmra.mxu0 %v6023
        %v6465 = vpop.f32.mrf.mxu0
        %v6466 = vadd.f32 %v5968, %v6465
        %v6467 = vpop.f32.mrf.mxu0
        %v6468 = vpop.f32.mrf.mxu0
        %v6469 = vadd.f32 %v5968, %v6468
        %v6470 = vpop.f32.mrf.mxu0
        %6471 = vmatprep.mubr.bf16.mxu0 0
        %6472 = vmatmul.mubr.bf16.gmra.mxu0 %v6026
        %v6473 = vpop.f32.mrf.mxu0
        %v6474 = vadd.f32 %v5968, %v6473
        %v6475 = vpop.f32.mrf.mxu0
        %v6476 = vpop.f32.mrf.mxu0
        %v6477 = vadd.f32 %v5968, %v6476
        %v6478 = vpop.f32.mrf.mxu0
        %6479 = vmatprep.mubr.bf16.mxu0 0
        %6480 = vmatmul.mubr.bf16.gmra.mxu0 %v6029
        %v6481 = vpop.f32.mrf.mxu0
        %v6482 = vadd.f32 %v5968, %v6481
        %v6483 = vpop.f32.mrf.mxu0
        %v6484 = vpop.f32.mrf.mxu0
        %v6485 = vadd.f32 %v5968, %v6484
        %v6486 = vpop.f32.mrf.mxu0
        %6487 = vmatprep.mubr.bf16.mxu0 0
        %6488 = vmatmul.mubr.bf16.gmra.mxu0 %v6032
        %v6489 = vpop.f32.mrf.mxu0
        %v6490 = vadd.f32 %v5968, %v6489
        %v6491 = vpop.f32.mrf.mxu0
        %v6492 = vpop.f32.mrf.mxu0
        %v6493 = vadd.f32 %v5968, %v6492
        %v6494 = vpop.f32.mrf.mxu0
        %6495 = vmatprep.mubr.bf16.mxu0 0
        %6496 = vmatmul.mubr.bf16.gmra.mxu0 %v6035
        %v6497 = vpop.f32.mrf.mxu0
        %v6498 = vadd.f32 %v5968, %v6497
        %v6499 = vpop.f32.mrf.mxu0
        %v6500 = vpop.f32.mrf.mxu0
        %v6501 = vadd.f32 %v5968, %v6500
        %v6502 = vpop.f32.mrf.mxu0
        %6503 = vmatprep.mubr.bf16.mxu0 0
        %6504 = vmatmul.mubr.bf16.gmra.mxu0 %v6038
        %v6505 = vpop.f32.mrf.mxu0
        %v6506 = vadd.f32 %v5968, %v6505
        %v6507 = vpop.f32.mrf.mxu0
        %v6508 = vpop.f32.mrf.mxu0
        %v6509 = vadd.f32 %v5968, %v6508
        %v6510 = vpop.f32.mrf.mxu0
        %6511 = vmatprep.mubr.bf16.mxu0 0
        %6512 = vmatmul.mubr.bf16.gmra.mxu0 %v6041
        %v6513 = vpop.f32.mrf.mxu0
        %v6514 = vadd.f32 %v5968, %v6513
        %v6515 = vpop.f32.mrf.mxu0
        %v6516 = vpop.f32.mrf.mxu0
        %v6517 = vadd.f32 %v5968, %v6516
        %v6518 = vpop.f32.mrf.mxu0
        %6519 = vmatprep.mubr.bf16.mxu0 0
        %6520 = vmatmul.mubr.bf16.gmra.mxu0 %v6044
        %v6521 = vpop.f32.mrf.mxu0
        %v6522 = vadd.f32 %v5968, %v6521
        %v6523 = vpop.f32.mrf.mxu0
        %v6524 = vpop.f32.mrf.mxu0
        %v6525 = vadd.f32 %v5968, %v6524
        %v6526 = vpop.f32.mrf.mxu0
        %6527 = vmatprep.mubr.bf16.mxu0 0
        %6528 = vmatmul.mubr.bf16.gmra.mxu0 %v6047
        %v6529 = vpop.f32.mrf.mxu0
        %v6530 = vadd.f32 %v5968, %v6529
        %v6531 = vpop.f32.mrf.mxu0
        %v6532 = vpop.f32.mrf.mxu0
        %v6533 = vadd.f32 %v5968, %v6532
        %v6534 = vpop.f32.mrf.mxu0
        %6535 = vmatprep.mubr.bf16.mxu0 0
        %6536 = vmatmul.mubr.bf16.gmra.mxu0 %v6050
        %v6537 = vpop.f32.mrf.mxu0
        %v6538 = vadd.f32 %v5968, %v6537
        %v6539 = vpop.f32.mrf.mxu0
        %v6540 = vpop.f32.mrf.mxu0
        %v6541 = vadd.f32 %v5968, %v6540
        %v6542 = vpop.f32.mrf.mxu0
        %6543 = vmatprep.mubr.bf16.mxu0 0
        %6544 = vmatmul.mubr.bf16.gmra.mxu0 %v6053
        %v6545 = vpop.f32.mrf.mxu0
        %v6546 = vadd.f32 %v5968, %v6545
        %v6547 = vpop.f32.mrf.mxu0
        %v6548 = vpop.f32.mrf.mxu0
        %v6549 = vadd.f32 %v5968, %v6548
        %v6550 = vpop.f32.mrf.mxu0
        %6551 = vmatprep.mubr.bf16.mxu0 0
        %6552 = vmatmul.mubr.bf16.gmra.mxu0 %v6056
        %v6553 = vpop.f32.mrf.mxu0
        %v6554 = vadd.f32 %v5968, %v6553
        %v6555 = vpop.f32.mrf.mxu0
        %v6556 = vpop.f32.mrf.mxu0
        %v6557 = vadd.f32 %v5968, %v6556
        %v6558 = vpop.f32.mrf.mxu0
        %6559 = vmatprep.mubr.bf16.mxu0 0
        %6560 = vmatmul.mubr.bf16.gmra.mxu0 %v6059
        %v6561 = vpop.f32.mrf.mxu0
        %v6562 = vadd.f32 %v5968, %v6561
        %v6563 = vpop.f32.mrf.mxu0
        %v6564 = vpop.f32.mrf.mxu0
        %v6565 = vadd.f32 %v5968, %v6564
        %v6566 = vpop.f32.mrf.mxu0
        %6567 = vmatprep.mubr.bf16.mxu0 0
        %6568 = vmatmul.mubr.bf16.gmra.mxu0 %v6062
        %v6569 = vpop.f32.mrf.mxu0
        %v6570 = vadd.f32 %v5968, %v6569
        %v6571 = vpop.f32.mrf.mxu0
        %v6572 = vpop.f32.mrf.mxu0
        %v6573 = vadd.f32 %v5968, %v6572
        %v6574 = vpop.f32.mrf.mxu0
        %6575 = vmatprep.mubr.bf16.mxu0 0
        %6576 = vmatmul.mubr.bf16.gmra.mxu0 %v6065
        %v6577 = vpop.f32.mrf.mxu0
        %v6578 = vadd.f32 %v5968, %v6577
        %v6579 = vpop.f32.mrf.mxu0
        %v6580 = vpop.f32.mrf.mxu0
        %v6581 = vadd.f32 %v5968, %v6580
        %v6582 = vpop.f32.mrf.mxu0
        %6583 = vmatprep.mubr.bf16.mxu0 0
        %6584 = vmatmul.mubr.bf16.gmra.mxu0 %v6068
        %v6585 = vpop.f32.mrf.mxu0
        %v6586 = vadd.f32 %v5968, %v6585
        %v6587 = vpop.f32.mrf.mxu0
        %v6588 = vpop.f32.mrf.mxu0
        %v6589 = vadd.f32 %v5968, %v6588
        %v6590 = vpop.f32.mrf.mxu0
        %6591 = vmatprep.mubr.bf16.mxu0 0
        %6592 = vmatmul.mubr.bf16.gmra.mxu0 %v6071
        %v6593 = vpop.f32.mrf.mxu0
        %v6594 = vadd.f32 %v5968, %v6593
        %v6595 = vpop.f32.mrf.mxu0
        %v6596 = vpop.f32.mrf.mxu0
        %v6597 = vadd.f32 %v5968, %v6596
        %v6598 = vpop.f32.mrf.mxu0
        %6599 = vmatprep.mubr.bf16.mxu0 0
        %6600 = vmatmul.mubr.bf16.gmra.mxu0 %v6074
        %v6601 = vpop.f32.mrf.mxu0
        %v6602 = vadd.f32 %v5968, %v6601
        %v6603 = vpop.f32.mrf.mxu0
        %v6604 = vpop.f32.mrf.mxu0
        %v6605 = vadd.f32 %v5968, %v6604
        %v6606 = vpop.f32.mrf.mxu0
        %6607 = vmatprep.mubr.bf16.mxu0 0
        %6608 = vmatmul.mubr.bf16.gmra.mxu0 %v6077
        %v6609 = vpop.f32.mrf.mxu0
        %v6610 = vadd.f32 %v5968, %v6609
        %v6611 = vpop.f32.mrf.mxu0
        %v6612 = vpop.f32.mrf.mxu0
        %v6613 = vadd.f32 %v5968, %v6612
        %v6614 = vpop.f32.mrf.mxu0
        %6615 = vmatprep.mubr.bf16.mxu0 0
        %6616 = vmatmul.mubr.bf16.gmra.mxu0 %v6080
        %v6617 = vpop.f32.mrf.mxu0
        %v6618 = vadd.f32 %v5968, %v6617
        %v6619 = vpop.f32.mrf.mxu0
        %v6620 = vpop.f32.mrf.mxu0
        %v6621 = vadd.f32 %v5968, %v6620
        %v6622 = vpop.f32.mrf.mxu0
        %6623 = vmatprep.mubr.bf16.mxu0 0
        %6624 = vmatmul.mubr.bf16.gmra.mxu0 %v6083
        %v6625 = vpop.f32.mrf.mxu0
        %v6626 = vadd.f32 %v5968, %v6625
        %v6627 = vpop.f32.mrf.mxu0
        %v6628 = vpop.f32.mrf.mxu0
        %v6629 = vadd.f32 %v5968, %v6628
        %v6630 = vpop.f32.mrf.mxu0
        %6631 = vmatprep.mubr.bf16.mxu0 0
        %6632 = vmatmul.mubr.bf16.gmra.mxu0 %v6086
        %v6633 = vpop.f32.mrf.mxu0
        %v6634 = vadd.f32 %v5968, %v6633
        %v6635 = vpop.f32.mrf.mxu0
        %v6636 = vpop.f32.mrf.mxu0
        %v6637 = vadd.f32 %v5968, %v6636
        %v6638 = vpop.f32.mrf.mxu0
        %6639 = vmatprep.mubr.bf16.mxu0 0
        %6640 = vmatmul.mubr.bf16.gmra.mxu0 %v6089
        %v6641 = vpop.f32.mrf.mxu0
        %v6642 = vadd.f32 %v5968, %v6641
        %v6643 = vpop.f32.mrf.mxu0
        %v6644 = vpop.f32.mrf.mxu0
        %v6645 = vadd.f32 %v5968, %v6644
        %v6646 = vpop.f32.mrf.mxu0
        %6647 = vmatprep.mubr.bf16.mxu0 0
        %6648 = vmatmul.mubr.bf16.gmra.mxu0 %v6092
        %v6649 = vpop.f32.mrf.mxu0
        %v6650 = vadd.f32 %v5968, %v6649
        %v6651 = vpop.f32.mrf.mxu0
        %v6652 = vpop.f32.mrf.mxu0
        %v6653 = vadd.f32 %v5968, %v6652
        %v6654 = vpop.f32.mrf.mxu0
        %6655 = vmatprep.mubr.bf16.mxu0 0
        %6656 = vmatmul.mubr.bf16.gmra.mxu0 %v6095
        %v6657 = vpop.f32.mrf.mxu0
        %v6658 = vadd.f32 %v5968, %v6657
        %v6659 = vpop.f32.mrf.mxu0
        %v6660 = vpop.f32.mrf.mxu0
        %v6661 = vadd.f32 %v5968, %v6660
        %v6662 = vpop.f32.mrf.mxu0
        %6663 = vmatprep.mubr.bf16.mxu0 0
        %6664 = vmatmul.mubr.bf16.gmra.mxu0 %v6098
        %v6665 = vpop.f32.mrf.mxu0
        %v6666 = vadd.f32 %v5968, %v6665
        %v6667 = vpop.f32.mrf.mxu0
        %v6668 = vpop.f32.mrf.mxu0
        %v6669 = vadd.f32 %v5968, %v6668
        %v6670 = vpop.f32.mrf.mxu0
        %6671 = vmatprep.mubr.bf16.mxu0 0
        %6672 = vmatmul.mubr.bf16.gmra.mxu0 %v6101
        %v6673 = vpop.f32.mrf.mxu0
        %v6674 = vadd.f32 %v5968, %v6673
        %v6675 = vpop.f32.mrf.mxu0
        %v6676 = vpop.f32.mrf.mxu0
        %v6677 = vadd.f32 %v5968, %v6676
        %v6678 = vpop.f32.mrf.mxu0
        %6679 = vmatprep.mubr.bf16.mxu0 0
        %6680 = vmatmul.mubr.bf16.gmra.mxu0 %v6104
        %v6681 = vpop.f32.mrf.mxu0
        %v6682 = vadd.f32 %v5968, %v6681
        %v6683 = vpop.f32.mrf.mxu0
        %v6684 = vpop.f32.mrf.mxu0
        %v6685 = vadd.f32 %v5968, %v6684
        %v6686 = vpop.f32.mrf.mxu0
        %6687 = vmatprep.mubr.bf16.mxu0 0
        %6688 = vmatmul.mubr.bf16.gmra.mxu0 %v6107
        %v6689 = vpop.f32.mrf.mxu0
        %v6690 = vadd.f32 %v5968, %v6689
        %v6691 = vpop.f32.mrf.mxu0
        %v6692 = vpop.f32.mrf.mxu0
        %v6693 = vadd.f32 %v5968, %v6692
        %v6694 = vpop.f32.mrf.mxu0
        %6695 = vmatprep.mubr.bf16.mxu0 0
        %6696 = vmatmul.mubr.bf16.gmra.mxu0 %v6110
        %v6697 = vpop.f32.mrf.mxu0
        %v6698 = vadd.f32 %v5968, %v6697
        %v6699 = vpop.f32.mrf.mxu0
        %v6700 = vpop.f32.mrf.mxu0
        %v6701 = vadd.f32 %v5968, %v6700
        %v6702 = vpop.f32.mrf.mxu0
        %6703 = vmatprep.mubr.bf16.mxu0 0
        %6704 = vmatmul.mubr.bf16.gmra.mxu0 %v6113
        %v6705 = vpop.f32.mrf.mxu0
        %v6706 = vadd.f32 %v5968, %v6705
        %v6707 = vpop.f32.mrf.mxu0
        %v6708 = vpop.f32.mrf.mxu0
        %v6709 = vadd.f32 %v5968, %v6708
        %v6710 = vpop.f32.mrf.mxu0
        %6711 = vmatprep.mubr.bf16.mxu0 0
        %6712 = vmatmul.mubr.bf16.gmra.mxu0 %v6116
        %v6713 = vpop.f32.mrf.mxu0
        %v6714 = vadd.f32 %v5968, %v6713
        %v6715 = vpop.f32.mrf.mxu0
        %v6716 = vpop.f32.mrf.mxu0
        %v6717 = vadd.f32 %v5968, %v6716
        %v6718 = vpop.f32.mrf.mxu0
        %6719 = vmatprep.mubr.bf16.mxu0 0
        %6720 = vmatmul.mubr.bf16.gmra.mxu0 %v6119
        %v6721 = vpop.f32.mrf.mxu0
        %v6722 = vadd.f32 %v5968, %v6721
        %v6723 = vpop.f32.mrf.mxu0
        %v6724 = vpop.f32.mrf.mxu0
        %v6725 = vadd.f32 %v5968, %v6724
        %v6726 = vpop.f32.mrf.mxu0
        %6727 = vmatprep.mubr.bf16.mxu0 0
        %6728 = vmatmul.mubr.bf16.gmra.mxu0 %v6122
        %v6729 = vpop.f32.mrf.mxu0
        %v6730 = vadd.f32 %v5968, %v6729
        %v6731 = vpop.f32.mrf.mxu0
        %v6732 = vpop.f32.mrf.mxu0
        %v6733 = vadd.f32 %v5968, %v6732
        %v6734 = vpop.f32.mrf.mxu0
        %6735 = vmatprep.mubr.bf16.mxu0 0
        %6736 = vmatmul.mubr.bf16.gmra.mxu0 %v6125
        %v6737 = vpop.f32.mrf.mxu0
        %v6738 = vadd.f32 %v5968, %v6737
        %v6739 = vpop.f32.mrf.mxu0
        %v6740 = vpop.f32.mrf.mxu0
        %v6741 = vadd.f32 %v5968, %v6740
        %v6742 = vpop.f32.mrf.mxu0
        %6743 = vmatprep.mubr.bf16.mxu0 0
        %6744 = vmatmul.mubr.bf16.gmra.mxu0 %v6128
        %v6745 = vpop.f32.mrf.mxu0
        %v6746 = vadd.f32 %v5968, %v6745
        %v6747 = vpop.f32.mrf.mxu0
        %v6748 = vpop.f32.mrf.mxu0
        %v6749 = vadd.f32 %v5968, %v6748
        %v6750 = vpop.f32.mrf.mxu0
        %6751 = vmatprep.mubr.bf16.mxu0 0
        %6752 = vmatmul.mubr.bf16.gmra.mxu0 %v6131
        %v6753 = vpop.f32.mrf.mxu0
        %v6754 = vadd.f32 %v5968, %v6753
        %v6755 = vpop.f32.mrf.mxu0
        %v6756 = vpop.f32.mrf.mxu0
        %v6757 = vadd.f32 %v5968, %v6756
        %v6758 = vpop.f32.mrf.mxu0
        %6759 = vmatprep.mubr.bf16.mxu0 0
        %6760 = vmatmul.mubr.bf16.gmra.mxu0 %v6134
        %v6761 = vpop.f32.mrf.mxu0
        %v6762 = vadd.f32 %v5968, %v6761
        %v6763 = vpop.f32.mrf.mxu0
        %v6764 = vpop.f32.mrf.mxu0
        %v6765 = vadd.f32 %v5968, %v6764
        %v6766 = vpop.f32.mrf.mxu0
        %6767 = vmatprep.mubr.bf16.mxu0 0
        %6768 = vmatmul.mubr.bf16.gmra.mxu0 %v6137
        %v6769 = vpop.f32.mrf.mxu0
        %v6770 = vadd.f32 %v5968, %v6769
        %v6771 = vpop.f32.mrf.mxu0
        %v6772 = vpop.f32.mrf.mxu0
        %v6773 = vadd.f32 %v5968, %v6772
        %v6774 = vpop.f32.mrf.mxu0
        %6775 = vmatprep.mubr.bf16.mxu0 0
        %6776 = vmatmul.mubr.bf16.gmra.mxu0 %v6140
        %v6777 = vpop.f32.mrf.mxu0
        %v6778 = vadd.f32 %v5968, %v6777
        %v6779 = vpop.f32.mrf.mxu0
        %v6780 = vpop.f32.mrf.mxu0
        %v6781 = vadd.f32 %v5968, %v6780
        %v6782 = vpop.f32.mrf.mxu0
        %6783 = vmatprep.mubr.bf16.mxu0 0
        %6784 = vmatmul.mubr.bf16.gmra.mxu0 %v6143
        %v6785 = vpop.f32.mrf.mxu0
        %v6786 = vadd.f32 %v5968, %v6785
        %v6787 = vpop.f32.mrf.mxu0
        %v6788 = vpop.f32.mrf.mxu0
        %v6789 = vadd.f32 %v5968, %v6788
        %v6790 = vpop.f32.mrf.mxu0
        %6791 = vmatprep.mubr.bf16.mxu0 0
        %6792 = vmatmul.mubr.bf16.gmra.mxu0 %v6146
        %v6793 = vpop.f32.mrf.mxu0
        %v6794 = vadd.f32 %v5968, %v6793
        %v6795 = vpop.f32.mrf.mxu0
        %v6796 = vpop.f32.mrf.mxu0
        %v6797 = vadd.f32 %v5968, %v6796
        %v6798 = vpop.f32.mrf.mxu0
        %6799 = vmatprep.mubr.bf16.mxu0 0
        %6800 = vmatmul.mubr.bf16.gmra.mxu0 %v6149
        %v6801 = vpop.f32.mrf.mxu0
        %v6802 = vadd.f32 %v5968, %v6801
        %v6803 = vpop.f32.mrf.mxu0
        %v6804 = vpop.f32.mrf.mxu0
        %v6805 = vadd.f32 %v5968, %v6804
        %v6806 = vpop.f32.mrf.mxu0
        %6807 = vmatprep.mubr.bf16.mxu0 0
        %6808 = vmatmul.mubr.bf16.gmra.mxu0 %v6152
        %v6809 = vpop.f32.mrf.mxu0
        %v6810 = vadd.f32 %v5968, %v6809
        %v6811 = vpop.f32.mrf.mxu0
        %v6812 = vpop.f32.mrf.mxu0
        %v6813 = vadd.f32 %v5968, %v6812
        %v6814 = vpop.f32.mrf.mxu0
        %6815 = vmatprep.mubr.bf16.mxu0 0
        %6816 = vmatmul.mubr.bf16.gmra.mxu0 %v6155
        %v6817 = vpop.f32.mrf.mxu0
        %v6818 = vadd.f32 %v5968, %v6817
        %v6819 = vpop.f32.mrf.mxu0
        %v6820 = vpop.f32.mrf.mxu0
        %v6821 = vadd.f32 %v5968, %v6820
        %v6822 = vpop.f32.mrf.mxu0
        %6823 = vmatprep.mubr.bf16.mxu0 0
        %6824 = vmatmul.mubr.bf16.gmra.mxu0 %v6158
        %v6825 = vpop.f32.mrf.mxu0
        %v6826 = vadd.f32 %v5968, %v6825
        %v6827 = vpop.f32.mrf.mxu0
        %v6828 = vpop.f32.mrf.mxu0
        %v6829 = vadd.f32 %v5968, %v6828
        %v6830 = vpop.f32.mrf.mxu0
        %6831 = vmatprep.mubr.bf16.mxu0 0
        %6832 = vmatmul.mubr.bf16.gmra.mxu0 %v6161
        %v6833 = vpop.f32.mrf.mxu0
        %v6834 = vadd.f32 %v5968, %v6833
        %v6835 = vpop.f32.mrf.mxu0
        %v6836 = vpop.f32.mrf.mxu0
        %v6837 = vadd.f32 %v5968, %v6836
        %v6838 = vpop.f32.mrf.mxu0
        %6839 = vmatprep.mubr.bf16.mxu0 0
        %6840 = vmatmul.mubr.bf16.gmra.mxu0 %v6164
        %v6841 = vpop.f32.mrf.mxu0
        %v6842 = vadd.f32 %v5968, %v6841
        %v6843 = vpop.f32.mrf.mxu0
        %v6844 = vpop.f32.mrf.mxu0
        %v6845 = vadd.f32 %v5968, %v6844
        %v6846 = vpop.f32.mrf.mxu0
        %6847 = vmatprep.mubr.bf16.mxu0 0
        %6848 = vmatmul.mubr.bf16.gmra.mxu0 %v6167
        %v6849 = vpop.f32.mrf.mxu0
        %v6850 = vadd.f32 %v5968, %v6849
        %v6851 = vpop.f32.mrf.mxu0
        %v6852 = vpop.f32.mrf.mxu0
        %v6853 = vadd.f32 %v5968, %v6852
        %v6854 = vpop.f32.mrf.mxu0
        %6855 = vmatprep.mubr.bf16.mxu0 0
        %6856 = vmatmul.mubr.bf16.gmra.mxu0 %v6170
        %v6857 = vpop.f32.mrf.mxu0
        %v6858 = vadd.f32 %v5968, %v6857
        %v6859 = vpop.f32.mrf.mxu0
        %v6860 = vpop.f32.mrf.mxu0
        %v6861 = vadd.f32 %v5968, %v6860
        %v6862 = vpop.f32.mrf.mxu0
        %6863 = vmatprep.mubr.bf16.mxu0 0
        %6864 = vmatmul.mubr.bf16.gmra.mxu0 %v6173
        %v6865 = vpop.f32.mrf.mxu0
        %v6866 = vadd.f32 %v5968, %v6865
        %v6867 = vpop.f32.mrf.mxu0
        %v6868 = vpop.f32.mrf.mxu0
        %v6869 = vadd.f32 %v5968, %v6868
        %v6870 = vpop.f32.mrf.mxu0
        %6871 = vmatprep.mubr.bf16.mxu0 0
        %6872 = vmatmul.mubr.bf16.gmra.mxu0 %v6176
        %v6873 = vpop.f32.mrf.mxu0
        %v6874 = vadd.f32 %v5968, %v6873
        %v6875 = vpop.f32.mrf.mxu0
        %v6876 = vpop.f32.mrf.mxu0
        %v6877 = vadd.f32 %v5968, %v6876
        %v6878 = vpop.f32.mrf.mxu0
        %6879 = vmatprep.mubr.bf16.mxu0 0
        %6880 = vmatmul.mubr.bf16.gmra.mxu0 %v6179
        %v6881 = vpop.f32.mrf.mxu0
        %v6882 = vadd.f32 %v5968, %v6881
        %v6883 = vpop.f32.mrf.mxu0
        %v6884 = vpop.f32.mrf.mxu0
        %v6885 = vadd.f32 %v5968, %v6884
        %v6886 = vpop.f32.mrf.mxu0
        %6887 = vmatprep.mubr.bf16.mxu0 0
        %6888 = vmatmul.mubr.bf16.gmra.mxu0 %v6182
        %v6889 = vpop.f32.mrf.mxu0
        %v6890 = vadd.f32 %v5968, %v6889
        %v6891 = vpop.f32.mrf.mxu0
        %v6892 = vpop.f32.mrf.mxu0
        %v6893 = vadd.f32 %v5968, %v6892
        %v6894 = vpop.f32.mrf.mxu0
        %6895 = vmatprep.mubr.bf16.mxu0 0
        %6896 = vmatmul.mubr.bf16.gmra.mxu0 %v6185
        %v6897 = vpop.f32.mrf.mxu0
        %v6898 = vadd.f32 %v5968, %v6897
        %v6899 = vpop.f32.mrf.mxu0
        %v6900 = vpop.f32.mrf.mxu0
        %v6901 = vadd.f32 %v5968, %v6900
        %v6902 = vpop.f32.mrf.mxu0
        %6903 = vmatprep.mubr.bf16.mxu0 0
        %6904 = vmatmul.mubr.bf16.gmra.mxu0 %v6188
        %v6905 = vpop.f32.mrf.mxu0
        %v6906 = vadd.f32 %v5968, %v6905
        %v6907 = vpop.f32.mrf.mxu0
        %v6908 = vpop.f32.mrf.mxu0
        %v6909 = vadd.f32 %v5968, %v6908
        %v6910 = vpop.f32.mrf.mxu0
        %6911 = vmatprep.mubr.bf16.mxu0 0
        %6912 = vmatmul.mubr.bf16.gmra.mxu0 %v6191
        %v6913 = vpop.f32.mrf.mxu0
        %v6914 = vadd.f32 %v5968, %v6913
        %v6915 = vpop.f32.mrf.mxu0
        %v6916 = vpop.f32.mrf.mxu0
        %v6917 = vadd.f32 %v5968, %v6916
        %v6918 = vpop.f32.mrf.mxu0
        %6919 = vmatprep.mubr.bf16.mxu0 0
        %6920 = vmatmul.mubr.bf16.gmra.mxu0 %v6194
        %v6921 = vpop.f32.mrf.mxu0
        %v6922 = vadd.f32 %v5968, %v6921
        %v6923 = vpop.f32.mrf.mxu0
        %v6924 = vpop.f32.mrf.mxu0
        %v6925 = vadd.f32 %v5968, %v6924
        %v6926 = vpop.f32.mrf.mxu0
        %6927 = vmatprep.mubr.bf16.mxu0 0
        %6928 = vmatmul.mubr.bf16.gmra.mxu0 %v6197
        %v6929 = vpop.f32.mrf.mxu0
        %v6930 = vadd.f32 %v5968, %v6929
        %v6931 = vpop.f32.mrf.mxu0
        %v6932 = vpop.f32.mrf.mxu0
        %v6933 = vadd.f32 %v5968, %v6932
        %v6934 = vpop.f32.mrf.mxu0
        %6935 = vmatprep.mubr.bf16.mxu0 0
        %6936 = vmatmul.mubr.bf16.gmra.mxu0 %v6200
        %v6937 = vpop.f32.mrf.mxu0
        %v6938 = vadd.f32 %v5968, %v6937
        %v6939 = vpop.f32.mrf.mxu0
        %v6940 = vpop.f32.mrf.mxu0
        %v6941 = vadd.f32 %v5968, %v6940
        %v6942 = vpop.f32.mrf.mxu0
        %6943 = vmatprep.mubr.bf16.mxu0 0
        %6944 = vmatmul.mubr.bf16.gmra.mxu0 %v6203
        %v6945 = vpop.f32.mrf.mxu0
        %v6946 = vadd.f32 %v5968, %v6945
        %v6947 = vpop.f32.mrf.mxu0
        %v6948 = vpop.f32.mrf.mxu0
        %v6949 = vadd.f32 %v5968, %v6948
        %v6950 = vpop.f32.mrf.mxu0
        %6951 = vmatprep.mubr.bf16.mxu0 0
        %6952 = vmatmul.mubr.bf16.gmra.mxu0 %v6206
        %v6953 = vpop.f32.mrf.mxu0
        %v6954 = vadd.f32 %v5968, %v6953
        %v6955 = vpop.f32.mrf.mxu0
        %v6956 = vpop.f32.mrf.mxu0
        %v6957 = vadd.f32 %v5968, %v6956
        %v6958 = vpop.f32.mrf.mxu0
        %6959 = vmatprep.mubr.bf16.mxu0 0
        %6960 = vmatmul.mubr.bf16.gmra.mxu0 %v6209
        %v6961 = vpop.f32.mrf.mxu0
        %v6962 = vadd.f32 %v5968, %v6961
        %v6963 = vpop.f32.mrf.mxu0
        %v6964 = vpop.f32.mrf.mxu0
        %v6965 = vadd.f32 %v5968, %v6964
        %v6966 = vpop.f32.mrf.mxu0
        %6967 = vmatprep.mubr.bf16.mxu0 0
        %6968 = vmatmul.mubr.bf16.gmra.mxu0 %v6212
        %v6969 = vpop.f32.mrf.mxu0
        %v6970 = vadd.f32 %v5968, %v6969
        %v6971 = vpop.f32.mrf.mxu0
        %v6972 = vpop.f32.mrf.mxu0
        %v6973 = vadd.f32 %v5968, %v6972
        %v6974 = vpop.f32.mrf.mxu0
        %6975 = vmatprep.mubr.bf16.mxu0 0
        %6976 = vmatmul.mubr.bf16.gmra.mxu0 %v6215
        %v6977 = vpop.f32.mrf.mxu0
        %v6978 = vadd.f32 %v5968, %v6977
        %v6979 = vpop.f32.mrf.mxu0
        %v6980 = vpop.f32.mrf.mxu0
        %v6981 = vadd.f32 %v5968, %v6980
        %v6982 = vpop.f32.mrf.mxu0
        %6983 = vmatprep.mubr.bf16.mxu0 0
        %6984 = vmatmul.mubr.bf16.gmra.mxu0 %v6218
        %v6985 = vpop.f32.mrf.mxu0
        %v6986 = vadd.f32 %v5968, %v6985
        %v6987 = vpop.f32.mrf.mxu0
        %v6988 = vpop.f32.mrf.mxu0
        %v6989 = vadd.f32 %v5968, %v6988
        %v6990 = vpop.f32.mrf.mxu0
        %6991 = vmatprep.mubr.bf16.mxu0 0
        %6992 = vmatmul.mubr.bf16.gmra.mxu0 %v6221
        %v6993 = vpop.f32.mrf.mxu0
        %v6994 = vadd.f32 %v5968, %v6993
        %v6995 = vpop.f32.mrf.mxu0
        %v6996 = vpop.f32.mrf.mxu0
        %v6997 = vadd.f32 %v5968, %v6996
        %v6998 = vpop.f32.mrf.mxu0
        %6999 = vmatprep.mubr.bf16.mxu0 0
        %7000 = vmatmul.mubr.bf16.gmra.mxu0 %v6224
        %v7001 = vpop.f32.mrf.mxu0
        %v7002 = vadd.f32 %v5968, %v7001
        %v7003 = vpop.f32.mrf.mxu0
        %v7004 = vpop.f32.mrf.mxu0
        %v7005 = vadd.f32 %v5968, %v7004
        %v7006 = vpop.f32.mrf.mxu0
        %7007 = vmatprep.mubr.bf16.mxu0 0
        %7008 = vmatmul.mubr.bf16.gmra.mxu0 %v6227
        %v7009 = vpop.f32.mrf.mxu0
        %v7010 = vadd.f32 %v5968, %v7009
        %v7011 = vpop.f32.mrf.mxu0
        %v7012 = vpop.f32.mrf.mxu0
        %v7013 = vadd.f32 %v5968, %v7012
        %v7014 = vpop.f32.mrf.mxu0
        %7015 = vmatprep.mubr.bf16.mxu0 0
        %7016 = vmatmul.mubr.bf16.gmra.mxu0 %v6230
        %v7017 = vpop.f32.mrf.mxu0
        %v7018 = vadd.f32 %v5968, %v7017
        %v7019 = vpop.f32.mrf.mxu0
        %v7020 = vpop.f32.mrf.mxu0
        %v7021 = vadd.f32 %v5968, %v7020
        %v7022 = vpop.f32.mrf.mxu0
        %7023 = vmatprep.mubr.bf16.mxu0 0
        %7024 = vmatmul.mubr.bf16.gmra.mxu0 %v6233
        %v7025 = vpop.f32.mrf.mxu0
        %v7026 = vadd.f32 %v5968, %v7025
        %v7027 = vpop.f32.mrf.mxu0
        %v7028 = vpop.f32.mrf.mxu0
        %v7029 = vadd.f32 %v5968, %v7028
        %v7030 = vpop.f32.mrf.mxu0
        %7031 = vmatprep.mubr.bf16.mxu0 0
        %7032 = vmatmul.mubr.bf16.gmra.mxu0 %v6236
        %v7033 = vpop.f32.mrf.mxu0
        %v7034 = vadd.f32 %v5968, %v7033
        %v7035 = vpop.f32.mrf.mxu0
        %v7036 = vpop.f32.mrf.mxu0
        %v7037 = vadd.f32 %v5968, %v7036
        %v7038 = vpop.f32.mrf.mxu0
        %7039 = vmatprep.mubr.bf16.mxu0 0
        %7040 = vmatmul.mubr.bf16.gmra.mxu0 %v6239
        %v7041 = vpop.f32.mrf.mxu0
        %v7042 = vadd.f32 %v5968, %v7041
        %v7043 = vpop.f32.mrf.mxu0
        %v7044 = vpop.f32.mrf.mxu0
        %v7045 = vadd.f32 %v5968, %v7044
        %v7046 = vpop.f32.mrf.mxu0
        %7047 = vmatprep.mubr.bf16.mxu0 0
        %7048 = vmatmul.mubr.bf16.gmra.mxu0 %v6242
        %v7049 = vpop.f32.mrf.mxu0
        %v7050 = vadd.f32 %v5968, %v7049
        %v7051 = vpop.f32.mrf.mxu0
        %v7052 = vpop.f32.mrf.mxu0
        %v7053 = vadd.f32 %v5968, %v7052
        %v7054 = vpop.f32.mrf.mxu0
        %7055 = vmatprep.mubr.bf16.mxu0 0
        %7056 = vmatmul.mubr.bf16.gmra.mxu0 %v6245
        %v7057 = vpop.f32.mrf.mxu0
        %v7058 = vadd.f32 %v5968, %v7057
        %v7059 = vpop.f32.mrf.mxu0
        %v7060 = vpop.f32.mrf.mxu0
        %v7061 = vadd.f32 %v5968, %v7060
        %v7062 = vpop.f32.mrf.mxu0
        %7063 = vmatprep.mubr.bf16.mxu0 0
        %7064 = vmatmul.mubr.bf16.gmra.mxu0 %v6248
        %v7065 = vpop.f32.mrf.mxu0
        %v7066 = vadd.f32 %v5968, %v7065
        %v7067 = vpop.f32.mrf.mxu0
        %v7068 = vpop.f32.mrf.mxu0
        %v7069 = vadd.f32 %v5968, %v7068
        %v7070 = vpop.f32.mrf.mxu0
        %7071 = vmatprep.mubr.bf16.mxu0 0
        %7072 = vmatmul.mubr.bf16.gmra.mxu0 %v6251
        %v7073 = vpop.f32.mrf.mxu0
        %v7074 = vadd.f32 %v5968, %v7073
        %v7075 = vpop.f32.mrf.mxu0
        %v7076 = vpop.f32.mrf.mxu0
        %v7077 = vadd.f32 %v5968, %v7076
        %v7078 = vpop.f32.mrf.mxu0
        %7079 = vmatprep.mubr.bf16.mxu0 0
        %7080 = vmatmul.mubr.bf16.gmra.mxu0 %v6254
        %v7081 = vpop.f32.mrf.mxu0
        %v7082 = vadd.f32 %v5968, %v7081
        %v7083 = vpop.f32.mrf.mxu0
        %v7084 = vpop.f32.mrf.mxu0
        %v7085 = vadd.f32 %v5968, %v7084
        %v7086 = vpop.f32.mrf.mxu0
        %7087 = vmatprep.mubr.bf16.mxu0 0
        %7088 = vmatmul.mubr.bf16.gmra.mxu0 %v6257
        %v7089 = vpop.f32.mrf.mxu0
        %v7090 = vadd.f32 %v5968, %v7089
        %v7091 = vpop.f32.mrf.mxu0
        %v7092 = vpop.f32.mrf.mxu0
        %v7093 = vadd.f32 %v5968, %v7092
        %v7094 = vpop.f32.mrf.mxu0
        %7095 = vmatprep.mubr.bf16.mxu0 0
        %7096 = vmatmul.mubr.bf16.gmra.mxu0 %v6260
        %v7097 = vpop.f32.mrf.mxu0
        %v7098 = vadd.f32 %v5968, %v7097
        %v7099 = vpop.f32.mrf.mxu0
        %v7100 = vpop.f32.mrf.mxu0
        %v7101 = vadd.f32 %v5968, %v7100
        %v7102 = vpop.f32.mrf.mxu0
        %7103 = vmatprep.mubr.bf16.mxu0 0
        %7104 = vmatmul.mubr.bf16.gmra.mxu0 %v6263
        %v7105 = vpop.f32.mrf.mxu0
        %v7106 = vadd.f32 %v5968, %v7105
        %v7107 = vpop.f32.mrf.mxu0
        %v7108 = vpop.f32.mrf.mxu0
        %v7109 = vadd.f32 %v5968, %v7108
        %v7110 = vpop.f32.mrf.mxu0
        %7111 = vmatprep.mubr.bf16.mxu0 0
        %7112 = vmatmul.mubr.bf16.gmra.mxu0 %v6266
        %v7113 = vpop.f32.mrf.mxu0
        %v7114 = vadd.f32 %v5968, %v7113
        %v7115 = vpop.f32.mrf.mxu0
        %v7116 = vpop.f32.mrf.mxu0
        %v7117 = vadd.f32 %v5968, %v7116
        %v7118 = vpop.f32.mrf.mxu0
        %7119 = vmatprep.mubr.bf16.mxu0 0
        %7120 = vmatmul.mubr.bf16.gmra.mxu0 %v6269
        %v7121 = vpop.f32.mrf.mxu0
        %v7122 = vadd.f32 %v5968, %v7121
        %v7123 = vpop.f32.mrf.mxu0
        %v7124 = vpop.f32.mrf.mxu0
        %v7125 = vadd.f32 %v5968, %v7124
        %v7126 = vpop.f32.mrf.mxu0
        %7127 = vmatprep.mubr.bf16.mxu0 0
        %7128 = vmatmul.mubr.bf16.gmra.mxu0 %v6272
        %v7129 = vpop.f32.mrf.mxu0
        %v7130 = vadd.f32 %v5968, %v7129
        %v7131 = vpop.f32.mrf.mxu0
        %v7132 = vpop.f32.mrf.mxu0
        %v7133 = vadd.f32 %v5968, %v7132
        %v7134 = vpop.f32.mrf.mxu0
        %7135 = vmatprep.mubr.bf16.mxu0 0
        %7136 = vmatmul.mubr.bf16.gmra.mxu0 %v6275
        %v7137 = vpop.f32.mrf.mxu0
        %v7138 = vadd.f32 %v5968, %v7137
        %v7139 = vpop.f32.mrf.mxu0
        %v7140 = vpop.f32.mrf.mxu0
        %v7141 = vadd.f32 %v5968, %v7140
        %v7142 = vpop.f32.mrf.mxu0
        %7143 = vmatprep.mubr.bf16.mxu0 0
        %7144 = vmatmul.mubr.bf16.gmra.mxu0 %v6278
        %v7145 = vpop.f32.mrf.mxu0
        %v7146 = vadd.f32 %v5968, %v7145
        %v7147 = vpop.f32.mrf.mxu0
        %v7148 = vpop.f32.mrf.mxu0
        %v7149 = vadd.f32 %v5968, %v7148
        %v7150 = vpop.f32.mrf.mxu0
        %7151 = vmatprep.mubr.bf16.mxu0 0
        %7152 = vmatmul.mubr.bf16.gmra.mxu0 %v6281
        %v7153 = vpop.f32.mrf.mxu0
        %v7154 = vadd.f32 %v5968, %v7153
        %v7155 = vpop.f32.mrf.mxu0
        %v7156 = vpop.f32.mrf.mxu0
        %v7157 = vadd.f32 %v5968, %v7156
        %v7158 = vpop.f32.mrf.mxu0
        %7159 = vmatprep.mubr.bf16.mxu0 0
        %7160 = vmatmul.mubr.bf16.gmra.mxu0 %v6284
        %v7161 = vpop.f32.mrf.mxu0
        %v7162 = vadd.f32 %v5968, %v7161
        %v7163 = vpop.f32.mrf.mxu0
        %v7164 = vpop.f32.mrf.mxu0
        %v7165 = vadd.f32 %v5968, %v7164
        %v7166 = vpop.f32.mrf.mxu0
        %7167 = vmatprep.mubr.bf16.mxu0 0
        %7168 = vmatmul.mubr.bf16.gmra.mxu0 %v6287
        %v7169 = vpop.f32.mrf.mxu0
        %v7170 = vadd.f32 %v5968, %v7169
        %v7171 = vpop.f32.mrf.mxu0
        %v7172 = vpop.f32.mrf.mxu0
        %v7173 = vadd.f32 %v5968, %v7172
        %v7174 = vpop.f32.mrf.mxu0
        %7175 = vmatprep.mubr.bf16.mxu0 0
        %7176 = vmatmul.mubr.bf16.gmra.mxu0 %v6290
        %v7177 = vpop.f32.mrf.mxu0
        %v7178 = vadd.f32 %v5968, %v7177
        %v7179 = vpop.f32.mrf.mxu0
        %v7180 = vpop.f32.mrf.mxu0
        %v7181 = vadd.f32 %v5968, %v7180
        %v7182 = vpop.f32.mrf.mxu0
        %7183 = vmatprep.mubr.bf16.mxu0 0
        %7184 = vmatmul.mubr.bf16.gmra.mxu0 %v6293
        %v7185 = vpop.f32.mrf.mxu0
        %v7186 = vadd.f32 %v5968, %v7185
        %v7187 = vpop.f32.mrf.mxu0
        %v7188 = vpop.f32.mrf.mxu0
        %v7189 = vadd.f32 %v5968, %v7188
        %v7190 = vpop.f32.mrf.mxu0
        %7191 = vmatprep.mubr.bf16.mxu0 0
        %7192 = vmatmul.mubr.bf16.gmra.mxu0 %v6296
        %v7193 = vpop.f32.mrf.mxu0
        %v7194 = vadd.f32 %v5968, %v7193
        %v7195 = vpop.f32.mrf.mxu0
        %v7196 = vpop.f32.mrf.mxu0
        %v7197 = vadd.f32 %v5968, %v7196
        %v7198 = vpop.f32.mrf.mxu0
        %7199 = vmatprep.mubr.bf16.mxu0 0
        %7200 = vmatmul.mubr.bf16.gmra.mxu0 %v6299
        %v7201 = vpop.f32.mrf.mxu0
        %v7202 = vadd.f32 %v5968, %v7201
        %v7203 = vpop.f32.mrf.mxu0
        %v7204 = vpop.f32.mrf.mxu0
        %v7205 = vadd.f32 %v5968, %v7204
        %v7206 = vpop.f32.mrf.mxu0
        %7207 = vmatprep.mubr.bf16.mxu0 0
        %7208 = vmatmul.mubr.bf16.gmra.mxu0 %v6302
        %v7209 = vpop.f32.mrf.mxu0
        %v7210 = vadd.f32 %v5968, %v7209
        %v7211 = vpop.f32.mrf.mxu0
        %v7212 = vpop.f32.mrf.mxu0
        %v7213 = vadd.f32 %v5968, %v7212
        %v7214 = vpop.f32.mrf.mxu0
        %7215 = vmatprep.mubr.bf16.mxu0 0
        %7216 = vmatmul.mubr.bf16.gmra.mxu0 %v6305
        %v7217 = vpop.f32.mrf.mxu0
        %v7218 = vadd.f32 %v5968, %v7217
        %v7219 = vpop.f32.mrf.mxu0
        %v7220 = vpop.f32.mrf.mxu0
        %v7221 = vadd.f32 %v5968, %v7220
        %v7222 = vpop.f32.mrf.mxu0
        %7223 = vmatprep.mubr.bf16.mxu0 0
        %7224 = vmatmul.mubr.bf16.gmra.mxu0 %v6308
        %v7225 = vpop.f32.mrf.mxu0
        %v7226 = vadd.f32 %v5968, %v7225
        %v7227 = vpop.f32.mrf.mxu0
        %v7228 = vpop.f32.mrf.mxu0
        %v7229 = vadd.f32 %v5968, %v7228
        %v7230 = vpop.f32.mrf.mxu0
        %7231 = vmatprep.mubr.bf16.mxu0 0
        %7232 = vmatmul.mubr.bf16.gmra.mxu0 %v6311
        %v7233 = vpop.f32.mrf.mxu0
        %v7234 = vadd.f32 %v5968, %v7233
        %v7235 = vpop.f32.mrf.mxu0
        %v7236 = vpop.f32.mrf.mxu0
        %v7237 = vadd.f32 %v5968, %v7236
        %v7238 = vpop.f32.mrf.mxu0
        %7239 = vmatprep.mubr.bf16.mxu0 0
        %7240 = vmatmul.mubr.bf16.gmra.mxu0 %v6314
        %v7241 = vpop.f32.mrf.mxu0
        %v7242 = vadd.f32 %v5968, %v7241
        %v7243 = vpop.f32.mrf.mxu0
        %v7244 = vpop.f32.mrf.mxu0
        %v7245 = vadd.f32 %v5968, %v7244
        %v7246 = vpop.f32.mrf.mxu0
        %7247 = vmatprep.mubr.bf16.mxu0 0
        %7248 = vmatmul.mubr.bf16.gmra.mxu0 %v6317
        %v7249 = vpop.f32.mrf.mxu0
        %v7250 = vadd.f32 %v5968, %v7249
        %v7251 = vpop.f32.mrf.mxu0
        %v7252 = vpop.f32.mrf.mxu0
        %v7253 = vadd.f32 %v5968, %v7252
        %v7254 = vpop.f32.mrf.mxu0
        %7255 = vmatprep.mubr.bf16.mxu0 0
        %7256 = vmatmul.mubr.bf16.gmra.mxu0 %v6320
        %v7257 = vpop.f32.mrf.mxu0
        %v7258 = vadd.f32 %v5968, %v7257
        %v7259 = vpop.f32.mrf.mxu0
        %v7260 = vpop.f32.mrf.mxu0
        %v7261 = vadd.f32 %v5968, %v7260
        %v7262 = vpop.f32.mrf.mxu0
        %7263 = vmatprep.mubr.bf16.mxu0 0
        %7264 = vmatmul.mubr.bf16.gmra.mxu0 %v6323
        %v7265 = vpop.f32.mrf.mxu0
        %v7266 = vadd.f32 %v5968, %v7265
        %v7267 = vpop.f32.mrf.mxu0
        %v7268 = vpop.f32.mrf.mxu0
        %v7269 = vadd.f32 %v5968, %v7268
        %v7270 = vpop.f32.mrf.mxu0
        %7271 = vmatprep.mubr.bf16.mxu0 0
        %7272 = vmatmul.mubr.bf16.gmra.mxu0 %v6326
        %v7273 = vpop.f32.mrf.mxu0
        %v7274 = vadd.f32 %v5968, %v7273
        %v7275 = vpop.f32.mrf.mxu0
        %v7276 = vpop.f32.mrf.mxu0
        %v7277 = vadd.f32 %v5968, %v7276
        %v7278 = vpop.f32.mrf.mxu0
        %7279 = vmatprep.mubr.bf16.mxu0 0
        %7280 = vmatmul.mubr.bf16.gmra.mxu0 %v6329
        %v7281 = vpop.f32.mrf.mxu0
        %v7282 = vadd.f32 %v5968, %v7281
        %v7283 = vpop.f32.mrf.mxu0
        %v7284 = vpop.f32.mrf.mxu0
        %v7285 = vadd.f32 %v5968, %v7284
        %v7286 = vpop.f32.mrf.mxu0
        %7287 = vmatprep.mubr.bf16.mxu0 0
        %7288 = vmatmul.mubr.bf16.gmra.mxu0 %v6332
        %v7289 = vpop.f32.mrf.mxu0
        %v7290 = vadd.f32 %v5968, %v7289
        %v7291 = vpop.f32.mrf.mxu0
        %v7292 = vpop.f32.mrf.mxu0
        %v7293 = vadd.f32 %v5968, %v7292
        %v7294 = vpop.f32.mrf.mxu0
        %7295 = vmatprep.mubr.bf16.mxu0 0
        %7296 = vmatmul.mubr.bf16.gmra.mxu0 %v6335
        %v7297 = vpop.f32.mrf.mxu0
        %v7298 = vadd.f32 %v5968, %v7297
        %v7299 = vpop.f32.mrf.mxu0
        %v7300 = vpop.f32.mrf.mxu0
        %v7301 = vadd.f32 %v5968, %v7300
        %v7302 = vpop.f32.mrf.mxu0
        %7303 = vmatprep.mubr.bf16.mxu0 0
        %7304 = vmatmul.mubr.bf16.gmra.mxu0 %v6338
        %v7305 = vpop.f32.mrf.mxu0
        %v7306 = vadd.f32 %v5968, %v7305
        %v7307 = vpop.f32.mrf.mxu0
        %v7308 = vpop.f32.mrf.mxu0
        %v7309 = vadd.f32 %v5968, %v7308
        %v7310 = vpop.f32.mrf.mxu0
        %7311 = vmatprep.mubr.bf16.mxu0 0
        %7312 = vmatmul.mubr.bf16.gmra.mxu0 %v6341
        %v7313 = vpop.f32.mrf.mxu0
        %v7314 = vadd.f32 %v5968, %v7313
        %v7315 = vpop.f32.mrf.mxu0
        %v7316 = vpop.f32.mrf.mxu0
        %v7317 = vadd.f32 %v5968, %v7316
        %v7318 = vpop.f32.mrf.mxu0
        %7319 = vmatprep.mubr.bf16.mxu0 0
        %7320 = vmatmul.mubr.bf16.gmra.mxu0 %v6344
        %v7321 = vpop.f32.mrf.mxu0
        %v7322 = vadd.f32 %v5968, %v7321
        %v7323 = vpop.f32.mrf.mxu0
        %v7324 = vpop.f32.mrf.mxu0
        %v7325 = vadd.f32 %v5968, %v7324
        %v7326 = vpop.f32.mrf.mxu0
        %7327 = vmatprep.mubr.bf16.mxu0 0
        %7328 = vmatmul.mubr.bf16.gmra.mxu0 %v6347
        %v7329 = vpop.f32.mrf.mxu0
        %v7330 = vadd.f32 %v5968, %v7329
        %v7331 = vpop.f32.mrf.mxu0
        %v7332 = vpop.f32.mrf.mxu0
        %v7333 = vadd.f32 %v5968, %v7332
        %v7334 = vpop.f32.mrf.mxu0
        %7335 = vmatprep.mubr.bf16.mxu0 0
        %7336 = vmatmul.mubr.bf16.gmra.mxu0 %v6350
        %v7337 = vpop.f32.mrf.mxu0
        %v7338 = vadd.f32 %v5968, %v7337
        %v7339 = vpop.f32.mrf.mxu0
        %v7340 = vpop.f32.mrf.mxu0
        %v7341 = vadd.f32 %v5968, %v7340
        %v7342 = vpop.f32.mrf.mxu0
        %7343 = vmatprep.mubr.bf16.mxu0 0
        %7344 = vmatmul.mubr.bf16.gmra.mxu0 %v6353
        %v7345 = vpop.f32.mrf.mxu0
        %v7346 = vadd.f32 %v5968, %v7345
        %v7347 = vpop.f32.mrf.mxu0
        %v7348 = vpop.f32.mrf.mxu0
        %v7349 = vadd.f32 %v5968, %v7348
        %v7350 = vpop.f32.mrf.mxu0
        %7351 = vmatprep.mubr.bf16.mxu0 0
        %7352 = vmatmul.mubr.bf16.gmra.mxu0 %v6356
        %v7353 = vpop.f32.mrf.mxu0
        %v7354 = vadd.f32 %v5968, %v7353
        %v7355 = vpop.f32.mrf.mxu0
        %v7356 = vpop.f32.mrf.mxu0
        %v7357 = vadd.f32 %v5968, %v7356
        %v7358 = vpop.f32.mrf.mxu0
        %7359 = vmatprep.mubr.bf16.mxu0 0
        %7360 = vmatmul.mubr.bf16.gmra.mxu0 %v6359
        %v7361 = vpop.f32.mrf.mxu0
        %v7362 = vadd.f32 %v5968, %v7361
        %v7363 = vpop.f32.mrf.mxu0
        %v7364 = vpop.f32.mrf.mxu0
        %v7365 = vadd.f32 %v5968, %v7364
        %v7366 = vpop.f32.mrf.mxu0
        %7367 = vmatprep.mubr.bf16.mxu0 0
        %7368 = vmatmul.mubr.bf16.gmra.mxu0 %v6362
        %v7369 = vpop.f32.mrf.mxu0
        %v7370 = vadd.f32 %v5968, %v7369
        %v7371 = vpop.f32.mrf.mxu0
        %v7372 = vpop.f32.mrf.mxu0
        %v7373 = vadd.f32 %v5968, %v7372
        %v7374 = vpop.f32.mrf.mxu0
        %7375 = vmatprep.mubr.bf16.mxu0 0
        %7376 = vmatmul.mubr.bf16.gmra.mxu0 %v6365
        %v7377 = vpop.f32.mrf.mxu0
        %v7378 = vadd.f32 %v5968, %v7377
        %v7379 = vpop.f32.mrf.mxu0
        %v7380 = vpop.f32.mrf.mxu0
        %v7381 = vadd.f32 %v5968, %v7380
        %v7382 = vpop.f32.mrf.mxu0
        %7383 = vmatprep.mubr.bf16.mxu0 0
        %7384 = vmatmul.mubr.bf16.gmra.mxu0 %v6368
        %v7385 = vpop.f32.mrf.mxu0
        %v7386 = vadd.f32 %v5968, %v7385
        %v7387 = vpop.f32.mrf.mxu0
        %v7388 = vpop.f32.mrf.mxu0
        %v7389 = vadd.f32 %v5968, %v7388
        %v7390 = vpop.f32.mrf.mxu0
        %7391 = vmatprep.mubr.bf16.mxu0 0
        %7392 = vmatmul.mubr.bf16.gmra.mxu0 %v6371
        %v7393 = vpop.f32.mrf.mxu0
        %v7394 = vadd.f32 %v5968, %v7393
        %v7395 = vpop.f32.mrf.mxu0
        %v7396 = vpop.f32.mrf.mxu0
        %v7397 = vadd.f32 %v5968, %v7396
        %v7398 = vpop.f32.mrf.mxu0
        %7399 = vmatprep.mubr.bf16.mxu0 0
        %7400 = vmatmul.mubr.bf16.gmra.mxu0 %v6374
        %v7401 = vpop.f32.mrf.mxu0
        %v7402 = vadd.f32 %v5968, %v7401
        %v7403 = vpop.f32.mrf.mxu0
        %v7404 = vpop.f32.mrf.mxu0
        %v7405 = vadd.f32 %v5968, %v7404
        %v7406 = vpop.f32.mrf.mxu0
        %7407 = vmatprep.mubr.bf16.mxu0 0
        %7408 = vmatmul.mubr.bf16.gmra.mxu0 %v6377
        %v7409 = vpop.f32.mrf.mxu0
        %v7410 = vadd.f32 %v5968, %v7409
        %v7411 = vpop.f32.mrf.mxu0
        %v7412 = vpop.f32.mrf.mxu0
        %v7413 = vadd.f32 %v5968, %v7412
        %v7414 = vpop.f32.mrf.mxu0
        %7415 = vmatprep.mubr.bf16.mxu0 0
        %7416 = vmatmul.mubr.bf16.gmra.mxu0 %v6380
        %v7417 = vpop.f32.mrf.mxu0
        %v7418 = vadd.f32 %v5968, %v7417
        %v7419 = vpop.f32.mrf.mxu0
        %v7420 = vpop.f32.mrf.mxu0
        %v7421 = vadd.f32 %v5968, %v7420
        %v7422 = vpop.f32.mrf.mxu0
        %7423 = vmatprep.mubr.bf16.mxu0 0
        %7424 = vmatmul.mubr.bf16.gmra.mxu0 %v6383
        %v7425 = vpop.f32.mrf.mxu0
        %v7426 = vadd.f32 %v5968, %v7425
        %v7427 = vpop.f32.mrf.mxu0
        %v7428 = vpop.f32.mrf.mxu0
        %v7429 = vadd.f32 %v5968, %v7428
        %v7430 = vpop.f32.mrf.mxu0
        %7431 = vmatprep.mubr.bf16.mxu0 0
        %7432 = vmatmul.mubr.bf16.gmra.mxu0 %v6386
        %v7433 = vpop.f32.mrf.mxu0
        %v7434 = vadd.f32 %v5968, %v7433
        %v7435 = vpop.f32.mrf.mxu0
        %v7436 = vpop.f32.mrf.mxu0
        %v7437 = vadd.f32 %v5968, %v7436
        %v7438 = vpop.f32.mrf.mxu0
        %7439 = vmatprep.mubr.bf16.mxu0 0
        %7440 = vmatmul.mubr.bf16.gmra.mxu0 %v6389
        %v7441 = vpop.f32.mrf.mxu0
        %v7442 = vadd.f32 %v5968, %v7441
        %v7443 = vpop.f32.mrf.mxu0
        %v7444 = vpop.f32.mrf.mxu0
        %v7445 = vadd.f32 %v5968, %v7444
        %v7446 = vpop.f32.mrf.mxu0
        %7447 = vdwg.mxu0
        %vm7448 = vcmask 15360
        %7449 = vst.msk [vmem:[%s299] sm:$0xff] %vm7448, %v6426
        %7450 = vst.msk [vmem:[%s299 + $0x8] sm:$0xff] %vm7448, %v6429
        %7451 = vst.msk [vmem:[%s299 + $0x10] sm:$0xff] %vm7448, %v6434
        %7452 = vst.msk [vmem:[%s299 + $0x18] sm:$0xff] %vm7448, %v6437
        %7453 = vst.msk [vmem:[%s299 + $0x20] sm:$0xff] %vm7448, %v6442
        %7454 = vst.msk [vmem:[%s299 + $0x28] sm:$0xff] %vm7448, %v6445
        %7455 = vst.msk [vmem:[%s299 + $0x30] sm:$0xff] %vm7448, %v6450
        %7456 = vst.msk [vmem:[%s299 + $0x38] sm:$0xff] %vm7448, %v6453
        %7457 = vst.msk [vmem:[%s299 + $0x40] sm:$0xff] %vm7448, %v6458
        %7458 = vst.msk [vmem:[%s299 + $0x48] sm:$0xff] %vm7448, %v6461
        %7459 = vst.msk [vmem:[%s299 + $0x50] sm:$0xff] %vm7448, %v6466
        %7460 = vst.msk [vmem:[%s299 + $0x58] sm:$0xff] %vm7448, %v6469
        %7461 = vst.msk [vmem:[%s299 + $0x60] sm:$0xff] %vm7448, %v6474
        %7462 = vst.msk [vmem:[%s299 + $0x68] sm:$0xff] %vm7448, %v6477
        %7463 = vst.msk [vmem:[%s299 + $0x70] sm:$0xff] %vm7448, %v6482
        %7464 = vst.msk [vmem:[%s299 + $0x78] sm:$0xff] %vm7448, %v6485
        %7465 = vst.msk [vmem:[%s299 + $0x80] sm:$0xff] %vm7448, %v6490
        %7466 = vst.msk [vmem:[%s299 + $0x88] sm:$0xff] %vm7448, %v6493
        %7467 = vst.msk [vmem:[%s299 + $0x90] sm:$0xff] %vm7448, %v6498
        %7468 = vst.msk [vmem:[%s299 + $0x98] sm:$0xff] %vm7448, %v6501
        %7469 = vst.msk [vmem:[%s299 + $0xa0] sm:$0xff] %vm7448, %v6506
        %7470 = vst.msk [vmem:[%s299 + $0xa8] sm:$0xff] %vm7448, %v6509
        %7471 = vst.msk [vmem:[%s299 + $0xb0] sm:$0xff] %vm7448, %v6514
        %7472 = vst.msk [vmem:[%s299 + $0xb8] sm:$0xff] %vm7448, %v6517
        %7473 = vst.msk [vmem:[%s299 + $0xc0] sm:$0xff] %vm7448, %v6522
        %7474 = vst.msk [vmem:[%s299 + $0xc8] sm:$0xff] %vm7448, %v6525
        %7475 = vst.msk [vmem:[%s299 + $0xd0] sm:$0xff] %vm7448, %v6530
        %7476 = vst.msk [vmem:[%s299 + $0xd8] sm:$0xff] %vm7448, %v6533
        %7477 = vst.msk [vmem:[%s299 + $0xe0] sm:$0xff] %vm7448, %v6538
        %7478 = vst.msk [vmem:[%s299 + $0xe8] sm:$0xff] %vm7448, %v6541
        %7479 = vst.msk [vmem:[%s299 + $0xf0] sm:$0xff] %vm7448, %v6546
        %7480 = vst.msk [vmem:[%s299 + $0xf8] sm:$0xff] %vm7448, %v6549
        %7481 = vst.msk [vmem:[%s299 + $0x100] sm:$0xff] %vm7448, %v6554
        %7482 = vst.msk [vmem:[%s299 + $0x108] sm:$0xff] %vm7448, %v6557
        %7483 = vst.msk [vmem:[%s299 + $0x110] sm:$0xff] %vm7448, %v6562
        %7484 = vst.msk [vmem:[%s299 + $0x118] sm:$0xff] %vm7448, %v6565
        %7485 = vst.msk [vmem:[%s299 + $0x120] sm:$0xff] %vm7448, %v6570
        %7486 = vst.msk [vmem:[%s299 + $0x128] sm:$0xff] %vm7448, %v6573
        %7487 = vst.msk [vmem:[%s299 + $0x130] sm:$0xff] %vm7448, %v6578
        %7488 = vst.msk [vmem:[%s299 + $0x138] sm:$0xff] %vm7448, %v6581
        %7489 = vst.msk [vmem:[%s299 + $0x140] sm:$0xff] %vm7448, %v6586
        %7490 = vst.msk [vmem:[%s299 + $0x148] sm:$0xff] %vm7448, %v6589
        %7491 = vst.msk [vmem:[%s299 + $0x150] sm:$0xff] %vm7448, %v6594
        %7492 = vst.msk [vmem:[%s299 + $0x158] sm:$0xff] %vm7448, %v6597
        %7493 = vst.msk [vmem:[%s299 + $0x160] sm:$0xff] %vm7448, %v6602
        %7494 = vst.msk [vmem:[%s299 + $0x168] sm:$0xff] %vm7448, %v6605
        %7495 = vst.msk [vmem:[%s299 + $0x170] sm:$0xff] %vm7448, %v6610
        %7496 = vst.msk [vmem:[%s299 + $0x178] sm:$0xff] %vm7448, %v6613
        %7497 = vst.msk [vmem:[%s299 + $0x180] sm:$0xff] %vm7448, %v6618
        %7498 = vst.msk [vmem:[%s299 + $0x188] sm:$0xff] %vm7448, %v6621
        %7499 = vst.msk [vmem:[%s299 + $0x190] sm:$0xff] %vm7448, %v6626
        %7500 = vst.msk [vmem:[%s299 + $0x198] sm:$0xff] %vm7448, %v6629
        %7501 = vst.msk [vmem:[%s299 + $0x1a0] sm:$0xff] %vm7448, %v6634
        %7502 = vst.msk [vmem:[%s299 + $0x1a8] sm:$0xff] %vm7448, %v6637
        %7503 = vst.msk [vmem:[%s299 + $0x1b0] sm:$0xff] %vm7448, %v6642
        %7504 = vst.msk [vmem:[%s299 + $0x1b8] sm:$0xff] %vm7448, %v6645
        %7505 = vst.msk [vmem:[%s299 + $0x1c0] sm:$0xff] %vm7448, %v6650
        %7506 = vst.msk [vmem:[%s299 + $0x1c8] sm:$0xff] %vm7448, %v6653
        %7507 = vst.msk [vmem:[%s299 + $0x1d0] sm:$0xff] %vm7448, %v6658
        %7508 = vst.msk [vmem:[%s299 + $0x1d8] sm:$0xff] %vm7448, %v6661
        %7509 = vst.msk [vmem:[%s299 + $0x1e0] sm:$0xff] %vm7448, %v6666
        %7510 = vst.msk [vmem:[%s299 + $0x1e8] sm:$0xff] %vm7448, %v6669
        %7511 = vst.msk [vmem:[%s299 + $0x1f0] sm:$0xff] %vm7448, %v6674
        %7512 = vst.msk [vmem:[%s299 + $0x1f8] sm:$0xff] %vm7448, %v6677
        %7513 = vst.msk [vmem:[%s299 + $0x200] sm:$0xff] %vm7448, %v6682
        %7514 = vst.msk [vmem:[%s299 + $0x208] sm:$0xff] %vm7448, %v6685
        %7515 = vst.msk [vmem:[%s299 + $0x210] sm:$0xff] %vm7448, %v6690
        %7516 = vst.msk [vmem:[%s299 + $0x218] sm:$0xff] %vm7448, %v6693
        %7517 = vst.msk [vmem:[%s299 + $0x220] sm:$0xff] %vm7448, %v6698
        %7518 = vst.msk [vmem:[%s299 + $0x228] sm:$0xff] %vm7448, %v6701
        %7519 = vst.msk [vmem:[%s299 + $0x230] sm:$0xff] %vm7448, %v6706
        %7520 = vst.msk [vmem:[%s299 + $0x238] sm:$0xff] %vm7448, %v6709
        %7521 = vst.msk [vmem:[%s299 + $0x240] sm:$0xff] %vm7448, %v6714
        %7522 = vst.msk [vmem:[%s299 + $0x248] sm:$0xff] %vm7448, %v6717
        %7523 = vst.msk [vmem:[%s299 + $0x250] sm:$0xff] %vm7448, %v6722
        %7524 = vst.msk [vmem:[%s299 + $0x258] sm:$0xff] %vm7448, %v6725
        %7525 = vst.msk [vmem:[%s299 + $0x260] sm:$0xff] %vm7448, %v6730
        %7526 = vst.msk [vmem:[%s299 + $0x268] sm:$0xff] %vm7448, %v6733
        %7527 = vst.msk [vmem:[%s299 + $0x270] sm:$0xff] %vm7448, %v6738
        %7528 = vst.msk [vmem:[%s299 + $0x278] sm:$0xff] %vm7448, %v6741
        %7529 = vst.msk [vmem:[%s299 + $0x280] sm:$0xff] %vm7448, %v6746
        %7530 = vst.msk [vmem:[%s299 + $0x288] sm:$0xff] %vm7448, %v6749
        %7531 = vst.msk [vmem:[%s299 + $0x290] sm:$0xff] %vm7448, %v6754
        %7532 = vst.msk [vmem:[%s299 + $0x298] sm:$0xff] %vm7448, %v6757
        %7533 = vst.msk [vmem:[%s299 + $0x2a0] sm:$0xff] %vm7448, %v6762
        %7534 = vst.msk [vmem:[%s299 + $0x2a8] sm:$0xff] %vm7448, %v6765
        %7535 = vst.msk [vmem:[%s299 + $0x2b0] sm:$0xff] %vm7448, %v6770
        %7536 = vst.msk [vmem:[%s299 + $0x2b8] sm:$0xff] %vm7448, %v6773
        %7537 = vst.msk [vmem:[%s299 + $0x2c0] sm:$0xff] %vm7448, %v6778
        %7538 = vst.msk [vmem:[%s299 + $0x2c8] sm:$0xff] %vm7448, %v6781
        %7539 = vst.msk [vmem:[%s299 + $0x2d0] sm:$0xff] %vm7448, %v6786
        %7540 = vst.msk [vmem:[%s299 + $0x2d8] sm:$0xff] %vm7448, %v6789
        %7541 = vst.msk [vmem:[%s299 + $0x2e0] sm:$0xff] %vm7448, %v6794
        %7542 = vst.msk [vmem:[%s299 + $0x2e8] sm:$0xff] %vm7448, %v6797
        %7543 = vst.msk [vmem:[%s299 + $0x2f0] sm:$0xff] %vm7448, %v6802
        %7544 = vst.msk [vmem:[%s299 + $0x2f8] sm:$0xff] %vm7448, %v6805
        %7545 = vst.msk [vmem:[%s299 + $0x300] sm:$0xff] %vm7448, %v6810
        %7546 = vst.msk [vmem:[%s299 + $0x308] sm:$0xff] %vm7448, %v6813
        %7547 = vst.msk [vmem:[%s299 + $0x310] sm:$0xff] %vm7448, %v6818
        %7548 = vst.msk [vmem:[%s299 + $0x318] sm:$0xff] %vm7448, %v6821
        %7549 = vst.msk [vmem:[%s299 + $0x320] sm:$0xff] %vm7448, %v6826
        %7550 = vst.msk [vmem:[%s299 + $0x328] sm:$0xff] %vm7448, %v6829
        %7551 = vst.msk [vmem:[%s299 + $0x330] sm:$0xff] %vm7448, %v6834
        %7552 = vst.msk [vmem:[%s299 + $0x338] sm:$0xff] %vm7448, %v6837
        %7553 = vst.msk [vmem:[%s299 + $0x340] sm:$0xff] %vm7448, %v6842
        %7554 = vst.msk [vmem:[%s299 + $0x348] sm:$0xff] %vm7448, %v6845
        %7555 = vst.msk [vmem:[%s299 + $0x350] sm:$0xff] %vm7448, %v6850
        %7556 = vst.msk [vmem:[%s299 + $0x358] sm:$0xff] %vm7448, %v6853
        %7557 = vst.msk [vmem:[%s299 + $0x360] sm:$0xff] %vm7448, %v6858
        %7558 = vst.msk [vmem:[%s299 + $0x368] sm:$0xff] %vm7448, %v6861
        %7559 = vst.msk [vmem:[%s299 + $0x370] sm:$0xff] %vm7448, %v6866
        %7560 = vst.msk [vmem:[%s299 + $0x378] sm:$0xff] %vm7448, %v6869
        %7561 = vst.msk [vmem:[%s299 + $0x380] sm:$0xff] %vm7448, %v6874
        %7562 = vst.msk [vmem:[%s299 + $0x388] sm:$0xff] %vm7448, %v6877
        %7563 = vst.msk [vmem:[%s299 + $0x390] sm:$0xff] %vm7448, %v6882
        %7564 = vst.msk [vmem:[%s299 + $0x398] sm:$0xff] %vm7448, %v6885
        %7565 = vst.msk [vmem:[%s299 + $0x3a0] sm:$0xff] %vm7448, %v6890
        %7566 = vst.msk [vmem:[%s299 + $0x3a8] sm:$0xff] %vm7448, %v6893
        %7567 = vst.msk [vmem:[%s299 + $0x3b0] sm:$0xff] %vm7448, %v6898
        %7568 = vst.msk [vmem:[%s299 + $0x3b8] sm:$0xff] %vm7448, %v6901
        %7569 = vst.msk [vmem:[%s299 + $0x3c0] sm:$0xff] %vm7448, %v6906
        %7570 = vst.msk [vmem:[%s299 + $0x3c8] sm:$0xff] %vm7448, %v6909
        %7571 = vst.msk [vmem:[%s299 + $0x3d0] sm:$0xff] %vm7448, %v6914
        %7572 = vst.msk [vmem:[%s299 + $0x3d8] sm:$0xff] %vm7448, %v6917
        %7573 = vst.msk [vmem:[%s299 + $0x3e0] sm:$0xff] %vm7448, %v6922
        %7574 = vst.msk [vmem:[%s299 + $0x3e8] sm:$0xff] %vm7448, %v6925
        %7575 = vst.msk [vmem:[%s299 + $0x3f0] sm:$0xff] %vm7448, %v6930
        %7576 = vst.msk [vmem:[%s299 + $0x3f8] sm:$0xff] %vm7448, %v6933
        %7577 = vst.msk [vmem:[%s299 + $0x400] sm:$0xff] %vm7448, %v6938
        %7578 = vst.msk [vmem:[%s299 + $0x408] sm:$0xff] %vm7448, %v6941
        %7579 = vst.msk [vmem:[%s299 + $0x410] sm:$0xff] %vm7448, %v6946
        %7580 = vst.msk [vmem:[%s299 + $0x418] sm:$0xff] %vm7448, %v6949
        %7581 = vst.msk [vmem:[%s299 + $0x420] sm:$0xff] %vm7448, %v6954
        %7582 = vst.msk [vmem:[%s299 + $0x428] sm:$0xff] %vm7448, %v6957
        %7583 = vst.msk [vmem:[%s299 + $0x430] sm:$0xff] %vm7448, %v6962
        %7584 = vst.msk [vmem:[%s299 + $0x438] sm:$0xff] %vm7448, %v6965
        %7585 = vst.msk [vmem:[%s299 + $0x440] sm:$0xff] %vm7448, %v6970
        %7586 = vst.msk [vmem:[%s299 + $0x448] sm:$0xff] %vm7448, %v6973
        %7587 = vst.msk [vmem:[%s299 + $0x450] sm:$0xff] %vm7448, %v6978
        %7588 = vst.msk [vmem:[%s299 + $0x458] sm:$0xff] %vm7448, %v6981
        %7589 = vst.msk [vmem:[%s299 + $0x460] sm:$0xff] %vm7448, %v6986
        %7590 = vst.msk [vmem:[%s299 + $0x468] sm:$0xff] %vm7448, %v6989
        %7591 = vst.msk [vmem:[%s299 + $0x470] sm:$0xff] %vm7448, %v6994
        %7592 = vst.msk [vmem:[%s299 + $0x478] sm:$0xff] %vm7448, %v6997
        %7593 = vst.msk [vmem:[%s299 + $0x480] sm:$0xff] %vm7448, %v7002
        %7594 = vst.msk [vmem:[%s299 + $0x488] sm:$0xff] %vm7448, %v7005
        %7595 = vst.msk [vmem:[%s299 + $0x490] sm:$0xff] %vm7448, %v7010
        %7596 = vst.msk [vmem:[%s299 + $0x498] sm:$0xff] %vm7448, %v7013
        %7597 = vst.msk [vmem:[%s299 + $0x4a0] sm:$0xff] %vm7448, %v7018
        %7598 = vst.msk [vmem:[%s299 + $0x4a8] sm:$0xff] %vm7448, %v7021
        %7599 = vst.msk [vmem:[%s299 + $0x4b0] sm:$0xff] %vm7448, %v7026
        %7600 = vst.msk [vmem:[%s299 + $0x4b8] sm:$0xff] %vm7448, %v7029
        %7601 = vst.msk [vmem:[%s299 + $0x4c0] sm:$0xff] %vm7448, %v7034
        %7602 = vst.msk [vmem:[%s299 + $0x4c8] sm:$0xff] %vm7448, %v7037
        %7603 = vst.msk [vmem:[%s299 + $0x4d0] sm:$0xff] %vm7448, %v7042
        %7604 = vst.msk [vmem:[%s299 + $0x4d8] sm:$0xff] %vm7448, %v7045
        %7605 = vst.msk [vmem:[%s299 + $0x4e0] sm:$0xff] %vm7448, %v7050
        %7606 = vst.msk [vmem:[%s299 + $0x4e8] sm:$0xff] %vm7448, %v7053
        %7607 = vst.msk [vmem:[%s299 + $0x4f0] sm:$0xff] %vm7448, %v7058
        %7608 = vst.msk [vmem:[%s299 + $0x4f8] sm:$0xff] %vm7448, %v7061
        %7609 = vst.msk [vmem:[%s299 + $0x500] sm:$0xff] %vm7448, %v7066
        %7610 = vst.msk [vmem:[%s299 + $0x508] sm:$0xff] %vm7448, %v7069
        %7611 = vst.msk [vmem:[%s299 + $0x510] sm:$0xff] %vm7448, %v7074
        %7612 = vst.msk [vmem:[%s299 + $0x518] sm:$0xff] %vm7448, %v7077
        %7613 = vst.msk [vmem:[%s299 + $0x520] sm:$0xff] %vm7448, %v7082
        %7614 = vst.msk [vmem:[%s299 + $0x528] sm:$0xff] %vm7448, %v7085
        %7615 = vst.msk [vmem:[%s299 + $0x530] sm:$0xff] %vm7448, %v7090
        %7616 = vst.msk [vmem:[%s299 + $0x538] sm:$0xff] %vm7448, %v7093
        %7617 = vst.msk [vmem:[%s299 + $0x540] sm:$0xff] %vm7448, %v7098
        %7618 = vst.msk [vmem:[%s299 + $0x548] sm:$0xff] %vm7448, %v7101
        %7619 = vst.msk [vmem:[%s299 + $0x550] sm:$0xff] %vm7448, %v7106
        %7620 = vst.msk [vmem:[%s299 + $0x558] sm:$0xff] %vm7448, %v7109
        %7621 = vst.msk [vmem:[%s299 + $0x560] sm:$0xff] %vm7448, %v7114
        %7622 = vst.msk [vmem:[%s299 + $0x568] sm:$0xff] %vm7448, %v7117
        %7623 = vst.msk [vmem:[%s299 + $0x570] sm:$0xff] %vm7448, %v7122
        %7624 = vst.msk [vmem:[%s299 + $0x578] sm:$0xff] %vm7448, %v7125
        %7625 = vst.msk [vmem:[%s299 + $0x580] sm:$0xff] %vm7448, %v7130
        %7626 = vst.msk [vmem:[%s299 + $0x588] sm:$0xff] %vm7448, %v7133
        %7627 = vst.msk [vmem:[%s299 + $0x590] sm:$0xff] %vm7448, %v7138
        %7628 = vst.msk [vmem:[%s299 + $0x598] sm:$0xff] %vm7448, %v7141
        %7629 = vst.msk [vmem:[%s299 + $0x5a0] sm:$0xff] %vm7448, %v7146
        %7630 = vst.msk [vmem:[%s299 + $0x5a8] sm:$0xff] %vm7448, %v7149
        %7631 = vst.msk [vmem:[%s299 + $0x5b0] sm:$0xff] %vm7448, %v7154
        %7632 = vst.msk [vmem:[%s299 + $0x5b8] sm:$0xff] %vm7448, %v7157
        %7633 = vst.msk [vmem:[%s299 + $0x5c0] sm:$0xff] %vm7448, %v7162
        %7634 = vst.msk [vmem:[%s299 + $0x5c8] sm:$0xff] %vm7448, %v7165
        %7635 = vst.msk [vmem:[%s299 + $0x5d0] sm:$0xff] %vm7448, %v7170
        %7636 = vst.msk [vmem:[%s299 + $0x5d8] sm:$0xff] %vm7448, %v7173
        %7637 = vst.msk [vmem:[%s299 + $0x5e0] sm:$0xff] %vm7448, %v7178
        %7638 = vst.msk [vmem:[%s299 + $0x5e8] sm:$0xff] %vm7448, %v7181
        %7639 = vst.msk [vmem:[%s299 + $0x5f0] sm:$0xff] %vm7448, %v7186
        %7640 = vst.msk [vmem:[%s299 + $0x5f8] sm:$0xff] %vm7448, %v7189
        %7641 = vst.msk [vmem:[%s299 + $0x600] sm:$0xff] %vm7448, %v7194
        %7642 = vst.msk [vmem:[%s299 + $0x608] sm:$0xff] %vm7448, %v7197
        %7643 = vst.msk [vmem:[%s299 + $0x610] sm:$0xff] %vm7448, %v7202
        %7644 = vst.msk [vmem:[%s299 + $0x618] sm:$0xff] %vm7448, %v7205
        %7645 = vst.msk [vmem:[%s299 + $0x620] sm:$0xff] %vm7448, %v7210
        %7646 = vst.msk [vmem:[%s299 + $0x628] sm:$0xff] %vm7448, %v7213
        %7647 = vst.msk [vmem:[%s299 + $0x630] sm:$0xff] %vm7448, %v7218
        %7648 = vst.msk [vmem:[%s299 + $0x638] sm:$0xff] %vm7448, %v7221
        %7649 = vst.msk [vmem:[%s299 + $0x640] sm:$0xff] %vm7448, %v7226
        %7650 = vst.msk [vmem:[%s299 + $0x648] sm:$0xff] %vm7448, %v7229
        %7651 = vst.msk [vmem:[%s299 + $0x650] sm:$0xff] %vm7448, %v7234
        %7652 = vst.msk [vmem:[%s299 + $0x658] sm:$0xff] %vm7448, %v7237
        %7653 = vst.msk [vmem:[%s299 + $0x660] sm:$0xff] %vm7448, %v7242
        %7654 = vst.msk [vmem:[%s299 + $0x668] sm:$0xff] %vm7448, %v7245
        %7655 = vst.msk [vmem:[%s299 + $0x670] sm:$0xff] %vm7448, %v7250
        %7656 = vst.msk [vmem:[%s299 + $0x678] sm:$0xff] %vm7448, %v7253
        %7657 = vst.msk [vmem:[%s299 + $0x680] sm:$0xff] %vm7448, %v7258
        %7658 = vst.msk [vmem:[%s299 + $0x688] sm:$0xff] %vm7448, %v7261
        %7659 = vst.msk [vmem:[%s299 + $0x690] sm:$0xff] %vm7448, %v7266
        %7660 = vst.msk [vmem:[%s299 + $0x698] sm:$0xff] %vm7448, %v7269
        %7661 = vst.msk [vmem:[%s299 + $0x6a0] sm:$0xff] %vm7448, %v7274
        %7662 = vst.msk [vmem:[%s299 + $0x6a8] sm:$0xff] %vm7448, %v7277
        %7663 = vst.msk [vmem:[%s299 + $0x6b0] sm:$0xff] %vm7448, %v7282
        %7664 = vst.msk [vmem:[%s299 + $0x6b8] sm:$0xff] %vm7448, %v7285
        %7665 = vst.msk [vmem:[%s299 + $0x6c0] sm:$0xff] %vm7448, %v7290
        %7666 = vst.msk [vmem:[%s299 + $0x6c8] sm:$0xff] %vm7448, %v7293
        %7667 = vst.msk [vmem:[%s299 + $0x6d0] sm:$0xff] %vm7448, %v7298
        %7668 = vst.msk [vmem:[%s299 + $0x6d8] sm:$0xff] %vm7448, %v7301
        %7669 = vst.msk [vmem:[%s299 + $0x6e0] sm:$0xff] %vm7448, %v7306
        %7670 = vst.msk [vmem:[%s299 + $0x6e8] sm:$0xff] %vm7448, %v7309
        %7671 = vst.msk [vmem:[%s299 + $0x6f0] sm:$0xff] %vm7448, %v7314
        %7672 = vst.msk [vmem:[%s299 + $0x6f8] sm:$0xff] %vm7448, %v7317
        %7673 = vst.msk [vmem:[%s299 + $0x700] sm:$0xff] %vm7448, %v7322
        %7674 = vst.msk [vmem:[%s299 + $0x708] sm:$0xff] %vm7448, %v7325
        %7675 = vst.msk [vmem:[%s299 + $0x710] sm:$0xff] %vm7448, %v7330
        %7676 = vst.msk [vmem:[%s299 + $0x718] sm:$0xff] %vm7448, %v7333
        %7677 = vst.msk [vmem:[%s299 + $0x720] sm:$0xff] %vm7448, %v7338
        %7678 = vst.msk [vmem:[%s299 + $0x728] sm:$0xff] %vm7448, %v7341
        %7679 = vst.msk [vmem:[%s299 + $0x730] sm:$0xff] %vm7448, %v7346
        %7680 = vst.msk [vmem:[%s299 + $0x738] sm:$0xff] %vm7448, %v7349
        %7681 = vst.msk [vmem:[%s299 + $0x740] sm:$0xff] %vm7448, %v7354
        %7682 = vst.msk [vmem:[%s299 + $0x748] sm:$0xff] %vm7448, %v7357
        %7683 = vst.msk [vmem:[%s299 + $0x750] sm:$0xff] %vm7448, %v7362
        %7684 = vst.msk [vmem:[%s299 + $0x758] sm:$0xff] %vm7448, %v7365
        %7685 = vst.msk [vmem:[%s299 + $0x760] sm:$0xff] %vm7448, %v7370
        %7686 = vst.msk [vmem:[%s299 + $0x768] sm:$0xff] %vm7448, %v7373
        %7687 = vst.msk [vmem:[%s299 + $0x770] sm:$0xff] %vm7448, %v7378
        %7688 = vst.msk [vmem:[%s299 + $0x778] sm:$0xff] %vm7448, %v7381
        %7689 = vst.msk [vmem:[%s299 + $0x780] sm:$0xff] %vm7448, %v7386
        %7690 = vst.msk [vmem:[%s299 + $0x788] sm:$0xff] %vm7448, %v7389
        %7691 = vst.msk [vmem:[%s299 + $0x790] sm:$0xff] %vm7448, %v7394
        %7692 = vst.msk [vmem:[%s299 + $0x798] sm:$0xff] %vm7448, %v7397
        %7693 = vst.msk [vmem:[%s299 + $0x7a0] sm:$0xff] %vm7448, %v7402
        %7694 = vst.msk [vmem:[%s299 + $0x7a8] sm:$0xff] %vm7448, %v7405
        %7695 = vst.msk [vmem:[%s299 + $0x7b0] sm:$0xff] %vm7448, %v7410
        %7696 = vst.msk [vmem:[%s299 + $0x7b8] sm:$0xff] %vm7448, %v7413
        %7697 = vst.msk [vmem:[%s299 + $0x7c0] sm:$0xff] %vm7448, %v7418
        %7698 = vst.msk [vmem:[%s299 + $0x7c8] sm:$0xff] %vm7448, %v7421
        %7699 = vst.msk [vmem:[%s299 + $0x7d0] sm:$0xff] %vm7448, %v7426
        %7700 = vst.msk [vmem:[%s299 + $0x7d8] sm:$0xff] %vm7448, %v7429
        %7701 = vst.msk [vmem:[%s299 + $0x7e0] sm:$0xff] %vm7448, %v7434
        %7702 = vst.msk [vmem:[%s299 + $0x7e8] sm:$0xff] %vm7448, %v7437
        %7703 = vst.msk [vmem:[%s299 + $0x7f0] sm:$0xff] %vm7448, %v7442
        %7704 = vst.msk [vmem:[%s299 + $0x7f8] sm:$0xff] %vm7448, %v7445
        %s7705 = smul.u32 256, %s21
        %p7706 = scmp.lt.s32.totalorder %s7705, 1023
        %s7707 = scalar_select %p7706, %s7705, 1023
        %s7708 = smul.addr %s7707, 8
        %s7709 = scalar_lea.vmem %s7, %s7708
        // Predicated region
        $region53: #{context4_forward.4} parent=47 // pred_check
          %p7710 = pneg %p191
        $region54: #{context4_forward.4} parent=47 // pred_check_branch
          %7712 = sbr.rel (%p7710) target = $region56
        $region55: #{context4_forward.4} parent=47 // pred_region
          %s7713 = smul.u32 256, %s21
        $region56: #{context4_forward.4} parent=47 // pred_fallthru
          _
      $region48: #{context4_forward.4} parent=5 // pred_fallthru
        _
      %p7714 = scmp.le.s32.totalorder 2, %s16
      // Predicated region
      $region57: #{context4_forward.4} parent=5 // pred_check
        %p7715 = pneg %p7714
      $region58: #{context4_forward.4} parent=5 // pred_check_branch
        %7717 = sbr.rel (%p7715) target = $region60
      $region59: #{context4_forward.4} parent=5 // pred_region
        %s7718 = ssub.s32 %s16, 2
        // Predicated region
        $region61: #{context4_forward.4} parent=59 // pred_check
          %p7719 = pneg %p197
        $region62: #{context4_forward.4} parent=59 // pred_check_branch
          %7721 = sbr.rel (%p7719) target = $region64
        $region63: #{context4_forward.4} parent=59 // pred_region
          %s7722 = smul.u32 256, %s22
          %p7723 = scmp.lt.s32.totalorder %s7722, 1023
          %s7724 = scalar_select %p7723, %s7722, 1023
          %s7725 = smul.addr %s7724, 8
          %s7726 = scalar_lea.vmem %s7, %s7725
        $region64: #{context4_forward.4} parent=59 // pred_fallthru
          _
      $region60: #{context4_forward.4} parent=5 // pred_fallthru
        _
    $region6: #{context4_forward.4} parent=1 // loop_footer
      %s20 = sadd.s32 1, %s16
    $region7: #{context4_forward.4} parent=1 // loop_footer_branch
      %15 = sbr.rel target = $region3
    $region8: #{context4_forward.4} parent=1 // loop_exit
      _
    %7727 = vsyncpa [#allocation3], 1
    %s7728 = scalar_lea.sflag [#allocation3], 1
    %7729 = vsyncpa %s7728, 1

</llo_original>
